<compile_context>
chip_gen: v5e
topology: v5e:2x2
jax: 0.10.0
libtpu: 0.0.40
codegen_flags: <defaults>
</compile_context>

<pallas_src>
import jax
import jax.numpy as jnp
from jax.experimental import pallas as pl
from jax.experimental.pallas import tpu as pltpu

LATENT_DIM = 32
HIDDEN = 400
HIDDEN_PAD = 512          # pad 400 -> 512: full 128-wide lanes, no masked ops
OUT_PAD = 128             # pad final N=1 -> 128: full MXU tile, unmasked stores
MAX_BATCH_TILE = 1024
BATCH_ALIGN = 128         # MXU / layout-clean M granularity


def _round_up(n, m):
    return ((n + m - 1) // m) * m


# --------------------------------------------------------------------------- #
# Kernel
# --------------------------------------------------------------------------- #
def _discriminator_kernel(
    x_ref,
    w1_ref, b1_ref,
    w2_ref, b2_ref,
    w3_ref, b3_ref,
    w4_ref, b4_ref,
    w5_ref, b5_ref,
    w6_ref, b6_ref,
    out_ref,
):
    """One batch tile of the MLP. Weights stay VMEM-resident across grid steps."""

    def linear_relu(h_bf16, w_ref, b_ref):
        # bf16 x bf16 matmul with f32 accumulation on the MXU; bias + ReLU on
        # the VPU in f32; cast back to bf16 for the next MXU pass.
        y = jnp.dot(h_bf16, w_ref[...], preferred_element_type=jnp.float32)
        return jnp.maximum(y + b_ref[...], 0.0).astype(jnp.bfloat16)

    # In-kernel f32 -> bf16 cast of the activation block (tiny, free on the VPU).
    h = x_ref[...].astype(jnp.bfloat16)
    h = linear_relu(h, w1_ref, b1_ref)
    h = linear_relu(h, w2_ref, b2_ref)
    h = linear_relu(h, w3_ref, b3_ref)
    h = linear_relu(h, w4_ref, b4_ref)
    h = linear_relu(h, w5_ref, b5_ref)

    # Final Linear(400 -> 1), N padded to 128: a full-tile MXU matmul whose
    # (tb, 128) result is stored lane-dense and unmasked; column 0 is the real
    # logit, the zero-padded columns produce sigmoid(0)=0.5 and are sliced off
    # by the wrapper.
    logits = jnp.dot(h, w6_ref[...], preferred_element_type=jnp.float32) + b6_ref[...]
    sig = pl.reciprocal(1.0 + jnp.exp(-logits), approx=True)   # EUP vrcp slot
    out_ref[...] = sig.astype(out_ref.dtype)


# --------------------------------------------------------------------------- #
# Parameters (PyTorch layout) + one-time kernel-layout conversion
# --------------------------------------------------------------------------- #
def make_discriminator_params(latent_dim=LATENT_DIM, hidden=HIDDEN, seed=0):
    """Deterministic synthetic params, shapes matching nn.Linear (out_features, in_features)."""
    key = jax.random.PRNGKey(seed)
    dims = [(hidden, latent_dim),
            (hidden, hidden),
            (hidden, hidden),
            (hidden, hidden),
            (hidden, hidden),
            (1, hidden)]
    params = []
    for (out_f, in_f) in dims:
        key, kw, kb = jax.random.split(key, 3)
        bound = 1.0 / jnp.sqrt(in_f)
        w = jax.random.uniform(kw, (out_f, in_f), jnp.float32, -bound, bound)
        b = jax.random.uniform(kb, (out_f,), jnp.float32, -bound, bound)
        params.append((w, b))
    return params


def prepare_discriminator_params(params, hidden_pad=HIDDEN_PAD, out_pad=OUT_PAD):
    """One-time conversion to kernel layout (call once, NOT per forward):
       - transpose weights to [in, out]
       - zero-pad the 400-wide hidden dims to `hidden_pad`, final out dim to `out_pad`
       - cast matmul weights to bf16 (biases stay f32)."""
    (w1, b1), (w2, b2), (w3, b3), (w4, b4), (w5, b5), (w6, b6) = [
        (jnp.asarray(w, jnp.float32), jnp.asarray(b, jnp.float32)) for (w, b) in params
    ]
    latent = w1.shape[1]

    def pad_to(a, shape):
        out = jnp.zeros(shape, a.dtype)
        return out.at[tuple(slice(0, s) for s in a.shape)].set(a)

    prepped = []
    prepped += [pad_to(w1.T, (latent, hidden_pad)).astype(jnp.bfloat16),
                pad_to(b1[None, :], (1, hidden_pad))]
    for (w, b) in ((w2, b2), (w3, b3), (w4, b4), (w5, b5)):
        prepped += [pad_to(w.T, (hidden_pad, hidden_pad)).astype(jnp.bfloat16),
                    pad_to(b[None, :], (1, hidden_pad))]
    # Final Linear(400,1): [hidden_pad, out_pad] bf16 (column 0 = real weights),
    # bias [1, out_pad] f32 (column 0 = real bias).
    prepped += [pad_to(w6.T, (hidden_pad, out_pad)).astype(jnp.bfloat16),
                pad_to(b6.reshape(1, 1), (1, out_pad))]
    return prepped


# --------------------------------------------------------------------------- #
# Forward wrapper
# --------------------------------------------------------------------------- #
def _choose_tiling(b_orig):
    """Pick (batch_tile, padded_batch). Multiples of 128; >=2 grid steps once the
       rounded batch reaches 256 so the parallel axis can use both v7x cores."""
    b_round = max(_round_up(b_orig, BATCH_ALIGN), BATCH_ALIGN)
    if b_round >= 2 * BATCH_ALIGN:
        tb = min(MAX_BATCH_TILE, _round_up(pl.cdiv(b_round, 2), BATCH_ALIGN))
    else:
        tb = b_round
    b_pad = _round_up(b_round, tb)
    return tb, b_pad


@jax.jit
def discriminator_forward(x, prepped):
    """x: [B, latent_dim] float32 -> [B, 1] float32 (matches the PyTorch module)."""
    b_orig, latent = x.shape
    tb, b_pad = _choose_tiling(b_orig)

    # Keep x in f32 (cast happens in-kernel); only materialize a pad copy when
    # the batch isn't already tile-aligned.
    if b_pad == b_orig:
        x_p = x
    else:
        x_p = jnp.zeros((b_pad, latent), x.dtype).at[:b_orig].set(x)

    x_spec = pl.BlockSpec((tb, latent), lambda i: (i, 0))
    out_spec = pl.BlockSpec((tb, OUT_PAD), lambda i: (i, 0))

    def resident(shape):
        # Same block index every grid step -> weights/biases stay VMEM-resident.
        return pl.BlockSpec(shape, lambda i: (0, 0))

    in_specs = [x_spec] + [resident(op.shape) for op in prepped]

    out = pl.pallas_call(
        _discriminator_kernel,
        out_shape=jax.ShapeDtypeStruct((b_pad, OUT_PAD), jnp.float32),
        grid=(b_pad // tb,),
        in_specs=in_specs,
        out_specs=out_spec,
        compiler_params=pltpu.CompilerParams(
            dimension_semantics=("parallel",),   # shard batch tiles across TCs (v7x)
            vmem_limit_bytes=32 << 20,           # footprint <~16 MiB at tb=1024
        ),
    )(x_p, *prepped)

    return out[:b_orig, :1]


# --------------------------------------------------------------------------- #
# References
# --------------------------------------------------------------------------- #
def _reference_forward(x, params):
    """Plain-JAX f32 reference matching the PyTorch semantics exactly."""
    h = x
    for i, (w, b) in enumerate(params):
        h = h @ w.T + b
        if i < len(params) - 1:
            h = jnp.maximum(h, 0.0)
    return jax.nn.sigmoid(h)


def _reference_prepped(x, prepped):
    """Plain-JAX reference mirroring the kernel's bf16/f32 mixed-precision math."""
    (w1, b1, w2, b2, w3, b3, w4, b4, w5, b5, w6, b6) = prepped

    def layer(h, w, b):
        y = jnp.dot(h, w, preferred_element_type=jnp.float32) + b
        return jnp.maximum(y, 0.0).astype(jnp.bfloat16)

    h = x.astype(jnp.bfloat16)
    for (w, b) in ((w1, b1), (w2, b2), (w3, b3), (w4, b4), (w5, b5)):
        h = layer(h, w, b)
    logits = jnp.dot(h, w6, preferred_element_type=jnp.float32) + b6
    return jax.nn.sigmoid(logits)[:, :1]


if __name__ == "__main__":
    key = jax.random.PRNGKey(0)
    batch = 2
    x = jax.random.normal(key, (batch, LATENT_DIM), jnp.float32)

    params = make_discriminator_params(LATENT_DIM, HIDDEN, seed=0)
    prepped = prepare_discriminator_params(params)   # one-time layout/dtype conversion

    out = discriminator_forward(x, prepped)
    out = jax.block_until_ready(out)
    assert out.shape == (batch, 1), out.shape

    # Tight check against a plain-JAX reference using the same bf16 weights
    # (tolerance covers the EUP approx-reciprocal in the sigmoid).
    ref_mixed = _reference_prepped(x, prepped)
    assert jnp.allclose(out, ref_mixed, atol=5e-3, rtol=0.0), (out, ref_mixed)

    # Loose check against the original f32 PyTorch-semantics reference
    # (difference is purely the bf16 weight/activation cast + approx recip).
    ref_f32 = _reference_forward(x, params)
    assert jnp.allclose(out, ref_f32, atol=4e-2, rtol=0.0), (out, ref_f32)

    print("KERNEL_OK")
</pallas_src>

<mosaic_0001>
module attributes {stable_mosaic.version = 11 : i64} {
  func.func @_discriminator_kernel(%arg0: i32, %arg1: memref<128x32xf32, #tpu.memory_space<vmem>>, %arg2: memref<32x512xbf16, #tpu.memory_space<vmem>>, %arg3: memref<1x512xf32, #tpu.memory_space<vmem>>, %arg4: memref<512x512xbf16, #tpu.memory_space<vmem>>, %arg5: memref<1x512xf32, #tpu.memory_space<vmem>>, %arg6: memref<512x512xbf16, #tpu.memory_space<vmem>>, %arg7: memref<1x512xf32, #tpu.memory_space<vmem>>, %arg8: memref<512x512xbf16, #tpu.memory_space<vmem>>, %arg9: memref<1x512xf32, #tpu.memory_space<vmem>>, %arg10: memref<512x512xbf16, #tpu.memory_space<vmem>>, %arg11: memref<1x512xf32, #tpu.memory_space<vmem>>, %arg12: memref<512x128xbf16, #tpu.memory_space<vmem>>, %arg13: memref<1x128xf32, #tpu.memory_space<vmem>>, %arg14: memref<128x128xf32, #tpu.memory_space<vmem>>) attributes {dimension_semantics = [#tpu.dimension_semantics<parallel>], iteration_bounds = array<i64: 1>, scalar_prefetch = 0 : i64, scratch_operands = 0 : i64, tpu.core_type = #tpu.core_type<tc>, window_params = [{transform_indices = @transform_0, window_bounds = array<i64: 128, 32>}, {pipeline_mode = #tpu.pipeline_mode<synchronous>, transform_indices = @transform_1, window_bounds = array<i64: 32, 512>}, {pipeline_mode = #tpu.pipeline_mode<synchronous>, transform_indices = @transform_2, window_bounds = array<i64: 1, 512>}, {pipeline_mode = #tpu.pipeline_mode<synchronous>, transform_indices = @transform_3, window_bounds = array<i64: 512, 512>}, {pipeline_mode = #tpu.pipeline_mode<synchronous>, transform_indices = @transform_4, window_bounds = array<i64: 1, 512>}, {pipeline_mode = #tpu.pipeline_mode<synchronous>, transform_indices = @transform_5, window_bounds = array<i64: 512, 512>}, {pipeline_mode = #tpu.pipeline_mode<synchronous>, transform_indices = @transform_6, window_bounds = array<i64: 1, 512>}, {pipeline_mode = #tpu.pipeline_mode<synchronous>, transform_indices = @transform_7, window_bounds = array<i64: 512, 512>}, {pipeline_mode = #tpu.pipeline_mode<synchronous>, transform_indices = @transform_8, window_bounds = array<i64: 1, 512>}, {pipeline_mode = #tpu.pipeline_mode<synchronous>, transform_indices = @transform_9, window_bounds = array<i64: 512, 512>}, {pipeline_mode = #tpu.pipeline_mode<synchronous>, transform_indices = @transform_10, window_bounds = array<i64: 1, 512>}, {pipeline_mode = #tpu.pipeline_mode<synchronous>, transform_indices = @transform_11, window_bounds = array<i64: 512, 128>}, {pipeline_mode = #tpu.pipeline_mode<synchronous>, transform_indices = @transform_12, window_bounds = array<i64: 1, 128>}, {transform_indices = @transform_13, window_bounds = array<i64: 128, 128>}]} {
    %c0 = arith.constant 0 : index
    %c0_0 = arith.constant 0 : index
    %0 = vector.load %arg1[%c0, %c0_0] : memref<128x32xf32, #tpu.memory_space<vmem>>, vector<128x32xf32>
    %1 = arith.truncf %0 : vector<128x32xf32> to vector<128x32xbf16>
    %c0_1 = arith.constant 0 : index
    %c0_2 = arith.constant 0 : index
    %2 = vector.load %arg2[%c0_1, %c0_2] : memref<32x512xbf16, #tpu.memory_space<vmem>>, vector<32x512xbf16>
    %cst = arith.constant dense<0.000000e+00> : vector<128x512xf32>
    %3 = tpu.matmul %1, %2, %cst {dimension_numbers = #tpu.dot_dimension_numbers<[1], [0], [0], [1], [0, 0, 1, 1], [], []>} : vector<128x32xbf16>, vector<32x512xbf16>, vector<128x512xf32> -> vector<128x512xf32>
    %c0_3 = arith.constant 0 : index
    %c0_4 = arith.constant 0 : index
    %4 = vector.load %arg3[%c0_3, %c0_4] : memref<1x512xf32, #tpu.memory_space<vmem>>, vector<1x512xf32>
    %5 = vector.broadcast %4 : vector<1x512xf32> to vector<128x512xf32>
    %6 = arith.addf %3, %5 : vector<128x512xf32>
    %cst_5 = arith.constant 0.000000e+00 : f32
    %7 = vector.broadcast %cst_5 : f32 to vector<128x512xf32>
    %8 = arith.maximumf %6, %7 : vector<128x512xf32>
    %9 = arith.truncf %8 : vector<128x512xf32> to vector<128x512xbf16>
    %c0_6 = arith.constant 0 : index
    %c0_7 = arith.constant 0 : index
    %10 = vector.load %arg4[%c0_6, %c0_7] : memref<512x512xbf16, #tpu.memory_space<vmem>>, vector<512x512xbf16>
    %cst_8 = arith.constant dense<0.000000e+00> : vector<128x512xf32>
    %11 = tpu.matmul %9, %10, %cst_8 {dimension_numbers = #tpu.dot_dimension_numbers<[1], [0], [0], [1], [0, 0, 1, 1], [], []>} : vector<128x512xbf16>, vector<512x512xbf16>, vector<128x512xf32> -> vector<128x512xf32>
    %c0_9 = arith.constant 0 : index
    %c0_10 = arith.constant 0 : index
    %12 = vector.load %arg5[%c0_9, %c0_10] : memref<1x512xf32, #tpu.memory_space<vmem>>, vector<1x512xf32>
    %13 = vector.broadcast %12 : vector<1x512xf32> to vector<128x512xf32>
    %14 = arith.addf %11, %13 : vector<128x512xf32>
    %cst_11 = arith.constant 0.000000e+00 : f32
    %15 = vector.broadcast %cst_11 : f32 to vector<128x512xf32>
    %16 = arith.maximumf %14, %15 : vector<128x512xf32>
    %17 = arith.truncf %16 : vector<128x512xf32> to vector<128x512xbf16>
    %c0_12 = arith.constant 0 : index
    %c0_13 = arith.constant 0 : index
    %18 = vector.load %arg6[%c0_12, %c0_13] : memref<512x512xbf16, #tpu.memory_space<vmem>>, vector<512x512xbf16>
    %cst_14 = arith.constant dense<0.000000e+00> : vector<128x512xf32>
    %19 = tpu.matmul %17, %18, %cst_14 {dimension_numbers = #tpu.dot_dimension_numbers<[1], [0], [0], [1], [0, 0, 1, 1], [], []>} : vector<128x512xbf16>, vector<512x512xbf16>, vector<128x512xf32> -> vector<128x512xf32>
    %c0_15 = arith.constant 0 : index
    %c0_16 = arith.constant 0 : index
    %20 = vector.load %arg7[%c0_15, %c0_16] : memref<1x512xf32, #tpu.memory_space<vmem>>, vector<1x512xf32>
    %21 = vector.broadcast %20 : vector<1x512xf32> to vector<128x512xf32>
    %22 = arith.addf %19, %21 : vector<128x512xf32>
    %cst_17 = arith.constant 0.000000e+00 : f32
    %23 = vector.broadcast %cst_17 : f32 to vector<128x512xf32>
    %24 = arith.maximumf %22, %23 : vector<128x512xf32>
    %25 = arith.truncf %24 : vector<128x512xf32> to vector<128x512xbf16>
    %c0_18 = arith.constant 0 : index
    %c0_19 = arith.constant 0 : index
    %26 = vector.load %arg8[%c0_18, %c0_19] : memref<512x512xbf16, #tpu.memory_space<vmem>>, vector<512x512xbf16>
    %cst_20 = arith.constant dense<0.000000e+00> : vector<128x512xf32>
    %27 = tpu.matmul %25, %26, %cst_20 {dimension_numbers = #tpu.dot_dimension_numbers<[1], [0], [0], [1], [0, 0, 1, 1], [], []>} : vector<128x512xbf16>, vector<512x512xbf16>, vector<128x512xf32> -> vector<128x512xf32>
    %c0_21 = arith.constant 0 : index
    %c0_22 = arith.constant 0 : index
    %28 = vector.load %arg9[%c0_21, %c0_22] : memref<1x512xf32, #tpu.memory_space<vmem>>, vector<1x512xf32>
    %29 = vector.broadcast %28 : vector<1x512xf32> to vector<128x512xf32>
    %30 = arith.addf %27, %29 : vector<128x512xf32>
    %cst_23 = arith.constant 0.000000e+00 : f32
    %31 = vector.broadcast %cst_23 : f32 to vector<128x512xf32>
    %32 = arith.maximumf %30, %31 : vector<128x512xf32>
    %33 = arith.truncf %32 : vector<128x512xf32> to vector<128x512xbf16>
    %c0_24 = arith.constant 0 : index
    %c0_25 = arith.constant 0 : index
    %34 = vector.load %arg10[%c0_24, %c0_25] : memref<512x512xbf16, #tpu.memory_space<vmem>>, vector<512x512xbf16>
    %cst_26 = arith.constant dense<0.000000e+00> : vector<128x512xf32>
    %35 = tpu.matmul %33, %34, %cst_26 {dimension_numbers = #tpu.dot_dimension_numbers<[1], [0], [0], [1], [0, 0, 1, 1], [], []>} : vector<128x512xbf16>, vector<512x512xbf16>, vector<128x512xf32> -> vector<128x512xf32>
    %c0_27 = arith.constant 0 : index
    %c0_28 = arith.constant 0 : index
    %36 = vector.load %arg11[%c0_27, %c0_28] : memref<1x512xf32, #tpu.memory_space<vmem>>, vector<1x512xf32>
    %37 = vector.broadcast %36 : vector<1x512xf32> to vector<128x512xf32>
    %38 = arith.addf %35, %37 : vector<128x512xf32>
    %cst_29 = arith.constant 0.000000e+00 : f32
    %39 = vector.broadcast %cst_29 : f32 to vector<128x512xf32>
    %40 = arith.maximumf %38, %39 : vector<128x512xf32>
    %41 = arith.truncf %40 : vector<128x512xf32> to vector<128x512xbf16>
    %c0_30 = arith.constant 0 : index
    %c0_31 = arith.constant 0 : index
    %42 = vector.load %arg12[%c0_30, %c0_31] : memref<512x128xbf16, #tpu.memory_space<vmem>>, vector<512x128xbf16>
    %cst_32 = arith.constant dense<0.000000e+00> : vector<128x128xf32>
    %43 = tpu.matmul %41, %42, %cst_32 {dimension_numbers = #tpu.dot_dimension_numbers<[1], [0], [0], [1], [0, 0, 1, 1], [], []>} : vector<128x512xbf16>, vector<512x128xbf16>, vector<128x128xf32> -> vector<128x128xf32>
    %c0_33 = arith.constant 0 : index
    %c0_34 = arith.constant 0 : index
    %44 = vector.load %arg13[%c0_33, %c0_34] : memref<1x128xf32, #tpu.memory_space<vmem>>, vector<1x128xf32>
    %45 = vector.broadcast %44 : vector<1x128xf32> to vector<128x128xf32>
    %46 = arith.addf %43, %45 : vector<128x128xf32>
    %cst_35 = arith.constant 0.000000e+00 : f32
    %47 = vector.broadcast %cst_35 : f32 to vector<128x128xf32>
    %48 = arith.subf %47, %46 : vector<128x128xf32>
    %49 = math.exp %48 : vector<128x128xf32>
    %cst_36 = arith.constant 1.000000e+00 : f32
    %50 = vector.broadcast %cst_36 : f32 to vector<128x128xf32>
    %51 = arith.addf %50, %49 : vector<128x128xf32>
    %52 = tpu.reciprocal %51 {approx = true} : vector<128x128xf32> -> vector<128x128xf32>
    %c0_37 = arith.constant 0 : index
    %c0_38 = arith.constant 0 : index
    %53 = vector.load %arg14[%c0_37, %c0_38] : memref<128x128xf32, #tpu.memory_space<vmem>>, vector<128x128xf32>
    tpu.vector_store %arg14[%c0_37, %c0_38], %52 {strides = array<i32>} : memref<128x128xf32, #tpu.memory_space<vmem>>, vector<128x128xf32>,
    return
  }
  func.func @transform_0(%arg0: i32) -> (i32, i32) {
    %c0_i32 = arith.constant 0 : i32
    %c0_i32_0 = arith.constant 0 : i32
    return %arg0, %c0_i32 : i32, i32
  }
  func.func @transform_1(%arg0: i32) -> (i32, i32) {
    %c0_i32 = arith.constant 0 : i32
    %c0_i32_0 = arith.constant 0 : i32
    %c0_i32_1 = arith.constant 0 : i32
    return %c0_i32, %c0_i32_0 : i32, i32
  }
  func.func @transform_2(%arg0: i32) -> (i32, i32) {
    %c0_i32 = arith.constant 0 : i32
    %c0_i32_0 = arith.constant 0 : i32
    %c0_i32_1 = arith.constant 0 : i32
    return %c0_i32, %c0_i32_0 : i32, i32
  }
  func.func @transform_3(%arg0: i32) -> (i32, i32) {
    %c0_i32 = arith.constant 0 : i32
    %c0_i32_0 = arith.constant 0 : i32
    %c0_i32_1 = arith.constant 0 : i32
    return %c0_i32, %c0_i32_0 : i32, i32
  }
  func.func @transform_4(%arg0: i32) -> (i32, i32) {
    %c0_i32 = arith.constant 0 : i32
    %c0_i32_0 = arith.constant 0 : i32
    %c0_i32_1 = arith.constant 0 : i32
    return %c0_i32, %c0_i32_0 : i32, i32
  }
  func.func @transform_5(%arg0: i32) -> (i32, i32) {
    %c0_i32 = arith.constant 0 : i32
    %c0_i32_0 = arith.constant 0 : i32
    %c0_i32_1 = arith.constant 0 : i32
    return %c0_i32, %c0_i32_0 : i32, i32
  }
  func.func @transform_6(%arg0: i32) -> (i32, i32) {
    %c0_i32 = arith.constant 0 : i32
    %c0_i32_0 = arith.constant 0 : i32
    %c0_i32_1 = arith.constant 0 : i32
    return %c0_i32, %c0_i32_0 : i32, i32
  }
  func.func @transform_7(%arg0: i32) -> (i32, i32) {
    %c0_i32 = arith.constant 0 : i32
    %c0_i32_0 = arith.constant 0 : i32
    %c0_i32_1 = arith.constant 0 : i32
    return %c0_i32, %c0_i32_0 : i32, i32
  }
  func.func @transform_8(%arg0: i32) -> (i32, i32) {
    %c0_i32 = arith.constant 0 : i32
    %c0_i32_0 = arith.constant 0 : i32
    %c0_i32_1 = arith.constant 0 : i32
    return %c0_i32, %c0_i32_0 : i32, i32
  }
  func.func @transform_9(%arg0: i32) -> (i32, i32) {
    %c0_i32 = arith.constant 0 : i32
    %c0_i32_0 = arith.constant 0 : i32
    %c0_i32_1 = arith.constant 0 : i32
    return %c0_i32, %c0_i32_0 : i32, i32
  }
  func.func @transform_10(%arg0: i32) -> (i32, i32) {
    %c0_i32 = arith.constant 0 : i32
    %c0_i32_0 = arith.constant 0 : i32
    %c0_i32_1 = arith.constant 0 : i32
    return %c0_i32, %c0_i32_0 : i32, i32
  }
  func.func @transform_11(%arg0: i32) -> (i32, i32) {
    %c0_i32 = arith.constant 0 : i32
    %c0_i32_0 = arith.constant 0 : i32
    %c0_i32_1 = arith.constant 0 : i32
    return %c0_i32, %c0_i32_0 : i32, i32
  }
  func.func @transform_12(%arg0: i32) -> (i32, i32) {
    %c0_i32 = arith.constant 0 : i32
    %c0_i32_0 = arith.constant 0 : i32
    %c0_i32_1 = arith.constant 0 : i32
    return %c0_i32, %c0_i32_0 : i32, i32
  }
  func.func @transform_13(%arg0: i32) -> (i32, i32) {
    %c0_i32 = arith.constant 0 : i32
    %c0_i32_0 = arith.constant 0 : i32
    return %arg0, %c0_i32 : i32, i32
  }
}

</mosaic_0001>

<llo_original>
// kernel: discriminator_forward.1
$region0: #{discriminator_forward.1}
  #allocation0 [shape = 'u32[]', space=smem, size = 0x4, offset = 0x4, fixed_abs, tag = 'smem constant byte address 0x4 - core index']
  #allocation1 [shape = 'u32[72,128]{1,0:T(1,128)}', space=vmem, size = 0x9000, scoped, tag = 'internal scratch']
  %s0 = inlined_call_operand.vmem [shape: f32[128,32], index: 0, kind: input, shape index: {}]
  %s1 = inlined_call_operand.vmem [shape: bf16[32,512], index: 1, kind: input, shape index: {}]
  %s2 = inlined_call_operand.vmem [shape: f32[1,512], index: 2, kind: input, shape index: {}]
  %s3 = inlined_call_operand.hbm [shape: bf16[512,512], index: 3, kind: input, shape index: {}]
  %s4 = inlined_call_operand.vmem [shape: f32[1,512], index: 4, kind: input, shape index: {}]
  %s5 = inlined_call_operand.hbm [shape: bf16[512,512], index: 5, kind: input, shape index: {}]
  %s6 = inlined_call_operand.vmem [shape: f32[1,512], index: 6, kind: input, shape index: {}]
  %s7 = inlined_call_operand.hbm [shape: bf16[512,512], index: 7, kind: input, shape index: {}]
  %s8 = inlined_call_operand.vmem [shape: f32[1,512], index: 8, kind: input, shape index: {}]
  %s9 = inlined_call_operand.hbm [shape: bf16[512,512], index: 9, kind: input, shape index: {}]
  %s10 = inlined_call_operand.vmem [shape: f32[1,512], index: 10, kind: input, shape index: {}]
  %s11 = inlined_call_operand.hbm [shape: bf16[512,128], index: 11, kind: input, shape index: {}]
  %s12 = inlined_call_operand.vmem [shape: f32[1,128], index: 12, kind: input, shape index: {}]
  %s13 = inlined_call_operand.vmem [shape: f32[128,128], index: 13, kind: output, shape index: {}]
  %s14 = sld [smem:[#allocation0]]
  $region82: #{discriminator_forward.1} parent=0
    _
  %s16 = ssub.s32 1, %s14
  %s17 = scalar_select 0, %s16, %s14
  $region1: #{discriminator_forward.1} parent=0
    #allocation2 [shape = 'u8[524288]{0}', space=vmem, size = 0x80000, scoped, tag = 'input window, operand 3, single buffered']
    #allocation3 [shape = 's32[1]{0}', space=sflag, size = 0x4, scoped, tag = 'scoped memory for discriminator_forward.1']
    #allocation4 [shape = 'u8[524288]{0}', space=vmem, size = 0x80000, scoped, tag = 'input window, operand 5, single buffered']
    #allocation5 [shape = 's32[1]{0}', space=sflag, size = 0x4, scoped, tag = 'scoped memory for discriminator_forward.1']
    #allocation6 [shape = 'u8[524288]{0}', space=vmem, size = 0x80000, scoped, tag = 'input window, operand 7, single buffered']
    #allocation7 [shape = 'u8[524288]{0}', space=vmem, size = 0x80000, scoped, tag = 'input window, operand 9, single buffered']
    #allocation8 [shape = 's32[1]{0}', space=sflag, size = 0x4, scoped, tag = 'scoped memory for discriminator_forward.1']
    #allocation9 [shape = 'u8[131072]{0}', space=vmem, size = 0x20000, scoped, tag = 'input window, operand 11, single buffered']
    %18 = vsyncpa [#allocation3], 0
    %19 = vsyncpa [#allocation5], 0
    %20 = vsyncpa [#allocation8], 0
    // Predicated region
    $region2: #{discriminator_forward.1} parent=1 // pred_check
      _
    $region3: #{discriminator_forward.1} parent=1 // pred_check_branch
      %22 = sbr.rel (0) target = $region5
    $region4: #{discriminator_forward.1} parent=1 // pred_region
      _
    $region5: #{discriminator_forward.1} parent=1 // pred_fallthru
      _
    // Predicated region
    $region6: #{discriminator_forward.1} parent=1 // pred_check
      _
    $region7: #{discriminator_forward.1} parent=1 // pred_check_branch
      %24 = sbr.rel (0) target = $region9
    $region8: #{discriminator_forward.1} parent=1 // pred_region
      _
    $region9: #{discriminator_forward.1} parent=1 // pred_fallthru
      _
    // Predicated region
    $region10: #{discriminator_forward.1} parent=1 // pred_check
      _
    $region11: #{discriminator_forward.1} parent=1 // pred_check_branch
      %26 = sbr.rel (0) target = $region13
    $region12: #{discriminator_forward.1} parent=1 // pred_region
      _
    $region13: #{discriminator_forward.1} parent=1 // pred_fallthru
      _
    // Predicated region
    $region14: #{discriminator_forward.1} parent=1 // pred_check
      _
    $region15: #{discriminator_forward.1} parent=1 // pred_check_branch
      %28 = sbr.rel (0) target = $region17
    $region16: #{discriminator_forward.1} parent=1 // pred_region
      %30 = vsyncadd [#allocation3], 0
      %s31 = sshll.u32 %s3, 4
      %s32 = int_to_ptr.hbm [resolvable:$true] %s31
      %s33 = sshll.u32 [#allocation2], 4
      %s34 = int_to_ptr.vmem [resolvable:$true] %s33
      %39 = dma.hbm_to_vmem [thread:$0]  %s32, 16384, %s34, [#allocation3], 256, 256, 16
    $region17: #{discriminator_forward.1} parent=1 // pred_fallthru
      _
    // Predicated region
    $region18: #{discriminator_forward.1} parent=1 // pred_check
      _
    $region19: #{discriminator_forward.1} parent=1 // pred_check_branch
      %41 = sbr.rel (0) target = $region21
    $region20: #{discriminator_forward.1} parent=1 // pred_region
      _
    $region21: #{discriminator_forward.1} parent=1 // pred_fallthru
      _
    // Predicated region
    $region22: #{discriminator_forward.1} parent=1 // pred_check
      _
    $region23: #{discriminator_forward.1} parent=1 // pred_check_branch
      %43 = sbr.rel (0) target = $region25
    $region24: #{discriminator_forward.1} parent=1 // pred_region
      %45 = vsyncadd [#allocation5], 0
      %s46 = sshll.u32 %s5, 4
      %s47 = int_to_ptr.hbm [resolvable:$true] %s46
      %s48 = sshll.u32 [#allocation4], 4
      %s49 = int_to_ptr.vmem [resolvable:$true] %s48
      %54 = dma.hbm_to_vmem [thread:$0]  %s47, 16384, %s49, [#allocation5], 256, 256, 16
    $region25: #{discriminator_forward.1} parent=1 // pred_fallthru
      _
    // Predicated region
    $region26: #{discriminator_forward.1} parent=1 // pred_check
      _
    $region27: #{discriminator_forward.1} parent=1 // pred_check_branch
      %56 = sbr.rel (0) target = $region29
    $region28: #{discriminator_forward.1} parent=1 // pred_region
      _
    $region29: #{discriminator_forward.1} parent=1 // pred_fallthru
      _
    // Predicated region
    $region30: #{discriminator_forward.1} parent=1 // pred_check
      _
    $region31: #{discriminator_forward.1} parent=1 // pred_check_branch
      %58 = sbr.rel (0) target = $region33
    $region32: #{discriminator_forward.1} parent=1 // pred_region
      %60 = vsyncadd [#allocation5], 0
      %s61 = sshll.u32 %s7, 4
      %s62 = int_to_ptr.hbm [resolvable:$true] %s61
      %s63 = sshll.u32 [#allocation6], 4
      %s64 = int_to_ptr.vmem [resolvable:$true] %s63
      %69 = dma.hbm_to_vmem [thread:$0]  %s62, 16384, %s64, [#allocation5], 256, 256, 16
    $region33: #{discriminator_forward.1} parent=1 // pred_fallthru
      _
    // Predicated region
    $region34: #{discriminator_forward.1} parent=1 // pred_check
      _
    $region35: #{discriminator_forward.1} parent=1 // pred_check_branch
      %71 = sbr.rel (0) target = $region37
    $region36: #{discriminator_forward.1} parent=1 // pred_region
      _
    $region37: #{discriminator_forward.1} parent=1 // pred_fallthru
      _
    // Predicated region
    $region38: #{discriminator_forward.1} parent=1 // pred_check
      _
    $region39: #{discriminator_forward.1} parent=1 // pred_check_branch
      %73 = sbr.rel (0) target = $region41
    $region40: #{discriminator_forward.1} parent=1 // pred_region
      %75 = vsyncadd [#allocation8], 0
      %s76 = sshll.u32 %s9, 4
      %s77 = int_to_ptr.hbm [resolvable:$true] %s76
      %s78 = sshll.u32 [#allocation7], 4
      %s79 = int_to_ptr.vmem [resolvable:$true] %s78
      %84 = dma.hbm_to_vmem [thread:$0]  %s77, 16384, %s79, [#allocation8], 256, 256, 16
    $region41: #{discriminator_forward.1} parent=1 // pred_fallthru
      _
    // Predicated region
    $region42: #{discriminator_forward.1} parent=1 // pred_check
      _
    $region43: #{discriminator_forward.1} parent=1 // pred_check_branch
      %86 = sbr.rel (0) target = $region45
    $region44: #{discriminator_forward.1} parent=1 // pred_region
      _
    $region45: #{discriminator_forward.1} parent=1 // pred_fallthru
      _
    // Predicated region
    $region46: #{discriminator_forward.1} parent=1 // pred_check
      _
    $region47: #{discriminator_forward.1} parent=1 // pred_check_branch
      %88 = sbr.rel (0) target = $region49
    $region48: #{discriminator_forward.1} parent=1 // pred_region
      %90 = vsyncadd [#allocation8], 0
      %s91 = sshll.u32 %s11, 4
      %s92 = int_to_ptr.hbm [resolvable:$true] %s91
      %s93 = sshll.u32 [#allocation9], 4
      %s94 = int_to_ptr.vmem [resolvable:$true] %s93
      %99 = dma.hbm_to_vmem [thread:$0]  %s92, 4096, %s94, [#allocation8], 64, 64, 4
    $region49: #{discriminator_forward.1} parent=1 // pred_fallthru
      _
    // Predicated region
    $region50: #{discriminator_forward.1} parent=1 // pred_check
      _
    $region51: #{discriminator_forward.1} parent=1 // pred_check_branch
      %101 = sbr.rel (0) target = $region53
    $region52: #{discriminator_forward.1} parent=1 // pred_region
      _
    $region53: #{discriminator_forward.1} parent=1 // pred_fallthru
      _
    // Predicated region
    $region54: #{discriminator_forward.1} parent=1 // pred_check
      _
    $region55: #{discriminator_forward.1} parent=1 // pred_check_branch
      %103 = sbr.rel (0) target = $region57
    $region56: #{discriminator_forward.1} parent=1 // pred_region
      %105 = dma.done [#allocation3], 16384
    $region57: #{discriminator_forward.1} parent=1 // pred_fallthru
      _
    // Predicated region
    $region58: #{discriminator_forward.1} parent=1 // pred_check
      _
    $region59: #{discriminator_forward.1} parent=1 // pred_check_branch
      %107 = sbr.rel (0) target = $region61
    $region60: #{discriminator_forward.1} parent=1 // pred_region
      %109 = dma.done [#allocation5], 16384
    $region61: #{discriminator_forward.1} parent=1 // pred_fallthru
      _
    // Predicated region
    $region62: #{discriminator_forward.1} parent=1 // pred_check
      _
    $region63: #{discriminator_forward.1} parent=1 // pred_check_branch
      %111 = sbr.rel (0) target = $region65
    $region64: #{discriminator_forward.1} parent=1 // pred_region
      %113 = dma.done [#allocation5], 16384
    $region65: #{discriminator_forward.1} parent=1 // pred_fallthru
      _
    // Predicated region
    $region66: #{discriminator_forward.1} parent=1 // pred_check
      _
    $region67: #{discriminator_forward.1} parent=1 // pred_check_branch
      %115 = sbr.rel (0) target = $region69
    $region68: #{discriminator_forward.1} parent=1 // pred_region
      %117 = dma.done [#allocation8], 16384
    $region69: #{discriminator_forward.1} parent=1 // pred_fallthru
      _
    // Predicated region
    $region70: #{discriminator_forward.1} parent=1 // pred_check
      _
    $region71: #{discriminator_forward.1} parent=1 // pred_check_branch
      %119 = sbr.rel (0) target = $region73
    $region72: #{discriminator_forward.1} parent=1 // pred_region
      %121 = dma.done [#allocation8], 4096
    $region73: #{discriminator_forward.1} parent=1 // pred_fallthru
      _
    %v123 = vld [vmem:[%s0] sm:$0xff]
    %v124 = vld [vmem:[%s0 + $0x8] sm:$0xff]
    %v125 = vld [vmem:[%s0 + $0x10] sm:$0xff]
    %v126 = vld [vmem:[%s0 + $0x18] sm:$0xff]
    %v127 = vld [vmem:[%s0 + $0x20] sm:$0xff]
    %v128 = vld [vmem:[%s0 + $0x28] sm:$0xff]
    %v129 = vld [vmem:[%s0 + $0x30] sm:$0xff]
    %v130 = vld [vmem:[%s0 + $0x38] sm:$0xff]
    %v131 = vld [vmem:[%s0 + $0x40] sm:$0xff]
    %v132 = vld [vmem:[%s0 + $0x48] sm:$0xff]
    %v133 = vld [vmem:[%s0 + $0x50] sm:$0xff]
    %v134 = vld [vmem:[%s0 + $0x58] sm:$0xff]
    %v135 = vld [vmem:[%s0 + $0x60] sm:$0xff]
    %v136 = vld [vmem:[%s0 + $0x68] sm:$0xff]
    %v137 = vld [vmem:[%s0 + $0x70] sm:$0xff]
    %v138 = vld [vmem:[%s0 + $0x78] sm:$0xff]
    %v139 = vpack.c.bf16 %v124, %v123
    %v140 = vpack.c.bf16 %v126, %v125
    %v141 = vpack.c.bf16 %v128, %v127
    %v142 = vpack.c.bf16 %v130, %v129
    %v143 = vpack.c.bf16 %v132, %v131
    %v144 = vpack.c.bf16 %v134, %v133
    %v145 = vpack.c.bf16 %v136, %v135
    %v146 = vpack.c.bf16 %v138, %v137
    %v147 = vld [vmem:[%s1] sm:$0xff]
    %v148 = vld [vmem:[%s1 + $0x8] sm:$0xff]
    %v149 = vld [vmem:[%s1 + $0x10] sm:$0xff]
    %v150 = vld [vmem:[%s1 + $0x18] sm:$0xff]
    %v151 = vld [vmem:[%s1 + $0x20] sm:$0xff]
    %v152 = vld [vmem:[%s1 + $0x28] sm:$0xff]
    %v153 = vld [vmem:[%s1 + $0x30] sm:$0xff]
    %v154 = vld [vmem:[%s1 + $0x38] sm:$0xff]
    %v155 = vld [vmem:[%s2] sm:$0xf]
    %v157 = vperm.slane %v155, 0
    %v158 = vperm.slane %v155, 1
    %v159 = vperm.slane %v155, 2
    %v160 = vperm.slane %v155, 3
    %v173 = vunpack.c.l.b16 %v147
    %v174 = vunpack.c.h.b16 %v147
    %v175 = vunpack.c.l.b16 %v148
    %v176 = vunpack.c.h.b16 %v148
    %v177 = vunpack.c.l.b16 %v149
    %v178 = vunpack.c.h.b16 %v149
    %v179 = vunpack.c.l.b16 %v150
    %v180 = vunpack.c.h.b16 %v150
    %v181 = vunpack.c.l.b16 %v151
    %v182 = vunpack.c.h.b16 %v151
    %v183 = vunpack.c.l.b16 %v152
    %v184 = vunpack.c.h.b16 %v152
    %v185 = vunpack.c.l.b16 %v153
    %v186 = vunpack.c.h.b16 %v153
    %v187 = vunpack.c.l.b16 %v154
    %v188 = vunpack.c.h.b16 %v154
    %v189 = vpack.c.b16 %v177, %v173
    %v190 = vpack.c.b16 %v178, %v174
    %v191 = vpack.c.b16 %v179, %v175
    %v192 = vpack.c.b16 %v180, %v176
    %v193 = vpack.c.b16 %v185, %v181
    %v194 = vpack.c.b16 %v186, %v182
    %v195 = vpack.c.b16 %v187, %v183
    %v196 = vpack.c.b16 %v188, %v184
    %vm205 = vcmask 261120
    %v207 = vsel %vm205, %v139, 0
    %v210 = vsel %vm205, %v140, 0
    %v213 = vsel %vm205, %v141, 0
    %v216 = vsel %vm205, %v142, 0
    %v219 = vsel %vm205, %v143, 0
    %v222 = vsel %vm205, %v144, 0
    %v225 = vsel %vm205, %v145, 0
    %v228 = vsel %vm205, %v146, 0
    %230 = vmatpush.bf16.msra.mxu0 0
    %231 = vmatpush.bf16.msra.mxu0 0
    %232 = vmatpush.bf16.msra.mxu0 0
    %233 = vmatpush.bf16.msra.mxu0 0
    %234 = vmatpush.bf16.msra.mxu0 0
    %235 = vmatpush.bf16.msra.mxu0 0
    %236 = vmatpush.bf16.msra.mxu0 %v193
    %237 = vmatpush.bf16.msra.mxu0 %v189
    %238 = vmatmul.bf16.gmra.mxu0 %v207
    %v239 = vpop.f32.mrf.mxu0
    %v240 = vadd.f32 %v157, %v239
    %v241 = vpop.f32.mrf.mxu0
    %v242 = vadd.f32 %v157, %v241
    %243 = vmatmul.bf16.gmra.mxu0 %v210
    %v244 = vpop.f32.mrf.mxu0
    %v245 = vadd.f32 %v157, %v244
    %v246 = vpop.f32.mrf.mxu0
    %v247 = vadd.f32 %v157, %v246
    %248 = vmatmul.bf16.gmra.mxu0 %v213
    %v249 = vpop.f32.mrf.mxu0
    %v250 = vadd.f32 %v157, %v249
    %v251 = vpop.f32.mrf.mxu0
    %v252 = vadd.f32 %v157, %v251
    %253 = vmatmul.bf16.gmra.mxu0 %v216
    %v254 = vpop.f32.mrf.mxu0
    %v255 = vadd.f32 %v157, %v254
    %v256 = vpop.f32.mrf.mxu0
    %v257 = vadd.f32 %v157, %v256
    %258 = vmatmul.bf16.gmra.mxu0 %v219
    %v259 = vpop.f32.mrf.mxu0
    %v260 = vadd.f32 %v157, %v259
    %v261 = vpop.f32.mrf.mxu0
    %v262 = vadd.f32 %v157, %v261
    %263 = vmatmul.bf16.gmra.mxu0 %v222
    %v264 = vpop.f32.mrf.mxu0
    %v265 = vadd.f32 %v157, %v264
    %v266 = vpop.f32.mrf.mxu0
    %v267 = vadd.f32 %v157, %v266
    %268 = vmatmul.bf16.gmra.mxu0 %v225
    %v269 = vpop.f32.mrf.mxu0
    %v270 = vadd.f32 %v157, %v269
    %v271 = vpop.f32.mrf.mxu0
    %v272 = vadd.f32 %v157, %v271
    %273 = vmatmul.bf16.gmra.mxu0 %v228
    %v274 = vpop.f32.mrf.mxu0
    %v275 = vadd.f32 %v157, %v274
    %v276 = vpop.f32.mrf.mxu0
    %v277 = vadd.f32 %v157, %v276
    %278 = vdwg.mxu0
    %279 = vmatpush.bf16.msra.mxu0 0
    %280 = vmatpush.bf16.msra.mxu0 0
    %281 = vmatpush.bf16.msra.mxu0 0
    %282 = vmatpush.bf16.msra.mxu0 0
    %283 = vmatpush.bf16.msra.mxu0 0
    %284 = vmatpush.bf16.msra.mxu0 0
    %285 = vmatpush.bf16.msra.mxu0 %v194
    %286 = vmatpush.bf16.msra.mxu0 %v190
    %287 = vmatmul.bf16.gmra.mxu0 %v207
    %v288 = vpop.f32.mrf.mxu0
    %v289 = vadd.f32 %v158, %v288
    %v290 = vpop.f32.mrf.mxu0
    %v291 = vadd.f32 %v158, %v290
    %292 = vmatmul.bf16.gmra.mxu0 %v210
    %v293 = vpop.f32.mrf.mxu0
    %v294 = vadd.f32 %v158, %v293
    %v295 = vpop.f32.mrf.mxu0
    %v296 = vadd.f32 %v158, %v295
    %297 = vmatmul.bf16.gmra.mxu0 %v213
    %v298 = vpop.f32.mrf.mxu0
    %v299 = vadd.f32 %v158, %v298
    %v300 = vpop.f32.mrf.mxu0
    %v301 = vadd.f32 %v158, %v300
    %302 = vmatmul.bf16.gmra.mxu0 %v216
    %v303 = vpop.f32.mrf.mxu0
    %v304 = vadd.f32 %v158, %v303
    %v305 = vpop.f32.mrf.mxu0
    %v306 = vadd.f32 %v158, %v305
    %307 = vmatmul.bf16.gmra.mxu0 %v219
    %v308 = vpop.f32.mrf.mxu0
    %v309 = vadd.f32 %v158, %v308
    %v310 = vpop.f32.mrf.mxu0
    %v311 = vadd.f32 %v158, %v310
    %312 = vmatmul.bf16.gmra.mxu0 %v222
    %v313 = vpop.f32.mrf.mxu0
    %v314 = vadd.f32 %v158, %v313
    %v315 = vpop.f32.mrf.mxu0
    %v316 = vadd.f32 %v158, %v315
    %317 = vmatmul.bf16.gmra.mxu0 %v225
    %v318 = vpop.f32.mrf.mxu0
    %v319 = vadd.f32 %v158, %v318
    %v320 = vpop.f32.mrf.mxu0
    %v321 = vadd.f32 %v158, %v320
    %322 = vmatmul.bf16.gmra.mxu0 %v228
    %v323 = vpop.f32.mrf.mxu0
    %v324 = vadd.f32 %v158, %v323
    %v325 = vpop.f32.mrf.mxu0
    %v326 = vadd.f32 %v158, %v325
    %327 = vdwg.mxu0
    %328 = vmatpush.bf16.msra.mxu0 0
    %329 = vmatpush.bf16.msra.mxu0 0
    %330 = vmatpush.bf16.msra.mxu0 0
    %331 = vmatpush.bf16.msra.mxu0 0
    %332 = vmatpush.bf16.msra.mxu0 0
    %333 = vmatpush.bf16.msra.mxu0 0
    %334 = vmatpush.bf16.msra.mxu0 %v195
    %335 = vmatpush.bf16.msra.mxu0 %v191
    %336 = vmatmul.bf16.gmra.mxu0 %v207
    %v337 = vpop.f32.mrf.mxu0
    %v338 = vadd.f32 %v159, %v337
    %v339 = vpop.f32.mrf.mxu0
    %v340 = vadd.f32 %v159, %v339
    %341 = vmatmul.bf16.gmra.mxu0 %v210
    %v342 = vpop.f32.mrf.mxu0
    %v343 = vadd.f32 %v159, %v342
    %v344 = vpop.f32.mrf.mxu0
    %v345 = vadd.f32 %v159, %v344
    %346 = vmatmul.bf16.gmra.mxu0 %v213
    %v347 = vpop.f32.mrf.mxu0
    %v348 = vadd.f32 %v159, %v347
    %v349 = vpop.f32.mrf.mxu0
    %v350 = vadd.f32 %v159, %v349
    %351 = vmatmul.bf16.gmra.mxu0 %v216
    %v352 = vpop.f32.mrf.mxu0
    %v353 = vadd.f32 %v159, %v352
    %v354 = vpop.f32.mrf.mxu0
    %v355 = vadd.f32 %v159, %v354
    %356 = vmatmul.bf16.gmra.mxu0 %v219
    %v357 = vpop.f32.mrf.mxu0
    %v358 = vadd.f32 %v159, %v357
    %v359 = vpop.f32.mrf.mxu0
    %v360 = vadd.f32 %v159, %v359
    %361 = vmatmul.bf16.gmra.mxu0 %v222
    %v362 = vpop.f32.mrf.mxu0
    %v363 = vadd.f32 %v159, %v362
    %v364 = vpop.f32.mrf.mxu0
    %v365 = vadd.f32 %v159, %v364
    %366 = vmatmul.bf16.gmra.mxu0 %v225
    %v367 = vpop.f32.mrf.mxu0
    %v368 = vadd.f32 %v159, %v367
    %v369 = vpop.f32.mrf.mxu0
    %v370 = vadd.f32 %v159, %v369
    %371 = vmatmul.bf16.gmra.mxu0 %v228
    %v372 = vpop.f32.mrf.mxu0
    %v373 = vadd.f32 %v159, %v372
    %v374 = vpop.f32.mrf.mxu0
    %v375 = vadd.f32 %v159, %v374
    %376 = vdwg.mxu0
    %377 = vmatpush.bf16.msra.mxu0 0
    %378 = vmatpush.bf16.msra.mxu0 0
    %379 = vmatpush.bf16.msra.mxu0 0
    %380 = vmatpush.bf16.msra.mxu0 0
    %381 = vmatpush.bf16.msra.mxu0 0
    %382 = vmatpush.bf16.msra.mxu0 0
    %383 = vmatpush.bf16.msra.mxu0 %v196
    %384 = vmatpush.bf16.msra.mxu0 %v192
    %385 = vmatmul.bf16.gmra.mxu0 %v207
    %v386 = vpop.f32.mrf.mxu0
    %v387 = vadd.f32 %v160, %v386
    %v388 = vpop.f32.mrf.mxu0
    %v389 = vadd.f32 %v160, %v388
    %390 = vmatmul.bf16.gmra.mxu0 %v210
    %v391 = vpop.f32.mrf.mxu0
    %v392 = vadd.f32 %v160, %v391
    %v393 = vpop.f32.mrf.mxu0
    %v394 = vadd.f32 %v160, %v393
    %395 = vmatmul.bf16.gmra.mxu0 %v213
    %v396 = vpop.f32.mrf.mxu0
    %v397 = vadd.f32 %v160, %v396
    %v398 = vpop.f32.mrf.mxu0
    %v399 = vadd.f32 %v160, %v398
    %400 = vmatmul.bf16.gmra.mxu0 %v216
    %v401 = vpop.f32.mrf.mxu0
    %v402 = vadd.f32 %v160, %v401
    %v403 = vpop.f32.mrf.mxu0
    %v404 = vadd.f32 %v160, %v403
    %405 = vmatmul.bf16.gmra.mxu0 %v219
    %v406 = vpop.f32.mrf.mxu0
    %v407 = vadd.f32 %v160, %v406
    %v408 = vpop.f32.mrf.mxu0
    %v409 = vadd.f32 %v160, %v408
    %410 = vmatmul.bf16.gmra.mxu0 %v222
    %v411 = vpop.f32.mrf.mxu0
    %v412 = vadd.f32 %v160, %v411
    %v413 = vpop.f32.mrf.mxu0
    %v414 = vadd.f32 %v160, %v413
    %415 = vmatmul.bf16.gmra.mxu0 %v225
    %v416 = vpop.f32.mrf.mxu0
    %v417 = vadd.f32 %v160, %v416
    %v418 = vpop.f32.mrf.mxu0
    %v419 = vadd.f32 %v160, %v418
    %420 = vmatmul.bf16.gmra.mxu0 %v228
    %v421 = vpop.f32.mrf.mxu0
    %v422 = vadd.f32 %v160, %v421
    %v423 = vpop.f32.mrf.mxu0
    %v424 = vadd.f32 %v160, %v423
    %425 = vdwg.mxu0
    %v426 = vmax.f32 %v240, 0.0
    %v427 = vmax.f32 %v289, 0.0
    %v428 = vmax.f32 %v338, 0.0
    %v429 = vmax.f32 %v387, 0.0
    %v430 = vmax.f32 %v242, 0.0
    %v431 = vmax.f32 %v291, 0.0
    %v432 = vmax.f32 %v340, 0.0
    %v433 = vmax.f32 %v389, 0.0
    %v434 = vmax.f32 %v245, 0.0
    %v435 = vmax.f32 %v294, 0.0
    %v436 = vmax.f32 %v343, 0.0
    %v437 = vmax.f32 %v392, 0.0
    %v438 = vmax.f32 %v247, 0.0
    %v439 = vmax.f32 %v296, 0.0
    %v440 = vmax.f32 %v345, 0.0
    %v441 = vmax.f32 %v394, 0.0
    %v442 = vmax.f32 %v250, 0.0
    %v443 = vmax.f32 %v299, 0.0
    %v444 = vmax.f32 %v348, 0.0
    %v445 = vmax.f32 %v397, 0.0
    %v446 = vmax.f32 %v252, 0.0
    %v447 = vmax.f32 %v301, 0.0
    %v448 = vmax.f32 %v350, 0.0
    %v449 = vmax.f32 %v399, 0.0
    %v450 = vmax.f32 %v255, 0.0
    %v451 = vmax.f32 %v304, 0.0
    %v452 = vmax.f32 %v353, 0.0
    %v453 = vmax.f32 %v402, 0.0
    %v454 = vmax.f32 %v257, 0.0
    %v455 = vmax.f32 %v306, 0.0
    %v456 = vmax.f32 %v355, 0.0
    %v457 = vmax.f32 %v404, 0.0
    %v458 = vmax.f32 %v260, 0.0
    %v459 = vmax.f32 %v309, 0.0
    %v460 = vmax.f32 %v358, 0.0
    %v461 = vmax.f32 %v407, 0.0
    %v462 = vmax.f32 %v262, 0.0
    %v463 = vmax.f32 %v311, 0.0
    %v464 = vmax.f32 %v360, 0.0
    %v465 = vmax.f32 %v409, 0.0
    %v466 = vmax.f32 %v265, 0.0
    %v467 = vmax.f32 %v314, 0.0
    %v468 = vmax.f32 %v363, 0.0
    %v469 = vmax.f32 %v412, 0.0
    %v470 = vmax.f32 %v267, 0.0
    %v471 = vmax.f32 %v316, 0.0
    %v472 = vmax.f32 %v365, 0.0
    %v473 = vmax.f32 %v414, 0.0
    %v474 = vmax.f32 %v270, 0.0
    %v475 = vmax.f32 %v319, 0.0
    %v476 = vmax.f32 %v368, 0.0
    %v477 = vmax.f32 %v417, 0.0
    %v478 = vmax.f32 %v272, 0.0
    %v479 = vmax.f32 %v321, 0.0
    %v480 = vmax.f32 %v370, 0.0
    %v481 = vmax.f32 %v419, 0.0
    %v482 = vmax.f32 %v275, 0.0
    %v483 = vmax.f32 %v324, 0.0
    %v484 = vmax.f32 %v373, 0.0
    %v485 = vmax.f32 %v422, 0.0
    %v486 = vmax.f32 %v277, 0.0
    %v487 = vmax.f32 %v326, 0.0
    %v488 = vmax.f32 %v375, 0.0
    %v489 = vmax.f32 %v424, 0.0
    %v490 = vpack.c.bf16 %v430, %v426
    %v491 = vpack.c.bf16 %v431, %v427
    %v492 = vpack.c.bf16 %v432, %v428
    %v493 = vpack.c.bf16 %v433, %v429
    %v494 = vpack.c.bf16 %v438, %v434
    %v495 = vpack.c.bf16 %v439, %v435
    %v496 = vpack.c.bf16 %v440, %v436
    %v497 = vpack.c.bf16 %v441, %v437
    %v498 = vpack.c.bf16 %v446, %v442
    %v499 = vpack.c.bf16 %v447, %v443
    %v500 = vpack.c.bf16 %v448, %v444
    %v501 = vpack.c.bf16 %v449, %v445
    %v502 = vpack.c.bf16 %v454, %v450
    %v503 = vpack.c.bf16 %v455, %v451
    %v504 = vpack.c.bf16 %v456, %v452
    %v505 = vpack.c.bf16 %v457, %v453
    %v506 = vpack.c.bf16 %v462, %v458
    %v507 = vpack.c.bf16 %v463, %v459
    %v508 = vpack.c.bf16 %v464, %v460
    %v509 = vpack.c.bf16 %v465, %v461
    %v510 = vpack.c.bf16 %v470, %v466
    %v511 = vpack.c.bf16 %v471, %v467
    %v512 = vpack.c.bf16 %v472, %v468
    %v513 = vpack.c.bf16 %v473, %v469
    %v514 = vpack.c.bf16 %v478, %v474
    %v515 = vpack.c.bf16 %v479, %v475
    %v516 = vpack.c.bf16 %v480, %v476
    %v517 = vpack.c.bf16 %v481, %v477
    %v518 = vpack.c.bf16 %v486, %v482
    %v519 = vpack.c.bf16 %v487, %v483
    %v520 = vpack.c.bf16 %v488, %v484
    %v521 = vpack.c.bf16 %v489, %v485
    %v522 = vld [vmem:[#allocation2] sm:$0xff]
    %v523 = vld [vmem:[#allocation2 + $0x8] sm:$0xff]
    %v524 = vld [vmem:[#allocation2 + $0x10] sm:$0xff]
    %v525 = vld [vmem:[#allocation2 + $0x18] sm:$0xff]
    %v526 = vld [vmem:[#allocation2 + $0x20] sm:$0xff]
    %v527 = vld [vmem:[#allocation2 + $0x28] sm:$0xff]
    %v528 = vld [vmem:[#allocation2 + $0x30] sm:$0xff]
    %v529 = vld [vmem:[#allocation2 + $0x38] sm:$0xff]
    %v530 = vld [vmem:[#allocation2 + $0x40] sm:$0xff]
    %v531 = vld [vmem:[#allocation2 + $0x48] sm:$0xff]
    %v532 = vld [vmem:[#allocation2 + $0x50] sm:$0xff]
    %v533 = vld [vmem:[#allocation2 + $0x58] sm:$0xff]
    %v534 = vld [vmem:[#allocation2 + $0x60] sm:$0xff]
    %v535 = vld [vmem:[#allocation2 + $0x68] sm:$0xff]
    %v536 = vld [vmem:[#allocation2 + $0x70] sm:$0xff]
    %v537 = vld [vmem:[#allocation2 + $0x78] sm:$0xff]
    %v538 = vld [vmem:[#allocation2 + $0x80] sm:$0xff]
    %v539 = vld [vmem:[#allocation2 + $0x88] sm:$0xff]
    %v540 = vld [vmem:[#allocation2 + $0x90] sm:$0xff]
    %v541 = vld [vmem:[#allocation2 + $0x98] sm:$0xff]
    %v542 = vld [vmem:[#allocation2 + $0xa0] sm:$0xff]
    %v543 = vld [vmem:[#allocation2 + $0xa8] sm:$0xff]
    %v544 = vld [vmem:[#allocation2 + $0xb0] sm:$0xff]
    %v545 = vld [vmem:[#allocation2 + $0xb8] sm:$0xff]
    %v546 = vld [vmem:[#allocation2 + $0xc0] sm:$0xff]
    %v547 = vld [vmem:[#allocation2 + $0xc8] sm:$0xff]
    %v548 = vld [vmem:[#allocation2 + $0xd0] sm:$0xff]
    %v549 = vld [vmem:[#allocation2 + $0xd8] sm:$0xff]
    %v550 = vld [vmem:[#allocation2 + $0xe0] sm:$0xff]
    %v551 = vld [vmem:[#allocation2 + $0xe8] sm:$0xff]
    %v552 = vld [vmem:[#allocation2 + $0xf0] sm:$0xff]
    %v553 = vld [vmem:[#allocation2 + $0xf8] sm:$0xff]
    %v554 = vld [vmem:[#allocation2 + $0x100] sm:$0xff]
    %v555 = vld [vmem:[#allocation2 + $0x108] sm:$0xff]
    %v556 = vld [vmem:[#allocation2 + $0x110] sm:$0xff]
    %v557 = vld [vmem:[#allocation2 + $0x118] sm:$0xff]
    %v558 = vld [vmem:[#allocation2 + $0x120] sm:$0xff]
    %v559 = vld [vmem:[#allocation2 + $0x128] sm:$0xff]
    %v560 = vld [vmem:[#allocation2 + $0x130] sm:$0xff]
    %v561 = vld [vmem:[#allocation2 + $0x138] sm:$0xff]
    %v562 = vld [vmem:[#allocation2 + $0x140] sm:$0xff]
    %v563 = vld [vmem:[#allocation2 + $0x148] sm:$0xff]
    %v564 = vld [vmem:[#allocation2 + $0x150] sm:$0xff]
    %v565 = vld [vmem:[#allocation2 + $0x158] sm:$0xff]
    %v566 = vld [vmem:[#allocation2 + $0x160] sm:$0xff]
    %v567 = vld [vmem:[#allocation2 + $0x168] sm:$0xff]
    %v568 = vld [vmem:[#allocation2 + $0x170] sm:$0xff]
    %v569 = vld [vmem:[#allocation2 + $0x178] sm:$0xff]
    %v570 = vld [vmem:[#allocation2 + $0x180] sm:$0xff]
    %v571 = vld [vmem:[#allocation2 + $0x188] sm:$0xff]
    %v572 = vld [vmem:[#allocation2 + $0x190] sm:$0xff]
    %v573 = vld [vmem:[#allocation2 + $0x198] sm:$0xff]
    %v574 = vld [vmem:[#allocation2 + $0x1a0] sm:$0xff]
    %v575 = vld [vmem:[#allocation2 + $0x1a8] sm:$0xff]
    %v576 = vld [vmem:[#allocation2 + $0x1b0] sm:$0xff]
    %v577 = vld [vmem:[#allocation2 + $0x1b8] sm:$0xff]
    %v578 = vld [vmem:[#allocation2 + $0x1c0] sm:$0xff]
    %v579 = vld [vmem:[#allocation2 + $0x1c8] sm:$0xff]
    %v580 = vld [vmem:[#allocation2 + $0x1d0] sm:$0xff]
    %v581 = vld [vmem:[#allocation2 + $0x1d8] sm:$0xff]
    %v582 = vld [vmem:[#allocation2 + $0x1e0] sm:$0xff]
    %v583 = vld [vmem:[#allocation2 + $0x1e8] sm:$0xff]
    %v584 = vld [vmem:[#allocation2 + $0x1f0] sm:$0xff]
    %v585 = vld [vmem:[#allocation2 + $0x1f8] sm:$0xff]
    %v586 = vld [vmem:[#allocation2 + $0x200] sm:$0xff]
    %v587 = vld [vmem:[#allocation2 + $0x208] sm:$0xff]
    %v588 = vld [vmem:[#allocation2 + $0x210] sm:$0xff]
    %v589 = vld [vmem:[#allocation2 + $0x218] sm:$0xff]
    %v590 = vld [vmem:[#allocation2 + $0x220] sm:$0xff]
    %v591 = vld [vmem:[#allocation2 + $0x228] sm:$0xff]
    %v592 = vld [vmem:[#allocation2 + $0x230] sm:$0xff]
    %v593 = vld [vmem:[#allocation2 + $0x238] sm:$0xff]
    %v594 = vld [vmem:[#allocation2 + $0x240] sm:$0xff]
    %v595 = vld [vmem:[#allocation2 + $0x248] sm:$0xff]
    %v596 = vld [vmem:[#allocation2 + $0x250] sm:$0xff]
    %v597 = vld [vmem:[#allocation2 + $0x258] sm:$0xff]
    %v598 = vld [vmem:[#allocation2 + $0x260] sm:$0xff]
    %v599 = vld [vmem:[#allocation2 + $0x268] sm:$0xff]
    %v600 = vld [vmem:[#allocation2 + $0x270] sm:$0xff]
    %v601 = vld [vmem:[#allocation2 + $0x278] sm:$0xff]
    %v602 = vld [vmem:[#allocation2 + $0x280] sm:$0xff]
    %v603 = vld [vmem:[#allocation2 + $0x288] sm:$0xff]
    %v604 = vld [vmem:[#allocation2 + $0x290] sm:$0xff]
    %v605 = vld [vmem:[#allocation2 + $0x298] sm:$0xff]
    %v606 = vld [vmem:[#allocation2 + $0x2a0] sm:$0xff]
    %v607 = vld [vmem:[#allocation2 + $0x2a8] sm:$0xff]
    %v608 = vld [vmem:[#allocation2 + $0x2b0] sm:$0xff]
    %v609 = vld [vmem:[#allocation2 + $0x2b8] sm:$0xff]
    %v610 = vld [vmem:[#allocation2 + $0x2c0] sm:$0xff]
    %v611 = vld [vmem:[#allocation2 + $0x2c8] sm:$0xff]
    %v612 = vld [vmem:[#allocation2 + $0x2d0] sm:$0xff]
    %v613 = vld [vmem:[#allocation2 + $0x2d8] sm:$0xff]
    %v614 = vld [vmem:[#allocation2 + $0x2e0] sm:$0xff]
    %v615 = vld [vmem:[#allocation2 + $0x2e8] sm:$0xff]
    %v616 = vld [vmem:[#allocation2 + $0x2f0] sm:$0xff]
    %v617 = vld [vmem:[#allocation2 + $0x2f8] sm:$0xff]
    %v618 = vld [vmem:[#allocation2 + $0x300] sm:$0xff]
    %v619 = vld [vmem:[#allocation2 + $0x308] sm:$0xff]
    %v620 = vld [vmem:[#allocation2 + $0x310] sm:$0xff]
    %v621 = vld [vmem:[#allocation2 + $0x318] sm:$0xff]
    %v622 = vld [vmem:[#allocation2 + $0x320] sm:$0xff]
    %v623 = vld [vmem:[#allocation2 + $0x328] sm:$0xff]
    %v624 = vld [vmem:[#allocation2 + $0x330] sm:$0xff]
    %v625 = vld [vmem:[#allocation2 + $0x338] sm:$0xff]
    %v626 = vld [vmem:[#allocation2 + $0x340] sm:$0xff]
    %v627 = vld [vmem:[#allocation2 + $0x348] sm:$0xff]
    %v628 = vld [vmem:[#allocation2 + $0x350] sm:$0xff]
    %v629 = vld [vmem:[#allocation2 + $0x358] sm:$0xff]
    %v630 = vld [vmem:[#allocation2 + $0x360] sm:$0xff]
    %v631 = vld [vmem:[#allocation2 + $0x368] sm:$0xff]
    %v632 = vld [vmem:[#allocation2 + $0x370] sm:$0xff]
    %v633 = vld [vmem:[#allocation2 + $0x378] sm:$0xff]
    %v634 = vld [vmem:[#allocation2 + $0x380] sm:$0xff]
    %v635 = vld [vmem:[#allocation2 + $0x388] sm:$0xff]
    %v636 = vld [vmem:[#allocation2 + $0x390] sm:$0xff]
    %v637 = vld [vmem:[#allocation2 + $0x398] sm:$0xff]
    %v638 = vld [vmem:[#allocation2 + $0x3a0] sm:$0xff]
    %v639 = vld [vmem:[#allocation2 + $0x3a8] sm:$0xff]
    %v640 = vld [vmem:[#allocation2 + $0x3b0] sm:$0xff]
    %v641 = vld [vmem:[#allocation2 + $0x3b8] sm:$0xff]
    %v642 = vld [vmem:[#allocation2 + $0x3c0] sm:$0xff]
    %v643 = vld [vmem:[#allocation2 + $0x3c8] sm:$0xff]
    %v644 = vld [vmem:[#allocation2 + $0x3d0] sm:$0xff]
    %v645 = vld [vmem:[#allocation2 + $0x3d8] sm:$0xff]
    %v646 = vld [vmem:[#allocation2 + $0x3e0] sm:$0xff]
    %v647 = vld [vmem:[#allocation2 + $0x3e8] sm:$0xff]
    %v648 = vld [vmem:[#allocation2 + $0x3f0] sm:$0xff]
    %v649 = vld [vmem:[#allocation2 + $0x3f8] sm:$0xff]
    %v650 = vld [vmem:[%s4] sm:$0xf]
    %v652 = vperm.slane %v650, 0
    %v653 = vperm.slane %v650, 1
    %v654 = vperm.slane %v650, 2
    %v655 = vperm.slane %v650, 3
    %v788 = vunpack.c.l.b16 %v522
    %v789 = vunpack.c.h.b16 %v522
    %v790 = vunpack.c.l.b16 %v523
    %v791 = vunpack.c.h.b16 %v523
    %v792 = vunpack.c.l.b16 %v524
    %v793 = vunpack.c.h.b16 %v524
    %v794 = vunpack.c.l.b16 %v525
    %v795 = vunpack.c.h.b16 %v525
    %v796 = vunpack.c.l.b16 %v526
    %v797 = vunpack.c.h.b16 %v526
    %v798 = vunpack.c.l.b16 %v527
    %v799 = vunpack.c.h.b16 %v527
    %v800 = vunpack.c.l.b16 %v528
    %v801 = vunpack.c.h.b16 %v528
    %v802 = vunpack.c.l.b16 %v529
    %v803 = vunpack.c.h.b16 %v529
    %v804 = vunpack.c.l.b16 %v530
    %v805 = vunpack.c.h.b16 %v530
    %v806 = vunpack.c.l.b16 %v531
    %v807 = vunpack.c.h.b16 %v531
    %v808 = vunpack.c.l.b16 %v532
    %v809 = vunpack.c.h.b16 %v532
    %v810 = vunpack.c.l.b16 %v533
    %v811 = vunpack.c.h.b16 %v533
    %v812 = vunpack.c.l.b16 %v534
    %v813 = vunpack.c.h.b16 %v534
    %v814 = vunpack.c.l.b16 %v535
    %v815 = vunpack.c.h.b16 %v535
    %v816 = vunpack.c.l.b16 %v536
    %v817 = vunpack.c.h.b16 %v536
    %v818 = vunpack.c.l.b16 %v537
    %v819 = vunpack.c.h.b16 %v537
    %v820 = vunpack.c.l.b16 %v538
    %v821 = vunpack.c.h.b16 %v538
    %v822 = vunpack.c.l.b16 %v539
    %v823 = vunpack.c.h.b16 %v539
    %v824 = vunpack.c.l.b16 %v540
    %v825 = vunpack.c.h.b16 %v540
    %v826 = vunpack.c.l.b16 %v541
    %v827 = vunpack.c.h.b16 %v541
    %v828 = vunpack.c.l.b16 %v542
    %v829 = vunpack.c.h.b16 %v542
    %v830 = vunpack.c.l.b16 %v543
    %v831 = vunpack.c.h.b16 %v543
    %v832 = vunpack.c.l.b16 %v544
    %v833 = vunpack.c.h.b16 %v544
    %v834 = vunpack.c.l.b16 %v545
    %v835 = vunpack.c.h.b16 %v545
    %v836 = vunpack.c.l.b16 %v546
    %v837 = vunpack.c.h.b16 %v546
    %v838 = vunpack.c.l.b16 %v547
    %v839 = vunpack.c.h.b16 %v547
    %v840 = vunpack.c.l.b16 %v548
    %v841 = vunpack.c.h.b16 %v548
    %v842 = vunpack.c.l.b16 %v549
    %v843 = vunpack.c.h.b16 %v549
    %v844 = vunpack.c.l.b16 %v550
    %v845 = vunpack.c.h.b16 %v550
    %v846 = vunpack.c.l.b16 %v551
    %v847 = vunpack.c.h.b16 %v551
    %v848 = vunpack.c.l.b16 %v552
    %v849 = vunpack.c.h.b16 %v552
    %v850 = vunpack.c.l.b16 %v553
    %v851 = vunpack.c.h.b16 %v553
    %v852 = vunpack.c.l.b16 %v554
    %v853 = vunpack.c.h.b16 %v554
    %v854 = vunpack.c.l.b16 %v555
    %v855 = vunpack.c.h.b16 %v555
    %v856 = vunpack.c.l.b16 %v556
    %v857 = vunpack.c.h.b16 %v556
    %v858 = vunpack.c.l.b16 %v557
    %v859 = vunpack.c.h.b16 %v557
    %v860 = vunpack.c.l.b16 %v558
    %v861 = vunpack.c.h.b16 %v558
    %v862 = vunpack.c.l.b16 %v559
    %v863 = vunpack.c.h.b16 %v559
    %v864 = vunpack.c.l.b16 %v560
    %v865 = vunpack.c.h.b16 %v560
    %v866 = vunpack.c.l.b16 %v561
    %v867 = vunpack.c.h.b16 %v561
    %v868 = vunpack.c.l.b16 %v562
    %v869 = vunpack.c.h.b16 %v562
    %v870 = vunpack.c.l.b16 %v563
    %v871 = vunpack.c.h.b16 %v563
    %v872 = vunpack.c.l.b16 %v564
    %v873 = vunpack.c.h.b16 %v564
    %v874 = vunpack.c.l.b16 %v565
    %v875 = vunpack.c.h.b16 %v565
    %v876 = vunpack.c.l.b16 %v566
    %v877 = vunpack.c.h.b16 %v566
    %v878 = vunpack.c.l.b16 %v567
    %v879 = vunpack.c.h.b16 %v567
    %v880 = vunpack.c.l.b16 %v568
    %v881 = vunpack.c.h.b16 %v568
    %v882 = vunpack.c.l.b16 %v569
    %v883 = vunpack.c.h.b16 %v569
    %v884 = vunpack.c.l.b16 %v570
    %v885 = vunpack.c.h.b16 %v570
    %v886 = vunpack.c.l.b16 %v571
    %v887 = vunpack.c.h.b16 %v571
    %v888 = vunpack.c.l.b16 %v572
    %v889 = vunpack.c.h.b16 %v572
    %v890 = vunpack.c.l.b16 %v573
    %v891 = vunpack.c.h.b16 %v573
    %v892 = vunpack.c.l.b16 %v574
    %v893 = vunpack.c.h.b16 %v574
    %v894 = vunpack.c.l.b16 %v575
    %v895 = vunpack.c.h.b16 %v575
    %v896 = vunpack.c.l.b16 %v576
    %v897 = vunpack.c.h.b16 %v576
    %v898 = vunpack.c.l.b16 %v577
    %v899 = vunpack.c.h.b16 %v577
    %v900 = vunpack.c.l.b16 %v578
    %v901 = vunpack.c.h.b16 %v578
    %v902 = vunpack.c.l.b16 %v579
    %v903 = vunpack.c.h.b16 %v579
    %v904 = vunpack.c.l.b16 %v580
    %v905 = vunpack.c.h.b16 %v580
    %v906 = vunpack.c.l.b16 %v581
    %v907 = vunpack.c.h.b16 %v581
    %v908 = vunpack.c.l.b16 %v582
    %v909 = vunpack.c.h.b16 %v582
    %v910 = vunpack.c.l.b16 %v583
    %v911 = vunpack.c.h.b16 %v583
    %v912 = vunpack.c.l.b16 %v584
    %v913 = vunpack.c.h.b16 %v584
    %v914 = vunpack.c.l.b16 %v585
    %v915 = vunpack.c.h.b16 %v585
    %v916 = vunpack.c.l.b16 %v586
    %v917 = vunpack.c.h.b16 %v586
    %v918 = vunpack.c.l.b16 %v587
    %v919 = vunpack.c.h.b16 %v587
    %v920 = vunpack.c.l.b16 %v588
    %v921 = vunpack.c.h.b16 %v588
    %v922 = vunpack.c.l.b16 %v589
    %v923 = vunpack.c.h.b16 %v589
    %v924 = vunpack.c.l.b16 %v590
    %v925 = vunpack.c.h.b16 %v590
    %v926 = vunpack.c.l.b16 %v591
    %v927 = vunpack.c.h.b16 %v591
    %v928 = vunpack.c.l.b16 %v592
    %v929 = vunpack.c.h.b16 %v592
    %v930 = vunpack.c.l.b16 %v593
    %v931 = vunpack.c.h.b16 %v593
    %v932 = vunpack.c.l.b16 %v594
    %v933 = vunpack.c.h.b16 %v594
    %v934 = vunpack.c.l.b16 %v595
    %v935 = vunpack.c.h.b16 %v595
    %v936 = vunpack.c.l.b16 %v596
    %v937 = vunpack.c.h.b16 %v596
    %v938 = vunpack.c.l.b16 %v597
    %v939 = vunpack.c.h.b16 %v597
    %v940 = vunpack.c.l.b16 %v598
    %v941 = vunpack.c.h.b16 %v598
    %v942 = vunpack.c.l.b16 %v599
    %v943 = vunpack.c.h.b16 %v599
    %v944 = vunpack.c.l.b16 %v600
    %v945 = vunpack.c.h.b16 %v600
    %v946 = vunpack.c.l.b16 %v601
    %v947 = vunpack.c.h.b16 %v601
    %v948 = vunpack.c.l.b16 %v602
    %v949 = vunpack.c.h.b16 %v602
    %v950 = vunpack.c.l.b16 %v603
    %v951 = vunpack.c.h.b16 %v603
    %v952 = vunpack.c.l.b16 %v604
    %v953 = vunpack.c.h.b16 %v604
    %v954 = vunpack.c.l.b16 %v605
    %v955 = vunpack.c.h.b16 %v605
    %v956 = vunpack.c.l.b16 %v606
    %v957 = vunpack.c.h.b16 %v606
    %v958 = vunpack.c.l.b16 %v607
    %v959 = vunpack.c.h.b16 %v607
    %v960 = vunpack.c.l.b16 %v608
    %v961 = vunpack.c.h.b16 %v608
    %v962 = vunpack.c.l.b16 %v609
    %v963 = vunpack.c.h.b16 %v609
    %v964 = vunpack.c.l.b16 %v610
    %v965 = vunpack.c.h.b16 %v610
    %v966 = vunpack.c.l.b16 %v611
    %v967 = vunpack.c.h.b16 %v611
    %v968 = vunpack.c.l.b16 %v612
    %v969 = vunpack.c.h.b16 %v612
    %v970 = vunpack.c.l.b16 %v613
    %v971 = vunpack.c.h.b16 %v613
    %v972 = vunpack.c.l.b16 %v614
    %v973 = vunpack.c.h.b16 %v614
    %v974 = vunpack.c.l.b16 %v615
    %v975 = vunpack.c.h.b16 %v615
    %v976 = vunpack.c.l.b16 %v616
    %v977 = vunpack.c.h.b16 %v616
    %v978 = vunpack.c.l.b16 %v617
    %v979 = vunpack.c.h.b16 %v617
    %v980 = vunpack.c.l.b16 %v618
    %v981 = vunpack.c.h.b16 %v618
    %v982 = vunpack.c.l.b16 %v619
    %v983 = vunpack.c.h.b16 %v619
    %v984 = vunpack.c.l.b16 %v620
    %v985 = vunpack.c.h.b16 %v620
    %v986 = vunpack.c.l.b16 %v621
    %v987 = vunpack.c.h.b16 %v621
    %v988 = vunpack.c.l.b16 %v622
    %v989 = vunpack.c.h.b16 %v622
    %v990 = vunpack.c.l.b16 %v623
    %v991 = vunpack.c.h.b16 %v623
    %v992 = vunpack.c.l.b16 %v624
    %v993 = vunpack.c.h.b16 %v624
    %v994 = vunpack.c.l.b16 %v625
    %v995 = vunpack.c.h.b16 %v625
    %v996 = vunpack.c.l.b16 %v626
    %v997 = vunpack.c.h.b16 %v626
    %v998 = vunpack.c.l.b16 %v627
    %v999 = vunpack.c.h.b16 %v627
    %v1000 = vunpack.c.l.b16 %v628
    %v1001 = vunpack.c.h.b16 %v628
    %v1002 = vunpack.c.l.b16 %v629
    %v1003 = vunpack.c.h.b16 %v629
    %v1004 = vunpack.c.l.b16 %v630
    %v1005 = vunpack.c.h.b16 %v630
    %v1006 = vunpack.c.l.b16 %v631
    %v1007 = vunpack.c.h.b16 %v631
    %v1008 = vunpack.c.l.b16 %v632
    %v1009 = vunpack.c.h.b16 %v632
    %v1010 = vunpack.c.l.b16 %v633
    %v1011 = vunpack.c.h.b16 %v633
    %v1012 = vunpack.c.l.b16 %v634
    %v1013 = vunpack.c.h.b16 %v634
    %v1014 = vunpack.c.l.b16 %v635
    %v1015 = vunpack.c.h.b16 %v635
    %v1016 = vunpack.c.l.b16 %v636
    %v1017 = vunpack.c.h.b16 %v636
    %v1018 = vunpack.c.l.b16 %v637
    %v1019 = vunpack.c.h.b16 %v637
    %v1020 = vunpack.c.l.b16 %v638
    %v1021 = vunpack.c.h.b16 %v638
    %v1022 = vunpack.c.l.b16 %v639
    %v1023 = vunpack.c.h.b16 %v639
    %v1024 = vunpack.c.l.b16 %v640
    %v1025 = vunpack.c.h.b16 %v640
    %v1026 = vunpack.c.l.b16 %v641
    %v1027 = vunpack.c.h.b16 %v641
    %v1028 = vunpack.c.l.b16 %v642
    %v1029 = vunpack.c.h.b16 %v642
    %v1030 = vunpack.c.l.b16 %v643
    %v1031 = vunpack.c.h.b16 %v643
    %v1032 = vunpack.c.l.b16 %v644
    %v1033 = vunpack.c.h.b16 %v644
    %v1034 = vunpack.c.l.b16 %v645
    %v1035 = vunpack.c.h.b16 %v645
    %v1036 = vunpack.c.l.b16 %v646
    %v1037 = vunpack.c.h.b16 %v646
    %v1038 = vunpack.c.l.b16 %v647
    %v1039 = vunpack.c.h.b16 %v647
    %v1040 = vunpack.c.l.b16 %v648
    %v1041 = vunpack.c.h.b16 %v648
    %v1042 = vunpack.c.l.b16 %v649
    %v1043 = vunpack.c.h.b16 %v649
    %v1044 = vpack.c.b16 %v792, %v788
    %v1045 = vpack.c.b16 %v793, %v789
    %v1046 = vpack.c.b16 %v794, %v790
    %v1047 = vpack.c.b16 %v795, %v791
    %v1048 = vpack.c.b16 %v800, %v796
    %v1049 = vpack.c.b16 %v801, %v797
    %v1050 = vpack.c.b16 %v802, %v798
    %v1051 = vpack.c.b16 %v803, %v799
    %v1052 = vpack.c.b16 %v808, %v804
    %v1053 = vpack.c.b16 %v809, %v805
    %v1054 = vpack.c.b16 %v810, %v806
    %v1055 = vpack.c.b16 %v811, %v807
    %v1056 = vpack.c.b16 %v816, %v812
    %v1057 = vpack.c.b16 %v817, %v813
    %v1058 = vpack.c.b16 %v818, %v814
    %v1059 = vpack.c.b16 %v819, %v815
    %v1060 = vpack.c.b16 %v824, %v820
    %v1061 = vpack.c.b16 %v825, %v821
    %v1062 = vpack.c.b16 %v826, %v822
    %v1063 = vpack.c.b16 %v827, %v823
    %v1064 = vpack.c.b16 %v832, %v828
    %v1065 = vpack.c.b16 %v833, %v829
    %v1066 = vpack.c.b16 %v834, %v830
    %v1067 = vpack.c.b16 %v835, %v831
    %v1068 = vpack.c.b16 %v840, %v836
    %v1069 = vpack.c.b16 %v841, %v837
    %v1070 = vpack.c.b16 %v842, %v838
    %v1071 = vpack.c.b16 %v843, %v839
    %v1072 = vpack.c.b16 %v848, %v844
    %v1073 = vpack.c.b16 %v849, %v845
    %v1074 = vpack.c.b16 %v850, %v846
    %v1075 = vpack.c.b16 %v851, %v847
    %v1076 = vpack.c.b16 %v856, %v852
    %v1077 = vpack.c.b16 %v857, %v853
    %v1078 = vpack.c.b16 %v858, %v854
    %v1079 = vpack.c.b16 %v859, %v855
    %v1080 = vpack.c.b16 %v864, %v860
    %v1081 = vpack.c.b16 %v865, %v861
    %v1082 = vpack.c.b16 %v866, %v862
    %v1083 = vpack.c.b16 %v867, %v863
    %v1084 = vpack.c.b16 %v872, %v868
    %v1085 = vpack.c.b16 %v873, %v869
    %v1086 = vpack.c.b16 %v874, %v870
    %v1087 = vpack.c.b16 %v875, %v871
    %v1088 = vpack.c.b16 %v880, %v876
    %v1089 = vpack.c.b16 %v881, %v877
    %v1090 = vpack.c.b16 %v882, %v878
    %v1091 = vpack.c.b16 %v883, %v879
    %v1092 = vpack.c.b16 %v888, %v884
    %v1093 = vpack.c.b16 %v889, %v885
    %v1094 = vpack.c.b16 %v890, %v886
    %v1095 = vpack.c.b16 %v891, %v887
    %v1096 = vpack.c.b16 %v896, %v892
    %v1097 = vpack.c.b16 %v897, %v893
    %v1098 = vpack.c.b16 %v898, %v894
    %v1099 = vpack.c.b16 %v899, %v895
    %v1100 = vpack.c.b16 %v904, %v900
    %v1101 = vpack.c.b16 %v905, %v901
    %v1102 = vpack.c.b16 %v906, %v902
    %v1103 = vpack.c.b16 %v907, %v903
    %v1104 = vpack.c.b16 %v912, %v908
    %v1105 = vpack.c.b16 %v913, %v909
    %v1106 = vpack.c.b16 %v914, %v910
    %v1107 = vpack.c.b16 %v915, %v911
    %v1108 = vpack.c.b16 %v920, %v916
    %v1109 = vpack.c.b16 %v921, %v917
    %v1110 = vpack.c.b16 %v922, %v918
    %v1111 = vpack.c.b16 %v923, %v919
    %v1112 = vpack.c.b16 %v928, %v924
    %v1113 = vpack.c.b16 %v929, %v925
    %v1114 = vpack.c.b16 %v930, %v926
    %v1115 = vpack.c.b16 %v931, %v927
    %v1116 = vpack.c.b16 %v936, %v932
    %v1117 = vpack.c.b16 %v937, %v933
    %v1118 = vpack.c.b16 %v938, %v934
    %v1119 = vpack.c.b16 %v939, %v935
    %v1120 = vpack.c.b16 %v944, %v940
    %v1121 = vpack.c.b16 %v945, %v941
    %v1122 = vpack.c.b16 %v946, %v942
    %v1123 = vpack.c.b16 %v947, %v943
    %v1124 = vpack.c.b16 %v952, %v948
    %v1125 = vpack.c.b16 %v953, %v949
    %v1126 = vpack.c.b16 %v954, %v950
    %v1127 = vpack.c.b16 %v955, %v951
    %v1128 = vpack.c.b16 %v960, %v956
    %v1129 = vpack.c.b16 %v961, %v957
    %v1130 = vpack.c.b16 %v962, %v958
    %v1131 = vpack.c.b16 %v963, %v959
    %v1132 = vpack.c.b16 %v968, %v964
    %v1133 = vpack.c.b16 %v969, %v965
    %v1134 = vpack.c.b16 %v970, %v966
    %v1135 = vpack.c.b16 %v971, %v967
    %v1136 = vpack.c.b16 %v976, %v972
    %v1137 = vpack.c.b16 %v977, %v973
    %v1138 = vpack.c.b16 %v978, %v974
    %v1139 = vpack.c.b16 %v979, %v975
    %v1140 = vpack.c.b16 %v984, %v980
    %v1141 = vpack.c.b16 %v985, %v981
    %v1142 = vpack.c.b16 %v986, %v982
    %v1143 = vpack.c.b16 %v987, %v983
    %v1144 = vpack.c.b16 %v992, %v988
    %v1145 = vpack.c.b16 %v993, %v989
    %v1146 = vpack.c.b16 %v994, %v990
    %v1147 = vpack.c.b16 %v995, %v991
    %v1148 = vpack.c.b16 %v1000, %v996
    %v1149 = vpack.c.b16 %v1001, %v997
    %v1150 = vpack.c.b16 %v1002, %v998
    %v1151 = vpack.c.b16 %v1003, %v999
    %v1152 = vpack.c.b16 %v1008, %v1004
    %v1153 = vpack.c.b16 %v1009, %v1005
    %v1154 = vpack.c.b16 %v1010, %v1006
    %v1155 = vpack.c.b16 %v1011, %v1007
    %v1156 = vpack.c.b16 %v1016, %v1012
    %v1157 = vpack.c.b16 %v1017, %v1013
    %v1158 = vpack.c.b16 %v1018, %v1014
    %v1159 = vpack.c.b16 %v1019, %v1015
    %v1160 = vpack.c.b16 %v1024, %v1020
    %v1161 = vpack.c.b16 %v1025, %v1021
    %v1162 = vpack.c.b16 %v1026, %v1022
    %v1163 = vpack.c.b16 %v1027, %v1023
    %v1164 = vpack.c.b16 %v1032, %v1028
    %v1165 = vpack.c.b16 %v1033, %v1029
    %v1166 = vpack.c.b16 %v1034, %v1030
    %v1167 = vpack.c.b16 %v1035, %v1031
    %v1168 = vpack.c.b16 %v1040, %v1036
    %v1169 = vpack.c.b16 %v1041, %v1037
    %v1170 = vpack.c.b16 %v1042, %v1038
    %v1171 = vpack.c.b16 %v1043, %v1039
    %1300 = vmatpush.bf16.msra.mxu0 %v1072
    %1301 = vmatpush.bf16.msra.mxu0 %v1068
    %1302 = vmatpush.bf16.msra.mxu0 %v1064
    %1303 = vmatpush.bf16.msra.mxu0 %v1060
    %1304 = vmatpush.bf16.msra.mxu0 %v1056
    %1305 = vmatpush.bf16.msra.mxu0 %v1052
    %1306 = vmatpush.bf16.msra.mxu0 %v1048
    %1307 = vmatpush.bf16.msra.mxu0 %v1044
    %1308 = vmatmul.bf16.gmra.mxu0 %v490
    %v1309 = vpop.f32.mrf.mxu0
    %v1310 = vadd.f32 %v652, %v1309
    %v1311 = vpop.f32.mrf.mxu0
    %v1312 = vadd.f32 %v652, %v1311
    %1313 = vmatmul.bf16.gmra.mxu0 %v494
    %v1314 = vpop.f32.mrf.mxu0
    %v1315 = vadd.f32 %v652, %v1314
    %v1316 = vpop.f32.mrf.mxu0
    %v1317 = vadd.f32 %v652, %v1316
    %1318 = vmatmul.bf16.gmra.mxu0 %v498
    %v1319 = vpop.f32.mrf.mxu0
    %v1320 = vadd.f32 %v652, %v1319
    %v1321 = vpop.f32.mrf.mxu0
    %v1322 = vadd.f32 %v652, %v1321
    %1323 = vmatmul.bf16.gmra.mxu0 %v502
    %v1324 = vpop.f32.mrf.mxu0
    %v1325 = vadd.f32 %v652, %v1324
    %v1326 = vpop.f32.mrf.mxu0
    %v1327 = vadd.f32 %v652, %v1326
    %1328 = vmatmul.bf16.gmra.mxu0 %v506
    %v1329 = vpop.f32.mrf.mxu0
    %v1330 = vadd.f32 %v652, %v1329
    %v1331 = vpop.f32.mrf.mxu0
    %v1332 = vadd.f32 %v652, %v1331
    %1333 = vmatmul.bf16.gmra.mxu0 %v510
    %v1334 = vpop.f32.mrf.mxu0
    %v1335 = vadd.f32 %v652, %v1334
    %v1336 = vpop.f32.mrf.mxu0
    %v1337 = vadd.f32 %v652, %v1336
    %1338 = vmatmul.bf16.gmra.mxu0 %v514
    %v1339 = vpop.f32.mrf.mxu0
    %v1340 = vadd.f32 %v652, %v1339
    %v1341 = vpop.f32.mrf.mxu0
    %v1342 = vadd.f32 %v652, %v1341
    %1343 = vmatmul.bf16.gmra.mxu0 %v518
    %v1344 = vpop.f32.mrf.mxu0
    %v1345 = vadd.f32 %v652, %v1344
    %v1346 = vpop.f32.mrf.mxu0
    %v1347 = vadd.f32 %v652, %v1346
    %1348 = vdwg.mxu0
    %1349 = vmatpush.bf16.msra.mxu0 %v1104
    %1350 = vmatpush.bf16.msra.mxu0 %v1100
    %1351 = vmatpush.bf16.msra.mxu0 %v1096
    %1352 = vmatpush.bf16.msra.mxu0 %v1092
    %1353 = vmatpush.bf16.msra.mxu0 %v1088
    %1354 = vmatpush.bf16.msra.mxu0 %v1084
    %1355 = vmatpush.bf16.msra.mxu0 %v1080
    %1356 = vmatpush.bf16.msra.mxu0 %v1076
    %1357 = vmatmul.bf16.gmra.mxu0 %v491
    %v1358 = vpop.f32.mrf.mxu0
    %v1359 = vadd.f32 %v1310, %v1358
    %v1360 = vpop.f32.mrf.mxu0
    %v1361 = vadd.f32 %v1312, %v1360
    %1362 = vmatmul.bf16.gmra.mxu0 %v495
    %v1363 = vpop.f32.mrf.mxu0
    %v1364 = vadd.f32 %v1315, %v1363
    %v1365 = vpop.f32.mrf.mxu0
    %v1366 = vadd.f32 %v1317, %v1365
    %1367 = vmatmul.bf16.gmra.mxu0 %v499
    %v1368 = vpop.f32.mrf.mxu0
    %v1369 = vadd.f32 %v1320, %v1368
    %v1370 = vpop.f32.mrf.mxu0
    %v1371 = vadd.f32 %v1322, %v1370
    %1372 = vmatmul.bf16.gmra.mxu0 %v503
    %v1373 = vpop.f32.mrf.mxu0
    %v1374 = vadd.f32 %v1325, %v1373
    %v1375 = vpop.f32.mrf.mxu0
    %v1376 = vadd.f32 %v1327, %v1375
    %1377 = vmatmul.bf16.gmra.mxu0 %v507
    %v1378 = vpop.f32.mrf.mxu0
    %v1379 = vadd.f32 %v1330, %v1378
    %v1380 = vpop.f32.mrf.mxu0
    %v1381 = vadd.f32 %v1332, %v1380
    %1382 = vmatmul.bf16.gmra.mxu0 %v511
    %v1383 = vpop.f32.mrf.mxu0
    %v1384 = vadd.f32 %v1335, %v1383
    %v1385 = vpop.f32.mrf.mxu0
    %v1386 = vadd.f32 %v1337, %v1385
    %1387 = vmatmul.bf16.gmra.mxu0 %v515
    %v1388 = vpop.f32.mrf.mxu0
    %v1389 = vadd.f32 %v1340, %v1388
    %v1390 = vpop.f32.mrf.mxu0
    %v1391 = vadd.f32 %v1342, %v1390
    %1392 = vmatmul.bf16.gmra.mxu0 %v519
    %v1393 = vpop.f32.mrf.mxu0
    %v1394 = vadd.f32 %v1345, %v1393
    %v1395 = vpop.f32.mrf.mxu0
    %v1396 = vadd.f32 %v1347, %v1395
    %1397 = vdwg.mxu0
    %1398 = vmatpush.bf16.msra.mxu0 %v1136
    %1399 = vmatpush.bf16.msra.mxu0 %v1132
    %1400 = vmatpush.bf16.msra.mxu0 %v1128
    %1401 = vmatpush.bf16.msra.mxu0 %v1124
    %1402 = vmatpush.bf16.msra.mxu0 %v1120
    %1403 = vmatpush.bf16.msra.mxu0 %v1116
    %1404 = vmatpush.bf16.msra.mxu0 %v1112
    %1405 = vmatpush.bf16.msra.mxu0 %v1108
    %1406 = vmatmul.bf16.gmra.mxu0 %v492
    %v1407 = vpop.f32.mrf.mxu0
    %v1408 = vadd.f32 %v1359, %v1407
    %v1409 = vpop.f32.mrf.mxu0
    %v1410 = vadd.f32 %v1361, %v1409
    %1411 = vmatmul.bf16.gmra.mxu0 %v496
    %v1412 = vpop.f32.mrf.mxu0
    %v1413 = vadd.f32 %v1364, %v1412
    %v1414 = vpop.f32.mrf.mxu0
    %v1415 = vadd.f32 %v1366, %v1414
    %1416 = vmatmul.bf16.gmra.mxu0 %v500
    %v1417 = vpop.f32.mrf.mxu0
    %v1418 = vadd.f32 %v1369, %v1417
    %v1419 = vpop.f32.mrf.mxu0
    %v1420 = vadd.f32 %v1371, %v1419
    %1421 = vmatmul.bf16.gmra.mxu0 %v504
    %v1422 = vpop.f32.mrf.mxu0
    %v1423 = vadd.f32 %v1374, %v1422
    %v1424 = vpop.f32.mrf.mxu0
    %v1425 = vadd.f32 %v1376, %v1424
    %1426 = vmatmul.bf16.gmra.mxu0 %v508
    %v1427 = vpop.f32.mrf.mxu0
    %v1428 = vadd.f32 %v1379, %v1427
    %v1429 = vpop.f32.mrf.mxu0
    %v1430 = vadd.f32 %v1381, %v1429
    %1431 = vmatmul.bf16.gmra.mxu0 %v512
    %v1432 = vpop.f32.mrf.mxu0
    %v1433 = vadd.f32 %v1384, %v1432
    %v1434 = vpop.f32.mrf.mxu0
    %v1435 = vadd.f32 %v1386, %v1434
    %1436 = vmatmul.bf16.gmra.mxu0 %v516
    %v1437 = vpop.f32.mrf.mxu0
    %v1438 = vadd.f32 %v1389, %v1437
    %v1439 = vpop.f32.mrf.mxu0
    %v1440 = vadd.f32 %v1391, %v1439
    %1441 = vmatmul.bf16.gmra.mxu0 %v520
    %v1442 = vpop.f32.mrf.mxu0
    %v1443 = vadd.f32 %v1394, %v1442
    %v1444 = vpop.f32.mrf.mxu0
    %v1445 = vadd.f32 %v1396, %v1444
    %1446 = vdwg.mxu0
    %1447 = vmatpush.bf16.msra.mxu0 %v1168
    %1448 = vmatpush.bf16.msra.mxu0 %v1164
    %1449 = vmatpush.bf16.msra.mxu0 %v1160
    %1450 = vmatpush.bf16.msra.mxu0 %v1156
    %1451 = vmatpush.bf16.msra.mxu0 %v1152
    %1452 = vmatpush.bf16.msra.mxu0 %v1148
    %1453 = vmatpush.bf16.msra.mxu0 %v1144
    %1454 = vmatpush.bf16.msra.mxu0 %v1140
    %1455 = vmatmul.bf16.gmra.mxu0 %v493
    %v1456 = vpop.f32.mrf.mxu0
    %v1457 = vadd.f32 %v1408, %v1456
    %v1458 = vpop.f32.mrf.mxu0
    %v1459 = vadd.f32 %v1410, %v1458
    %1460 = vmatmul.bf16.gmra.mxu0 %v497
    %v1461 = vpop.f32.mrf.mxu0
    %v1462 = vadd.f32 %v1413, %v1461
    %v1463 = vpop.f32.mrf.mxu0
    %v1464 = vadd.f32 %v1415, %v1463
    %1465 = vmatmul.bf16.gmra.mxu0 %v501
    %v1466 = vpop.f32.mrf.mxu0
    %v1467 = vadd.f32 %v1418, %v1466
    %v1468 = vpop.f32.mrf.mxu0
    %v1469 = vadd.f32 %v1420, %v1468
    %1470 = vmatmul.bf16.gmra.mxu0 %v505
    %v1471 = vpop.f32.mrf.mxu0
    %v1472 = vadd.f32 %v1423, %v1471
    %v1473 = vpop.f32.mrf.mxu0
    %v1474 = vadd.f32 %v1425, %v1473
    %1475 = vmatmul.bf16.gmra.mxu0 %v509
    %v1476 = vpop.f32.mrf.mxu0
    %v1477 = vadd.f32 %v1428, %v1476
    %v1478 = vpop.f32.mrf.mxu0
    %v1479 = vadd.f32 %v1430, %v1478
    %1480 = vmatmul.bf16.gmra.mxu0 %v513
    %v1481 = vpop.f32.mrf.mxu0
    %v1482 = vadd.f32 %v1433, %v1481
    %v1483 = vpop.f32.mrf.mxu0
    %v1484 = vadd.f32 %v1435, %v1483
    %1485 = vmatmul.bf16.gmra.mxu0 %v517
    %v1486 = vpop.f32.mrf.mxu0
    %v1487 = vadd.f32 %v1438, %v1486
    %v1488 = vpop.f32.mrf.mxu0
    %v1489 = vadd.f32 %v1440, %v1488
    %1490 = vmatmul.bf16.gmra.mxu0 %v521
    %v1491 = vpop.f32.mrf.mxu0
    %v1492 = vadd.f32 %v1443, %v1491
    %v1493 = vpop.f32.mrf.mxu0
    %v1494 = vadd.f32 %v1445, %v1493
    %1495 = vdwg.mxu0
    %1496 = vmatpush.bf16.msra.mxu0 %v1073
    %1497 = vmatpush.bf16.msra.mxu0 %v1069
    %1498 = vmatpush.bf16.msra.mxu0 %v1065
    %1499 = vmatpush.bf16.msra.mxu0 %v1061
    %1500 = vmatpush.bf16.msra.mxu0 %v1057
    %1501 = vmatpush.bf16.msra.mxu0 %v1053
    %1502 = vmatpush.bf16.msra.mxu0 %v1049
    %1503 = vmatpush.bf16.msra.mxu0 %v1045
    %1504 = vmatmul.bf16.gmra.mxu0 %v490
    %v1505 = vpop.f32.mrf.mxu0
    %v1506 = vadd.f32 %v653, %v1505
    %v1507 = vpop.f32.mrf.mxu0
    %v1508 = vadd.f32 %v653, %v1507
    %1509 = vmatmul.bf16.gmra.mxu0 %v494
    %v1510 = vpop.f32.mrf.mxu0
    %v1511 = vadd.f32 %v653, %v1510
    %v1512 = vpop.f32.mrf.mxu0
    %v1513 = vadd.f32 %v653, %v1512
    %1514 = vmatmul.bf16.gmra.mxu0 %v498
    %v1515 = vpop.f32.mrf.mxu0
    %v1516 = vadd.f32 %v653, %v1515
    %v1517 = vpop.f32.mrf.mxu0
    %v1518 = vadd.f32 %v653, %v1517
    %1519 = vmatmul.bf16.gmra.mxu0 %v502
    %v1520 = vpop.f32.mrf.mxu0
    %v1521 = vadd.f32 %v653, %v1520
    %v1522 = vpop.f32.mrf.mxu0
    %v1523 = vadd.f32 %v653, %v1522
    %1524 = vmatmul.bf16.gmra.mxu0 %v506
    %v1525 = vpop.f32.mrf.mxu0
    %v1526 = vadd.f32 %v653, %v1525
    %v1527 = vpop.f32.mrf.mxu0
    %v1528 = vadd.f32 %v653, %v1527
    %1529 = vmatmul.bf16.gmra.mxu0 %v510
    %v1530 = vpop.f32.mrf.mxu0
    %v1531 = vadd.f32 %v653, %v1530
    %v1532 = vpop.f32.mrf.mxu0
    %v1533 = vadd.f32 %v653, %v1532
    %1534 = vmatmul.bf16.gmra.mxu0 %v514
    %v1535 = vpop.f32.mrf.mxu0
    %v1536 = vadd.f32 %v653, %v1535
    %v1537 = vpop.f32.mrf.mxu0
    %v1538 = vadd.f32 %v653, %v1537
    %1539 = vmatmul.bf16.gmra.mxu0 %v518
    %v1540 = vpop.f32.mrf.mxu0
    %v1541 = vadd.f32 %v653, %v1540
    %v1542 = vpop.f32.mrf.mxu0
    %v1543 = vadd.f32 %v653, %v1542
    %1544 = vdwg.mxu0
    %1545 = vmatpush.bf16.msra.mxu0 %v1105
    %1546 = vmatpush.bf16.msra.mxu0 %v1101
    %1547 = vmatpush.bf16.msra.mxu0 %v1097
    %1548 = vmatpush.bf16.msra.mxu0 %v1093
    %1549 = vmatpush.bf16.msra.mxu0 %v1089
    %1550 = vmatpush.bf16.msra.mxu0 %v1085
    %1551 = vmatpush.bf16.msra.mxu0 %v1081
    %1552 = vmatpush.bf16.msra.mxu0 %v1077
    %1553 = vmatmul.bf16.gmra.mxu0 %v491
    %v1554 = vpop.f32.mrf.mxu0
    %v1555 = vadd.f32 %v1506, %v1554
    %v1556 = vpop.f32.mrf.mxu0
    %v1557 = vadd.f32 %v1508, %v1556
    %1558 = vmatmul.bf16.gmra.mxu0 %v495
    %v1559 = vpop.f32.mrf.mxu0
    %v1560 = vadd.f32 %v1511, %v1559
    %v1561 = vpop.f32.mrf.mxu0
    %v1562 = vadd.f32 %v1513, %v1561
    %1563 = vmatmul.bf16.gmra.mxu0 %v499
    %v1564 = vpop.f32.mrf.mxu0
    %v1565 = vadd.f32 %v1516, %v1564
    %v1566 = vpop.f32.mrf.mxu0
    %v1567 = vadd.f32 %v1518, %v1566
    %1568 = vmatmul.bf16.gmra.mxu0 %v503
    %v1569 = vpop.f32.mrf.mxu0
    %v1570 = vadd.f32 %v1521, %v1569
    %v1571 = vpop.f32.mrf.mxu0
    %v1572 = vadd.f32 %v1523, %v1571
    %1573 = vmatmul.bf16.gmra.mxu0 %v507
    %v1574 = vpop.f32.mrf.mxu0
    %v1575 = vadd.f32 %v1526, %v1574
    %v1576 = vpop.f32.mrf.mxu0
    %v1577 = vadd.f32 %v1528, %v1576
    %1578 = vmatmul.bf16.gmra.mxu0 %v511
    %v1579 = vpop.f32.mrf.mxu0
    %v1580 = vadd.f32 %v1531, %v1579
    %v1581 = vpop.f32.mrf.mxu0
    %v1582 = vadd.f32 %v1533, %v1581
    %1583 = vmatmul.bf16.gmra.mxu0 %v515
    %v1584 = vpop.f32.mrf.mxu0
    %v1585 = vadd.f32 %v1536, %v1584
    %v1586 = vpop.f32.mrf.mxu0
    %v1587 = vadd.f32 %v1538, %v1586
    %1588 = vmatmul.bf16.gmra.mxu0 %v519
    %v1589 = vpop.f32.mrf.mxu0
    %v1590 = vadd.f32 %v1541, %v1589
    %v1591 = vpop.f32.mrf.mxu0
    %v1592 = vadd.f32 %v1543, %v1591
    %1593 = vdwg.mxu0
    %1594 = vmatpush.bf16.msra.mxu0 %v1137
    %1595 = vmatpush.bf16.msra.mxu0 %v1133
    %1596 = vmatpush.bf16.msra.mxu0 %v1129
    %1597 = vmatpush.bf16.msra.mxu0 %v1125
    %1598 = vmatpush.bf16.msra.mxu0 %v1121
    %1599 = vmatpush.bf16.msra.mxu0 %v1117
    %1600 = vmatpush.bf16.msra.mxu0 %v1113
    %1601 = vmatpush.bf16.msra.mxu0 %v1109
    %1602 = vmatmul.bf16.gmra.mxu0 %v492
    %v1603 = vpop.f32.mrf.mxu0
    %v1604 = vadd.f32 %v1555, %v1603
    %v1605 = vpop.f32.mrf.mxu0
    %v1606 = vadd.f32 %v1557, %v1605
    %1607 = vmatmul.bf16.gmra.mxu0 %v496
    %v1608 = vpop.f32.mrf.mxu0
    %v1609 = vadd.f32 %v1560, %v1608
    %v1610 = vpop.f32.mrf.mxu0
    %v1611 = vadd.f32 %v1562, %v1610
    %1612 = vmatmul.bf16.gmra.mxu0 %v500
    %v1613 = vpop.f32.mrf.mxu0
    %v1614 = vadd.f32 %v1565, %v1613
    %v1615 = vpop.f32.mrf.mxu0
    %v1616 = vadd.f32 %v1567, %v1615
    %1617 = vmatmul.bf16.gmra.mxu0 %v504
    %v1618 = vpop.f32.mrf.mxu0
    %v1619 = vadd.f32 %v1570, %v1618
    %v1620 = vpop.f32.mrf.mxu0
    %v1621 = vadd.f32 %v1572, %v1620
    %1622 = vmatmul.bf16.gmra.mxu0 %v508
    %v1623 = vpop.f32.mrf.mxu0
    %v1624 = vadd.f32 %v1575, %v1623
    %v1625 = vpop.f32.mrf.mxu0
    %v1626 = vadd.f32 %v1577, %v1625
    %1627 = vmatmul.bf16.gmra.mxu0 %v512
    %v1628 = vpop.f32.mrf.mxu0
    %v1629 = vadd.f32 %v1580, %v1628
    %v1630 = vpop.f32.mrf.mxu0
    %v1631 = vadd.f32 %v1582, %v1630
    %1632 = vmatmul.bf16.gmra.mxu0 %v516
    %v1633 = vpop.f32.mrf.mxu0
    %v1634 = vadd.f32 %v1585, %v1633
    %v1635 = vpop.f32.mrf.mxu0
    %v1636 = vadd.f32 %v1587, %v1635
    %1637 = vmatmul.bf16.gmra.mxu0 %v520
    %v1638 = vpop.f32.mrf.mxu0
    %v1639 = vadd.f32 %v1590, %v1638
    %v1640 = vpop.f32.mrf.mxu0
    %v1641 = vadd.f32 %v1592, %v1640
    %1642 = vdwg.mxu0
    %1643 = vmatpush.bf16.msra.mxu0 %v1169
    %1644 = vmatpush.bf16.msra.mxu0 %v1165
    %1645 = vmatpush.bf16.msra.mxu0 %v1161
    %1646 = vmatpush.bf16.msra.mxu0 %v1157
    %1647 = vmatpush.bf16.msra.mxu0 %v1153
    %1648 = vmatpush.bf16.msra.mxu0 %v1149
    %1649 = vmatpush.bf16.msra.mxu0 %v1145
    %1650 = vmatpush.bf16.msra.mxu0 %v1141
    %1651 = vmatmul.bf16.gmra.mxu0 %v493
    %v1652 = vpop.f32.mrf.mxu0
    %v1653 = vadd.f32 %v1604, %v1652
    %v1654 = vpop.f32.mrf.mxu0
    %v1655 = vadd.f32 %v1606, %v1654
    %1656 = vmatmul.bf16.gmra.mxu0 %v497
    %v1657 = vpop.f32.mrf.mxu0
    %v1658 = vadd.f32 %v1609, %v1657
    %v1659 = vpop.f32.mrf.mxu0
    %v1660 = vadd.f32 %v1611, %v1659
    %1661 = vmatmul.bf16.gmra.mxu0 %v501
    %v1662 = vpop.f32.mrf.mxu0
    %v1663 = vadd.f32 %v1614, %v1662
    %v1664 = vpop.f32.mrf.mxu0
    %v1665 = vadd.f32 %v1616, %v1664
    %1666 = vmatmul.bf16.gmra.mxu0 %v505
    %v1667 = vpop.f32.mrf.mxu0
    %v1668 = vadd.f32 %v1619, %v1667
    %v1669 = vpop.f32.mrf.mxu0
    %v1670 = vadd.f32 %v1621, %v1669
    %1671 = vmatmul.bf16.gmra.mxu0 %v509
    %v1672 = vpop.f32.mrf.mxu0
    %v1673 = vadd.f32 %v1624, %v1672
    %v1674 = vpop.f32.mrf.mxu0
    %v1675 = vadd.f32 %v1626, %v1674
    %1676 = vmatmul.bf16.gmra.mxu0 %v513
    %v1677 = vpop.f32.mrf.mxu0
    %v1678 = vadd.f32 %v1629, %v1677
    %v1679 = vpop.f32.mrf.mxu0
    %v1680 = vadd.f32 %v1631, %v1679
    %1681 = vmatmul.bf16.gmra.mxu0 %v517
    %v1682 = vpop.f32.mrf.mxu0
    %v1683 = vadd.f32 %v1634, %v1682
    %v1684 = vpop.f32.mrf.mxu0
    %v1685 = vadd.f32 %v1636, %v1684
    %1686 = vmatmul.bf16.gmra.mxu0 %v521
    %v1687 = vpop.f32.mrf.mxu0
    %v1688 = vadd.f32 %v1639, %v1687
    %v1689 = vpop.f32.mrf.mxu0
    %v1690 = vadd.f32 %v1641, %v1689
    %1691 = vdwg.mxu0
    %1692 = vmatpush.bf16.msra.mxu0 %v1074
    %1693 = vmatpush.bf16.msra.mxu0 %v1070
    %1694 = vmatpush.bf16.msra.mxu0 %v1066
    %1695 = vmatpush.bf16.msra.mxu0 %v1062
    %1696 = vmatpush.bf16.msra.mxu0 %v1058
    %1697 = vmatpush.bf16.msra.mxu0 %v1054
    %1698 = vmatpush.bf16.msra.mxu0 %v1050
    %1699 = vmatpush.bf16.msra.mxu0 %v1046
    %1700 = vmatmul.bf16.gmra.mxu0 %v490
    %v1701 = vpop.f32.mrf.mxu0
    %v1702 = vadd.f32 %v654, %v1701
    %v1703 = vpop.f32.mrf.mxu0
    %v1704 = vadd.f32 %v654, %v1703
    %1705 = vmatmul.bf16.gmra.mxu0 %v494
    %v1706 = vpop.f32.mrf.mxu0
    %v1707 = vadd.f32 %v654, %v1706
    %v1708 = vpop.f32.mrf.mxu0
    %v1709 = vadd.f32 %v654, %v1708
    %1710 = vmatmul.bf16.gmra.mxu0 %v498
    %v1711 = vpop.f32.mrf.mxu0
    %v1712 = vadd.f32 %v654, %v1711
    %v1713 = vpop.f32.mrf.mxu0
    %v1714 = vadd.f32 %v654, %v1713
    %1715 = vmatmul.bf16.gmra.mxu0 %v502
    %v1716 = vpop.f32.mrf.mxu0
    %v1717 = vadd.f32 %v654, %v1716
    %v1718 = vpop.f32.mrf.mxu0
    %v1719 = vadd.f32 %v654, %v1718
    %1720 = vmatmul.bf16.gmra.mxu0 %v506
    %v1721 = vpop.f32.mrf.mxu0
    %v1722 = vadd.f32 %v654, %v1721
    %v1723 = vpop.f32.mrf.mxu0
    %v1724 = vadd.f32 %v654, %v1723
    %1725 = vmatmul.bf16.gmra.mxu0 %v510
    %v1726 = vpop.f32.mrf.mxu0
    %v1727 = vadd.f32 %v654, %v1726
    %v1728 = vpop.f32.mrf.mxu0
    %v1729 = vadd.f32 %v654, %v1728
    %1730 = vmatmul.bf16.gmra.mxu0 %v514
    %v1731 = vpop.f32.mrf.mxu0
    %v1732 = vadd.f32 %v654, %v1731
    %v1733 = vpop.f32.mrf.mxu0
    %v1734 = vadd.f32 %v654, %v1733
    %1735 = vmatmul.bf16.gmra.mxu0 %v518
    %v1736 = vpop.f32.mrf.mxu0
    %v1737 = vadd.f32 %v654, %v1736
    %v1738 = vpop.f32.mrf.mxu0
    %v1739 = vadd.f32 %v654, %v1738
    %1740 = vdwg.mxu0
    %1741 = vmatpush.bf16.msra.mxu0 %v1106
    %1742 = vmatpush.bf16.msra.mxu0 %v1102
    %1743 = vmatpush.bf16.msra.mxu0 %v1098
    %1744 = vmatpush.bf16.msra.mxu0 %v1094
    %1745 = vmatpush.bf16.msra.mxu0 %v1090
    %1746 = vmatpush.bf16.msra.mxu0 %v1086
    %1747 = vmatpush.bf16.msra.mxu0 %v1082
    %1748 = vmatpush.bf16.msra.mxu0 %v1078
    %1749 = vmatmul.bf16.gmra.mxu0 %v491
    %v1750 = vpop.f32.mrf.mxu0
    %v1751 = vadd.f32 %v1702, %v1750
    %v1752 = vpop.f32.mrf.mxu0
    %v1753 = vadd.f32 %v1704, %v1752
    %1754 = vmatmul.bf16.gmra.mxu0 %v495
    %v1755 = vpop.f32.mrf.mxu0
    %v1756 = vadd.f32 %v1707, %v1755
    %v1757 = vpop.f32.mrf.mxu0
    %v1758 = vadd.f32 %v1709, %v1757
    %1759 = vmatmul.bf16.gmra.mxu0 %v499
    %v1760 = vpop.f32.mrf.mxu0
    %v1761 = vadd.f32 %v1712, %v1760
    %v1762 = vpop.f32.mrf.mxu0
    %v1763 = vadd.f32 %v1714, %v1762
    %1764 = vmatmul.bf16.gmra.mxu0 %v503
    %v1765 = vpop.f32.mrf.mxu0
    %v1766 = vadd.f32 %v1717, %v1765
    %v1767 = vpop.f32.mrf.mxu0
    %v1768 = vadd.f32 %v1719, %v1767
    %1769 = vmatmul.bf16.gmra.mxu0 %v507
    %v1770 = vpop.f32.mrf.mxu0
    %v1771 = vadd.f32 %v1722, %v1770
    %v1772 = vpop.f32.mrf.mxu0
    %v1773 = vadd.f32 %v1724, %v1772
    %1774 = vmatmul.bf16.gmra.mxu0 %v511
    %v1775 = vpop.f32.mrf.mxu0
    %v1776 = vadd.f32 %v1727, %v1775
    %v1777 = vpop.f32.mrf.mxu0
    %v1778 = vadd.f32 %v1729, %v1777
    %1779 = vmatmul.bf16.gmra.mxu0 %v515
    %v1780 = vpop.f32.mrf.mxu0
    %v1781 = vadd.f32 %v1732, %v1780
    %v1782 = vpop.f32.mrf.mxu0
    %v1783 = vadd.f32 %v1734, %v1782
    %1784 = vmatmul.bf16.gmra.mxu0 %v519
    %v1785 = vpop.f32.mrf.mxu0
    %v1786 = vadd.f32 %v1737, %v1785
    %v1787 = vpop.f32.mrf.mxu0
    %v1788 = vadd.f32 %v1739, %v1787
    %1789 = vdwg.mxu0
    %1790 = vmatpush.bf16.msra.mxu0 %v1138
    %1791 = vmatpush.bf16.msra.mxu0 %v1134
    %1792 = vmatpush.bf16.msra.mxu0 %v1130
    %1793 = vmatpush.bf16.msra.mxu0 %v1126
    %1794 = vmatpush.bf16.msra.mxu0 %v1122
    %1795 = vmatpush.bf16.msra.mxu0 %v1118
    %1796 = vmatpush.bf16.msra.mxu0 %v1114
    %1797 = vmatpush.bf16.msra.mxu0 %v1110
    %1798 = vmatmul.bf16.gmra.mxu0 %v492
    %v1799 = vpop.f32.mrf.mxu0
    %v1800 = vadd.f32 %v1751, %v1799
    %v1801 = vpop.f32.mrf.mxu0
    %v1802 = vadd.f32 %v1753, %v1801
    %1803 = vmatmul.bf16.gmra.mxu0 %v496
    %v1804 = vpop.f32.mrf.mxu0
    %v1805 = vadd.f32 %v1756, %v1804
    %v1806 = vpop.f32.mrf.mxu0
    %v1807 = vadd.f32 %v1758, %v1806
    %1808 = vmatmul.bf16.gmra.mxu0 %v500
    %v1809 = vpop.f32.mrf.mxu0
    %v1810 = vadd.f32 %v1761, %v1809
    %v1811 = vpop.f32.mrf.mxu0
    %v1812 = vadd.f32 %v1763, %v1811
    %1813 = vmatmul.bf16.gmra.mxu0 %v504
    %v1814 = vpop.f32.mrf.mxu0
    %v1815 = vadd.f32 %v1766, %v1814
    %v1816 = vpop.f32.mrf.mxu0
    %v1817 = vadd.f32 %v1768, %v1816
    %1818 = vmatmul.bf16.gmra.mxu0 %v508
    %v1819 = vpop.f32.mrf.mxu0
    %v1820 = vadd.f32 %v1771, %v1819
    %v1821 = vpop.f32.mrf.mxu0
    %v1822 = vadd.f32 %v1773, %v1821
    %1823 = vmatmul.bf16.gmra.mxu0 %v512
    %v1824 = vpop.f32.mrf.mxu0
    %v1825 = vadd.f32 %v1776, %v1824
    %v1826 = vpop.f32.mrf.mxu0
    %v1827 = vadd.f32 %v1778, %v1826
    %1828 = vmatmul.bf16.gmra.mxu0 %v516
    %v1829 = vpop.f32.mrf.mxu0
    %v1830 = vadd.f32 %v1781, %v1829
    %v1831 = vpop.f32.mrf.mxu0
    %v1832 = vadd.f32 %v1783, %v1831
    %1833 = vmatmul.bf16.gmra.mxu0 %v520
    %v1834 = vpop.f32.mrf.mxu0
    %v1835 = vadd.f32 %v1786, %v1834
    %v1836 = vpop.f32.mrf.mxu0
    %v1837 = vadd.f32 %v1788, %v1836
    %1838 = vdwg.mxu0
    %1839 = vmatpush.bf16.msra.mxu0 %v1170
    %1840 = vmatpush.bf16.msra.mxu0 %v1166
    %1841 = vmatpush.bf16.msra.mxu0 %v1162
    %1842 = vmatpush.bf16.msra.mxu0 %v1158
    %1843 = vmatpush.bf16.msra.mxu0 %v1154
    %1844 = vmatpush.bf16.msra.mxu0 %v1150
    %1845 = vmatpush.bf16.msra.mxu0 %v1146
    %1846 = vmatpush.bf16.msra.mxu0 %v1142
    %1847 = vmatmul.bf16.gmra.mxu0 %v493
    %v1848 = vpop.f32.mrf.mxu0
    %v1849 = vadd.f32 %v1800, %v1848
    %v1850 = vpop.f32.mrf.mxu0
    %v1851 = vadd.f32 %v1802, %v1850
    %1852 = vmatmul.bf16.gmra.mxu0 %v497
    %v1853 = vpop.f32.mrf.mxu0
    %v1854 = vadd.f32 %v1805, %v1853
    %v1855 = vpop.f32.mrf.mxu0
    %v1856 = vadd.f32 %v1807, %v1855
    %1857 = vmatmul.bf16.gmra.mxu0 %v501
    %v1858 = vpop.f32.mrf.mxu0
    %v1859 = vadd.f32 %v1810, %v1858
    %v1860 = vpop.f32.mrf.mxu0
    %v1861 = vadd.f32 %v1812, %v1860
    %1862 = vmatmul.bf16.gmra.mxu0 %v505
    %v1863 = vpop.f32.mrf.mxu0
    %v1864 = vadd.f32 %v1815, %v1863
    %v1865 = vpop.f32.mrf.mxu0
    %v1866 = vadd.f32 %v1817, %v1865
    %1867 = vmatmul.bf16.gmra.mxu0 %v509
    %v1868 = vpop.f32.mrf.mxu0
    %v1869 = vadd.f32 %v1820, %v1868
    %v1870 = vpop.f32.mrf.mxu0
    %v1871 = vadd.f32 %v1822, %v1870
    %1872 = vmatmul.bf16.gmra.mxu0 %v513
    %v1873 = vpop.f32.mrf.mxu0
    %v1874 = vadd.f32 %v1825, %v1873
    %v1875 = vpop.f32.mrf.mxu0
    %v1876 = vadd.f32 %v1827, %v1875
    %1877 = vmatmul.bf16.gmra.mxu0 %v517
    %v1878 = vpop.f32.mrf.mxu0
    %v1879 = vadd.f32 %v1830, %v1878
    %v1880 = vpop.f32.mrf.mxu0
    %v1881 = vadd.f32 %v1832, %v1880
    %1882 = vmatmul.bf16.gmra.mxu0 %v521
    %v1883 = vpop.f32.mrf.mxu0
    %v1884 = vadd.f32 %v1835, %v1883
    %v1885 = vpop.f32.mrf.mxu0
    %v1886 = vadd.f32 %v1837, %v1885
    %1887 = vdwg.mxu0
    %1888 = vmatpush.bf16.msra.mxu0 %v1075
    %1889 = vmatpush.bf16.msra.mxu0 %v1071
    %1890 = vmatpush.bf16.msra.mxu0 %v1067
    %1891 = vmatpush.bf16.msra.mxu0 %v1063
    %1892 = vmatpush.bf16.msra.mxu0 %v1059
    %1893 = vmatpush.bf16.msra.mxu0 %v1055
    %1894 = vmatpush.bf16.msra.mxu0 %v1051
    %1895 = vmatpush.bf16.msra.mxu0 %v1047
    %1896 = vmatmul.bf16.gmra.mxu0 %v490
    %v1897 = vpop.f32.mrf.mxu0
    %v1898 = vadd.f32 %v655, %v1897
    %v1899 = vpop.f32.mrf.mxu0
    %v1900 = vadd.f32 %v655, %v1899
    %1901 = vmatmul.bf16.gmra.mxu0 %v494
    %v1902 = vpop.f32.mrf.mxu0
    %v1903 = vadd.f32 %v655, %v1902
    %v1904 = vpop.f32.mrf.mxu0
    %v1905 = vadd.f32 %v655, %v1904
    %1906 = vmatmul.bf16.gmra.mxu0 %v498
    %v1907 = vpop.f32.mrf.mxu0
    %v1908 = vadd.f32 %v655, %v1907
    %v1909 = vpop.f32.mrf.mxu0
    %v1910 = vadd.f32 %v655, %v1909
    %1911 = vmatmul.bf16.gmra.mxu0 %v502
    %v1912 = vpop.f32.mrf.mxu0
    %v1913 = vadd.f32 %v655, %v1912
    %v1914 = vpop.f32.mrf.mxu0
    %v1915 = vadd.f32 %v655, %v1914
    %1916 = vmatmul.bf16.gmra.mxu0 %v506
    %v1917 = vpop.f32.mrf.mxu0
    %v1918 = vadd.f32 %v655, %v1917
    %v1919 = vpop.f32.mrf.mxu0
    %v1920 = vadd.f32 %v655, %v1919
    %1921 = vmatmul.bf16.gmra.mxu0 %v510
    %v1922 = vpop.f32.mrf.mxu0
    %v1923 = vadd.f32 %v655, %v1922
    %v1924 = vpop.f32.mrf.mxu0
    %v1925 = vadd.f32 %v655, %v1924
    %1926 = vmatmul.bf16.gmra.mxu0 %v514
    %v1927 = vpop.f32.mrf.mxu0
    %v1928 = vadd.f32 %v655, %v1927
    %v1929 = vpop.f32.mrf.mxu0
    %v1930 = vadd.f32 %v655, %v1929
    %1931 = vmatmul.bf16.gmra.mxu0 %v518
    %v1932 = vpop.f32.mrf.mxu0
    %v1933 = vadd.f32 %v655, %v1932
    %v1934 = vpop.f32.mrf.mxu0
    %v1935 = vadd.f32 %v655, %v1934
    %1936 = vdwg.mxu0
    %1937 = vmatpush.bf16.msra.mxu0 %v1107
    %1938 = vmatpush.bf16.msra.mxu0 %v1103
    %1939 = vmatpush.bf16.msra.mxu0 %v1099
    %1940 = vmatpush.bf16.msra.mxu0 %v1095
    %1941 = vmatpush.bf16.msra.mxu0 %v1091
    %1942 = vmatpush.bf16.msra.mxu0 %v1087
    %1943 = vmatpush.bf16.msra.mxu0 %v1083
    %1944 = vmatpush.bf16.msra.mxu0 %v1079
    %1945 = vmatmul.bf16.gmra.mxu0 %v491
    %v1946 = vpop.f32.mrf.mxu0
    %v1947 = vadd.f32 %v1898, %v1946
    %v1948 = vpop.f32.mrf.mxu0
    %v1949 = vadd.f32 %v1900, %v1948
    %1950 = vmatmul.bf16.gmra.mxu0 %v495
    %v1951 = vpop.f32.mrf.mxu0
    %v1952 = vadd.f32 %v1903, %v1951
    %v1953 = vpop.f32.mrf.mxu0
    %v1954 = vadd.f32 %v1905, %v1953
    %1955 = vmatmul.bf16.gmra.mxu0 %v499
    %v1956 = vpop.f32.mrf.mxu0
    %v1957 = vadd.f32 %v1908, %v1956
    %v1958 = vpop.f32.mrf.mxu0
    %v1959 = vadd.f32 %v1910, %v1958
    %1960 = vmatmul.bf16.gmra.mxu0 %v503
    %v1961 = vpop.f32.mrf.mxu0
    %v1962 = vadd.f32 %v1913, %v1961
    %v1963 = vpop.f32.mrf.mxu0
    %v1964 = vadd.f32 %v1915, %v1963
    %1965 = vmatmul.bf16.gmra.mxu0 %v507
    %v1966 = vpop.f32.mrf.mxu0
    %v1967 = vadd.f32 %v1918, %v1966
    %v1968 = vpop.f32.mrf.mxu0
    %v1969 = vadd.f32 %v1920, %v1968
    %1970 = vmatmul.bf16.gmra.mxu0 %v511
    %v1971 = vpop.f32.mrf.mxu0
    %v1972 = vadd.f32 %v1923, %v1971
    %v1973 = vpop.f32.mrf.mxu0
    %v1974 = vadd.f32 %v1925, %v1973
    %1975 = vmatmul.bf16.gmra.mxu0 %v515
    %v1976 = vpop.f32.mrf.mxu0
    %v1977 = vadd.f32 %v1928, %v1976
    %v1978 = vpop.f32.mrf.mxu0
    %v1979 = vadd.f32 %v1930, %v1978
    %1980 = vmatmul.bf16.gmra.mxu0 %v519
    %v1981 = vpop.f32.mrf.mxu0
    %v1982 = vadd.f32 %v1933, %v1981
    %v1983 = vpop.f32.mrf.mxu0
    %v1984 = vadd.f32 %v1935, %v1983
    %1985 = vdwg.mxu0
    %1986 = vmatpush.bf16.msra.mxu0 %v1139
    %1987 = vmatpush.bf16.msra.mxu0 %v1135
    %1988 = vmatpush.bf16.msra.mxu0 %v1131
    %1989 = vmatpush.bf16.msra.mxu0 %v1127
    %1990 = vmatpush.bf16.msra.mxu0 %v1123
    %1991 = vmatpush.bf16.msra.mxu0 %v1119
    %1992 = vmatpush.bf16.msra.mxu0 %v1115
    %1993 = vmatpush.bf16.msra.mxu0 %v1111
    %1994 = vmatmul.bf16.gmra.mxu0 %v492
    %v1995 = vpop.f32.mrf.mxu0
    %v1996 = vadd.f32 %v1947, %v1995
    %v1997 = vpop.f32.mrf.mxu0
    %v1998 = vadd.f32 %v1949, %v1997
    %1999 = vmatmul.bf16.gmra.mxu0 %v496
    %v2000 = vpop.f32.mrf.mxu0
    %v2001 = vadd.f32 %v1952, %v2000
    %v2002 = vpop.f32.mrf.mxu0
    %v2003 = vadd.f32 %v1954, %v2002
    %2004 = vmatmul.bf16.gmra.mxu0 %v500
    %v2005 = vpop.f32.mrf.mxu0
    %v2006 = vadd.f32 %v1957, %v2005
    %v2007 = vpop.f32.mrf.mxu0
    %v2008 = vadd.f32 %v1959, %v2007
    %2009 = vmatmul.bf16.gmra.mxu0 %v504
    %v2010 = vpop.f32.mrf.mxu0
    %v2011 = vadd.f32 %v1962, %v2010
    %v2012 = vpop.f32.mrf.mxu0
    %v2013 = vadd.f32 %v1964, %v2012
    %2014 = vmatmul.bf16.gmra.mxu0 %v508
    %v2015 = vpop.f32.mrf.mxu0
    %v2016 = vadd.f32 %v1967, %v2015
    %v2017 = vpop.f32.mrf.mxu0
    %v2018 = vadd.f32 %v1969, %v2017
    %2019 = vmatmul.bf16.gmra.mxu0 %v512
    %v2020 = vpop.f32.mrf.mxu0
    %v2021 = vadd.f32 %v1972, %v2020
    %v2022 = vpop.f32.mrf.mxu0
    %v2023 = vadd.f32 %v1974, %v2022
    %2024 = vmatmul.bf16.gmra.mxu0 %v516
    %v2025 = vpop.f32.mrf.mxu0
    %v2026 = vadd.f32 %v1977, %v2025
    %v2027 = vpop.f32.mrf.mxu0
    %v2028 = vadd.f32 %v1979, %v2027
    %2029 = vmatmul.bf16.gmra.mxu0 %v520
    %v2030 = vpop.f32.mrf.mxu0
    %v2031 = vadd.f32 %v1982, %v2030
    %v2032 = vpop.f32.mrf.mxu0
    %v2033 = vadd.f32 %v1984, %v2032
    %2034 = vdwg.mxu0
    %2035 = vmatpush.bf16.msra.mxu0 %v1171
    %2036 = vmatpush.bf16.msra.mxu0 %v1167
    %2037 = vmatpush.bf16.msra.mxu0 %v1163
    %2038 = vmatpush.bf16.msra.mxu0 %v1159
    %2039 = vmatpush.bf16.msra.mxu0 %v1155
    %2040 = vmatpush.bf16.msra.mxu0 %v1151
    %2041 = vmatpush.bf16.msra.mxu0 %v1147
    %2042 = vmatpush.bf16.msra.mxu0 %v1143
    %2043 = vmatmul.bf16.gmra.mxu0 %v493
    %v2044 = vpop.f32.mrf.mxu0
    %v2045 = vadd.f32 %v1996, %v2044
    %v2046 = vpop.f32.mrf.mxu0
    %v2047 = vadd.f32 %v1998, %v2046
    %2048 = vmatmul.bf16.gmra.mxu0 %v497
    %v2049 = vpop.f32.mrf.mxu0
    %v2050 = vadd.f32 %v2001, %v2049
    %v2051 = vpop.f32.mrf.mxu0
    %v2052 = vadd.f32 %v2003, %v2051
    %2053 = vmatmul.bf16.gmra.mxu0 %v501
    %v2054 = vpop.f32.mrf.mxu0
    %v2055 = vadd.f32 %v2006, %v2054
    %v2056 = vpop.f32.mrf.mxu0
    %v2057 = vadd.f32 %v2008, %v2056
    %2058 = vmatmul.bf16.gmra.mxu0 %v505
    %v2059 = vpop.f32.mrf.mxu0
    %v2060 = vadd.f32 %v2011, %v2059
    %v2061 = vpop.f32.mrf.mxu0
    %v2062 = vadd.f32 %v2013, %v2061
    %2063 = vmatmul.bf16.gmra.mxu0 %v509
    %v2064 = vpop.f32.mrf.mxu0
    %v2065 = vadd.f32 %v2016, %v2064
    %v2066 = vpop.f32.mrf.mxu0
    %v2067 = vadd.f32 %v2018, %v2066
    %2068 = vmatmul.bf16.gmra.mxu0 %v513
    %v2069 = vpop.f32.mrf.mxu0
    %v2070 = vadd.f32 %v2021, %v2069
    %v2071 = vpop.f32.mrf.mxu0
    %v2072 = vadd.f32 %v2023, %v2071
    %2073 = vmatmul.bf16.gmra.mxu0 %v517
    %v2074 = vpop.f32.mrf.mxu0
    %v2075 = vadd.f32 %v2026, %v2074
    %v2076 = vpop.f32.mrf.mxu0
    %v2077 = vadd.f32 %v2028, %v2076
    %2078 = vmatmul.bf16.gmra.mxu0 %v521
    %v2079 = vpop.f32.mrf.mxu0
    %v2080 = vadd.f32 %v2031, %v2079
    %v2081 = vpop.f32.mrf.mxu0
    %v2082 = vadd.f32 %v2033, %v2081
    %2083 = vdwg.mxu0
    %v2084 = vmax.f32 %v1457, 0.0
    %v2085 = vmax.f32 %v1653, 0.0
    %v2086 = vmax.f32 %v1849, 0.0
    %v2087 = vmax.f32 %v2045, 0.0
    %v2088 = vmax.f32 %v1459, 0.0
    %v2089 = vmax.f32 %v1655, 0.0
    %v2090 = vmax.f32 %v1851, 0.0
    %v2091 = vmax.f32 %v2047, 0.0
    %v2092 = vmax.f32 %v1462, 0.0
    %v2093 = vmax.f32 %v1658, 0.0
    %v2094 = vmax.f32 %v1854, 0.0
    %v2095 = vmax.f32 %v2050, 0.0
    %v2096 = vmax.f32 %v1464, 0.0
    %v2097 = vmax.f32 %v1660, 0.0
    %v2098 = vmax.f32 %v1856, 0.0
    %v2099 = vmax.f32 %v2052, 0.0
    %v2100 = vmax.f32 %v1467, 0.0
    %v2101 = vmax.f32 %v1663, 0.0
    %v2102 = vmax.f32 %v1859, 0.0
    %v2103 = vmax.f32 %v2055, 0.0
    %v2104 = vmax.f32 %v1469, 0.0
    %v2105 = vmax.f32 %v1665, 0.0
    %v2106 = vmax.f32 %v1861, 0.0
    %v2107 = vmax.f32 %v2057, 0.0
    %v2108 = vmax.f32 %v1472, 0.0
    %v2109 = vmax.f32 %v1668, 0.0
    %v2110 = vmax.f32 %v1864, 0.0
    %v2111 = vmax.f32 %v2060, 0.0
    %v2112 = vmax.f32 %v1474, 0.0
    %v2113 = vmax.f32 %v1670, 0.0
    %v2114 = vmax.f32 %v1866, 0.0
    %v2115 = vmax.f32 %v2062, 0.0
    %v2116 = vmax.f32 %v1477, 0.0
    %v2117 = vmax.f32 %v1673, 0.0
    %v2118 = vmax.f32 %v1869, 0.0
    %v2119 = vmax.f32 %v2065, 0.0
    %v2120 = vmax.f32 %v1479, 0.0
    %v2121 = vmax.f32 %v1675, 0.0
    %v2122 = vmax.f32 %v1871, 0.0
    %v2123 = vmax.f32 %v2067, 0.0
    %v2124 = vmax.f32 %v1482, 0.0
    %v2125 = vmax.f32 %v1678, 0.0
    %v2126 = vmax.f32 %v1874, 0.0
    %v2127 = vmax.f32 %v2070, 0.0
    %v2128 = vmax.f32 %v1484, 0.0
    %v2129 = vmax.f32 %v1680, 0.0
    %v2130 = vmax.f32 %v1876, 0.0
    %v2131 = vmax.f32 %v2072, 0.0
    %v2132 = vmax.f32 %v1487, 0.0
    %v2133 = vmax.f32 %v1683, 0.0
    %v2134 = vmax.f32 %v1879, 0.0
    %v2135 = vmax.f32 %v2075, 0.0
    %v2136 = vmax.f32 %v1489, 0.0
    %v2137 = vmax.f32 %v1685, 0.0
    %v2138 = vmax.f32 %v1881, 0.0
    %v2139 = vmax.f32 %v2077, 0.0
    %v2140 = vmax.f32 %v1492, 0.0
    %v2141 = vmax.f32 %v1688, 0.0
    %v2142 = vmax.f32 %v1884, 0.0
    %v2143 = vmax.f32 %v2080, 0.0
    %v2144 = vmax.f32 %v1494, 0.0
    %v2145 = vmax.f32 %v1690, 0.0
    %v2146 = vmax.f32 %v1886, 0.0
    %v2147 = vmax.f32 %v2082, 0.0
    %v2148 = vpack.c.bf16 %v2088, %v2084
    %v2149 = vpack.c.bf16 %v2089, %v2085
    %v2150 = vpack.c.bf16 %v2090, %v2086
    %v2151 = vpack.c.bf16 %v2091, %v2087
    %v2152 = vpack.c.bf16 %v2096, %v2092
    %v2153 = vpack.c.bf16 %v2097, %v2093
    %v2154 = vpack.c.bf16 %v2098, %v2094
    %v2155 = vpack.c.bf16 %v2099, %v2095
    %v2156 = vpack.c.bf16 %v2104, %v2100
    %v2157 = vpack.c.bf16 %v2105, %v2101
    %v2158 = vpack.c.bf16 %v2106, %v2102
    %v2159 = vpack.c.bf16 %v2107, %v2103
    %v2160 = vpack.c.bf16 %v2112, %v2108
    %v2161 = vpack.c.bf16 %v2113, %v2109
    %v2162 = vpack.c.bf16 %v2114, %v2110
    %v2163 = vpack.c.bf16 %v2115, %v2111
    %v2164 = vpack.c.bf16 %v2120, %v2116
    %v2165 = vpack.c.bf16 %v2121, %v2117
    %v2166 = vpack.c.bf16 %v2122, %v2118
    %v2167 = vpack.c.bf16 %v2123, %v2119
    %v2168 = vpack.c.bf16 %v2128, %v2124
    %v2169 = vpack.c.bf16 %v2129, %v2125
    %v2170 = vpack.c.bf16 %v2130, %v2126
    %v2171 = vpack.c.bf16 %v2131, %v2127
    %v2172 = vpack.c.bf16 %v2136, %v2132
    %v2173 = vpack.c.bf16 %v2137, %v2133
    %v2174 = vpack.c.bf16 %v2138, %v2134
    %v2175 = vpack.c.bf16 %v2139, %v2135
    %v2176 = vpack.c.bf16 %v2144, %v2140
    %v2177 = vpack.c.bf16 %v2145, %v2141
    %v2178 = vpack.c.bf16 %v2146, %v2142
    %v2179 = vpack.c.bf16 %v2147, %v2143
    %v2180 = vld [vmem:[#allocation4] sm:$0xff]
    %v2181 = vld [vmem:[#allocation4 + $0x8] sm:$0xff]
    %v2182 = vld [vmem:[#allocation4 + $0x10] sm:$0xff]
    %v2183 = vld [vmem:[#allocation4 + $0x18] sm:$0xff]
    %v2184 = vld [vmem:[#allocation4 + $0x20] sm:$0xff]
    %v2185 = vld [vmem:[#allocation4 + $0x28] sm:$0xff]
    %v2186 = vld [vmem:[#allocation4 + $0x30] sm:$0xff]
    %v2187 = vld [vmem:[#allocation4 + $0x38] sm:$0xff]
    %v2188 = vld [vmem:[#allocation4 + $0x40] sm:$0xff]
    %v2189 = vld [vmem:[#allocation4 + $0x48] sm:$0xff]
    %v2190 = vld [vmem:[#allocation4 + $0x50] sm:$0xff]
    %v2191 = vld [vmem:[#allocation4 + $0x58] sm:$0xff]
    %v2192 = vld [vmem:[#allocation4 + $0x60] sm:$0xff]
    %v2193 = vld [vmem:[#allocation4 + $0x68] sm:$0xff]
    %v2194 = vld [vmem:[#allocation4 + $0x70] sm:$0xff]
    %v2195 = vld [vmem:[#allocation4 + $0x78] sm:$0xff]
    %v2196 = vld [vmem:[#allocation4 + $0x80] sm:$0xff]
    %v2197 = vld [vmem:[#allocation4 + $0x88] sm:$0xff]
    %v2198 = vld [vmem:[#allocation4 + $0x90] sm:$0xff]
    %v2199 = vld [vmem:[#allocation4 + $0x98] sm:$0xff]
    %v2200 = vld [vmem:[#allocation4 + $0xa0] sm:$0xff]
    %v2201 = vld [vmem:[#allocation4 + $0xa8] sm:$0xff]
    %v2202 = vld [vmem:[#allocation4 + $0xb0] sm:$0xff]
    %v2203 = vld [vmem:[#allocation4 + $0xb8] sm:$0xff]
    %v2204 = vld [vmem:[#allocation4 + $0xc0] sm:$0xff]
    %v2205 = vld [vmem:[#allocation4 + $0xc8] sm:$0xff]
    %v2206 = vld [vmem:[#allocation4 + $0xd0] sm:$0xff]
    %v2207 = vld [vmem:[#allocation4 + $0xd8] sm:$0xff]
    %v2208 = vld [vmem:[#allocation4 + $0xe0] sm:$0xff]
    %v2209 = vld [vmem:[#allocation4 + $0xe8] sm:$0xff]
    %v2210 = vld [vmem:[#allocation4 + $0xf0] sm:$0xff]
    %v2211 = vld [vmem:[#allocation4 + $0xf8] sm:$0xff]
    %v2212 = vld [vmem:[#allocation4 + $0x100] sm:$0xff]
    %v2213 = vld [vmem:[#allocation4 + $0x108] sm:$0xff]
    %v2214 = vld [vmem:[#allocation4 + $0x110] sm:$0xff]
    %v2215 = vld [vmem:[#allocation4 + $0x118] sm:$0xff]
    %v2216 = vld [vmem:[#allocation4 + $0x120] sm:$0xff]
    %v2217 = vld [vmem:[#allocation4 + $0x128] sm:$0xff]
    %v2218 = vld [vmem:[#allocation4 + $0x130] sm:$0xff]
    %v2219 = vld [vmem:[#allocation4 + $0x138] sm:$0xff]
    %v2220 = vld [vmem:[#allocation4 + $0x140] sm:$0xff]
    %v2221 = vld [vmem:[#allocation4 + $0x148] sm:$0xff]
    %v2222 = vld [vmem:[#allocation4 + $0x150] sm:$0xff]
    %v2223 = vld [vmem:[#allocation4 + $0x158] sm:$0xff]
    %v2224 = vld [vmem:[#allocation4 + $0x160] sm:$0xff]
    %v2225 = vld [vmem:[#allocation4 + $0x168] sm:$0xff]
    %v2226 = vld [vmem:[#allocation4 + $0x170] sm:$0xff]
    %v2227 = vld [vmem:[#allocation4 + $0x178] sm:$0xff]
    %v2228 = vld [vmem:[#allocation4 + $0x180] sm:$0xff]
    %v2229 = vld [vmem:[#allocation4 + $0x188] sm:$0xff]
    %v2230 = vld [vmem:[#allocation4 + $0x190] sm:$0xff]
    %v2231 = vld [vmem:[#allocation4 + $0x198] sm:$0xff]
    %v2232 = vld [vmem:[#allocation4 + $0x1a0] sm:$0xff]
    %v2233 = vld [vmem:[#allocation4 + $0x1a8] sm:$0xff]
    %v2234 = vld [vmem:[#allocation4 + $0x1b0] sm:$0xff]
    %v2235 = vld [vmem:[#allocation4 + $0x1b8] sm:$0xff]
    %v2236 = vld [vmem:[#allocation4 + $0x1c0] sm:$0xff]
    %v2237 = vld [vmem:[#allocation4 + $0x1c8] sm:$0xff]
    %v2238 = vld [vmem:[#allocation4 + $0x1d0] sm:$0xff]
    %v2239 = vld [vmem:[#allocation4 + $0x1d8] sm:$0xff]
    %v2240 = vld [vmem:[#allocation4 + $0x1e0] sm:$0xff]
    %v2241 = vld [vmem:[#allocation4 + $0x1e8] sm:$0xff]
    %v2242 = vld [vmem:[#allocation4 + $0x1f0] sm:$0xff]
    %v2243 = vld [vmem:[#allocation4 + $0x1f8] sm:$0xff]
    %v2244 = vld [vmem:[#allocation4 + $0x200] sm:$0xff]
    %v2245 = vld [vmem:[#allocation4 + $0x208] sm:$0xff]
    %v2246 = vld [vmem:[#allocation4 + $0x210] sm:$0xff]
    %v2247 = vld [vmem:[#allocation4 + $0x218] sm:$0xff]
    %v2248 = vld [vmem:[#allocation4 + $0x220] sm:$0xff]
    %v2249 = vld [vmem:[#allocation4 + $0x228] sm:$0xff]
    %v2250 = vld [vmem:[#allocation4 + $0x230] sm:$0xff]
    %v2251 = vld [vmem:[#allocation4 + $0x238] sm:$0xff]
    %v2252 = vld [vmem:[#allocation4 + $0x240] sm:$0xff]
    %v2253 = vld [vmem:[#allocation4 + $0x248] sm:$0xff]
    %v2254 = vld [vmem:[#allocation4 + $0x250] sm:$0xff]
    %v2255 = vld [vmem:[#allocation4 + $0x258] sm:$0xff]
    %v2256 = vld [vmem:[#allocation4 + $0x260] sm:$0xff]
    %v2257 = vld [vmem:[#allocation4 + $0x268] sm:$0xff]
    %v2258 = vld [vmem:[#allocation4 + $0x270] sm:$0xff]
    %v2259 = vld [vmem:[#allocation4 + $0x278] sm:$0xff]
    %v2260 = vld [vmem:[#allocation4 + $0x280] sm:$0xff]
    %v2261 = vld [vmem:[#allocation4 + $0x288] sm:$0xff]
    %v2262 = vld [vmem:[#allocation4 + $0x290] sm:$0xff]
    %v2263 = vld [vmem:[#allocation4 + $0x298] sm:$0xff]
    %v2264 = vld [vmem:[#allocation4 + $0x2a0] sm:$0xff]
    %v2265 = vld [vmem:[#allocation4 + $0x2a8] sm:$0xff]
    %v2266 = vld [vmem:[#allocation4 + $0x2b0] sm:$0xff]
    %v2267 = vld [vmem:[#allocation4 + $0x2b8] sm:$0xff]
    %v2268 = vld [vmem:[#allocation4 + $0x2c0] sm:$0xff]
    %v2269 = vld [vmem:[#allocation4 + $0x2c8] sm:$0xff]
    %v2270 = vld [vmem:[#allocation4 + $0x2d0] sm:$0xff]
    %v2271 = vld [vmem:[#allocation4 + $0x2d8] sm:$0xff]
    %v2272 = vld [vmem:[#allocation4 + $0x2e0] sm:$0xff]
    %v2273 = vld [vmem:[#allocation4 + $0x2e8] sm:$0xff]
    %v2274 = vld [vmem:[#allocation4 + $0x2f0] sm:$0xff]
    %v2275 = vld [vmem:[#allocation4 + $0x2f8] sm:$0xff]
    %v2276 = vld [vmem:[#allocation4 + $0x300] sm:$0xff]
    %v2277 = vld [vmem:[#allocation4 + $0x308] sm:$0xff]
    %v2278 = vld [vmem:[#allocation4 + $0x310] sm:$0xff]
    %v2279 = vld [vmem:[#allocation4 + $0x318] sm:$0xff]
    %v2280 = vld [vmem:[#allocation4 + $0x320] sm:$0xff]
    %v2281 = vld [vmem:[#allocation4 + $0x328] sm:$0xff]
    %v2282 = vld [vmem:[#allocation4 + $0x330] sm:$0xff]
    %v2283 = vld [vmem:[#allocation4 + $0x338] sm:$0xff]
    %v2284 = vld [vmem:[#allocation4 + $0x340] sm:$0xff]
    %v2285 = vld [vmem:[#allocation4 + $0x348] sm:$0xff]
    %v2286 = vld [vmem:[#allocation4 + $0x350] sm:$0xff]
    %v2287 = vld [vmem:[#allocation4 + $0x358] sm:$0xff]
    %v2288 = vld [vmem:[#allocation4 + $0x360] sm:$0xff]
    %v2289 = vld [vmem:[#allocation4 + $0x368] sm:$0xff]
    %v2290 = vld [vmem:[#allocation4 + $0x370] sm:$0xff]
    %v2291 = vld [vmem:[#allocation4 + $0x378] sm:$0xff]
    %v2292 = vld [vmem:[#allocation4 + $0x380] sm:$0xff]
    %v2293 = vld [vmem:[#allocation4 + $0x388] sm:$0xff]
    %v2294 = vld [vmem:[#allocation4 + $0x390] sm:$0xff]
    %v2295 = vld [vmem:[#allocation4 + $0x398] sm:$0xff]
    %v2296 = vld [vmem:[#allocation4 + $0x3a0] sm:$0xff]
    %v2297 = vld [vmem:[#allocation4 + $0x3a8] sm:$0xff]
    %v2298 = vld [vmem:[#allocation4 + $0x3b0] sm:$0xff]
    %v2299 = vld [vmem:[#allocation4 + $0x3b8] sm:$0xff]
    %v2300 = vld [vmem:[#allocation4 + $0x3c0] sm:$0xff]
    %v2301 = vld [vmem:[#allocation4 + $0x3c8] sm:$0xff]
    %v2302 = vld [vmem:[#allocation4 + $0x3d0] sm:$0xff]
    %v2303 = vld [vmem:[#allocation4 + $0x3d8] sm:$0xff]
    %v2304 = vld [vmem:[#allocation4 + $0x3e0] sm:$0xff]
    %v2305 = vld [vmem:[#allocation4 + $0x3e8] sm:$0xff]
    %v2306 = vld [vmem:[#allocation4 + $0x3f0] sm:$0xff]
    %v2307 = vld [vmem:[#allocation4 + $0x3f8] sm:$0xff]
    %v2308 = vld [vmem:[%s6] sm:$0xf]
    %v2310 = vperm.slane %v2308, 0
    %v2311 = vperm.slane %v2308, 1
    %v2312 = vperm.slane %v2308, 2
    %v2313 = vperm.slane %v2308, 3
    %v2446 = vunpack.c.l.b16 %v2180
    %v2447 = vunpack.c.h.b16 %v2180
    %v2448 = vunpack.c.l.b16 %v2181
    %v2449 = vunpack.c.h.b16 %v2181
    %v2450 = vunpack.c.l.b16 %v2182
    %v2451 = vunpack.c.h.b16 %v2182
    %v2452 = vunpack.c.l.b16 %v2183
    %v2453 = vunpack.c.h.b16 %v2183
    %v2454 = vunpack.c.l.b16 %v2184
    %v2455 = vunpack.c.h.b16 %v2184
    %v2456 = vunpack.c.l.b16 %v2185
    %v2457 = vunpack.c.h.b16 %v2185
    %v2458 = vunpack.c.l.b16 %v2186
    %v2459 = vunpack.c.h.b16 %v2186
    %v2460 = vunpack.c.l.b16 %v2187
    %v2461 = vunpack.c.h.b16 %v2187
    %v2462 = vunpack.c.l.b16 %v2188
    %v2463 = vunpack.c.h.b16 %v2188
    %v2464 = vunpack.c.l.b16 %v2189
    %v2465 = vunpack.c.h.b16 %v2189
    %v2466 = vunpack.c.l.b16 %v2190
    %v2467 = vunpack.c.h.b16 %v2190
    %v2468 = vunpack.c.l.b16 %v2191
    %v2469 = vunpack.c.h.b16 %v2191
    %v2470 = vunpack.c.l.b16 %v2192
    %v2471 = vunpack.c.h.b16 %v2192
    %v2472 = vunpack.c.l.b16 %v2193
    %v2473 = vunpack.c.h.b16 %v2193
    %v2474 = vunpack.c.l.b16 %v2194
    %v2475 = vunpack.c.h.b16 %v2194
    %v2476 = vunpack.c.l.b16 %v2195
    %v2477 = vunpack.c.h.b16 %v2195
    %v2478 = vunpack.c.l.b16 %v2196
    %v2479 = vunpack.c.h.b16 %v2196
    %v2480 = vunpack.c.l.b16 %v2197
    %v2481 = vunpack.c.h.b16 %v2197
    %v2482 = vunpack.c.l.b16 %v2198
    %v2483 = vunpack.c.h.b16 %v2198
    %v2484 = vunpack.c.l.b16 %v2199
    %v2485 = vunpack.c.h.b16 %v2199
    %v2486 = vunpack.c.l.b16 %v2200
    %v2487 = vunpack.c.h.b16 %v2200
    %v2488 = vunpack.c.l.b16 %v2201
    %v2489 = vunpack.c.h.b16 %v2201
    %v2490 = vunpack.c.l.b16 %v2202
    %v2491 = vunpack.c.h.b16 %v2202
    %v2492 = vunpack.c.l.b16 %v2203
    %v2493 = vunpack.c.h.b16 %v2203
    %v2494 = vunpack.c.l.b16 %v2204
    %v2495 = vunpack.c.h.b16 %v2204
    %v2496 = vunpack.c.l.b16 %v2205
    %v2497 = vunpack.c.h.b16 %v2205
    %v2498 = vunpack.c.l.b16 %v2206
    %v2499 = vunpack.c.h.b16 %v2206
    %v2500 = vunpack.c.l.b16 %v2207
    %v2501 = vunpack.c.h.b16 %v2207
    %v2502 = vunpack.c.l.b16 %v2208
    %v2503 = vunpack.c.h.b16 %v2208
    %v2504 = vunpack.c.l.b16 %v2209
    %v2505 = vunpack.c.h.b16 %v2209
    %v2506 = vunpack.c.l.b16 %v2210
    %v2507 = vunpack.c.h.b16 %v2210
    %v2508 = vunpack.c.l.b16 %v2211
    %v2509 = vunpack.c.h.b16 %v2211
    %v2510 = vunpack.c.l.b16 %v2212
    %v2511 = vunpack.c.h.b16 %v2212
    %v2512 = vunpack.c.l.b16 %v2213
    %v2513 = vunpack.c.h.b16 %v2213
    %v2514 = vunpack.c.l.b16 %v2214
    %v2515 = vunpack.c.h.b16 %v2214
    %v2516 = vunpack.c.l.b16 %v2215
    %v2517 = vunpack.c.h.b16 %v2215
    %v2518 = vunpack.c.l.b16 %v2216
    %v2519 = vunpack.c.h.b16 %v2216
    %v2520 = vunpack.c.l.b16 %v2217
    %v2521 = vunpack.c.h.b16 %v2217
    %v2522 = vunpack.c.l.b16 %v2218
    %v2523 = vunpack.c.h.b16 %v2218
    %v2524 = vunpack.c.l.b16 %v2219
    %v2525 = vunpack.c.h.b16 %v2219
    %v2526 = vunpack.c.l.b16 %v2220
    %v2527 = vunpack.c.h.b16 %v2220
    %v2528 = vunpack.c.l.b16 %v2221
    %v2529 = vunpack.c.h.b16 %v2221
    %v2530 = vunpack.c.l.b16 %v2222
    %v2531 = vunpack.c.h.b16 %v2222
    %v2532 = vunpack.c.l.b16 %v2223
    %v2533 = vunpack.c.h.b16 %v2223
    %v2534 = vunpack.c.l.b16 %v2224
    %v2535 = vunpack.c.h.b16 %v2224
    %v2536 = vunpack.c.l.b16 %v2225
    %v2537 = vunpack.c.h.b16 %v2225
    %v2538 = vunpack.c.l.b16 %v2226
    %v2539 = vunpack.c.h.b16 %v2226
    %v2540 = vunpack.c.l.b16 %v2227
    %v2541 = vunpack.c.h.b16 %v2227
    %v2542 = vunpack.c.l.b16 %v2228
    %v2543 = vunpack.c.h.b16 %v2228
    %v2544 = vunpack.c.l.b16 %v2229
    %v2545 = vunpack.c.h.b16 %v2229
    %v2546 = vunpack.c.l.b16 %v2230
    %v2547 = vunpack.c.h.b16 %v2230
    %v2548 = vunpack.c.l.b16 %v2231
    %v2549 = vunpack.c.h.b16 %v2231
    %v2550 = vunpack.c.l.b16 %v2232
    %v2551 = vunpack.c.h.b16 %v2232
    %v2552 = vunpack.c.l.b16 %v2233
    %v2553 = vunpack.c.h.b16 %v2233
    %v2554 = vunpack.c.l.b16 %v2234
    %v2555 = vunpack.c.h.b16 %v2234
    %v2556 = vunpack.c.l.b16 %v2235
    %v2557 = vunpack.c.h.b16 %v2235
    %v2558 = vunpack.c.l.b16 %v2236
    %v2559 = vunpack.c.h.b16 %v2236
    %v2560 = vunpack.c.l.b16 %v2237
    %v2561 = vunpack.c.h.b16 %v2237
    %v2562 = vunpack.c.l.b16 %v2238
    %v2563 = vunpack.c.h.b16 %v2238
    %v2564 = vunpack.c.l.b16 %v2239
    %v2565 = vunpack.c.h.b16 %v2239
    %v2566 = vunpack.c.l.b16 %v2240
    %v2567 = vunpack.c.h.b16 %v2240
    %v2568 = vunpack.c.l.b16 %v2241
    %v2569 = vunpack.c.h.b16 %v2241
    %v2570 = vunpack.c.l.b16 %v2242
    %v2571 = vunpack.c.h.b16 %v2242
    %v2572 = vunpack.c.l.b16 %v2243
    %v2573 = vunpack.c.h.b16 %v2243
    %v2574 = vunpack.c.l.b16 %v2244
    %v2575 = vunpack.c.h.b16 %v2244
    %v2576 = vunpack.c.l.b16 %v2245
    %v2577 = vunpack.c.h.b16 %v2245
    %v2578 = vunpack.c.l.b16 %v2246
    %v2579 = vunpack.c.h.b16 %v2246
    %v2580 = vunpack.c.l.b16 %v2247
    %v2581 = vunpack.c.h.b16 %v2247
    %v2582 = vunpack.c.l.b16 %v2248
    %v2583 = vunpack.c.h.b16 %v2248
    %v2584 = vunpack.c.l.b16 %v2249
    %v2585 = vunpack.c.h.b16 %v2249
    %v2586 = vunpack.c.l.b16 %v2250
    %v2587 = vunpack.c.h.b16 %v2250
    %v2588 = vunpack.c.l.b16 %v2251
    %v2589 = vunpack.c.h.b16 %v2251
    %v2590 = vunpack.c.l.b16 %v2252
    %v2591 = vunpack.c.h.b16 %v2252
    %v2592 = vunpack.c.l.b16 %v2253
    %v2593 = vunpack.c.h.b16 %v2253
    %v2594 = vunpack.c.l.b16 %v2254
    %v2595 = vunpack.c.h.b16 %v2254
    %v2596 = vunpack.c.l.b16 %v2255
    %v2597 = vunpack.c.h.b16 %v2255
    %v2598 = vunpack.c.l.b16 %v2256
    %v2599 = vunpack.c.h.b16 %v2256
    %v2600 = vunpack.c.l.b16 %v2257
    %v2601 = vunpack.c.h.b16 %v2257
    %v2602 = vunpack.c.l.b16 %v2258
    %v2603 = vunpack.c.h.b16 %v2258
    %v2604 = vunpack.c.l.b16 %v2259
    %v2605 = vunpack.c.h.b16 %v2259
    %v2606 = vunpack.c.l.b16 %v2260
    %v2607 = vunpack.c.h.b16 %v2260
    %v2608 = vunpack.c.l.b16 %v2261
    %v2609 = vunpack.c.h.b16 %v2261
    %v2610 = vunpack.c.l.b16 %v2262
    %v2611 = vunpack.c.h.b16 %v2262
    %v2612 = vunpack.c.l.b16 %v2263
    %v2613 = vunpack.c.h.b16 %v2263
    %v2614 = vunpack.c.l.b16 %v2264
    %v2615 = vunpack.c.h.b16 %v2264
    %v2616 = vunpack.c.l.b16 %v2265
    %v2617 = vunpack.c.h.b16 %v2265
    %v2618 = vunpack.c.l.b16 %v2266
    %v2619 = vunpack.c.h.b16 %v2266
    %v2620 = vunpack.c.l.b16 %v2267
    %v2621 = vunpack.c.h.b16 %v2267
    %v2622 = vunpack.c.l.b16 %v2268
    %v2623 = vunpack.c.h.b16 %v2268
    %v2624 = vunpack.c.l.b16 %v2269
    %v2625 = vunpack.c.h.b16 %v2269
    %v2626 = vunpack.c.l.b16 %v2270
    %v2627 = vunpack.c.h.b16 %v2270
    %v2628 = vunpack.c.l.b16 %v2271
    %v2629 = vunpack.c.h.b16 %v2271
    %v2630 = vunpack.c.l.b16 %v2272
    %v2631 = vunpack.c.h.b16 %v2272
    %v2632 = vunpack.c.l.b16 %v2273
    %v2633 = vunpack.c.h.b16 %v2273
    %v2634 = vunpack.c.l.b16 %v2274
    %v2635 = vunpack.c.h.b16 %v2274
    %v2636 = vunpack.c.l.b16 %v2275
    %v2637 = vunpack.c.h.b16 %v2275
    %v2638 = vunpack.c.l.b16 %v2276
    %v2639 = vunpack.c.h.b16 %v2276
    %v2640 = vunpack.c.l.b16 %v2277
    %v2641 = vunpack.c.h.b16 %v2277
    %v2642 = vunpack.c.l.b16 %v2278
    %v2643 = vunpack.c.h.b16 %v2278
    %v2644 = vunpack.c.l.b16 %v2279
    %v2645 = vunpack.c.h.b16 %v2279
    %v2646 = vunpack.c.l.b16 %v2280
    %v2647 = vunpack.c.h.b16 %v2280
    %v2648 = vunpack.c.l.b16 %v2281
    %v2649 = vunpack.c.h.b16 %v2281
    %v2650 = vunpack.c.l.b16 %v2282
    %v2651 = vunpack.c.h.b16 %v2282
    %v2652 = vunpack.c.l.b16 %v2283
    %v2653 = vunpack.c.h.b16 %v2283
    %v2654 = vunpack.c.l.b16 %v2284
    %v2655 = vunpack.c.h.b16 %v2284
    %v2656 = vunpack.c.l.b16 %v2285
    %v2657 = vunpack.c.h.b16 %v2285
    %v2658 = vunpack.c.l.b16 %v2286
    %v2659 = vunpack.c.h.b16 %v2286
    %v2660 = vunpack.c.l.b16 %v2287
    %v2661 = vunpack.c.h.b16 %v2287
    %v2662 = vunpack.c.l.b16 %v2288
    %v2663 = vunpack.c.h.b16 %v2288
    %v2664 = vunpack.c.l.b16 %v2289
    %v2665 = vunpack.c.h.b16 %v2289
    %v2666 = vunpack.c.l.b16 %v2290
    %v2667 = vunpack.c.h.b16 %v2290
    %v2668 = vunpack.c.l.b16 %v2291
    %v2669 = vunpack.c.h.b16 %v2291
    %v2670 = vunpack.c.l.b16 %v2292
    %v2671 = vunpack.c.h.b16 %v2292
    %v2672 = vunpack.c.l.b16 %v2293
    %v2673 = vunpack.c.h.b16 %v2293
    %v2674 = vunpack.c.l.b16 %v2294
    %v2675 = vunpack.c.h.b16 %v2294
    %v2676 = vunpack.c.l.b16 %v2295
    %v2677 = vunpack.c.h.b16 %v2295
    %v2678 = vunpack.c.l.b16 %v2296
    %v2679 = vunpack.c.h.b16 %v2296
    %v2680 = vunpack.c.l.b16 %v2297
    %v2681 = vunpack.c.h.b16 %v2297
    %v2682 = vunpack.c.l.b16 %v2298
    %v2683 = vunpack.c.h.b16 %v2298
    %v2684 = vunpack.c.l.b16 %v2299
    %v2685 = vunpack.c.h.b16 %v2299
    %v2686 = vunpack.c.l.b16 %v2300
    %v2687 = vunpack.c.h.b16 %v2300
    %v2688 = vunpack.c.l.b16 %v2301
    %v2689 = vunpack.c.h.b16 %v2301
    %v2690 = vunpack.c.l.b16 %v2302
    %v2691 = vunpack.c.h.b16 %v2302
    %v2692 = vunpack.c.l.b16 %v2303
    %v2693 = vunpack.c.h.b16 %v2303
    %v2694 = vunpack.c.l.b16 %v2304
    %v2695 = vunpack.c.h.b16 %v2304
    %v2696 = vunpack.c.l.b16 %v2305
    %v2697 = vunpack.c.h.b16 %v2305
    %v2698 = vunpack.c.l.b16 %v2306
    %v2699 = vunpack.c.h.b16 %v2306
    %v2700 = vunpack.c.l.b16 %v2307
    %v2701 = vunpack.c.h.b16 %v2307
    %v2702 = vpack.c.b16 %v2450, %v2446
    %v2703 = vpack.c.b16 %v2451, %v2447
    %v2704 = vpack.c.b16 %v2452, %v2448
    %v2705 = vpack.c.b16 %v2453, %v2449
    %v2706 = vpack.c.b16 %v2458, %v2454
    %v2707 = vpack.c.b16 %v2459, %v2455
    %v2708 = vpack.c.b16 %v2460, %v2456
    %v2709 = vpack.c.b16 %v2461, %v2457
    %v2710 = vpack.c.b16 %v2466, %v2462
    %v2711 = vpack.c.b16 %v2467, %v2463
    %v2712 = vpack.c.b16 %v2468, %v2464
    %v2713 = vpack.c.b16 %v2469, %v2465
    %v2714 = vpack.c.b16 %v2474, %v2470
    %v2715 = vpack.c.b16 %v2475, %v2471
    %v2716 = vpack.c.b16 %v2476, %v2472
    %v2717 = vpack.c.b16 %v2477, %v2473
    %v2718 = vpack.c.b16 %v2482, %v2478
    %v2719 = vpack.c.b16 %v2483, %v2479
    %v2720 = vpack.c.b16 %v2484, %v2480
    %v2721 = vpack.c.b16 %v2485, %v2481
    %v2722 = vpack.c.b16 %v2490, %v2486
    %v2723 = vpack.c.b16 %v2491, %v2487
    %v2724 = vpack.c.b16 %v2492, %v2488
    %v2725 = vpack.c.b16 %v2493, %v2489
    %v2726 = vpack.c.b16 %v2498, %v2494
    %v2727 = vpack.c.b16 %v2499, %v2495
    %v2728 = vpack.c.b16 %v2500, %v2496
    %v2729 = vpack.c.b16 %v2501, %v2497
    %v2730 = vpack.c.b16 %v2506, %v2502
    %v2731 = vpack.c.b16 %v2507, %v2503
    %v2732 = vpack.c.b16 %v2508, %v2504
    %v2733 = vpack.c.b16 %v2509, %v2505
    %v2734 = vpack.c.b16 %v2514, %v2510
    %v2735 = vpack.c.b16 %v2515, %v2511
    %v2736 = vpack.c.b16 %v2516, %v2512
    %v2737 = vpack.c.b16 %v2517, %v2513
    %v2738 = vpack.c.b16 %v2522, %v2518
    %v2739 = vpack.c.b16 %v2523, %v2519
    %v2740 = vpack.c.b16 %v2524, %v2520
    %v2741 = vpack.c.b16 %v2525, %v2521
    %v2742 = vpack.c.b16 %v2530, %v2526
    %v2743 = vpack.c.b16 %v2531, %v2527
    %v2744 = vpack.c.b16 %v2532, %v2528
    %v2745 = vpack.c.b16 %v2533, %v2529
    %v2746 = vpack.c.b16 %v2538, %v2534
    %v2747 = vpack.c.b16 %v2539, %v2535
    %v2748 = vpack.c.b16 %v2540, %v2536
    %v2749 = vpack.c.b16 %v2541, %v2537
    %v2750 = vpack.c.b16 %v2546, %v2542
    %v2751 = vpack.c.b16 %v2547, %v2543
    %v2752 = vpack.c.b16 %v2548, %v2544
    %v2753 = vpack.c.b16 %v2549, %v2545
    %v2754 = vpack.c.b16 %v2554, %v2550
    %v2755 = vpack.c.b16 %v2555, %v2551
    %v2756 = vpack.c.b16 %v2556, %v2552
    %v2757 = vpack.c.b16 %v2557, %v2553
    %v2758 = vpack.c.b16 %v2562, %v2558
    %v2759 = vpack.c.b16 %v2563, %v2559
    %v2760 = vpack.c.b16 %v2564, %v2560
    %v2761 = vpack.c.b16 %v2565, %v2561
    %v2762 = vpack.c.b16 %v2570, %v2566
    %v2763 = vpack.c.b16 %v2571, %v2567
    %v2764 = vpack.c.b16 %v2572, %v2568
    %v2765 = vpack.c.b16 %v2573, %v2569
    %v2766 = vpack.c.b16 %v2578, %v2574
    %v2767 = vpack.c.b16 %v2579, %v2575
    %v2768 = vpack.c.b16 %v2580, %v2576
    %v2769 = vpack.c.b16 %v2581, %v2577
    %v2770 = vpack.c.b16 %v2586, %v2582
    %v2771 = vpack.c.b16 %v2587, %v2583
    %v2772 = vpack.c.b16 %v2588, %v2584
    %v2773 = vpack.c.b16 %v2589, %v2585
    %v2774 = vpack.c.b16 %v2594, %v2590
    %v2775 = vpack.c.b16 %v2595, %v2591
    %v2776 = vpack.c.b16 %v2596, %v2592
    %v2777 = vpack.c.b16 %v2597, %v2593
    %v2778 = vpack.c.b16 %v2602, %v2598
    %v2779 = vpack.c.b16 %v2603, %v2599
    %v2780 = vpack.c.b16 %v2604, %v2600
    %v2781 = vpack.c.b16 %v2605, %v2601
    %v2782 = vpack.c.b16 %v2610, %v2606
    %v2783 = vpack.c.b16 %v2611, %v2607
    %v2784 = vpack.c.b16 %v2612, %v2608
    %v2785 = vpack.c.b16 %v2613, %v2609
    %v2786 = vpack.c.b16 %v2618, %v2614
    %v2787 = vpack.c.b16 %v2619, %v2615
    %v2788 = vpack.c.b16 %v2620, %v2616
    %v2789 = vpack.c.b16 %v2621, %v2617
    %v2790 = vpack.c.b16 %v2626, %v2622
    %v2791 = vpack.c.b16 %v2627, %v2623
    %v2792 = vpack.c.b16 %v2628, %v2624
    %v2793 = vpack.c.b16 %v2629, %v2625
    %v2794 = vpack.c.b16 %v2634, %v2630
    %v2795 = vpack.c.b16 %v2635, %v2631
    %v2796 = vpack.c.b16 %v2636, %v2632
    %v2797 = vpack.c.b16 %v2637, %v2633
    %v2798 = vpack.c.b16 %v2642, %v2638
    %v2799 = vpack.c.b16 %v2643, %v2639
    %v2800 = vpack.c.b16 %v2644, %v2640
    %v2801 = vpack.c.b16 %v2645, %v2641
    %v2802 = vpack.c.b16 %v2650, %v2646
    %v2803 = vpack.c.b16 %v2651, %v2647
    %v2804 = vpack.c.b16 %v2652, %v2648
    %v2805 = vpack.c.b16 %v2653, %v2649
    %v2806 = vpack.c.b16 %v2658, %v2654
    %v2807 = vpack.c.b16 %v2659, %v2655
    %v2808 = vpack.c.b16 %v2660, %v2656
    %v2809 = vpack.c.b16 %v2661, %v2657
    %v2810 = vpack.c.b16 %v2666, %v2662
    %v2811 = vpack.c.b16 %v2667, %v2663
    %v2812 = vpack.c.b16 %v2668, %v2664
    %v2813 = vpack.c.b16 %v2669, %v2665
    %v2814 = vpack.c.b16 %v2674, %v2670
    %v2815 = vpack.c.b16 %v2675, %v2671
    %v2816 = vpack.c.b16 %v2676, %v2672
    %v2817 = vpack.c.b16 %v2677, %v2673
    %v2818 = vpack.c.b16 %v2682, %v2678
    %v2819 = vpack.c.b16 %v2683, %v2679
    %v2820 = vpack.c.b16 %v2684, %v2680
    %v2821 = vpack.c.b16 %v2685, %v2681
    %v2822 = vpack.c.b16 %v2690, %v2686
    %v2823 = vpack.c.b16 %v2691, %v2687
    %v2824 = vpack.c.b16 %v2692, %v2688
    %v2825 = vpack.c.b16 %v2693, %v2689
    %v2826 = vpack.c.b16 %v2698, %v2694
    %v2827 = vpack.c.b16 %v2699, %v2695
    %v2828 = vpack.c.b16 %v2700, %v2696
    %v2829 = vpack.c.b16 %v2701, %v2697
    %2958 = vmatpush.bf16.msra.mxu0 %v2730
    %2959 = vmatpush.bf16.msra.mxu0 %v2726
    %2960 = vmatpush.bf16.msra.mxu0 %v2722
    %2961 = vmatpush.bf16.msra.mxu0 %v2718
    %2962 = vmatpush.bf16.msra.mxu0 %v2714
    %2963 = vmatpush.bf16.msra.mxu0 %v2710
    %2964 = vmatpush.bf16.msra.mxu0 %v2706
    %2965 = vmatpush.bf16.msra.mxu0 %v2702
    %2966 = vmatmul.bf16.gmra.mxu0 %v2148
    %v2967 = vpop.f32.mrf.mxu0
    %v2968 = vadd.f32 %v2310, %v2967
    %v2969 = vpop.f32.mrf.mxu0
    %v2970 = vadd.f32 %v2310, %v2969
    %2971 = vmatmul.bf16.gmra.mxu0 %v2152
    %v2972 = vpop.f32.mrf.mxu0
    %v2973 = vadd.f32 %v2310, %v2972
    %v2974 = vpop.f32.mrf.mxu0
    %v2975 = vadd.f32 %v2310, %v2974
    %2976 = vmatmul.bf16.gmra.mxu0 %v2156
    %v2977 = vpop.f32.mrf.mxu0
    %v2978 = vadd.f32 %v2310, %v2977
    %v2979 = vpop.f32.mrf.mxu0
    %v2980 = vadd.f32 %v2310, %v2979
    %2981 = vmatmul.bf16.gmra.mxu0 %v2160
    %v2982 = vpop.f32.mrf.mxu0
    %v2983 = vadd.f32 %v2310, %v2982
    %v2984 = vpop.f32.mrf.mxu0
    %v2985 = vadd.f32 %v2310, %v2984
    %2986 = vmatmul.bf16.gmra.mxu0 %v2164
    %v2987 = vpop.f32.mrf.mxu0
    %v2988 = vadd.f32 %v2310, %v2987
    %v2989 = vpop.f32.mrf.mxu0
    %v2990 = vadd.f32 %v2310, %v2989
    %2991 = vmatmul.bf16.gmra.mxu0 %v2168
    %v2992 = vpop.f32.mrf.mxu0
    %v2993 = vadd.f32 %v2310, %v2992
    %v2994 = vpop.f32.mrf.mxu0
    %v2995 = vadd.f32 %v2310, %v2994
    %2996 = vmatmul.bf16.gmra.mxu0 %v2172
    %v2997 = vpop.f32.mrf.mxu0
    %v2998 = vadd.f32 %v2310, %v2997
    %v2999 = vpop.f32.mrf.mxu0
    %v3000 = vadd.f32 %v2310, %v2999
    %3001 = vmatmul.bf16.gmra.mxu0 %v2176
    %v3002 = vpop.f32.mrf.mxu0
    %v3003 = vadd.f32 %v2310, %v3002
    %v3004 = vpop.f32.mrf.mxu0
    %v3005 = vadd.f32 %v2310, %v3004
    %3006 = vdwg.mxu0
    %3007 = vmatpush.bf16.msra.mxu0 %v2762
    %3008 = vmatpush.bf16.msra.mxu0 %v2758
    %3009 = vmatpush.bf16.msra.mxu0 %v2754
    %3010 = vmatpush.bf16.msra.mxu0 %v2750
    %3011 = vmatpush.bf16.msra.mxu0 %v2746
    %3012 = vmatpush.bf16.msra.mxu0 %v2742
    %3013 = vmatpush.bf16.msra.mxu0 %v2738
    %3014 = vmatpush.bf16.msra.mxu0 %v2734
    %3015 = vmatmul.bf16.gmra.mxu0 %v2149
    %v3016 = vpop.f32.mrf.mxu0
    %v3017 = vadd.f32 %v2968, %v3016
    %v3018 = vpop.f32.mrf.mxu0
    %v3019 = vadd.f32 %v2970, %v3018
    %3020 = vmatmul.bf16.gmra.mxu0 %v2153
    %v3021 = vpop.f32.mrf.mxu0
    %v3022 = vadd.f32 %v2973, %v3021
    %v3023 = vpop.f32.mrf.mxu0
    %v3024 = vadd.f32 %v2975, %v3023
    %3025 = vmatmul.bf16.gmra.mxu0 %v2157
    %v3026 = vpop.f32.mrf.mxu0
    %v3027 = vadd.f32 %v2978, %v3026
    %v3028 = vpop.f32.mrf.mxu0
    %v3029 = vadd.f32 %v2980, %v3028
    %3030 = vmatmul.bf16.gmra.mxu0 %v2161
    %v3031 = vpop.f32.mrf.mxu0
    %v3032 = vadd.f32 %v2983, %v3031
    %v3033 = vpop.f32.mrf.mxu0
    %v3034 = vadd.f32 %v2985, %v3033
    %3035 = vmatmul.bf16.gmra.mxu0 %v2165
    %v3036 = vpop.f32.mrf.mxu0
    %v3037 = vadd.f32 %v2988, %v3036
    %v3038 = vpop.f32.mrf.mxu0
    %v3039 = vadd.f32 %v2990, %v3038
    %3040 = vmatmul.bf16.gmra.mxu0 %v2169
    %v3041 = vpop.f32.mrf.mxu0
    %v3042 = vadd.f32 %v2993, %v3041
    %v3043 = vpop.f32.mrf.mxu0
    %v3044 = vadd.f32 %v2995, %v3043
    %3045 = vmatmul.bf16.gmra.mxu0 %v2173
    %v3046 = vpop.f32.mrf.mxu0
    %v3047 = vadd.f32 %v2998, %v3046
    %v3048 = vpop.f32.mrf.mxu0
    %v3049 = vadd.f32 %v3000, %v3048
    %3050 = vmatmul.bf16.gmra.mxu0 %v2177
    %v3051 = vpop.f32.mrf.mxu0
    %v3052 = vadd.f32 %v3003, %v3051
    %v3053 = vpop.f32.mrf.mxu0
    %v3054 = vadd.f32 %v3005, %v3053
    %3055 = vdwg.mxu0
    %3056 = vmatpush.bf16.msra.mxu0 %v2794
    %3057 = vmatpush.bf16.msra.mxu0 %v2790
    %3058 = vmatpush.bf16.msra.mxu0 %v2786
    %3059 = vmatpush.bf16.msra.mxu0 %v2782
    %3060 = vmatpush.bf16.msra.mxu0 %v2778
    %3061 = vmatpush.bf16.msra.mxu0 %v2774
    %3062 = vmatpush.bf16.msra.mxu0 %v2770
    %3063 = vmatpush.bf16.msra.mxu0 %v2766
    %3064 = vmatmul.bf16.gmra.mxu0 %v2150
    %v3065 = vpop.f32.mrf.mxu0
    %v3066 = vadd.f32 %v3017, %v3065
    %v3067 = vpop.f32.mrf.mxu0
    %v3068 = vadd.f32 %v3019, %v3067
    %3069 = vmatmul.bf16.gmra.mxu0 %v2154
    %v3070 = vpop.f32.mrf.mxu0
    %v3071 = vadd.f32 %v3022, %v3070
    %v3072 = vpop.f32.mrf.mxu0
    %v3073 = vadd.f32 %v3024, %v3072
    %3074 = vmatmul.bf16.gmra.mxu0 %v2158
    %v3075 = vpop.f32.mrf.mxu0
    %v3076 = vadd.f32 %v3027, %v3075
    %v3077 = vpop.f32.mrf.mxu0
    %v3078 = vadd.f32 %v3029, %v3077
    %3079 = vmatmul.bf16.gmra.mxu0 %v2162
    %v3080 = vpop.f32.mrf.mxu0
    %v3081 = vadd.f32 %v3032, %v3080
    %v3082 = vpop.f32.mrf.mxu0
    %v3083 = vadd.f32 %v3034, %v3082
    %3084 = vmatmul.bf16.gmra.mxu0 %v2166
    %v3085 = vpop.f32.mrf.mxu0
    %v3086 = vadd.f32 %v3037, %v3085
    %v3087 = vpop.f32.mrf.mxu0
    %v3088 = vadd.f32 %v3039, %v3087
    %3089 = vmatmul.bf16.gmra.mxu0 %v2170
    %v3090 = vpop.f32.mrf.mxu0
    %v3091 = vadd.f32 %v3042, %v3090
    %v3092 = vpop.f32.mrf.mxu0
    %v3093 = vadd.f32 %v3044, %v3092
    %3094 = vmatmul.bf16.gmra.mxu0 %v2174
    %v3095 = vpop.f32.mrf.mxu0
    %v3096 = vadd.f32 %v3047, %v3095
    %v3097 = vpop.f32.mrf.mxu0
    %v3098 = vadd.f32 %v3049, %v3097
    %3099 = vmatmul.bf16.gmra.mxu0 %v2178
    %v3100 = vpop.f32.mrf.mxu0
    %v3101 = vadd.f32 %v3052, %v3100
    %v3102 = vpop.f32.mrf.mxu0
    %v3103 = vadd.f32 %v3054, %v3102
    %3104 = vdwg.mxu0
    %3105 = vmatpush.bf16.msra.mxu0 %v2826
    %3106 = vmatpush.bf16.msra.mxu0 %v2822
    %3107 = vmatpush.bf16.msra.mxu0 %v2818
    %3108 = vmatpush.bf16.msra.mxu0 %v2814
    %3109 = vmatpush.bf16.msra.mxu0 %v2810
    %3110 = vmatpush.bf16.msra.mxu0 %v2806
    %3111 = vmatpush.bf16.msra.mxu0 %v2802
    %3112 = vmatpush.bf16.msra.mxu0 %v2798
    %3113 = vmatmul.bf16.gmra.mxu0 %v2151
    %v3114 = vpop.f32.mrf.mxu0
    %v3115 = vadd.f32 %v3066, %v3114
    %v3116 = vpop.f32.mrf.mxu0
    %v3117 = vadd.f32 %v3068, %v3116
    %3118 = vmatmul.bf16.gmra.mxu0 %v2155
    %v3119 = vpop.f32.mrf.mxu0
    %v3120 = vadd.f32 %v3071, %v3119
    %v3121 = vpop.f32.mrf.mxu0
    %v3122 = vadd.f32 %v3073, %v3121
    %3123 = vmatmul.bf16.gmra.mxu0 %v2159
    %v3124 = vpop.f32.mrf.mxu0
    %v3125 = vadd.f32 %v3076, %v3124
    %v3126 = vpop.f32.mrf.mxu0
    %v3127 = vadd.f32 %v3078, %v3126
    %3128 = vmatmul.bf16.gmra.mxu0 %v2163
    %v3129 = vpop.f32.mrf.mxu0
    %v3130 = vadd.f32 %v3081, %v3129
    %v3131 = vpop.f32.mrf.mxu0
    %v3132 = vadd.f32 %v3083, %v3131
    %3133 = vmatmul.bf16.gmra.mxu0 %v2167
    %v3134 = vpop.f32.mrf.mxu0
    %v3135 = vadd.f32 %v3086, %v3134
    %v3136 = vpop.f32.mrf.mxu0
    %v3137 = vadd.f32 %v3088, %v3136
    %3138 = vmatmul.bf16.gmra.mxu0 %v2171
    %v3139 = vpop.f32.mrf.mxu0
    %v3140 = vadd.f32 %v3091, %v3139
    %v3141 = vpop.f32.mrf.mxu0
    %v3142 = vadd.f32 %v3093, %v3141
    %3143 = vmatmul.bf16.gmra.mxu0 %v2175
    %v3144 = vpop.f32.mrf.mxu0
    %v3145 = vadd.f32 %v3096, %v3144
    %v3146 = vpop.f32.mrf.mxu0
    %v3147 = vadd.f32 %v3098, %v3146
    %3148 = vmatmul.bf16.gmra.mxu0 %v2179
    %v3149 = vpop.f32.mrf.mxu0
    %v3150 = vadd.f32 %v3101, %v3149
    %v3151 = vpop.f32.mrf.mxu0
    %v3152 = vadd.f32 %v3103, %v3151
    %3153 = vdwg.mxu0
    %3154 = vmatpush.bf16.msra.mxu0 %v2731
    %3155 = vmatpush.bf16.msra.mxu0 %v2727
    %3156 = vmatpush.bf16.msra.mxu0 %v2723
    %3157 = vmatpush.bf16.msra.mxu0 %v2719
    %3158 = vmatpush.bf16.msra.mxu0 %v2715
    %3159 = vmatpush.bf16.msra.mxu0 %v2711
    %3160 = vmatpush.bf16.msra.mxu0 %v2707
    %3161 = vmatpush.bf16.msra.mxu0 %v2703
    %3162 = vmatmul.bf16.gmra.mxu0 %v2148
    %v3163 = vpop.f32.mrf.mxu0
    %v3164 = vadd.f32 %v2311, %v3163
    %v3165 = vpop.f32.mrf.mxu0
    %v3166 = vadd.f32 %v2311, %v3165
    %3167 = vmatmul.bf16.gmra.mxu0 %v2152
    %v3168 = vpop.f32.mrf.mxu0
    %v3169 = vadd.f32 %v2311, %v3168
    %v3170 = vpop.f32.mrf.mxu0
    %v3171 = vadd.f32 %v2311, %v3170
    %3172 = vmatmul.bf16.gmra.mxu0 %v2156
    %v3173 = vpop.f32.mrf.mxu0
    %v3174 = vadd.f32 %v2311, %v3173
    %v3175 = vpop.f32.mrf.mxu0
    %v3176 = vadd.f32 %v2311, %v3175
    %3177 = vmatmul.bf16.gmra.mxu0 %v2160
    %v3178 = vpop.f32.mrf.mxu0
    %v3179 = vadd.f32 %v2311, %v3178
    %v3180 = vpop.f32.mrf.mxu0
    %v3181 = vadd.f32 %v2311, %v3180
    %3182 = vmatmul.bf16.gmra.mxu0 %v2164
    %v3183 = vpop.f32.mrf.mxu0
    %v3184 = vadd.f32 %v2311, %v3183
    %v3185 = vpop.f32.mrf.mxu0
    %v3186 = vadd.f32 %v2311, %v3185
    %3187 = vmatmul.bf16.gmra.mxu0 %v2168
    %v3188 = vpop.f32.mrf.mxu0
    %v3189 = vadd.f32 %v2311, %v3188
    %v3190 = vpop.f32.mrf.mxu0
    %v3191 = vadd.f32 %v2311, %v3190
    %3192 = vmatmul.bf16.gmra.mxu0 %v2172
    %v3193 = vpop.f32.mrf.mxu0
    %v3194 = vadd.f32 %v2311, %v3193
    %v3195 = vpop.f32.mrf.mxu0
    %v3196 = vadd.f32 %v2311, %v3195
    %3197 = vmatmul.bf16.gmra.mxu0 %v2176
    %v3198 = vpop.f32.mrf.mxu0
    %v3199 = vadd.f32 %v2311, %v3198
    %v3200 = vpop.f32.mrf.mxu0
    %v3201 = vadd.f32 %v2311, %v3200
    %3202 = vdwg.mxu0
    %3203 = vmatpush.bf16.msra.mxu0 %v2763
    %3204 = vmatpush.bf16.msra.mxu0 %v2759
    %3205 = vmatpush.bf16.msra.mxu0 %v2755
    %3206 = vmatpush.bf16.msra.mxu0 %v2751
    %3207 = vmatpush.bf16.msra.mxu0 %v2747
    %3208 = vmatpush.bf16.msra.mxu0 %v2743
    %3209 = vmatpush.bf16.msra.mxu0 %v2739
    %3210 = vmatpush.bf16.msra.mxu0 %v2735
    %3211 = vmatmul.bf16.gmra.mxu0 %v2149
    %v3212 = vpop.f32.mrf.mxu0
    %v3213 = vadd.f32 %v3164, %v3212
    %v3214 = vpop.f32.mrf.mxu0
    %v3215 = vadd.f32 %v3166, %v3214
    %3216 = vmatmul.bf16.gmra.mxu0 %v2153
    %v3217 = vpop.f32.mrf.mxu0
    %v3218 = vadd.f32 %v3169, %v3217
    %v3219 = vpop.f32.mrf.mxu0
    %v3220 = vadd.f32 %v3171, %v3219
    %3221 = vmatmul.bf16.gmra.mxu0 %v2157
    %v3222 = vpop.f32.mrf.mxu0
    %v3223 = vadd.f32 %v3174, %v3222
    %v3224 = vpop.f32.mrf.mxu0
    %v3225 = vadd.f32 %v3176, %v3224
    %3226 = vmatmul.bf16.gmra.mxu0 %v2161
    %v3227 = vpop.f32.mrf.mxu0
    %v3228 = vadd.f32 %v3179, %v3227
    %v3229 = vpop.f32.mrf.mxu0
    %v3230 = vadd.f32 %v3181, %v3229
    %3231 = vmatmul.bf16.gmra.mxu0 %v2165
    %v3232 = vpop.f32.mrf.mxu0
    %v3233 = vadd.f32 %v3184, %v3232
    %v3234 = vpop.f32.mrf.mxu0
    %v3235 = vadd.f32 %v3186, %v3234
    %3236 = vmatmul.bf16.gmra.mxu0 %v2169
    %v3237 = vpop.f32.mrf.mxu0
    %v3238 = vadd.f32 %v3189, %v3237
    %v3239 = vpop.f32.mrf.mxu0
    %v3240 = vadd.f32 %v3191, %v3239
    %3241 = vmatmul.bf16.gmra.mxu0 %v2173
    %v3242 = vpop.f32.mrf.mxu0
    %v3243 = vadd.f32 %v3194, %v3242
    %v3244 = vpop.f32.mrf.mxu0
    %v3245 = vadd.f32 %v3196, %v3244
    %3246 = vmatmul.bf16.gmra.mxu0 %v2177
    %v3247 = vpop.f32.mrf.mxu0
    %v3248 = vadd.f32 %v3199, %v3247
    %v3249 = vpop.f32.mrf.mxu0
    %v3250 = vadd.f32 %v3201, %v3249
    %3251 = vdwg.mxu0
    %3252 = vmatpush.bf16.msra.mxu0 %v2795
    %3253 = vmatpush.bf16.msra.mxu0 %v2791
    %3254 = vmatpush.bf16.msra.mxu0 %v2787
    %3255 = vmatpush.bf16.msra.mxu0 %v2783
    %3256 = vmatpush.bf16.msra.mxu0 %v2779
    %3257 = vmatpush.bf16.msra.mxu0 %v2775
    %3258 = vmatpush.bf16.msra.mxu0 %v2771
    %3259 = vmatpush.bf16.msra.mxu0 %v2767
    %3260 = vmatmul.bf16.gmra.mxu0 %v2150
    %v3261 = vpop.f32.mrf.mxu0
    %v3262 = vadd.f32 %v3213, %v3261
    %v3263 = vpop.f32.mrf.mxu0
    %v3264 = vadd.f32 %v3215, %v3263
    %3265 = vmatmul.bf16.gmra.mxu0 %v2154
    %v3266 = vpop.f32.mrf.mxu0
    %v3267 = vadd.f32 %v3218, %v3266
    %v3268 = vpop.f32.mrf.mxu0
    %v3269 = vadd.f32 %v3220, %v3268
    %3270 = vmatmul.bf16.gmra.mxu0 %v2158
    %v3271 = vpop.f32.mrf.mxu0
    %v3272 = vadd.f32 %v3223, %v3271
    %v3273 = vpop.f32.mrf.mxu0
    %v3274 = vadd.f32 %v3225, %v3273
    %3275 = vmatmul.bf16.gmra.mxu0 %v2162
    %v3276 = vpop.f32.mrf.mxu0
    %v3277 = vadd.f32 %v3228, %v3276
    %v3278 = vpop.f32.mrf.mxu0
    %v3279 = vadd.f32 %v3230, %v3278
    %3280 = vmatmul.bf16.gmra.mxu0 %v2166
    %v3281 = vpop.f32.mrf.mxu0
    %v3282 = vadd.f32 %v3233, %v3281
    %v3283 = vpop.f32.mrf.mxu0
    %v3284 = vadd.f32 %v3235, %v3283
    %3285 = vmatmul.bf16.gmra.mxu0 %v2170
    %v3286 = vpop.f32.mrf.mxu0
    %v3287 = vadd.f32 %v3238, %v3286
    %v3288 = vpop.f32.mrf.mxu0
    %v3289 = vadd.f32 %v3240, %v3288
    %3290 = vmatmul.bf16.gmra.mxu0 %v2174
    %v3291 = vpop.f32.mrf.mxu0
    %v3292 = vadd.f32 %v3243, %v3291
    %v3293 = vpop.f32.mrf.mxu0
    %v3294 = vadd.f32 %v3245, %v3293
    %3295 = vmatmul.bf16.gmra.mxu0 %v2178
    %v3296 = vpop.f32.mrf.mxu0
    %v3297 = vadd.f32 %v3248, %v3296
    %v3298 = vpop.f32.mrf.mxu0
    %v3299 = vadd.f32 %v3250, %v3298
    %3300 = vdwg.mxu0
    %3301 = vmatpush.bf16.msra.mxu0 %v2827
    %3302 = vmatpush.bf16.msra.mxu0 %v2823
    %3303 = vmatpush.bf16.msra.mxu0 %v2819
    %3304 = vmatpush.bf16.msra.mxu0 %v2815
    %3305 = vmatpush.bf16.msra.mxu0 %v2811
    %3306 = vmatpush.bf16.msra.mxu0 %v2807
    %3307 = vmatpush.bf16.msra.mxu0 %v2803
    %3308 = vmatpush.bf16.msra.mxu0 %v2799
    %3309 = vmatmul.bf16.gmra.mxu0 %v2151
    %v3310 = vpop.f32.mrf.mxu0
    %v3311 = vadd.f32 %v3262, %v3310
    %v3312 = vpop.f32.mrf.mxu0
    %v3313 = vadd.f32 %v3264, %v3312
    %3314 = vmatmul.bf16.gmra.mxu0 %v2155
    %v3315 = vpop.f32.mrf.mxu0
    %v3316 = vadd.f32 %v3267, %v3315
    %v3317 = vpop.f32.mrf.mxu0
    %v3318 = vadd.f32 %v3269, %v3317
    %3319 = vmatmul.bf16.gmra.mxu0 %v2159
    %v3320 = vpop.f32.mrf.mxu0
    %v3321 = vadd.f32 %v3272, %v3320
    %v3322 = vpop.f32.mrf.mxu0
    %v3323 = vadd.f32 %v3274, %v3322
    %3324 = vmatmul.bf16.gmra.mxu0 %v2163
    %v3325 = vpop.f32.mrf.mxu0
    %v3326 = vadd.f32 %v3277, %v3325
    %v3327 = vpop.f32.mrf.mxu0
    %v3328 = vadd.f32 %v3279, %v3327
    %3329 = vmatmul.bf16.gmra.mxu0 %v2167
    %v3330 = vpop.f32.mrf.mxu0
    %v3331 = vadd.f32 %v3282, %v3330
    %v3332 = vpop.f32.mrf.mxu0
    %v3333 = vadd.f32 %v3284, %v3332
    %3334 = vmatmul.bf16.gmra.mxu0 %v2171
    %v3335 = vpop.f32.mrf.mxu0
    %v3336 = vadd.f32 %v3287, %v3335
    %v3337 = vpop.f32.mrf.mxu0
    %v3338 = vadd.f32 %v3289, %v3337
    %3339 = vmatmul.bf16.gmra.mxu0 %v2175
    %v3340 = vpop.f32.mrf.mxu0
    %v3341 = vadd.f32 %v3292, %v3340
    %v3342 = vpop.f32.mrf.mxu0
    %v3343 = vadd.f32 %v3294, %v3342
    %3344 = vmatmul.bf16.gmra.mxu0 %v2179
    %v3345 = vpop.f32.mrf.mxu0
    %v3346 = vadd.f32 %v3297, %v3345
    %v3347 = vpop.f32.mrf.mxu0
    %v3348 = vadd.f32 %v3299, %v3347
    %3349 = vdwg.mxu0
    %3350 = vmatpush.bf16.msra.mxu0 %v2732
    %3351 = vmatpush.bf16.msra.mxu0 %v2728
    %3352 = vmatpush.bf16.msra.mxu0 %v2724
    %3353 = vmatpush.bf16.msra.mxu0 %v2720
    %3354 = vmatpush.bf16.msra.mxu0 %v2716
    %3355 = vmatpush.bf16.msra.mxu0 %v2712
    %3356 = vmatpush.bf16.msra.mxu0 %v2708
    %3357 = vmatpush.bf16.msra.mxu0 %v2704
    %3358 = vmatmul.bf16.gmra.mxu0 %v2148
    %v3359 = vpop.f32.mrf.mxu0
    %v3360 = vadd.f32 %v2312, %v3359
    %v3361 = vpop.f32.mrf.mxu0
    %v3362 = vadd.f32 %v2312, %v3361
    %3363 = vmatmul.bf16.gmra.mxu0 %v2152
    %v3364 = vpop.f32.mrf.mxu0
    %v3365 = vadd.f32 %v2312, %v3364
    %v3366 = vpop.f32.mrf.mxu0
    %v3367 = vadd.f32 %v2312, %v3366
    %3368 = vmatmul.bf16.gmra.mxu0 %v2156
    %v3369 = vpop.f32.mrf.mxu0
    %v3370 = vadd.f32 %v2312, %v3369
    %v3371 = vpop.f32.mrf.mxu0
    %v3372 = vadd.f32 %v2312, %v3371
    %3373 = vmatmul.bf16.gmra.mxu0 %v2160
    %v3374 = vpop.f32.mrf.mxu0
    %v3375 = vadd.f32 %v2312, %v3374
    %v3376 = vpop.f32.mrf.mxu0
    %v3377 = vadd.f32 %v2312, %v3376
    %3378 = vmatmul.bf16.gmra.mxu0 %v2164
    %v3379 = vpop.f32.mrf.mxu0
    %v3380 = vadd.f32 %v2312, %v3379
    %v3381 = vpop.f32.mrf.mxu0
    %v3382 = vadd.f32 %v2312, %v3381
    %3383 = vmatmul.bf16.gmra.mxu0 %v2168
    %v3384 = vpop.f32.mrf.mxu0
    %v3385 = vadd.f32 %v2312, %v3384
    %v3386 = vpop.f32.mrf.mxu0
    %v3387 = vadd.f32 %v2312, %v3386
    %3388 = vmatmul.bf16.gmra.mxu0 %v2172
    %v3389 = vpop.f32.mrf.mxu0
    %v3390 = vadd.f32 %v2312, %v3389
    %v3391 = vpop.f32.mrf.mxu0
    %v3392 = vadd.f32 %v2312, %v3391
    %3393 = vmatmul.bf16.gmra.mxu0 %v2176
    %v3394 = vpop.f32.mrf.mxu0
    %v3395 = vadd.f32 %v2312, %v3394
    %v3396 = vpop.f32.mrf.mxu0
    %v3397 = vadd.f32 %v2312, %v3396
    %3398 = vdwg.mxu0
    %3399 = vmatpush.bf16.msra.mxu0 %v2764
    %3400 = vmatpush.bf16.msra.mxu0 %v2760
    %3401 = vmatpush.bf16.msra.mxu0 %v2756
    %3402 = vmatpush.bf16.msra.mxu0 %v2752
    %3403 = vmatpush.bf16.msra.mxu0 %v2748
    %3404 = vmatpush.bf16.msra.mxu0 %v2744
    %3405 = vmatpush.bf16.msra.mxu0 %v2740
    %3406 = vmatpush.bf16.msra.mxu0 %v2736
    %3407 = vmatmul.bf16.gmra.mxu0 %v2149
    %v3408 = vpop.f32.mrf.mxu0
    %v3409 = vadd.f32 %v3360, %v3408
    %v3410 = vpop.f32.mrf.mxu0
    %v3411 = vadd.f32 %v3362, %v3410
    %3412 = vmatmul.bf16.gmra.mxu0 %v2153
    %v3413 = vpop.f32.mrf.mxu0
    %v3414 = vadd.f32 %v3365, %v3413
    %v3415 = vpop.f32.mrf.mxu0
    %v3416 = vadd.f32 %v3367, %v3415
    %3417 = vmatmul.bf16.gmra.mxu0 %v2157
    %v3418 = vpop.f32.mrf.mxu0
    %v3419 = vadd.f32 %v3370, %v3418
    %v3420 = vpop.f32.mrf.mxu0
    %v3421 = vadd.f32 %v3372, %v3420
    %3422 = vmatmul.bf16.gmra.mxu0 %v2161
    %v3423 = vpop.f32.mrf.mxu0
    %v3424 = vadd.f32 %v3375, %v3423
    %v3425 = vpop.f32.mrf.mxu0
    %v3426 = vadd.f32 %v3377, %v3425
    %3427 = vmatmul.bf16.gmra.mxu0 %v2165
    %v3428 = vpop.f32.mrf.mxu0
    %v3429 = vadd.f32 %v3380, %v3428
    %v3430 = vpop.f32.mrf.mxu0
    %v3431 = vadd.f32 %v3382, %v3430
    %3432 = vmatmul.bf16.gmra.mxu0 %v2169
    %v3433 = vpop.f32.mrf.mxu0
    %v3434 = vadd.f32 %v3385, %v3433
    %v3435 = vpop.f32.mrf.mxu0
    %v3436 = vadd.f32 %v3387, %v3435
    %3437 = vmatmul.bf16.gmra.mxu0 %v2173
    %v3438 = vpop.f32.mrf.mxu0
    %v3439 = vadd.f32 %v3390, %v3438
    %v3440 = vpop.f32.mrf.mxu0
    %v3441 = vadd.f32 %v3392, %v3440
    %3442 = vmatmul.bf16.gmra.mxu0 %v2177
    %v3443 = vpop.f32.mrf.mxu0
    %v3444 = vadd.f32 %v3395, %v3443
    %v3445 = vpop.f32.mrf.mxu0
    %v3446 = vadd.f32 %v3397, %v3445
    %3447 = vdwg.mxu0
    %3448 = vmatpush.bf16.msra.mxu0 %v2796
    %3449 = vmatpush.bf16.msra.mxu0 %v2792
    %3450 = vmatpush.bf16.msra.mxu0 %v2788
    %3451 = vmatpush.bf16.msra.mxu0 %v2784
    %3452 = vmatpush.bf16.msra.mxu0 %v2780
    %3453 = vmatpush.bf16.msra.mxu0 %v2776
    %3454 = vmatpush.bf16.msra.mxu0 %v2772
    %3455 = vmatpush.bf16.msra.mxu0 %v2768
    %3456 = vmatmul.bf16.gmra.mxu0 %v2150
    %v3457 = vpop.f32.mrf.mxu0
    %v3458 = vadd.f32 %v3409, %v3457
    %v3459 = vpop.f32.mrf.mxu0
    %v3460 = vadd.f32 %v3411, %v3459
    %3461 = vmatmul.bf16.gmra.mxu0 %v2154
    %v3462 = vpop.f32.mrf.mxu0
    %v3463 = vadd.f32 %v3414, %v3462
    %v3464 = vpop.f32.mrf.mxu0
    %v3465 = vadd.f32 %v3416, %v3464
    %3466 = vmatmul.bf16.gmra.mxu0 %v2158
    %v3467 = vpop.f32.mrf.mxu0
    %v3468 = vadd.f32 %v3419, %v3467
    %v3469 = vpop.f32.mrf.mxu0
    %v3470 = vadd.f32 %v3421, %v3469
    %3471 = vmatmul.bf16.gmra.mxu0 %v2162
    %v3472 = vpop.f32.mrf.mxu0
    %v3473 = vadd.f32 %v3424, %v3472
    %v3474 = vpop.f32.mrf.mxu0
    %v3475 = vadd.f32 %v3426, %v3474
    %3476 = vmatmul.bf16.gmra.mxu0 %v2166
    %v3477 = vpop.f32.mrf.mxu0
    %v3478 = vadd.f32 %v3429, %v3477
    %v3479 = vpop.f32.mrf.mxu0
    %v3480 = vadd.f32 %v3431, %v3479
    %3481 = vmatmul.bf16.gmra.mxu0 %v2170
    %v3482 = vpop.f32.mrf.mxu0
    %v3483 = vadd.f32 %v3434, %v3482
    %v3484 = vpop.f32.mrf.mxu0
    %v3485 = vadd.f32 %v3436, %v3484
    %3486 = vmatmul.bf16.gmra.mxu0 %v2174
    %v3487 = vpop.f32.mrf.mxu0
    %v3488 = vadd.f32 %v3439, %v3487
    %v3489 = vpop.f32.mrf.mxu0
    %v3490 = vadd.f32 %v3441, %v3489
    %3491 = vmatmul.bf16.gmra.mxu0 %v2178
    %v3492 = vpop.f32.mrf.mxu0
    %v3493 = vadd.f32 %v3444, %v3492
    %v3494 = vpop.f32.mrf.mxu0
    %v3495 = vadd.f32 %v3446, %v3494
    %3496 = vdwg.mxu0
    %3497 = vmatpush.bf16.msra.mxu0 %v2828
    %3498 = vmatpush.bf16.msra.mxu0 %v2824
    %3499 = vmatpush.bf16.msra.mxu0 %v2820
    %3500 = vmatpush.bf16.msra.mxu0 %v2816
    %3501 = vmatpush.bf16.msra.mxu0 %v2812
    %3502 = vmatpush.bf16.msra.mxu0 %v2808
    %3503 = vmatpush.bf16.msra.mxu0 %v2804
    %3504 = vmatpush.bf16.msra.mxu0 %v2800
    %3505 = vmatmul.bf16.gmra.mxu0 %v2151
    %v3506 = vpop.f32.mrf.mxu0
    %v3507 = vadd.f32 %v3458, %v3506
    %v3508 = vpop.f32.mrf.mxu0
    %v3509 = vadd.f32 %v3460, %v3508
    %3510 = vmatmul.bf16.gmra.mxu0 %v2155
    %v3511 = vpop.f32.mrf.mxu0
    %v3512 = vadd.f32 %v3463, %v3511
    %v3513 = vpop.f32.mrf.mxu0
    %v3514 = vadd.f32 %v3465, %v3513
    %3515 = vmatmul.bf16.gmra.mxu0 %v2159
    %v3516 = vpop.f32.mrf.mxu0
    %v3517 = vadd.f32 %v3468, %v3516
    %v3518 = vpop.f32.mrf.mxu0
    %v3519 = vadd.f32 %v3470, %v3518
    %3520 = vmatmul.bf16.gmra.mxu0 %v2163
    %v3521 = vpop.f32.mrf.mxu0
    %v3522 = vadd.f32 %v3473, %v3521
    %v3523 = vpop.f32.mrf.mxu0
    %v3524 = vadd.f32 %v3475, %v3523
    %3525 = vmatmul.bf16.gmra.mxu0 %v2167
    %v3526 = vpop.f32.mrf.mxu0
    %v3527 = vadd.f32 %v3478, %v3526
    %v3528 = vpop.f32.mrf.mxu0
    %v3529 = vadd.f32 %v3480, %v3528
    %3530 = vmatmul.bf16.gmra.mxu0 %v2171
    %v3531 = vpop.f32.mrf.mxu0
    %v3532 = vadd.f32 %v3483, %v3531
    %v3533 = vpop.f32.mrf.mxu0
    %v3534 = vadd.f32 %v3485, %v3533
    %3535 = vmatmul.bf16.gmra.mxu0 %v2175
    %v3536 = vpop.f32.mrf.mxu0
    %v3537 = vadd.f32 %v3488, %v3536
    %v3538 = vpop.f32.mrf.mxu0
    %v3539 = vadd.f32 %v3490, %v3538
    %3540 = vmatmul.bf16.gmra.mxu0 %v2179
    %v3541 = vpop.f32.mrf.mxu0
    %v3542 = vadd.f32 %v3493, %v3541
    %v3543 = vpop.f32.mrf.mxu0
    %v3544 = vadd.f32 %v3495, %v3543
    %3545 = vdwg.mxu0
    %3546 = vmatpush.bf16.msra.mxu0 %v2733
    %3547 = vmatpush.bf16.msra.mxu0 %v2729
    %3548 = vmatpush.bf16.msra.mxu0 %v2725
    %3549 = vmatpush.bf16.msra.mxu0 %v2721
    %3550 = vmatpush.bf16.msra.mxu0 %v2717
    %3551 = vmatpush.bf16.msra.mxu0 %v2713
    %3552 = vmatpush.bf16.msra.mxu0 %v2709
    %3553 = vmatpush.bf16.msra.mxu0 %v2705
    %3554 = vmatmul.bf16.gmra.mxu0 %v2148
    %v3555 = vpop.f32.mrf.mxu0
    %v3556 = vadd.f32 %v2313, %v3555
    %v3557 = vpop.f32.mrf.mxu0
    %v3558 = vadd.f32 %v2313, %v3557
    %3559 = vmatmul.bf16.gmra.mxu0 %v2152
    %v3560 = vpop.f32.mrf.mxu0
    %v3561 = vadd.f32 %v2313, %v3560
    %v3562 = vpop.f32.mrf.mxu0
    %v3563 = vadd.f32 %v2313, %v3562
    %3564 = vmatmul.bf16.gmra.mxu0 %v2156
    %v3565 = vpop.f32.mrf.mxu0
    %v3566 = vadd.f32 %v2313, %v3565
    %v3567 = vpop.f32.mrf.mxu0
    %v3568 = vadd.f32 %v2313, %v3567
    %3569 = vmatmul.bf16.gmra.mxu0 %v2160
    %v3570 = vpop.f32.mrf.mxu0
    %v3571 = vadd.f32 %v2313, %v3570
    %v3572 = vpop.f32.mrf.mxu0
    %v3573 = vadd.f32 %v2313, %v3572
    %3574 = vmatmul.bf16.gmra.mxu0 %v2164
    %v3575 = vpop.f32.mrf.mxu0
    %v3576 = vadd.f32 %v2313, %v3575
    %v3577 = vpop.f32.mrf.mxu0
    %v3578 = vadd.f32 %v2313, %v3577
    %3579 = vmatmul.bf16.gmra.mxu0 %v2168
    %v3580 = vpop.f32.mrf.mxu0
    %v3581 = vadd.f32 %v2313, %v3580
    %v3582 = vpop.f32.mrf.mxu0
    %v3583 = vadd.f32 %v2313, %v3582
    %3584 = vmatmul.bf16.gmra.mxu0 %v2172
    %v3585 = vpop.f32.mrf.mxu0
    %v3586 = vadd.f32 %v2313, %v3585
    %v3587 = vpop.f32.mrf.mxu0
    %v3588 = vadd.f32 %v2313, %v3587
    %3589 = vmatmul.bf16.gmra.mxu0 %v2176
    %v3590 = vpop.f32.mrf.mxu0
    %v3591 = vadd.f32 %v2313, %v3590
    %v3592 = vpop.f32.mrf.mxu0
    %v3593 = vadd.f32 %v2313, %v3592
    %3594 = vdwg.mxu0
    %3595 = vmatpush.bf16.msra.mxu0 %v2765
    %3596 = vmatpush.bf16.msra.mxu0 %v2761
    %3597 = vmatpush.bf16.msra.mxu0 %v2757
    %3598 = vmatpush.bf16.msra.mxu0 %v2753
    %3599 = vmatpush.bf16.msra.mxu0 %v2749
    %3600 = vmatpush.bf16.msra.mxu0 %v2745
    %3601 = vmatpush.bf16.msra.mxu0 %v2741
    %3602 = vmatpush.bf16.msra.mxu0 %v2737
    %3603 = vmatmul.bf16.gmra.mxu0 %v2149
    %v3604 = vpop.f32.mrf.mxu0
    %v3605 = vadd.f32 %v3556, %v3604
    %v3606 = vpop.f32.mrf.mxu0
    %v3607 = vadd.f32 %v3558, %v3606
    %3608 = vmatmul.bf16.gmra.mxu0 %v2153
    %v3609 = vpop.f32.mrf.mxu0
    %v3610 = vadd.f32 %v3561, %v3609
    %v3611 = vpop.f32.mrf.mxu0
    %v3612 = vadd.f32 %v3563, %v3611
    %3613 = vmatmul.bf16.gmra.mxu0 %v2157
    %v3614 = vpop.f32.mrf.mxu0
    %v3615 = vadd.f32 %v3566, %v3614
    %v3616 = vpop.f32.mrf.mxu0
    %v3617 = vadd.f32 %v3568, %v3616
    %3618 = vmatmul.bf16.gmra.mxu0 %v2161
    %v3619 = vpop.f32.mrf.mxu0
    %v3620 = vadd.f32 %v3571, %v3619
    %v3621 = vpop.f32.mrf.mxu0
    %v3622 = vadd.f32 %v3573, %v3621
    %3623 = vmatmul.bf16.gmra.mxu0 %v2165
    %v3624 = vpop.f32.mrf.mxu0
    %v3625 = vadd.f32 %v3576, %v3624
    %v3626 = vpop.f32.mrf.mxu0
    %v3627 = vadd.f32 %v3578, %v3626
    %3628 = vmatmul.bf16.gmra.mxu0 %v2169
    %v3629 = vpop.f32.mrf.mxu0
    %v3630 = vadd.f32 %v3581, %v3629
    %v3631 = vpop.f32.mrf.mxu0
    %v3632 = vadd.f32 %v3583, %v3631
    %3633 = vmatmul.bf16.gmra.mxu0 %v2173
    %v3634 = vpop.f32.mrf.mxu0
    %v3635 = vadd.f32 %v3586, %v3634
    %v3636 = vpop.f32.mrf.mxu0
    %v3637 = vadd.f32 %v3588, %v3636
    %3638 = vmatmul.bf16.gmra.mxu0 %v2177
    %v3639 = vpop.f32.mrf.mxu0
    %v3640 = vadd.f32 %v3591, %v3639
    %v3641 = vpop.f32.mrf.mxu0
    %v3642 = vadd.f32 %v3593, %v3641
    %3643 = vdwg.mxu0
    %3644 = vmatpush.bf16.msra.mxu0 %v2797
    %3645 = vmatpush.bf16.msra.mxu0 %v2793
    %3646 = vmatpush.bf16.msra.mxu0 %v2789
    %3647 = vmatpush.bf16.msra.mxu0 %v2785
    %3648 = vmatpush.bf16.msra.mxu0 %v2781
    %3649 = vmatpush.bf16.msra.mxu0 %v2777
    %3650 = vmatpush.bf16.msra.mxu0 %v2773
    %3651 = vmatpush.bf16.msra.mxu0 %v2769
    %3652 = vmatmul.bf16.gmra.mxu0 %v2150
    %v3653 = vpop.f32.mrf.mxu0
    %v3654 = vadd.f32 %v3605, %v3653
    %v3655 = vpop.f32.mrf.mxu0
    %v3656 = vadd.f32 %v3607, %v3655
    %3657 = vmatmul.bf16.gmra.mxu0 %v2154
    %v3658 = vpop.f32.mrf.mxu0
    %v3659 = vadd.f32 %v3610, %v3658
    %v3660 = vpop.f32.mrf.mxu0
    %v3661 = vadd.f32 %v3612, %v3660
    %3662 = vmatmul.bf16.gmra.mxu0 %v2158
    %v3663 = vpop.f32.mrf.mxu0
    %v3664 = vadd.f32 %v3615, %v3663
    %v3665 = vpop.f32.mrf.mxu0
    %v3666 = vadd.f32 %v3617, %v3665
    %3667 = vmatmul.bf16.gmra.mxu0 %v2162
    %v3668 = vpop.f32.mrf.mxu0
    %v3669 = vadd.f32 %v3620, %v3668
    %v3670 = vpop.f32.mrf.mxu0
    %v3671 = vadd.f32 %v3622, %v3670
    %3672 = vmatmul.bf16.gmra.mxu0 %v2166
    %v3673 = vpop.f32.mrf.mxu0
    %v3674 = vadd.f32 %v3625, %v3673
    %v3675 = vpop.f32.mrf.mxu0
    %v3676 = vadd.f32 %v3627, %v3675
    %3677 = vmatmul.bf16.gmra.mxu0 %v2170
    %v3678 = vpop.f32.mrf.mxu0
    %v3679 = vadd.f32 %v3630, %v3678
    %v3680 = vpop.f32.mrf.mxu0
    %v3681 = vadd.f32 %v3632, %v3680
    %3682 = vmatmul.bf16.gmra.mxu0 %v2174
    %v3683 = vpop.f32.mrf.mxu0
    %v3684 = vadd.f32 %v3635, %v3683
    %v3685 = vpop.f32.mrf.mxu0
    %v3686 = vadd.f32 %v3637, %v3685
    %3687 = vmatmul.bf16.gmra.mxu0 %v2178
    %v3688 = vpop.f32.mrf.mxu0
    %v3689 = vadd.f32 %v3640, %v3688
    %v3690 = vpop.f32.mrf.mxu0
    %v3691 = vadd.f32 %v3642, %v3690
    %3692 = vdwg.mxu0
    %3693 = vmatpush.bf16.msra.mxu0 %v2829
    %3694 = vmatpush.bf16.msra.mxu0 %v2825
    %3695 = vmatpush.bf16.msra.mxu0 %v2821
    %3696 = vmatpush.bf16.msra.mxu0 %v2817
    %3697 = vmatpush.bf16.msra.mxu0 %v2813
    %3698 = vmatpush.bf16.msra.mxu0 %v2809
    %3699 = vmatpush.bf16.msra.mxu0 %v2805
    %3700 = vmatpush.bf16.msra.mxu0 %v2801
    %3701 = vmatmul.bf16.gmra.mxu0 %v2151
    %v3702 = vpop.f32.mrf.mxu0
    %v3703 = vadd.f32 %v3654, %v3702
    %v3704 = vpop.f32.mrf.mxu0
    %v3705 = vadd.f32 %v3656, %v3704
    %3706 = vmatmul.bf16.gmra.mxu0 %v2155
    %v3707 = vpop.f32.mrf.mxu0
    %v3708 = vadd.f32 %v3659, %v3707
    %v3709 = vpop.f32.mrf.mxu0
    %v3710 = vadd.f32 %v3661, %v3709
    %3711 = vmatmul.bf16.gmra.mxu0 %v2159
    %v3712 = vpop.f32.mrf.mxu0
    %v3713 = vadd.f32 %v3664, %v3712
    %v3714 = vpop.f32.mrf.mxu0
    %v3715 = vadd.f32 %v3666, %v3714
    %3716 = vmatmul.bf16.gmra.mxu0 %v2163
    %v3717 = vpop.f32.mrf.mxu0
    %v3718 = vadd.f32 %v3669, %v3717
    %v3719 = vpop.f32.mrf.mxu0
    %v3720 = vadd.f32 %v3671, %v3719
    %3721 = vmatmul.bf16.gmra.mxu0 %v2167
    %v3722 = vpop.f32.mrf.mxu0
    %v3723 = vadd.f32 %v3674, %v3722
    %v3724 = vpop.f32.mrf.mxu0
    %v3725 = vadd.f32 %v3676, %v3724
    %3726 = vmatmul.bf16.gmra.mxu0 %v2171
    %v3727 = vpop.f32.mrf.mxu0
    %v3728 = vadd.f32 %v3679, %v3727
    %v3729 = vpop.f32.mrf.mxu0
    %v3730 = vadd.f32 %v3681, %v3729
    %3731 = vmatmul.bf16.gmra.mxu0 %v2175
    %v3732 = vpop.f32.mrf.mxu0
    %v3733 = vadd.f32 %v3684, %v3732
    %v3734 = vpop.f32.mrf.mxu0
    %v3735 = vadd.f32 %v3686, %v3734
    %3736 = vmatmul.bf16.gmra.mxu0 %v2179
    %v3737 = vpop.f32.mrf.mxu0
    %v3738 = vadd.f32 %v3689, %v3737
    %v3739 = vpop.f32.mrf.mxu0
    %v3740 = vadd.f32 %v3691, %v3739
    %3741 = vdwg.mxu0
    %v3742 = vmax.f32 %v3115, 0.0
    %v3743 = vmax.f32 %v3311, 0.0
    %v3744 = vmax.f32 %v3507, 0.0
    %v3745 = vmax.f32 %v3703, 0.0
    %v3746 = vmax.f32 %v3117, 0.0
    %v3747 = vmax.f32 %v3313, 0.0
    %v3748 = vmax.f32 %v3509, 0.0
    %v3749 = vmax.f32 %v3705, 0.0
    %v3750 = vmax.f32 %v3120, 0.0
    %v3751 = vmax.f32 %v3316, 0.0
    %v3752 = vmax.f32 %v3512, 0.0
    %v3753 = vmax.f32 %v3708, 0.0
    %v3754 = vmax.f32 %v3122, 0.0
    %v3755 = vmax.f32 %v3318, 0.0
    %v3756 = vmax.f32 %v3514, 0.0
    %v3757 = vmax.f32 %v3710, 0.0
    %v3758 = vmax.f32 %v3125, 0.0
    %v3759 = vmax.f32 %v3321, 0.0
    %v3760 = vmax.f32 %v3517, 0.0
    %v3761 = vmax.f32 %v3713, 0.0
    %v3762 = vmax.f32 %v3127, 0.0
    %v3763 = vmax.f32 %v3323, 0.0
    %v3764 = vmax.f32 %v3519, 0.0
    %v3765 = vmax.f32 %v3715, 0.0
    %v3766 = vmax.f32 %v3130, 0.0
    %v3767 = vmax.f32 %v3326, 0.0
    %v3768 = vmax.f32 %v3522, 0.0
    %v3769 = vmax.f32 %v3718, 0.0
    %v3770 = vmax.f32 %v3132, 0.0
    %v3771 = vmax.f32 %v3328, 0.0
    %v3772 = vmax.f32 %v3524, 0.0
    %v3773 = vmax.f32 %v3720, 0.0
    %v3774 = vmax.f32 %v3135, 0.0
    %v3775 = vmax.f32 %v3331, 0.0
    %v3776 = vmax.f32 %v3527, 0.0
    %v3777 = vmax.f32 %v3723, 0.0
    %v3778 = vmax.f32 %v3137, 0.0
    %v3779 = vmax.f32 %v3333, 0.0
    %v3780 = vmax.f32 %v3529, 0.0
    %v3781 = vmax.f32 %v3725, 0.0
    %v3782 = vmax.f32 %v3140, 0.0
    %v3783 = vmax.f32 %v3336, 0.0
    %v3784 = vmax.f32 %v3532, 0.0
    %v3785 = vmax.f32 %v3728, 0.0
    %v3786 = vmax.f32 %v3142, 0.0
    %v3787 = vmax.f32 %v3338, 0.0
    %v3788 = vmax.f32 %v3534, 0.0
    %v3789 = vmax.f32 %v3730, 0.0
    %v3790 = vmax.f32 %v3145, 0.0
    %v3791 = vmax.f32 %v3341, 0.0
    %v3792 = vmax.f32 %v3537, 0.0
    %v3793 = vmax.f32 %v3733, 0.0
    %v3794 = vmax.f32 %v3147, 0.0
    %v3795 = vmax.f32 %v3343, 0.0
    %v3796 = vmax.f32 %v3539, 0.0
    %v3797 = vmax.f32 %v3735, 0.0
    %v3798 = vmax.f32 %v3150, 0.0
    %v3799 = vmax.f32 %v3346, 0.0
    %v3800 = vmax.f32 %v3542, 0.0
    %v3801 = vmax.f32 %v3738, 0.0
    %v3802 = vmax.f32 %v3152, 0.0
    %v3803 = vmax.f32 %v3348, 0.0
    %v3804 = vmax.f32 %v3544, 0.0
    %v3805 = vmax.f32 %v3740, 0.0
    %v3806 = vpack.c.bf16 %v3746, %v3742
    %v3807 = vpack.c.bf16 %v3747, %v3743
    %v3808 = vpack.c.bf16 %v3748, %v3744
    %v3809 = vpack.c.bf16 %v3749, %v3745
    %v3810 = vpack.c.bf16 %v3754, %v3750
    %v3811 = vpack.c.bf16 %v3755, %v3751
    %v3812 = vpack.c.bf16 %v3756, %v3752
    %v3813 = vpack.c.bf16 %v3757, %v3753
    %v3814 = vpack.c.bf16 %v3762, %v3758
    %v3815 = vpack.c.bf16 %v3763, %v3759
    %v3816 = vpack.c.bf16 %v3764, %v3760
    %v3817 = vpack.c.bf16 %v3765, %v3761
    %v3818 = vpack.c.bf16 %v3770, %v3766
    %v3819 = vpack.c.bf16 %v3771, %v3767
    %v3820 = vpack.c.bf16 %v3772, %v3768
    %v3821 = vpack.c.bf16 %v3773, %v3769
    %v3822 = vpack.c.bf16 %v3778, %v3774
    %v3823 = vpack.c.bf16 %v3779, %v3775
    %v3824 = vpack.c.bf16 %v3780, %v3776
    %v3825 = vpack.c.bf16 %v3781, %v3777
    %v3826 = vpack.c.bf16 %v3786, %v3782
    %v3827 = vpack.c.bf16 %v3787, %v3783
    %v3828 = vpack.c.bf16 %v3788, %v3784
    %v3829 = vpack.c.bf16 %v3789, %v3785
    %v3830 = vpack.c.bf16 %v3794, %v3790
    %v3831 = vpack.c.bf16 %v3795, %v3791
    %v3832 = vpack.c.bf16 %v3796, %v3792
    %v3833 = vpack.c.bf16 %v3797, %v3793
    %v3834 = vpack.c.bf16 %v3802, %v3798
    %v3835 = vpack.c.bf16 %v3803, %v3799
    %v3836 = vpack.c.bf16 %v3804, %v3800
    %v3837 = vpack.c.bf16 %v3805, %v3801
    %v3838 = vld [vmem:[#allocation6] sm:$0xff]
    %v3839 = vld [vmem:[#allocation6 + $0x8] sm:$0xff]
    %v3840 = vld [vmem:[#allocation6 + $0x10] sm:$0xff]
    %v3841 = vld [vmem:[#allocation6 + $0x18] sm:$0xff]
    %v3842 = vld [vmem:[#allocation6 + $0x20] sm:$0xff]
    %v3843 = vld [vmem:[#allocation6 + $0x28] sm:$0xff]
    %v3844 = vld [vmem:[#allocation6 + $0x30] sm:$0xff]
    %v3845 = vld [vmem:[#allocation6 + $0x38] sm:$0xff]
    %v3846 = vld [vmem:[#allocation6 + $0x40] sm:$0xff]
    %v3847 = vld [vmem:[#allocation6 + $0x48] sm:$0xff]
    %v3848 = vld [vmem:[#allocation6 + $0x50] sm:$0xff]
    %v3849 = vld [vmem:[#allocation6 + $0x58] sm:$0xff]
    %v3850 = vld [vmem:[#allocation6 + $0x60] sm:$0xff]
    %v3851 = vld [vmem:[#allocation6 + $0x68] sm:$0xff]
    %v3852 = vld [vmem:[#allocation6 + $0x70] sm:$0xff]
    %v3853 = vld [vmem:[#allocation6 + $0x78] sm:$0xff]
    %v3854 = vld [vmem:[#allocation6 + $0x80] sm:$0xff]
    %v3855 = vld [vmem:[#allocation6 + $0x88] sm:$0xff]
    %v3856 = vld [vmem:[#allocation6 + $0x90] sm:$0xff]
    %v3857 = vld [vmem:[#allocation6 + $0x98] sm:$0xff]
    %v3858 = vld [vmem:[#allocation6 + $0xa0] sm:$0xff]
    %v3859 = vld [vmem:[#allocation6 + $0xa8] sm:$0xff]
    %v3860 = vld [vmem:[#allocation6 + $0xb0] sm:$0xff]
    %v3861 = vld [vmem:[#allocation6 + $0xb8] sm:$0xff]
    %v3862 = vld [vmem:[#allocation6 + $0xc0] sm:$0xff]
    %v3863 = vld [vmem:[#allocation6 + $0xc8] sm:$0xff]
    %v3864 = vld [vmem:[#allocation6 + $0xd0] sm:$0xff]
    %v3865 = vld [vmem:[#allocation6 + $0xd8] sm:$0xff]
    %v3866 = vld [vmem:[#allocation6 + $0xe0] sm:$0xff]
    %v3867 = vld [vmem:[#allocation6 + $0xe8] sm:$0xff]
    %v3868 = vld [vmem:[#allocation6 + $0xf0] sm:$0xff]
    %v3869 = vld [vmem:[#allocation6 + $0xf8] sm:$0xff]
    %v3870 = vld [vmem:[#allocation6 + $0x100] sm:$0xff]
    %v3871 = vld [vmem:[#allocation6 + $0x108] sm:$0xff]
    %v3872 = vld [vmem:[#allocation6 + $0x110] sm:$0xff]
    %v3873 = vld [vmem:[#allocation6 + $0x118] sm:$0xff]
    %v3874 = vld [vmem:[#allocation6 + $0x120] sm:$0xff]
    %v3875 = vld [vmem:[#allocation6 + $0x128] sm:$0xff]
    %v3876 = vld [vmem:[#allocation6 + $0x130] sm:$0xff]
    %v3877 = vld [vmem:[#allocation6 + $0x138] sm:$0xff]
    %v3878 = vld [vmem:[#allocation6 + $0x140] sm:$0xff]
    %v3879 = vld [vmem:[#allocation6 + $0x148] sm:$0xff]
    %v3880 = vld [vmem:[#allocation6 + $0x150] sm:$0xff]
    %v3881 = vld [vmem:[#allocation6 + $0x158] sm:$0xff]
    %v3882 = vld [vmem:[#allocation6 + $0x160] sm:$0xff]
    %v3883 = vld [vmem:[#allocation6 + $0x168] sm:$0xff]
    %v3884 = vld [vmem:[#allocation6 + $0x170] sm:$0xff]
    %v3885 = vld [vmem:[#allocation6 + $0x178] sm:$0xff]
    %v3886 = vld [vmem:[#allocation6 + $0x180] sm:$0xff]
    %v3887 = vld [vmem:[#allocation6 + $0x188] sm:$0xff]
    %v3888 = vld [vmem:[#allocation6 + $0x190] sm:$0xff]
    %v3889 = vld [vmem:[#allocation6 + $0x198] sm:$0xff]
    %v3890 = vld [vmem:[#allocation6 + $0x1a0] sm:$0xff]
    %v3891 = vld [vmem:[#allocation6 + $0x1a8] sm:$0xff]
    %v3892 = vld [vmem:[#allocation6 + $0x1b0] sm:$0xff]
    %v3893 = vld [vmem:[#allocation6 + $0x1b8] sm:$0xff]
    %v3894 = vld [vmem:[#allocation6 + $0x1c0] sm:$0xff]
    %v3895 = vld [vmem:[#allocation6 + $0x1c8] sm:$0xff]
    %v3896 = vld [vmem:[#allocation6 + $0x1d0] sm:$0xff]
    %v3897 = vld [vmem:[#allocation6 + $0x1d8] sm:$0xff]
    %v3898 = vld [vmem:[#allocation6 + $0x1e0] sm:$0xff]
    %v3899 = vld [vmem:[#allocation6 + $0x1e8] sm:$0xff]
    %v3900 = vld [vmem:[#allocation6 + $0x1f0] sm:$0xff]
    %v3901 = vld [vmem:[#allocation6 + $0x1f8] sm:$0xff]
    %v3902 = vld [vmem:[#allocation6 + $0x200] sm:$0xff]
    %v3903 = vld [vmem:[#allocation6 + $0x208] sm:$0xff]
    %v3904 = vld [vmem:[#allocation6 + $0x210] sm:$0xff]
    %v3905 = vld [vmem:[#allocation6 + $0x218] sm:$0xff]
    %v3906 = vld [vmem:[#allocation6 + $0x220] sm:$0xff]
    %v3907 = vld [vmem:[#allocation6 + $0x228] sm:$0xff]
    %v3908 = vld [vmem:[#allocation6 + $0x230] sm:$0xff]
    %v3909 = vld [vmem:[#allocation6 + $0x238] sm:$0xff]
    %v3910 = vld [vmem:[#allocation6 + $0x240] sm:$0xff]
    %v3911 = vld [vmem:[#allocation6 + $0x248] sm:$0xff]
    %v3912 = vld [vmem:[#allocation6 + $0x250] sm:$0xff]
    %v3913 = vld [vmem:[#allocation6 + $0x258] sm:$0xff]
    %v3914 = vld [vmem:[#allocation6 + $0x260] sm:$0xff]
    %v3915 = vld [vmem:[#allocation6 + $0x268] sm:$0xff]
    %v3916 = vld [vmem:[#allocation6 + $0x270] sm:$0xff]
    %v3917 = vld [vmem:[#allocation6 + $0x278] sm:$0xff]
    %v3918 = vld [vmem:[#allocation6 + $0x280] sm:$0xff]
    %v3919 = vld [vmem:[#allocation6 + $0x288] sm:$0xff]
    %v3920 = vld [vmem:[#allocation6 + $0x290] sm:$0xff]
    %v3921 = vld [vmem:[#allocation6 + $0x298] sm:$0xff]
    %v3922 = vld [vmem:[#allocation6 + $0x2a0] sm:$0xff]
    %v3923 = vld [vmem:[#allocation6 + $0x2a8] sm:$0xff]
    %v3924 = vld [vmem:[#allocation6 + $0x2b0] sm:$0xff]
    %v3925 = vld [vmem:[#allocation6 + $0x2b8] sm:$0xff]
    %v3926 = vld [vmem:[#allocation6 + $0x2c0] sm:$0xff]
    %v3927 = vld [vmem:[#allocation6 + $0x2c8] sm:$0xff]
    %v3928 = vld [vmem:[#allocation6 + $0x2d0] sm:$0xff]
    %v3929 = vld [vmem:[#allocation6 + $0x2d8] sm:$0xff]
    %v3930 = vld [vmem:[#allocation6 + $0x2e0] sm:$0xff]
    %v3931 = vld [vmem:[#allocation6 + $0x2e8] sm:$0xff]
    %v3932 = vld [vmem:[#allocation6 + $0x2f0] sm:$0xff]
    %v3933 = vld [vmem:[#allocation6 + $0x2f8] sm:$0xff]
    %v3934 = vld [vmem:[#allocation6 + $0x300] sm:$0xff]
    %v3935 = vld [vmem:[#allocation6 + $0x308] sm:$0xff]
    %v3936 = vld [vmem:[#allocation6 + $0x310] sm:$0xff]
    %v3937 = vld [vmem:[#allocation6 + $0x318] sm:$0xff]
    %v3938 = vld [vmem:[#allocation6 + $0x320] sm:$0xff]
    %v3939 = vld [vmem:[#allocation6 + $0x328] sm:$0xff]
    %v3940 = vld [vmem:[#allocation6 + $0x330] sm:$0xff]
    %v3941 = vld [vmem:[#allocation6 + $0x338] sm:$0xff]
    %v3942 = vld [vmem:[#allocation6 + $0x340] sm:$0xff]
    %v3943 = vld [vmem:[#allocation6 + $0x348] sm:$0xff]
    %v3944 = vld [vmem:[#allocation6 + $0x350] sm:$0xff]
    %v3945 = vld [vmem:[#allocation6 + $0x358] sm:$0xff]
    %v3946 = vld [vmem:[#allocation6 + $0x360] sm:$0xff]
    %v3947 = vld [vmem:[#allocation6 + $0x368] sm:$0xff]
    %v3948 = vld [vmem:[#allocation6 + $0x370] sm:$0xff]
    %v3949 = vld [vmem:[#allocation6 + $0x378] sm:$0xff]
    %v3950 = vld [vmem:[#allocation6 + $0x380] sm:$0xff]
    %v3951 = vld [vmem:[#allocation6 + $0x388] sm:$0xff]
    %v3952 = vld [vmem:[#allocation6 + $0x390] sm:$0xff]
    %v3953 = vld [vmem:[#allocation6 + $0x398] sm:$0xff]
    %v3954 = vld [vmem:[#allocation6 + $0x3a0] sm:$0xff]
    %v3955 = vld [vmem:[#allocation6 + $0x3a8] sm:$0xff]
    %v3956 = vld [vmem:[#allocation6 + $0x3b0] sm:$0xff]
    %v3957 = vld [vmem:[#allocation6 + $0x3b8] sm:$0xff]
    %v3958 = vld [vmem:[#allocation6 + $0x3c0] sm:$0xff]
    %v3959 = vld [vmem:[#allocation6 + $0x3c8] sm:$0xff]
    %v3960 = vld [vmem:[#allocation6 + $0x3d0] sm:$0xff]
    %v3961 = vld [vmem:[#allocation6 + $0x3d8] sm:$0xff]
    %v3962 = vld [vmem:[#allocation6 + $0x3e0] sm:$0xff]
    %v3963 = vld [vmem:[#allocation6 + $0x3e8] sm:$0xff]
    %v3964 = vld [vmem:[#allocation6 + $0x3f0] sm:$0xff]
    %v3965 = vld [vmem:[#allocation6 + $0x3f8] sm:$0xff]
    %v3966 = vld [vmem:[%s8] sm:$0xf]
    %v3968 = vperm.slane %v3966, 0
    %v3969 = vperm.slane %v3966, 1
    %v3970 = vperm.slane %v3966, 2
    %v3971 = vperm.slane %v3966, 3
    %v4104 = vunpack.c.l.b16 %v3838
    %v4105 = vunpack.c.h.b16 %v3838
    %v4106 = vunpack.c.l.b16 %v3839
    %v4107 = vunpack.c.h.b16 %v3839
    %v4108 = vunpack.c.l.b16 %v3840
    %v4109 = vunpack.c.h.b16 %v3840
    %v4110 = vunpack.c.l.b16 %v3841
    %v4111 = vunpack.c.h.b16 %v3841
    %v4112 = vunpack.c.l.b16 %v3842
    %v4113 = vunpack.c.h.b16 %v3842
    %v4114 = vunpack.c.l.b16 %v3843
    %v4115 = vunpack.c.h.b16 %v3843
    %v4116 = vunpack.c.l.b16 %v3844
    %v4117 = vunpack.c.h.b16 %v3844
    %v4118 = vunpack.c.l.b16 %v3845
    %v4119 = vunpack.c.h.b16 %v3845
    %v4120 = vunpack.c.l.b16 %v3846
    %v4121 = vunpack.c.h.b16 %v3846
    %v4122 = vunpack.c.l.b16 %v3847
    %v4123 = vunpack.c.h.b16 %v3847
    %v4124 = vunpack.c.l.b16 %v3848
    %v4125 = vunpack.c.h.b16 %v3848
    %v4126 = vunpack.c.l.b16 %v3849
    %v4127 = vunpack.c.h.b16 %v3849
    %v4128 = vunpack.c.l.b16 %v3850
    %v4129 = vunpack.c.h.b16 %v3850
    %v4130 = vunpack.c.l.b16 %v3851
    %v4131 = vunpack.c.h.b16 %v3851
    %v4132 = vunpack.c.l.b16 %v3852
    %v4133 = vunpack.c.h.b16 %v3852
    %v4134 = vunpack.c.l.b16 %v3853
    %v4135 = vunpack.c.h.b16 %v3853
    %v4136 = vunpack.c.l.b16 %v3854
    %v4137 = vunpack.c.h.b16 %v3854
    %v4138 = vunpack.c.l.b16 %v3855
    %v4139 = vunpack.c.h.b16 %v3855
    %v4140 = vunpack.c.l.b16 %v3856
    %v4141 = vunpack.c.h.b16 %v3856
    %v4142 = vunpack.c.l.b16 %v3857
    %v4143 = vunpack.c.h.b16 %v3857
    %v4144 = vunpack.c.l.b16 %v3858
    %v4145 = vunpack.c.h.b16 %v3858
    %v4146 = vunpack.c.l.b16 %v3859
    %v4147 = vunpack.c.h.b16 %v3859
    %v4148 = vunpack.c.l.b16 %v3860
    %v4149 = vunpack.c.h.b16 %v3860
    %v4150 = vunpack.c.l.b16 %v3861
    %v4151 = vunpack.c.h.b16 %v3861
    %v4152 = vunpack.c.l.b16 %v3862
    %v4153 = vunpack.c.h.b16 %v3862
    %v4154 = vunpack.c.l.b16 %v3863
    %v4155 = vunpack.c.h.b16 %v3863
    %v4156 = vunpack.c.l.b16 %v3864
    %v4157 = vunpack.c.h.b16 %v3864
    %v4158 = vunpack.c.l.b16 %v3865
    %v4159 = vunpack.c.h.b16 %v3865
    %v4160 = vunpack.c.l.b16 %v3866
    %v4161 = vunpack.c.h.b16 %v3866
    %v4162 = vunpack.c.l.b16 %v3867
    %v4163 = vunpack.c.h.b16 %v3867
    %v4164 = vunpack.c.l.b16 %v3868
    %v4165 = vunpack.c.h.b16 %v3868
    %v4166 = vunpack.c.l.b16 %v3869
    %v4167 = vunpack.c.h.b16 %v3869
    %v4168 = vunpack.c.l.b16 %v3870
    %v4169 = vunpack.c.h.b16 %v3870
    %v4170 = vunpack.c.l.b16 %v3871
    %v4171 = vunpack.c.h.b16 %v3871
    %v4172 = vunpack.c.l.b16 %v3872
    %v4173 = vunpack.c.h.b16 %v3872
    %v4174 = vunpack.c.l.b16 %v3873
    %v4175 = vunpack.c.h.b16 %v3873
    %v4176 = vunpack.c.l.b16 %v3874
    %v4177 = vunpack.c.h.b16 %v3874
    %v4178 = vunpack.c.l.b16 %v3875
    %v4179 = vunpack.c.h.b16 %v3875
    %v4180 = vunpack.c.l.b16 %v3876
    %v4181 = vunpack.c.h.b16 %v3876
    %v4182 = vunpack.c.l.b16 %v3877
    %v4183 = vunpack.c.h.b16 %v3877
    %v4184 = vunpack.c.l.b16 %v3878
    %v4185 = vunpack.c.h.b16 %v3878
    %v4186 = vunpack.c.l.b16 %v3879
    %v4187 = vunpack.c.h.b16 %v3879
    %v4188 = vunpack.c.l.b16 %v3880
    %v4189 = vunpack.c.h.b16 %v3880
    %v4190 = vunpack.c.l.b16 %v3881
    %v4191 = vunpack.c.h.b16 %v3881
    %v4192 = vunpack.c.l.b16 %v3882
    %v4193 = vunpack.c.h.b16 %v3882
    %v4194 = vunpack.c.l.b16 %v3883
    %v4195 = vunpack.c.h.b16 %v3883
    %v4196 = vunpack.c.l.b16 %v3884
    %v4197 = vunpack.c.h.b16 %v3884
    %v4198 = vunpack.c.l.b16 %v3885
    %v4199 = vunpack.c.h.b16 %v3885
    %v4200 = vunpack.c.l.b16 %v3886
    %v4201 = vunpack.c.h.b16 %v3886
    %v4202 = vunpack.c.l.b16 %v3887
    %v4203 = vunpack.c.h.b16 %v3887
    %v4204 = vunpack.c.l.b16 %v3888
    %v4205 = vunpack.c.h.b16 %v3888
    %v4206 = vunpack.c.l.b16 %v3889
    %v4207 = vunpack.c.h.b16 %v3889
    %v4208 = vunpack.c.l.b16 %v3890
    %v4209 = vunpack.c.h.b16 %v3890
    %v4210 = vunpack.c.l.b16 %v3891
    %v4211 = vunpack.c.h.b16 %v3891
    %v4212 = vunpack.c.l.b16 %v3892
    %v4213 = vunpack.c.h.b16 %v3892
    %v4214 = vunpack.c.l.b16 %v3893
    %v4215 = vunpack.c.h.b16 %v3893
    %v4216 = vunpack.c.l.b16 %v3894
    %v4217 = vunpack.c.h.b16 %v3894
    %v4218 = vunpack.c.l.b16 %v3895
    %v4219 = vunpack.c.h.b16 %v3895
    %v4220 = vunpack.c.l.b16 %v3896
    %v4221 = vunpack.c.h.b16 %v3896
    %v4222 = vunpack.c.l.b16 %v3897
    %v4223 = vunpack.c.h.b16 %v3897
    %v4224 = vunpack.c.l.b16 %v3898
    %v4225 = vunpack.c.h.b16 %v3898
    %v4226 = vunpack.c.l.b16 %v3899
    %v4227 = vunpack.c.h.b16 %v3899
    %v4228 = vunpack.c.l.b16 %v3900
    %v4229 = vunpack.c.h.b16 %v3900
    %v4230 = vunpack.c.l.b16 %v3901
    %v4231 = vunpack.c.h.b16 %v3901
    %v4232 = vunpack.c.l.b16 %v3902
    %v4233 = vunpack.c.h.b16 %v3902
    %v4234 = vunpack.c.l.b16 %v3903
    %v4235 = vunpack.c.h.b16 %v3903
    %v4236 = vunpack.c.l.b16 %v3904
    %v4237 = vunpack.c.h.b16 %v3904
    %v4238 = vunpack.c.l.b16 %v3905
    %v4239 = vunpack.c.h.b16 %v3905
    %v4240 = vunpack.c.l.b16 %v3906
    %v4241 = vunpack.c.h.b16 %v3906
    %v4242 = vunpack.c.l.b16 %v3907
    %v4243 = vunpack.c.h.b16 %v3907
    %v4244 = vunpack.c.l.b16 %v3908
    %v4245 = vunpack.c.h.b16 %v3908
    %v4246 = vunpack.c.l.b16 %v3909
    %v4247 = vunpack.c.h.b16 %v3909
    %v4248 = vunpack.c.l.b16 %v3910
    %v4249 = vunpack.c.h.b16 %v3910
    %v4250 = vunpack.c.l.b16 %v3911
    %v4251 = vunpack.c.h.b16 %v3911
    %v4252 = vunpack.c.l.b16 %v3912
    %v4253 = vunpack.c.h.b16 %v3912
    %v4254 = vunpack.c.l.b16 %v3913
    %v4255 = vunpack.c.h.b16 %v3913
    %v4256 = vunpack.c.l.b16 %v3914
    %v4257 = vunpack.c.h.b16 %v3914
    %v4258 = vunpack.c.l.b16 %v3915
    %v4259 = vunpack.c.h.b16 %v3915
    %v4260 = vunpack.c.l.b16 %v3916
    %v4261 = vunpack.c.h.b16 %v3916
    %v4262 = vunpack.c.l.b16 %v3917
    %v4263 = vunpack.c.h.b16 %v3917
    %v4264 = vunpack.c.l.b16 %v3918
    %v4265 = vunpack.c.h.b16 %v3918
    %v4266 = vunpack.c.l.b16 %v3919
    %v4267 = vunpack.c.h.b16 %v3919
    %v4268 = vunpack.c.l.b16 %v3920
    %v4269 = vunpack.c.h.b16 %v3920
    %v4270 = vunpack.c.l.b16 %v3921
    %v4271 = vunpack.c.h.b16 %v3921
    %v4272 = vunpack.c.l.b16 %v3922
    %v4273 = vunpack.c.h.b16 %v3922
    %v4274 = vunpack.c.l.b16 %v3923
    %v4275 = vunpack.c.h.b16 %v3923
    %v4276 = vunpack.c.l.b16 %v3924
    %v4277 = vunpack.c.h.b16 %v3924
    %v4278 = vunpack.c.l.b16 %v3925
    %v4279 = vunpack.c.h.b16 %v3925
    %v4280 = vunpack.c.l.b16 %v3926
    %v4281 = vunpack.c.h.b16 %v3926
    %v4282 = vunpack.c.l.b16 %v3927
    %v4283 = vunpack.c.h.b16 %v3927
    %v4284 = vunpack.c.l.b16 %v3928
    %v4285 = vunpack.c.h.b16 %v3928
    %v4286 = vunpack.c.l.b16 %v3929
    %v4287 = vunpack.c.h.b16 %v3929
    %v4288 = vunpack.c.l.b16 %v3930
    %v4289 = vunpack.c.h.b16 %v3930
    %v4290 = vunpack.c.l.b16 %v3931
    %v4291 = vunpack.c.h.b16 %v3931
    %v4292 = vunpack.c.l.b16 %v3932
    %v4293 = vunpack.c.h.b16 %v3932
    %v4294 = vunpack.c.l.b16 %v3933
    %v4295 = vunpack.c.h.b16 %v3933
    %v4296 = vunpack.c.l.b16 %v3934
    %v4297 = vunpack.c.h.b16 %v3934
    %v4298 = vunpack.c.l.b16 %v3935
    %v4299 = vunpack.c.h.b16 %v3935
    %v4300 = vunpack.c.l.b16 %v3936
    %v4301 = vunpack.c.h.b16 %v3936
    %v4302 = vunpack.c.l.b16 %v3937
    %v4303 = vunpack.c.h.b16 %v3937
    %v4304 = vunpack.c.l.b16 %v3938
    %v4305 = vunpack.c.h.b16 %v3938
    %v4306 = vunpack.c.l.b16 %v3939
    %v4307 = vunpack.c.h.b16 %v3939
    %v4308 = vunpack.c.l.b16 %v3940
    %v4309 = vunpack.c.h.b16 %v3940
    %v4310 = vunpack.c.l.b16 %v3941
    %v4311 = vunpack.c.h.b16 %v3941
    %v4312 = vunpack.c.l.b16 %v3942
    %v4313 = vunpack.c.h.b16 %v3942
    %v4314 = vunpack.c.l.b16 %v3943
    %v4315 = vunpack.c.h.b16 %v3943
    %v4316 = vunpack.c.l.b16 %v3944
    %v4317 = vunpack.c.h.b16 %v3944
    %v4318 = vunpack.c.l.b16 %v3945
    %v4319 = vunpack.c.h.b16 %v3945
    %v4320 = vunpack.c.l.b16 %v3946
    %v4321 = vunpack.c.h.b16 %v3946
    %v4322 = vunpack.c.l.b16 %v3947
    %v4323 = vunpack.c.h.b16 %v3947
    %v4324 = vunpack.c.l.b16 %v3948
    %v4325 = vunpack.c.h.b16 %v3948
    %v4326 = vunpack.c.l.b16 %v3949
    %v4327 = vunpack.c.h.b16 %v3949
    %v4328 = vunpack.c.l.b16 %v3950
    %v4329 = vunpack.c.h.b16 %v3950
    %v4330 = vunpack.c.l.b16 %v3951
    %v4331 = vunpack.c.h.b16 %v3951
    %v4332 = vunpack.c.l.b16 %v3952
    %v4333 = vunpack.c.h.b16 %v3952
    %v4334 = vunpack.c.l.b16 %v3953
    %v4335 = vunpack.c.h.b16 %v3953
    %v4336 = vunpack.c.l.b16 %v3954
    %v4337 = vunpack.c.h.b16 %v3954
    %v4338 = vunpack.c.l.b16 %v3955
    %v4339 = vunpack.c.h.b16 %v3955
    %v4340 = vunpack.c.l.b16 %v3956
    %v4341 = vunpack.c.h.b16 %v3956
    %v4342 = vunpack.c.l.b16 %v3957
    %v4343 = vunpack.c.h.b16 %v3957
    %v4344 = vunpack.c.l.b16 %v3958
    %v4345 = vunpack.c.h.b16 %v3958
    %v4346 = vunpack.c.l.b16 %v3959
    %v4347 = vunpack.c.h.b16 %v3959
    %v4348 = vunpack.c.l.b16 %v3960
    %v4349 = vunpack.c.h.b16 %v3960
    %v4350 = vunpack.c.l.b16 %v3961
    %v4351 = vunpack.c.h.b16 %v3961
    %v4352 = vunpack.c.l.b16 %v3962
    %v4353 = vunpack.c.h.b16 %v3962
    %v4354 = vunpack.c.l.b16 %v3963
    %v4355 = vunpack.c.h.b16 %v3963
    %v4356 = vunpack.c.l.b16 %v3964
    %v4357 = vunpack.c.h.b16 %v3964
    %v4358 = vunpack.c.l.b16 %v3965
    %v4359 = vunpack.c.h.b16 %v3965
    %v4360 = vpack.c.b16 %v4108, %v4104
    %v4361 = vpack.c.b16 %v4109, %v4105
    %v4362 = vpack.c.b16 %v4110, %v4106
    %v4363 = vpack.c.b16 %v4111, %v4107
    %v4364 = vpack.c.b16 %v4116, %v4112
    %v4365 = vpack.c.b16 %v4117, %v4113
    %v4366 = vpack.c.b16 %v4118, %v4114
    %v4367 = vpack.c.b16 %v4119, %v4115
    %v4368 = vpack.c.b16 %v4124, %v4120
    %v4369 = vpack.c.b16 %v4125, %v4121
    %v4370 = vpack.c.b16 %v4126, %v4122
    %v4371 = vpack.c.b16 %v4127, %v4123
    %v4372 = vpack.c.b16 %v4132, %v4128
    %v4373 = vpack.c.b16 %v4133, %v4129
    %v4374 = vpack.c.b16 %v4134, %v4130
    %v4375 = vpack.c.b16 %v4135, %v4131
    %v4376 = vpack.c.b16 %v4140, %v4136
    %v4377 = vpack.c.b16 %v4141, %v4137
    %v4378 = vpack.c.b16 %v4142, %v4138
    %v4379 = vpack.c.b16 %v4143, %v4139
    %v4380 = vpack.c.b16 %v4148, %v4144
    %v4381 = vpack.c.b16 %v4149, %v4145
    %v4382 = vpack.c.b16 %v4150, %v4146
    %v4383 = vpack.c.b16 %v4151, %v4147
    %v4384 = vpack.c.b16 %v4156, %v4152
    %v4385 = vpack.c.b16 %v4157, %v4153
    %v4386 = vpack.c.b16 %v4158, %v4154
    %v4387 = vpack.c.b16 %v4159, %v4155
    %v4388 = vpack.c.b16 %v4164, %v4160
    %v4389 = vpack.c.b16 %v4165, %v4161
    %v4390 = vpack.c.b16 %v4166, %v4162
    %v4391 = vpack.c.b16 %v4167, %v4163
    %v4392 = vpack.c.b16 %v4172, %v4168
    %v4393 = vpack.c.b16 %v4173, %v4169
    %v4394 = vpack.c.b16 %v4174, %v4170
    %v4395 = vpack.c.b16 %v4175, %v4171
    %v4396 = vpack.c.b16 %v4180, %v4176
    %v4397 = vpack.c.b16 %v4181, %v4177
    %v4398 = vpack.c.b16 %v4182, %v4178
    %v4399 = vpack.c.b16 %v4183, %v4179
    %v4400 = vpack.c.b16 %v4188, %v4184
    %v4401 = vpack.c.b16 %v4189, %v4185
    %v4402 = vpack.c.b16 %v4190, %v4186
    %v4403 = vpack.c.b16 %v4191, %v4187
    %v4404 = vpack.c.b16 %v4196, %v4192
    %v4405 = vpack.c.b16 %v4197, %v4193
    %v4406 = vpack.c.b16 %v4198, %v4194
    %v4407 = vpack.c.b16 %v4199, %v4195
    %v4408 = vpack.c.b16 %v4204, %v4200
    %v4409 = vpack.c.b16 %v4205, %v4201
    %v4410 = vpack.c.b16 %v4206, %v4202
    %v4411 = vpack.c.b16 %v4207, %v4203
    %v4412 = vpack.c.b16 %v4212, %v4208
    %v4413 = vpack.c.b16 %v4213, %v4209
    %v4414 = vpack.c.b16 %v4214, %v4210
    %v4415 = vpack.c.b16 %v4215, %v4211
    %v4416 = vpack.c.b16 %v4220, %v4216
    %v4417 = vpack.c.b16 %v4221, %v4217
    %v4418 = vpack.c.b16 %v4222, %v4218
    %v4419 = vpack.c.b16 %v4223, %v4219
    %v4420 = vpack.c.b16 %v4228, %v4224
    %v4421 = vpack.c.b16 %v4229, %v4225
    %v4422 = vpack.c.b16 %v4230, %v4226
    %v4423 = vpack.c.b16 %v4231, %v4227
    %v4424 = vpack.c.b16 %v4236, %v4232
    %v4425 = vpack.c.b16 %v4237, %v4233
    %v4426 = vpack.c.b16 %v4238, %v4234
    %v4427 = vpack.c.b16 %v4239, %v4235
    %v4428 = vpack.c.b16 %v4244, %v4240
    %v4429 = vpack.c.b16 %v4245, %v4241
    %v4430 = vpack.c.b16 %v4246, %v4242
    %v4431 = vpack.c.b16 %v4247, %v4243
    %v4432 = vpack.c.b16 %v4252, %v4248
    %v4433 = vpack.c.b16 %v4253, %v4249
    %v4434 = vpack.c.b16 %v4254, %v4250
    %v4435 = vpack.c.b16 %v4255, %v4251
    %v4436 = vpack.c.b16 %v4260, %v4256
    %v4437 = vpack.c.b16 %v4261, %v4257
    %v4438 = vpack.c.b16 %v4262, %v4258
    %v4439 = vpack.c.b16 %v4263, %v4259
    %v4440 = vpack.c.b16 %v4268, %v4264
    %v4441 = vpack.c.b16 %v4269, %v4265
    %v4442 = vpack.c.b16 %v4270, %v4266
    %v4443 = vpack.c.b16 %v4271, %v4267
    %v4444 = vpack.c.b16 %v4276, %v4272
    %v4445 = vpack.c.b16 %v4277, %v4273
    %v4446 = vpack.c.b16 %v4278, %v4274
    %v4447 = vpack.c.b16 %v4279, %v4275
    %v4448 = vpack.c.b16 %v4284, %v4280
    %v4449 = vpack.c.b16 %v4285, %v4281
    %v4450 = vpack.c.b16 %v4286, %v4282
    %v4451 = vpack.c.b16 %v4287, %v4283
    %v4452 = vpack.c.b16 %v4292, %v4288
    %v4453 = vpack.c.b16 %v4293, %v4289
    %v4454 = vpack.c.b16 %v4294, %v4290
    %v4455 = vpack.c.b16 %v4295, %v4291
    %v4456 = vpack.c.b16 %v4300, %v4296
    %v4457 = vpack.c.b16 %v4301, %v4297
    %v4458 = vpack.c.b16 %v4302, %v4298
    %v4459 = vpack.c.b16 %v4303, %v4299
    %v4460 = vpack.c.b16 %v4308, %v4304
    %v4461 = vpack.c.b16 %v4309, %v4305
    %v4462 = vpack.c.b16 %v4310, %v4306
    %v4463 = vpack.c.b16 %v4311, %v4307
    %v4464 = vpack.c.b16 %v4316, %v4312
    %v4465 = vpack.c.b16 %v4317, %v4313
    %v4466 = vpack.c.b16 %v4318, %v4314
    %v4467 = vpack.c.b16 %v4319, %v4315
    %v4468 = vpack.c.b16 %v4324, %v4320
    %v4469 = vpack.c.b16 %v4325, %v4321
    %v4470 = vpack.c.b16 %v4326, %v4322
    %v4471 = vpack.c.b16 %v4327, %v4323
    %v4472 = vpack.c.b16 %v4332, %v4328
    %v4473 = vpack.c.b16 %v4333, %v4329
    %v4474 = vpack.c.b16 %v4334, %v4330
    %v4475 = vpack.c.b16 %v4335, %v4331
    %v4476 = vpack.c.b16 %v4340, %v4336
    %v4477 = vpack.c.b16 %v4341, %v4337
    %v4478 = vpack.c.b16 %v4342, %v4338
    %v4479 = vpack.c.b16 %v4343, %v4339
    %v4480 = vpack.c.b16 %v4348, %v4344
    %v4481 = vpack.c.b16 %v4349, %v4345
    %v4482 = vpack.c.b16 %v4350, %v4346
    %v4483 = vpack.c.b16 %v4351, %v4347
    %v4484 = vpack.c.b16 %v4356, %v4352
    %v4485 = vpack.c.b16 %v4357, %v4353
    %v4486 = vpack.c.b16 %v4358, %v4354
    %v4487 = vpack.c.b16 %v4359, %v4355
    %4616 = vmatpush.bf16.msra.mxu0 %v4388
    %4617 = vmatpush.bf16.msra.mxu0 %v4384
    %4618 = vmatpush.bf16.msra.mxu0 %v4380
    %4619 = vmatpush.bf16.msra.mxu0 %v4376
    %4620 = vmatpush.bf16.msra.mxu0 %v4372
    %4621 = vmatpush.bf16.msra.mxu0 %v4368
    %4622 = vmatpush.bf16.msra.mxu0 %v4364
    %4623 = vmatpush.bf16.msra.mxu0 %v4360
    %4624 = vmatmul.bf16.gmra.mxu0 %v3806
    %v4625 = vpop.f32.mrf.mxu0
    %v4626 = vadd.f32 %v3968, %v4625
    %v4627 = vpop.f32.mrf.mxu0
    %v4628 = vadd.f32 %v3968, %v4627
    %4629 = vmatmul.bf16.gmra.mxu0 %v3810
    %v4630 = vpop.f32.mrf.mxu0
    %v4631 = vadd.f32 %v3968, %v4630
    %v4632 = vpop.f32.mrf.mxu0
    %v4633 = vadd.f32 %v3968, %v4632
    %4634 = vmatmul.bf16.gmra.mxu0 %v3814
    %v4635 = vpop.f32.mrf.mxu0
    %v4636 = vadd.f32 %v3968, %v4635
    %v4637 = vpop.f32.mrf.mxu0
    %v4638 = vadd.f32 %v3968, %v4637
    %4639 = vmatmul.bf16.gmra.mxu0 %v3818
    %v4640 = vpop.f32.mrf.mxu0
    %v4641 = vadd.f32 %v3968, %v4640
    %v4642 = vpop.f32.mrf.mxu0
    %v4643 = vadd.f32 %v3968, %v4642
    %4644 = vmatmul.bf16.gmra.mxu0 %v3822
    %v4645 = vpop.f32.mrf.mxu0
    %v4646 = vadd.f32 %v3968, %v4645
    %v4647 = vpop.f32.mrf.mxu0
    %v4648 = vadd.f32 %v3968, %v4647
    %4649 = vmatmul.bf16.gmra.mxu0 %v3826
    %v4650 = vpop.f32.mrf.mxu0
    %v4651 = vadd.f32 %v3968, %v4650
    %v4652 = vpop.f32.mrf.mxu0
    %v4653 = vadd.f32 %v3968, %v4652
    %4654 = vmatmul.bf16.gmra.mxu0 %v3830
    %v4655 = vpop.f32.mrf.mxu0
    %v4656 = vadd.f32 %v3968, %v4655
    %v4657 = vpop.f32.mrf.mxu0
    %v4658 = vadd.f32 %v3968, %v4657
    %4659 = vmatmul.bf16.gmra.mxu0 %v3834
    %v4660 = vpop.f32.mrf.mxu0
    %v4661 = vadd.f32 %v3968, %v4660
    %v4662 = vpop.f32.mrf.mxu0
    %v4663 = vadd.f32 %v3968, %v4662
    %4664 = vdwg.mxu0
    %4665 = vmatpush.bf16.msra.mxu0 %v4420
    %4666 = vmatpush.bf16.msra.mxu0 %v4416
    %4667 = vmatpush.bf16.msra.mxu0 %v4412
    %4668 = vmatpush.bf16.msra.mxu0 %v4408
    %4669 = vmatpush.bf16.msra.mxu0 %v4404
    %4670 = vmatpush.bf16.msra.mxu0 %v4400
    %4671 = vmatpush.bf16.msra.mxu0 %v4396
    %4672 = vmatpush.bf16.msra.mxu0 %v4392
    %4673 = vmatmul.bf16.gmra.mxu0 %v3807
    %v4674 = vpop.f32.mrf.mxu0
    %v4675 = vadd.f32 %v4626, %v4674
    %v4676 = vpop.f32.mrf.mxu0
    %v4677 = vadd.f32 %v4628, %v4676
    %4678 = vmatmul.bf16.gmra.mxu0 %v3811
    %v4679 = vpop.f32.mrf.mxu0
    %v4680 = vadd.f32 %v4631, %v4679
    %v4681 = vpop.f32.mrf.mxu0
    %v4682 = vadd.f32 %v4633, %v4681
    %4683 = vmatmul.bf16.gmra.mxu0 %v3815
    %v4684 = vpop.f32.mrf.mxu0
    %v4685 = vadd.f32 %v4636, %v4684
    %v4686 = vpop.f32.mrf.mxu0
    %v4687 = vadd.f32 %v4638, %v4686
    %4688 = vmatmul.bf16.gmra.mxu0 %v3819
    %v4689 = vpop.f32.mrf.mxu0
    %v4690 = vadd.f32 %v4641, %v4689
    %v4691 = vpop.f32.mrf.mxu0
    %v4692 = vadd.f32 %v4643, %v4691
    %4693 = vmatmul.bf16.gmra.mxu0 %v3823
    %v4694 = vpop.f32.mrf.mxu0
    %v4695 = vadd.f32 %v4646, %v4694
    %v4696 = vpop.f32.mrf.mxu0
    %v4697 = vadd.f32 %v4648, %v4696
    %4698 = vmatmul.bf16.gmra.mxu0 %v3827
    %v4699 = vpop.f32.mrf.mxu0
    %v4700 = vadd.f32 %v4651, %v4699
    %v4701 = vpop.f32.mrf.mxu0
    %v4702 = vadd.f32 %v4653, %v4701
    %4703 = vmatmul.bf16.gmra.mxu0 %v3831
    %v4704 = vpop.f32.mrf.mxu0
    %v4705 = vadd.f32 %v4656, %v4704
    %v4706 = vpop.f32.mrf.mxu0
    %v4707 = vadd.f32 %v4658, %v4706
    %4708 = vmatmul.bf16.gmra.mxu0 %v3835
    %v4709 = vpop.f32.mrf.mxu0
    %v4710 = vadd.f32 %v4661, %v4709
    %v4711 = vpop.f32.mrf.mxu0
    %v4712 = vadd.f32 %v4663, %v4711
    %4713 = vdwg.mxu0
    %4714 = vmatpush.bf16.msra.mxu0 %v4452
    %4715 = vmatpush.bf16.msra.mxu0 %v4448
    %4716 = vmatpush.bf16.msra.mxu0 %v4444
    %4717 = vmatpush.bf16.msra.mxu0 %v4440
    %4718 = vmatpush.bf16.msra.mxu0 %v4436
    %4719 = vmatpush.bf16.msra.mxu0 %v4432
    %4720 = vmatpush.bf16.msra.mxu0 %v4428
    %4721 = vmatpush.bf16.msra.mxu0 %v4424
    %4722 = vmatmul.bf16.gmra.mxu0 %v3808
    %v4723 = vpop.f32.mrf.mxu0
    %v4724 = vadd.f32 %v4675, %v4723
    %v4725 = vpop.f32.mrf.mxu0
    %v4726 = vadd.f32 %v4677, %v4725
    %4727 = vmatmul.bf16.gmra.mxu0 %v3812
    %v4728 = vpop.f32.mrf.mxu0
    %v4729 = vadd.f32 %v4680, %v4728
    %v4730 = vpop.f32.mrf.mxu0
    %v4731 = vadd.f32 %v4682, %v4730
    %4732 = vmatmul.bf16.gmra.mxu0 %v3816
    %v4733 = vpop.f32.mrf.mxu0
    %v4734 = vadd.f32 %v4685, %v4733
    %v4735 = vpop.f32.mrf.mxu0
    %v4736 = vadd.f32 %v4687, %v4735
    %4737 = vmatmul.bf16.gmra.mxu0 %v3820
    %v4738 = vpop.f32.mrf.mxu0
    %v4739 = vadd.f32 %v4690, %v4738
    %v4740 = vpop.f32.mrf.mxu0
    %v4741 = vadd.f32 %v4692, %v4740
    %4742 = vmatmul.bf16.gmra.mxu0 %v3824
    %v4743 = vpop.f32.mrf.mxu0
    %v4744 = vadd.f32 %v4695, %v4743
    %v4745 = vpop.f32.mrf.mxu0
    %v4746 = vadd.f32 %v4697, %v4745
    %4747 = vmatmul.bf16.gmra.mxu0 %v3828
    %v4748 = vpop.f32.mrf.mxu0
    %v4749 = vadd.f32 %v4700, %v4748
    %v4750 = vpop.f32.mrf.mxu0
    %v4751 = vadd.f32 %v4702, %v4750
    %4752 = vmatmul.bf16.gmra.mxu0 %v3832
    %v4753 = vpop.f32.mrf.mxu0
    %v4754 = vadd.f32 %v4705, %v4753
    %v4755 = vpop.f32.mrf.mxu0
    %v4756 = vadd.f32 %v4707, %v4755
    %4757 = vmatmul.bf16.gmra.mxu0 %v3836
    %v4758 = vpop.f32.mrf.mxu0
    %v4759 = vadd.f32 %v4710, %v4758
    %v4760 = vpop.f32.mrf.mxu0
    %v4761 = vadd.f32 %v4712, %v4760
    %4762 = vdwg.mxu0
    %4763 = vmatpush.bf16.msra.mxu0 %v4484
    %4764 = vmatpush.bf16.msra.mxu0 %v4480
    %4765 = vmatpush.bf16.msra.mxu0 %v4476
    %4766 = vmatpush.bf16.msra.mxu0 %v4472
    %4767 = vmatpush.bf16.msra.mxu0 %v4468
    %4768 = vmatpush.bf16.msra.mxu0 %v4464
    %4769 = vmatpush.bf16.msra.mxu0 %v4460
    %4770 = vmatpush.bf16.msra.mxu0 %v4456
    %4771 = vmatmul.bf16.gmra.mxu0 %v3809
    %v4772 = vpop.f32.mrf.mxu0
    %v4773 = vadd.f32 %v4724, %v4772
    %v4774 = vpop.f32.mrf.mxu0
    %v4775 = vadd.f32 %v4726, %v4774
    %4776 = vmatmul.bf16.gmra.mxu0 %v3813
    %v4777 = vpop.f32.mrf.mxu0
    %v4778 = vadd.f32 %v4729, %v4777
    %v4779 = vpop.f32.mrf.mxu0
    %v4780 = vadd.f32 %v4731, %v4779
    %4781 = vmatmul.bf16.gmra.mxu0 %v3817
    %v4782 = vpop.f32.mrf.mxu0
    %v4783 = vadd.f32 %v4734, %v4782
    %v4784 = vpop.f32.mrf.mxu0
    %v4785 = vadd.f32 %v4736, %v4784
    %4786 = vmatmul.bf16.gmra.mxu0 %v3821
    %v4787 = vpop.f32.mrf.mxu0
    %v4788 = vadd.f32 %v4739, %v4787
    %v4789 = vpop.f32.mrf.mxu0
    %v4790 = vadd.f32 %v4741, %v4789
    %4791 = vmatmul.bf16.gmra.mxu0 %v3825
    %v4792 = vpop.f32.mrf.mxu0
    %v4793 = vadd.f32 %v4744, %v4792
    %v4794 = vpop.f32.mrf.mxu0
    %v4795 = vadd.f32 %v4746, %v4794
    %4796 = vmatmul.bf16.gmra.mxu0 %v3829
    %v4797 = vpop.f32.mrf.mxu0
    %v4798 = vadd.f32 %v4749, %v4797
    %v4799 = vpop.f32.mrf.mxu0
    %v4800 = vadd.f32 %v4751, %v4799
    %4801 = vmatmul.bf16.gmra.mxu0 %v3833
    %v4802 = vpop.f32.mrf.mxu0
    %v4803 = vadd.f32 %v4754, %v4802
    %v4804 = vpop.f32.mrf.mxu0
    %v4805 = vadd.f32 %v4756, %v4804
    %4806 = vmatmul.bf16.gmra.mxu0 %v3837
    %v4807 = vpop.f32.mrf.mxu0
    %v4808 = vadd.f32 %v4759, %v4807
    %v4809 = vpop.f32.mrf.mxu0
    %v4810 = vadd.f32 %v4761, %v4809
    %4811 = vdwg.mxu0
    %4812 = vmatpush.bf16.msra.mxu0 %v4389
    %4813 = vmatpush.bf16.msra.mxu0 %v4385
    %4814 = vmatpush.bf16.msra.mxu0 %v4381
    %4815 = vmatpush.bf16.msra.mxu0 %v4377
    %4816 = vmatpush.bf16.msra.mxu0 %v4373
    %4817 = vmatpush.bf16.msra.mxu0 %v4369
    %4818 = vmatpush.bf16.msra.mxu0 %v4365
    %4819 = vmatpush.bf16.msra.mxu0 %v4361
    %4820 = vmatmul.bf16.gmra.mxu0 %v3806
    %v4821 = vpop.f32.mrf.mxu0
    %v4822 = vadd.f32 %v3969, %v4821
    %v4823 = vpop.f32.mrf.mxu0
    %v4824 = vadd.f32 %v3969, %v4823
    %4825 = vmatmul.bf16.gmra.mxu0 %v3810
    %v4826 = vpop.f32.mrf.mxu0
    %v4827 = vadd.f32 %v3969, %v4826
    %v4828 = vpop.f32.mrf.mxu0
    %v4829 = vadd.f32 %v3969, %v4828
    %4830 = vmatmul.bf16.gmra.mxu0 %v3814
    %v4831 = vpop.f32.mrf.mxu0
    %v4832 = vadd.f32 %v3969, %v4831
    %v4833 = vpop.f32.mrf.mxu0
    %v4834 = vadd.f32 %v3969, %v4833
    %4835 = vmatmul.bf16.gmra.mxu0 %v3818
    %v4836 = vpop.f32.mrf.mxu0
    %v4837 = vadd.f32 %v3969, %v4836
    %v4838 = vpop.f32.mrf.mxu0
    %v4839 = vadd.f32 %v3969, %v4838
    %4840 = vmatmul.bf16.gmra.mxu0 %v3822
    %v4841 = vpop.f32.mrf.mxu0
    %v4842 = vadd.f32 %v3969, %v4841
    %v4843 = vpop.f32.mrf.mxu0
    %v4844 = vadd.f32 %v3969, %v4843
    %4845 = vmatmul.bf16.gmra.mxu0 %v3826
    %v4846 = vpop.f32.mrf.mxu0
    %v4847 = vadd.f32 %v3969, %v4846
    %v4848 = vpop.f32.mrf.mxu0
    %v4849 = vadd.f32 %v3969, %v4848
    %4850 = vmatmul.bf16.gmra.mxu0 %v3830
    %v4851 = vpop.f32.mrf.mxu0
    %v4852 = vadd.f32 %v3969, %v4851
    %v4853 = vpop.f32.mrf.mxu0
    %v4854 = vadd.f32 %v3969, %v4853
    %4855 = vmatmul.bf16.gmra.mxu0 %v3834
    %v4856 = vpop.f32.mrf.mxu0
    %v4857 = vadd.f32 %v3969, %v4856
    %v4858 = vpop.f32.mrf.mxu0
    %v4859 = vadd.f32 %v3969, %v4858
    %4860 = vdwg.mxu0
    %4861 = vmatpush.bf16.msra.mxu0 %v4421
    %4862 = vmatpush.bf16.msra.mxu0 %v4417
    %4863 = vmatpush.bf16.msra.mxu0 %v4413
    %4864 = vmatpush.bf16.msra.mxu0 %v4409
    %4865 = vmatpush.bf16.msra.mxu0 %v4405
    %4866 = vmatpush.bf16.msra.mxu0 %v4401
    %4867 = vmatpush.bf16.msra.mxu0 %v4397
    %4868 = vmatpush.bf16.msra.mxu0 %v4393
    %4869 = vmatmul.bf16.gmra.mxu0 %v3807
    %v4870 = vpop.f32.mrf.mxu0
    %v4871 = vadd.f32 %v4822, %v4870
    %v4872 = vpop.f32.mrf.mxu0
    %v4873 = vadd.f32 %v4824, %v4872
    %4874 = vmatmul.bf16.gmra.mxu0 %v3811
    %v4875 = vpop.f32.mrf.mxu0
    %v4876 = vadd.f32 %v4827, %v4875
    %v4877 = vpop.f32.mrf.mxu0
    %v4878 = vadd.f32 %v4829, %v4877
    %4879 = vmatmul.bf16.gmra.mxu0 %v3815
    %v4880 = vpop.f32.mrf.mxu0
    %v4881 = vadd.f32 %v4832, %v4880
    %v4882 = vpop.f32.mrf.mxu0
    %v4883 = vadd.f32 %v4834, %v4882
    %4884 = vmatmul.bf16.gmra.mxu0 %v3819
    %v4885 = vpop.f32.mrf.mxu0
    %v4886 = vadd.f32 %v4837, %v4885
    %v4887 = vpop.f32.mrf.mxu0
    %v4888 = vadd.f32 %v4839, %v4887
    %4889 = vmatmul.bf16.gmra.mxu0 %v3823
    %v4890 = vpop.f32.mrf.mxu0
    %v4891 = vadd.f32 %v4842, %v4890
    %v4892 = vpop.f32.mrf.mxu0
    %v4893 = vadd.f32 %v4844, %v4892
    %4894 = vmatmul.bf16.gmra.mxu0 %v3827
    %v4895 = vpop.f32.mrf.mxu0
    %v4896 = vadd.f32 %v4847, %v4895
    %v4897 = vpop.f32.mrf.mxu0
    %v4898 = vadd.f32 %v4849, %v4897
    %4899 = vmatmul.bf16.gmra.mxu0 %v3831
    %v4900 = vpop.f32.mrf.mxu0
    %v4901 = vadd.f32 %v4852, %v4900
    %v4902 = vpop.f32.mrf.mxu0
    %v4903 = vadd.f32 %v4854, %v4902
    %4904 = vmatmul.bf16.gmra.mxu0 %v3835
    %v4905 = vpop.f32.mrf.mxu0
    %v4906 = vadd.f32 %v4857, %v4905
    %v4907 = vpop.f32.mrf.mxu0
    %v4908 = vadd.f32 %v4859, %v4907
    %4909 = vdwg.mxu0
    %4910 = vmatpush.bf16.msra.mxu0 %v4453
    %4911 = vmatpush.bf16.msra.mxu0 %v4449
    %4912 = vmatpush.bf16.msra.mxu0 %v4445
    %4913 = vmatpush.bf16.msra.mxu0 %v4441
    %4914 = vmatpush.bf16.msra.mxu0 %v4437
    %4915 = vmatpush.bf16.msra.mxu0 %v4433
    %4916 = vmatpush.bf16.msra.mxu0 %v4429
    %4917 = vmatpush.bf16.msra.mxu0 %v4425
    %4918 = vmatmul.bf16.gmra.mxu0 %v3808
    %v4919 = vpop.f32.mrf.mxu0
    %v4920 = vadd.f32 %v4871, %v4919
    %v4921 = vpop.f32.mrf.mxu0
    %v4922 = vadd.f32 %v4873, %v4921
    %4923 = vmatmul.bf16.gmra.mxu0 %v3812
    %v4924 = vpop.f32.mrf.mxu0
    %v4925 = vadd.f32 %v4876, %v4924
    %v4926 = vpop.f32.mrf.mxu0
    %v4927 = vadd.f32 %v4878, %v4926
    %4928 = vmatmul.bf16.gmra.mxu0 %v3816
    %v4929 = vpop.f32.mrf.mxu0
    %v4930 = vadd.f32 %v4881, %v4929
    %v4931 = vpop.f32.mrf.mxu0
    %v4932 = vadd.f32 %v4883, %v4931
    %4933 = vmatmul.bf16.gmra.mxu0 %v3820
    %v4934 = vpop.f32.mrf.mxu0
    %v4935 = vadd.f32 %v4886, %v4934
    %v4936 = vpop.f32.mrf.mxu0
    %v4937 = vadd.f32 %v4888, %v4936
    %4938 = vmatmul.bf16.gmra.mxu0 %v3824
    %v4939 = vpop.f32.mrf.mxu0
    %v4940 = vadd.f32 %v4891, %v4939
    %v4941 = vpop.f32.mrf.mxu0
    %v4942 = vadd.f32 %v4893, %v4941
    %4943 = vmatmul.bf16.gmra.mxu0 %v3828
    %v4944 = vpop.f32.mrf.mxu0
    %v4945 = vadd.f32 %v4896, %v4944
    %v4946 = vpop.f32.mrf.mxu0
    %v4947 = vadd.f32 %v4898, %v4946
    %4948 = vmatmul.bf16.gmra.mxu0 %v3832
    %v4949 = vpop.f32.mrf.mxu0
    %v4950 = vadd.f32 %v4901, %v4949
    %v4951 = vpop.f32.mrf.mxu0
    %v4952 = vadd.f32 %v4903, %v4951
    %4953 = vmatmul.bf16.gmra.mxu0 %v3836
    %v4954 = vpop.f32.mrf.mxu0
    %v4955 = vadd.f32 %v4906, %v4954
    %v4956 = vpop.f32.mrf.mxu0
    %v4957 = vadd.f32 %v4908, %v4956
    %4958 = vdwg.mxu0
    %4959 = vmatpush.bf16.msra.mxu0 %v4485
    %4960 = vmatpush.bf16.msra.mxu0 %v4481
    %4961 = vmatpush.bf16.msra.mxu0 %v4477
    %4962 = vmatpush.bf16.msra.mxu0 %v4473
    %4963 = vmatpush.bf16.msra.mxu0 %v4469
    %4964 = vmatpush.bf16.msra.mxu0 %v4465
    %4965 = vmatpush.bf16.msra.mxu0 %v4461
    %4966 = vmatpush.bf16.msra.mxu0 %v4457
    %4967 = vmatmul.bf16.gmra.mxu0 %v3809
    %v4968 = vpop.f32.mrf.mxu0
    %v4969 = vadd.f32 %v4920, %v4968
    %v4970 = vpop.f32.mrf.mxu0
    %v4971 = vadd.f32 %v4922, %v4970
    %4972 = vmatmul.bf16.gmra.mxu0 %v3813
    %v4973 = vpop.f32.mrf.mxu0
    %v4974 = vadd.f32 %v4925, %v4973
    %v4975 = vpop.f32.mrf.mxu0
    %v4976 = vadd.f32 %v4927, %v4975
    %4977 = vmatmul.bf16.gmra.mxu0 %v3817
    %v4978 = vpop.f32.mrf.mxu0
    %v4979 = vadd.f32 %v4930, %v4978
    %v4980 = vpop.f32.mrf.mxu0
    %v4981 = vadd.f32 %v4932, %v4980
    %4982 = vmatmul.bf16.gmra.mxu0 %v3821
    %v4983 = vpop.f32.mrf.mxu0
    %v4984 = vadd.f32 %v4935, %v4983
    %v4985 = vpop.f32.mrf.mxu0
    %v4986 = vadd.f32 %v4937, %v4985
    %4987 = vmatmul.bf16.gmra.mxu0 %v3825
    %v4988 = vpop.f32.mrf.mxu0
    %v4989 = vadd.f32 %v4940, %v4988
    %v4990 = vpop.f32.mrf.mxu0
    %v4991 = vadd.f32 %v4942, %v4990
    %4992 = vmatmul.bf16.gmra.mxu0 %v3829
    %v4993 = vpop.f32.mrf.mxu0
    %v4994 = vadd.f32 %v4945, %v4993
    %v4995 = vpop.f32.mrf.mxu0
    %v4996 = vadd.f32 %v4947, %v4995
    %4997 = vmatmul.bf16.gmra.mxu0 %v3833
    %v4998 = vpop.f32.mrf.mxu0
    %v4999 = vadd.f32 %v4950, %v4998
    %v5000 = vpop.f32.mrf.mxu0
    %v5001 = vadd.f32 %v4952, %v5000
    %5002 = vmatmul.bf16.gmra.mxu0 %v3837
    %v5003 = vpop.f32.mrf.mxu0
    %v5004 = vadd.f32 %v4955, %v5003
    %v5005 = vpop.f32.mrf.mxu0
    %v5006 = vadd.f32 %v4957, %v5005
    %5007 = vdwg.mxu0
    %5008 = vmatpush.bf16.msra.mxu0 %v4390
    %5009 = vmatpush.bf16.msra.mxu0 %v4386
    %5010 = vmatpush.bf16.msra.mxu0 %v4382
    %5011 = vmatpush.bf16.msra.mxu0 %v4378
    %5012 = vmatpush.bf16.msra.mxu0 %v4374
    %5013 = vmatpush.bf16.msra.mxu0 %v4370
    %5014 = vmatpush.bf16.msra.mxu0 %v4366
    %5015 = vmatpush.bf16.msra.mxu0 %v4362
    %5016 = vmatmul.bf16.gmra.mxu0 %v3806
    %v5017 = vpop.f32.mrf.mxu0
    %v5018 = vadd.f32 %v3970, %v5017
    %v5019 = vpop.f32.mrf.mxu0
    %v5020 = vadd.f32 %v3970, %v5019
    %5021 = vmatmul.bf16.gmra.mxu0 %v3810
    %v5022 = vpop.f32.mrf.mxu0
    %v5023 = vadd.f32 %v3970, %v5022
    %v5024 = vpop.f32.mrf.mxu0
    %v5025 = vadd.f32 %v3970, %v5024
    %5026 = vmatmul.bf16.gmra.mxu0 %v3814
    %v5027 = vpop.f32.mrf.mxu0
    %v5028 = vadd.f32 %v3970, %v5027
    %v5029 = vpop.f32.mrf.mxu0
    %v5030 = vadd.f32 %v3970, %v5029
    %5031 = vmatmul.bf16.gmra.mxu0 %v3818
    %v5032 = vpop.f32.mrf.mxu0
    %v5033 = vadd.f32 %v3970, %v5032
    %v5034 = vpop.f32.mrf.mxu0
    %v5035 = vadd.f32 %v3970, %v5034
    %5036 = vmatmul.bf16.gmra.mxu0 %v3822
    %v5037 = vpop.f32.mrf.mxu0
    %v5038 = vadd.f32 %v3970, %v5037
    %v5039 = vpop.f32.mrf.mxu0
    %v5040 = vadd.f32 %v3970, %v5039
    %5041 = vmatmul.bf16.gmra.mxu0 %v3826
    %v5042 = vpop.f32.mrf.mxu0
    %v5043 = vadd.f32 %v3970, %v5042
    %v5044 = vpop.f32.mrf.mxu0
    %v5045 = vadd.f32 %v3970, %v5044
    %5046 = vmatmul.bf16.gmra.mxu0 %v3830
    %v5047 = vpop.f32.mrf.mxu0
    %v5048 = vadd.f32 %v3970, %v5047
    %v5049 = vpop.f32.mrf.mxu0
    %v5050 = vadd.f32 %v3970, %v5049
    %5051 = vmatmul.bf16.gmra.mxu0 %v3834
    %v5052 = vpop.f32.mrf.mxu0
    %v5053 = vadd.f32 %v3970, %v5052
    %v5054 = vpop.f32.mrf.mxu0
    %v5055 = vadd.f32 %v3970, %v5054
    %5056 = vdwg.mxu0
    %5057 = vmatpush.bf16.msra.mxu0 %v4422
    %5058 = vmatpush.bf16.msra.mxu0 %v4418
    %5059 = vmatpush.bf16.msra.mxu0 %v4414
    %5060 = vmatpush.bf16.msra.mxu0 %v4410
    %5061 = vmatpush.bf16.msra.mxu0 %v4406
    %5062 = vmatpush.bf16.msra.mxu0 %v4402
    %5063 = vmatpush.bf16.msra.mxu0 %v4398
    %5064 = vmatpush.bf16.msra.mxu0 %v4394
    %5065 = vmatmul.bf16.gmra.mxu0 %v3807
    %v5066 = vpop.f32.mrf.mxu0
    %v5067 = vadd.f32 %v5018, %v5066
    %v5068 = vpop.f32.mrf.mxu0
    %v5069 = vadd.f32 %v5020, %v5068
    %5070 = vmatmul.bf16.gmra.mxu0 %v3811
    %v5071 = vpop.f32.mrf.mxu0
    %v5072 = vadd.f32 %v5023, %v5071
    %v5073 = vpop.f32.mrf.mxu0
    %v5074 = vadd.f32 %v5025, %v5073
    %5075 = vmatmul.bf16.gmra.mxu0 %v3815
    %v5076 = vpop.f32.mrf.mxu0
    %v5077 = vadd.f32 %v5028, %v5076
    %v5078 = vpop.f32.mrf.mxu0
    %v5079 = vadd.f32 %v5030, %v5078
    %5080 = vmatmul.bf16.gmra.mxu0 %v3819
    %v5081 = vpop.f32.mrf.mxu0
    %v5082 = vadd.f32 %v5033, %v5081
    %v5083 = vpop.f32.mrf.mxu0
    %v5084 = vadd.f32 %v5035, %v5083
    %5085 = vmatmul.bf16.gmra.mxu0 %v3823
    %v5086 = vpop.f32.mrf.mxu0
    %v5087 = vadd.f32 %v5038, %v5086
    %v5088 = vpop.f32.mrf.mxu0
    %v5089 = vadd.f32 %v5040, %v5088
    %5090 = vmatmul.bf16.gmra.mxu0 %v3827
    %v5091 = vpop.f32.mrf.mxu0
    %v5092 = vadd.f32 %v5043, %v5091
    %v5093 = vpop.f32.mrf.mxu0
    %v5094 = vadd.f32 %v5045, %v5093
    %5095 = vmatmul.bf16.gmra.mxu0 %v3831
    %v5096 = vpop.f32.mrf.mxu0
    %v5097 = vadd.f32 %v5048, %v5096
    %v5098 = vpop.f32.mrf.mxu0
    %v5099 = vadd.f32 %v5050, %v5098
    %5100 = vmatmul.bf16.gmra.mxu0 %v3835
    %v5101 = vpop.f32.mrf.mxu0
    %v5102 = vadd.f32 %v5053, %v5101
    %v5103 = vpop.f32.mrf.mxu0
    %v5104 = vadd.f32 %v5055, %v5103
    %5105 = vdwg.mxu0
    %5106 = vmatpush.bf16.msra.mxu0 %v4454
    %5107 = vmatpush.bf16.msra.mxu0 %v4450
    %5108 = vmatpush.bf16.msra.mxu0 %v4446
    %5109 = vmatpush.bf16.msra.mxu0 %v4442
    %5110 = vmatpush.bf16.msra.mxu0 %v4438
    %5111 = vmatpush.bf16.msra.mxu0 %v4434
    %5112 = vmatpush.bf16.msra.mxu0 %v4430
    %5113 = vmatpush.bf16.msra.mxu0 %v4426
    %5114 = vmatmul.bf16.gmra.mxu0 %v3808
    %v5115 = vpop.f32.mrf.mxu0
    %v5116 = vadd.f32 %v5067, %v5115
    %v5117 = vpop.f32.mrf.mxu0
    %v5118 = vadd.f32 %v5069, %v5117
    %5119 = vmatmul.bf16.gmra.mxu0 %v3812
    %v5120 = vpop.f32.mrf.mxu0
    %v5121 = vadd.f32 %v5072, %v5120
    %v5122 = vpop.f32.mrf.mxu0
    %v5123 = vadd.f32 %v5074, %v5122
    %5124 = vmatmul.bf16.gmra.mxu0 %v3816
    %v5125 = vpop.f32.mrf.mxu0
    %v5126 = vadd.f32 %v5077, %v5125
    %v5127 = vpop.f32.mrf.mxu0
    %v5128 = vadd.f32 %v5079, %v5127
    %5129 = vmatmul.bf16.gmra.mxu0 %v3820
    %v5130 = vpop.f32.mrf.mxu0
    %v5131 = vadd.f32 %v5082, %v5130
    %v5132 = vpop.f32.mrf.mxu0
    %v5133 = vadd.f32 %v5084, %v5132
    %5134 = vmatmul.bf16.gmra.mxu0 %v3824
    %v5135 = vpop.f32.mrf.mxu0
    %v5136 = vadd.f32 %v5087, %v5135
    %v5137 = vpop.f32.mrf.mxu0
    %v5138 = vadd.f32 %v5089, %v5137
    %5139 = vmatmul.bf16.gmra.mxu0 %v3828
    %v5140 = vpop.f32.mrf.mxu0
    %v5141 = vadd.f32 %v5092, %v5140
    %v5142 = vpop.f32.mrf.mxu0
    %v5143 = vadd.f32 %v5094, %v5142
    %5144 = vmatmul.bf16.gmra.mxu0 %v3832
    %v5145 = vpop.f32.mrf.mxu0
    %v5146 = vadd.f32 %v5097, %v5145
    %v5147 = vpop.f32.mrf.mxu0
    %v5148 = vadd.f32 %v5099, %v5147
    %5149 = vmatmul.bf16.gmra.mxu0 %v3836
    %v5150 = vpop.f32.mrf.mxu0
    %v5151 = vadd.f32 %v5102, %v5150
    %v5152 = vpop.f32.mrf.mxu0
    %v5153 = vadd.f32 %v5104, %v5152
    %5154 = vdwg.mxu0
    %5155 = vmatpush.bf16.msra.mxu0 %v4486
    %5156 = vmatpush.bf16.msra.mxu0 %v4482
    %5157 = vmatpush.bf16.msra.mxu0 %v4478
    %5158 = vmatpush.bf16.msra.mxu0 %v4474
    %5159 = vmatpush.bf16.msra.mxu0 %v4470
    %5160 = vmatpush.bf16.msra.mxu0 %v4466
    %5161 = vmatpush.bf16.msra.mxu0 %v4462
    %5162 = vmatpush.bf16.msra.mxu0 %v4458
    %5163 = vmatmul.bf16.gmra.mxu0 %v3809
    %v5164 = vpop.f32.mrf.mxu0
    %v5165 = vadd.f32 %v5116, %v5164
    %v5166 = vpop.f32.mrf.mxu0
    %v5167 = vadd.f32 %v5118, %v5166
    %5168 = vmatmul.bf16.gmra.mxu0 %v3813
    %v5169 = vpop.f32.mrf.mxu0
    %v5170 = vadd.f32 %v5121, %v5169
    %v5171 = vpop.f32.mrf.mxu0
    %v5172 = vadd.f32 %v5123, %v5171
    %5173 = vmatmul.bf16.gmra.mxu0 %v3817
    %v5174 = vpop.f32.mrf.mxu0
    %v5175 = vadd.f32 %v5126, %v5174
    %v5176 = vpop.f32.mrf.mxu0
    %v5177 = vadd.f32 %v5128, %v5176
    %5178 = vmatmul.bf16.gmra.mxu0 %v3821
    %v5179 = vpop.f32.mrf.mxu0
    %v5180 = vadd.f32 %v5131, %v5179
    %v5181 = vpop.f32.mrf.mxu0
    %v5182 = vadd.f32 %v5133, %v5181
    %5183 = vmatmul.bf16.gmra.mxu0 %v3825
    %v5184 = vpop.f32.mrf.mxu0
    %v5185 = vadd.f32 %v5136, %v5184
    %v5186 = vpop.f32.mrf.mxu0
    %v5187 = vadd.f32 %v5138, %v5186
    %5188 = vmatmul.bf16.gmra.mxu0 %v3829
    %v5189 = vpop.f32.mrf.mxu0
    %v5190 = vadd.f32 %v5141, %v5189
    %v5191 = vpop.f32.mrf.mxu0
    %v5192 = vadd.f32 %v5143, %v5191
    %5193 = vmatmul.bf16.gmra.mxu0 %v3833
    %v5194 = vpop.f32.mrf.mxu0
    %v5195 = vadd.f32 %v5146, %v5194
    %v5196 = vpop.f32.mrf.mxu0
    %v5197 = vadd.f32 %v5148, %v5196
    %5198 = vmatmul.bf16.gmra.mxu0 %v3837
    %v5199 = vpop.f32.mrf.mxu0
    %v5200 = vadd.f32 %v5151, %v5199
    %v5201 = vpop.f32.mrf.mxu0
    %v5202 = vadd.f32 %v5153, %v5201
    %5203 = vdwg.mxu0
    %5204 = vmatpush.bf16.msra.mxu0 %v4391
    %5205 = vmatpush.bf16.msra.mxu0 %v4387
    %5206 = vmatpush.bf16.msra.mxu0 %v4383
    %5207 = vmatpush.bf16.msra.mxu0 %v4379
    %5208 = vmatpush.bf16.msra.mxu0 %v4375
    %5209 = vmatpush.bf16.msra.mxu0 %v4371
    %5210 = vmatpush.bf16.msra.mxu0 %v4367
    %5211 = vmatpush.bf16.msra.mxu0 %v4363
    %5212 = vmatmul.bf16.gmra.mxu0 %v3806
    %v5213 = vpop.f32.mrf.mxu0
    %v5214 = vadd.f32 %v3971, %v5213
    %v5215 = vpop.f32.mrf.mxu0
    %v5216 = vadd.f32 %v3971, %v5215
    %5217 = vmatmul.bf16.gmra.mxu0 %v3810
    %v5218 = vpop.f32.mrf.mxu0
    %v5219 = vadd.f32 %v3971, %v5218
    %v5220 = vpop.f32.mrf.mxu0
    %v5221 = vadd.f32 %v3971, %v5220
    %5222 = vmatmul.bf16.gmra.mxu0 %v3814
    %v5223 = vpop.f32.mrf.mxu0
    %v5224 = vadd.f32 %v3971, %v5223
    %v5225 = vpop.f32.mrf.mxu0
    %v5226 = vadd.f32 %v3971, %v5225
    %5227 = vmatmul.bf16.gmra.mxu0 %v3818
    %v5228 = vpop.f32.mrf.mxu0
    %v5229 = vadd.f32 %v3971, %v5228
    %v5230 = vpop.f32.mrf.mxu0
    %v5231 = vadd.f32 %v3971, %v5230
    %5232 = vmatmul.bf16.gmra.mxu0 %v3822
    %v5233 = vpop.f32.mrf.mxu0
    %v5234 = vadd.f32 %v3971, %v5233
    %v5235 = vpop.f32.mrf.mxu0
    %v5236 = vadd.f32 %v3971, %v5235
    %5237 = vmatmul.bf16.gmra.mxu0 %v3826
    %v5238 = vpop.f32.mrf.mxu0
    %v5239 = vadd.f32 %v3971, %v5238
    %v5240 = vpop.f32.mrf.mxu0
    %v5241 = vadd.f32 %v3971, %v5240
    %5242 = vmatmul.bf16.gmra.mxu0 %v3830
    %v5243 = vpop.f32.mrf.mxu0
    %v5244 = vadd.f32 %v3971, %v5243
    %v5245 = vpop.f32.mrf.mxu0
    %v5246 = vadd.f32 %v3971, %v5245
    %5247 = vmatmul.bf16.gmra.mxu0 %v3834
    %v5248 = vpop.f32.mrf.mxu0
    %v5249 = vadd.f32 %v3971, %v5248
    %v5250 = vpop.f32.mrf.mxu0
    %v5251 = vadd.f32 %v3971, %v5250
    %5252 = vdwg.mxu0
    %5253 = vmatpush.bf16.msra.mxu0 %v4423
    %5254 = vmatpush.bf16.msra.mxu0 %v4419
    %5255 = vmatpush.bf16.msra.mxu0 %v4415
    %5256 = vmatpush.bf16.msra.mxu0 %v4411
    %5257 = vmatpush.bf16.msra.mxu0 %v4407
    %5258 = vmatpush.bf16.msra.mxu0 %v4403
    %5259 = vmatpush.bf16.msra.mxu0 %v4399
    %5260 = vmatpush.bf16.msra.mxu0 %v4395
    %5261 = vmatmul.bf16.gmra.mxu0 %v3807
    %v5262 = vpop.f32.mrf.mxu0
    %v5263 = vadd.f32 %v5214, %v5262
    %v5264 = vpop.f32.mrf.mxu0
    %v5265 = vadd.f32 %v5216, %v5264
    %5266 = vmatmul.bf16.gmra.mxu0 %v3811
    %v5267 = vpop.f32.mrf.mxu0
    %v5268 = vadd.f32 %v5219, %v5267
    %v5269 = vpop.f32.mrf.mxu0
    %v5270 = vadd.f32 %v5221, %v5269
    %5271 = vmatmul.bf16.gmra.mxu0 %v3815
    %v5272 = vpop.f32.mrf.mxu0
    %v5273 = vadd.f32 %v5224, %v5272
    %v5274 = vpop.f32.mrf.mxu0
    %v5275 = vadd.f32 %v5226, %v5274
    %5276 = vmatmul.bf16.gmra.mxu0 %v3819
    %v5277 = vpop.f32.mrf.mxu0
    %v5278 = vadd.f32 %v5229, %v5277
    %v5279 = vpop.f32.mrf.mxu0
    %v5280 = vadd.f32 %v5231, %v5279
    %5281 = vmatmul.bf16.gmra.mxu0 %v3823
    %v5282 = vpop.f32.mrf.mxu0
    %v5283 = vadd.f32 %v5234, %v5282
    %v5284 = vpop.f32.mrf.mxu0
    %v5285 = vadd.f32 %v5236, %v5284
    %5286 = vmatmul.bf16.gmra.mxu0 %v3827
    %v5287 = vpop.f32.mrf.mxu0
    %v5288 = vadd.f32 %v5239, %v5287
    %v5289 = vpop.f32.mrf.mxu0
    %v5290 = vadd.f32 %v5241, %v5289
    %5291 = vmatmul.bf16.gmra.mxu0 %v3831
    %v5292 = vpop.f32.mrf.mxu0
    %v5293 = vadd.f32 %v5244, %v5292
    %v5294 = vpop.f32.mrf.mxu0
    %v5295 = vadd.f32 %v5246, %v5294
    %5296 = vmatmul.bf16.gmra.mxu0 %v3835
    %v5297 = vpop.f32.mrf.mxu0
    %v5298 = vadd.f32 %v5249, %v5297
    %v5299 = vpop.f32.mrf.mxu0
    %v5300 = vadd.f32 %v5251, %v5299
    %5301 = vdwg.mxu0
    %5302 = vmatpush.bf16.msra.mxu0 %v4455
    %5303 = vmatpush.bf16.msra.mxu0 %v4451
    %5304 = vmatpush.bf16.msra.mxu0 %v4447
    %5305 = vmatpush.bf16.msra.mxu0 %v4443
    %5306 = vmatpush.bf16.msra.mxu0 %v4439
    %5307 = vmatpush.bf16.msra.mxu0 %v4435
    %5308 = vmatpush.bf16.msra.mxu0 %v4431
    %5309 = vmatpush.bf16.msra.mxu0 %v4427
    %5310 = vmatmul.bf16.gmra.mxu0 %v3808
    %v5311 = vpop.f32.mrf.mxu0
    %v5312 = vadd.f32 %v5263, %v5311
    %v5313 = vpop.f32.mrf.mxu0
    %v5314 = vadd.f32 %v5265, %v5313
    %5315 = vmatmul.bf16.gmra.mxu0 %v3812
    %v5316 = vpop.f32.mrf.mxu0
    %v5317 = vadd.f32 %v5268, %v5316
    %v5318 = vpop.f32.mrf.mxu0
    %v5319 = vadd.f32 %v5270, %v5318
    %5320 = vmatmul.bf16.gmra.mxu0 %v3816
    %v5321 = vpop.f32.mrf.mxu0
    %v5322 = vadd.f32 %v5273, %v5321
    %v5323 = vpop.f32.mrf.mxu0
    %v5324 = vadd.f32 %v5275, %v5323
    %5325 = vmatmul.bf16.gmra.mxu0 %v3820
    %v5326 = vpop.f32.mrf.mxu0
    %v5327 = vadd.f32 %v5278, %v5326
    %v5328 = vpop.f32.mrf.mxu0
    %v5329 = vadd.f32 %v5280, %v5328
    %5330 = vmatmul.bf16.gmra.mxu0 %v3824
    %v5331 = vpop.f32.mrf.mxu0
    %v5332 = vadd.f32 %v5283, %v5331
    %v5333 = vpop.f32.mrf.mxu0
    %v5334 = vadd.f32 %v5285, %v5333
    %5335 = vmatmul.bf16.gmra.mxu0 %v3828
    %v5336 = vpop.f32.mrf.mxu0
    %v5337 = vadd.f32 %v5288, %v5336
    %v5338 = vpop.f32.mrf.mxu0
    %v5339 = vadd.f32 %v5290, %v5338
    %5340 = vmatmul.bf16.gmra.mxu0 %v3832
    %v5341 = vpop.f32.mrf.mxu0
    %v5342 = vadd.f32 %v5293, %v5341
    %v5343 = vpop.f32.mrf.mxu0
    %v5344 = vadd.f32 %v5295, %v5343
    %5345 = vmatmul.bf16.gmra.mxu0 %v3836
    %v5346 = vpop.f32.mrf.mxu0
    %v5347 = vadd.f32 %v5298, %v5346
    %v5348 = vpop.f32.mrf.mxu0
    %v5349 = vadd.f32 %v5300, %v5348
    %5350 = vdwg.mxu0
    %5351 = vmatpush.bf16.msra.mxu0 %v4487
    %5352 = vmatpush.bf16.msra.mxu0 %v4483
    %5353 = vmatpush.bf16.msra.mxu0 %v4479
    %5354 = vmatpush.bf16.msra.mxu0 %v4475
    %5355 = vmatpush.bf16.msra.mxu0 %v4471
    %5356 = vmatpush.bf16.msra.mxu0 %v4467
    %5357 = vmatpush.bf16.msra.mxu0 %v4463
    %5358 = vmatpush.bf16.msra.mxu0 %v4459
    %5359 = vmatmul.bf16.gmra.mxu0 %v3809
    %v5360 = vpop.f32.mrf.mxu0
    %v5361 = vadd.f32 %v5312, %v5360
    %v5362 = vpop.f32.mrf.mxu0
    %v5363 = vadd.f32 %v5314, %v5362
    %5364 = vmatmul.bf16.gmra.mxu0 %v3813
    %v5365 = vpop.f32.mrf.mxu0
    %v5366 = vadd.f32 %v5317, %v5365
    %v5367 = vpop.f32.mrf.mxu0
    %v5368 = vadd.f32 %v5319, %v5367
    %5369 = vmatmul.bf16.gmra.mxu0 %v3817
    %v5370 = vpop.f32.mrf.mxu0
    %v5371 = vadd.f32 %v5322, %v5370
    %v5372 = vpop.f32.mrf.mxu0
    %v5373 = vadd.f32 %v5324, %v5372
    %5374 = vmatmul.bf16.gmra.mxu0 %v3821
    %v5375 = vpop.f32.mrf.mxu0
    %v5376 = vadd.f32 %v5327, %v5375
    %v5377 = vpop.f32.mrf.mxu0
    %v5378 = vadd.f32 %v5329, %v5377
    %5379 = vmatmul.bf16.gmra.mxu0 %v3825
    %v5380 = vpop.f32.mrf.mxu0
    %v5381 = vadd.f32 %v5332, %v5380
    %v5382 = vpop.f32.mrf.mxu0
    %v5383 = vadd.f32 %v5334, %v5382
    %5384 = vmatmul.bf16.gmra.mxu0 %v3829
    %v5385 = vpop.f32.mrf.mxu0
    %v5386 = vadd.f32 %v5337, %v5385
    %v5387 = vpop.f32.mrf.mxu0
    %v5388 = vadd.f32 %v5339, %v5387
    %5389 = vmatmul.bf16.gmra.mxu0 %v3833
    %v5390 = vpop.f32.mrf.mxu0
    %v5391 = vadd.f32 %v5342, %v5390
    %v5392 = vpop.f32.mrf.mxu0
    %v5393 = vadd.f32 %v5344, %v5392
    %5394 = vmatmul.bf16.gmra.mxu0 %v3837
    %v5395 = vpop.f32.mrf.mxu0
    %v5396 = vadd.f32 %v5347, %v5395
    %v5397 = vpop.f32.mrf.mxu0
    %v5398 = vadd.f32 %v5349, %v5397
    %5399 = vdwg.mxu0
    %v5400 = vmax.f32 %v4773, 0.0
    %v5401 = vmax.f32 %v4969, 0.0
    %v5402 = vmax.f32 %v5165, 0.0
    %v5403 = vmax.f32 %v5361, 0.0
    %v5404 = vmax.f32 %v4775, 0.0
    %v5405 = vmax.f32 %v4971, 0.0
    %v5406 = vmax.f32 %v5167, 0.0
    %v5407 = vmax.f32 %v5363, 0.0
    %v5408 = vmax.f32 %v4778, 0.0
    %v5409 = vmax.f32 %v4974, 0.0
    %v5410 = vmax.f32 %v5170, 0.0
    %v5411 = vmax.f32 %v5366, 0.0
    %v5412 = vmax.f32 %v4780, 0.0
    %v5413 = vmax.f32 %v4976, 0.0
    %v5414 = vmax.f32 %v5172, 0.0
    %v5415 = vmax.f32 %v5368, 0.0
    %v5416 = vmax.f32 %v4783, 0.0
    %v5417 = vmax.f32 %v4979, 0.0
    %v5418 = vmax.f32 %v5175, 0.0
    %v5419 = vmax.f32 %v5371, 0.0
    %v5420 = vmax.f32 %v4785, 0.0
    %v5421 = vmax.f32 %v4981, 0.0
    %v5422 = vmax.f32 %v5177, 0.0
    %v5423 = vmax.f32 %v5373, 0.0
    %v5424 = vmax.f32 %v4788, 0.0
    %v5425 = vmax.f32 %v4984, 0.0
    %v5426 = vmax.f32 %v5180, 0.0
    %v5427 = vmax.f32 %v5376, 0.0
    %v5428 = vmax.f32 %v4790, 0.0
    %v5429 = vmax.f32 %v4986, 0.0
    %v5430 = vmax.f32 %v5182, 0.0
    %v5431 = vmax.f32 %v5378, 0.0
    %v5432 = vmax.f32 %v4793, 0.0
    %v5433 = vmax.f32 %v4989, 0.0
    %v5434 = vmax.f32 %v5185, 0.0
    %v5435 = vmax.f32 %v5381, 0.0
    %v5436 = vmax.f32 %v4795, 0.0
    %v5437 = vmax.f32 %v4991, 0.0
    %v5438 = vmax.f32 %v5187, 0.0
    %v5439 = vmax.f32 %v5383, 0.0
    %v5440 = vmax.f32 %v4798, 0.0
    %v5441 = vmax.f32 %v4994, 0.0
    %v5442 = vmax.f32 %v5190, 0.0
    %v5443 = vmax.f32 %v5386, 0.0
    %v5444 = vmax.f32 %v4800, 0.0
    %v5445 = vmax.f32 %v4996, 0.0
    %v5446 = vmax.f32 %v5192, 0.0
    %v5447 = vmax.f32 %v5388, 0.0
    %v5448 = vmax.f32 %v4803, 0.0
    %v5449 = vmax.f32 %v4999, 0.0
    %v5450 = vmax.f32 %v5195, 0.0
    %v5451 = vmax.f32 %v5391, 0.0
    %v5452 = vmax.f32 %v4805, 0.0
    %v5453 = vmax.f32 %v5001, 0.0
    %v5454 = vmax.f32 %v5197, 0.0
    %v5455 = vmax.f32 %v5393, 0.0
    %v5456 = vmax.f32 %v4808, 0.0
    %v5457 = vmax.f32 %v5004, 0.0
    %v5458 = vmax.f32 %v5200, 0.0
    %v5459 = vmax.f32 %v5396, 0.0
    %v5460 = vmax.f32 %v4810, 0.0
    %v5461 = vmax.f32 %v5006, 0.0
    %v5462 = vmax.f32 %v5202, 0.0
    %v5463 = vmax.f32 %v5398, 0.0
    %v5464 = vpack.c.bf16 %v5404, %v5400
    %v5465 = vpack.c.bf16 %v5405, %v5401
    %v5466 = vpack.c.bf16 %v5406, %v5402
    %v5467 = vpack.c.bf16 %v5407, %v5403
    %v5468 = vpack.c.bf16 %v5412, %v5408
    %v5469 = vpack.c.bf16 %v5413, %v5409
    %v5470 = vpack.c.bf16 %v5414, %v5410
    %v5471 = vpack.c.bf16 %v5415, %v5411
    %v5472 = vpack.c.bf16 %v5420, %v5416
    %v5473 = vpack.c.bf16 %v5421, %v5417
    %v5474 = vpack.c.bf16 %v5422, %v5418
    %v5475 = vpack.c.bf16 %v5423, %v5419
    %v5476 = vpack.c.bf16 %v5428, %v5424
    %v5477 = vpack.c.bf16 %v5429, %v5425
    %v5478 = vpack.c.bf16 %v5430, %v5426
    %v5479 = vpack.c.bf16 %v5431, %v5427
    %v5480 = vpack.c.bf16 %v5436, %v5432
    %v5481 = vpack.c.bf16 %v5437, %v5433
    %v5482 = vpack.c.bf16 %v5438, %v5434
    %v5483 = vpack.c.bf16 %v5439, %v5435
    %v5484 = vpack.c.bf16 %v5444, %v5440
    %v5485 = vpack.c.bf16 %v5445, %v5441
    %v5486 = vpack.c.bf16 %v5446, %v5442
    %v5487 = vpack.c.bf16 %v5447, %v5443
    %v5488 = vpack.c.bf16 %v5452, %v5448
    %v5489 = vpack.c.bf16 %v5453, %v5449
    %v5490 = vpack.c.bf16 %v5454, %v5450
    %v5491 = vpack.c.bf16 %v5455, %v5451
    %v5492 = vpack.c.bf16 %v5460, %v5456
    %v5493 = vpack.c.bf16 %v5461, %v5457
    %v5494 = vpack.c.bf16 %v5462, %v5458
    %v5495 = vpack.c.bf16 %v5463, %v5459
    %v5496 = vld [vmem:[#allocation7] sm:$0xff]
    %v5497 = vld [vmem:[#allocation7 + $0x8] sm:$0xff]
    %v5498 = vld [vmem:[#allocation7 + $0x10] sm:$0xff]
    %v5499 = vld [vmem:[#allocation7 + $0x18] sm:$0xff]
    %v5500 = vld [vmem:[#allocation7 + $0x20] sm:$0xff]
    %v5501 = vld [vmem:[#allocation7 + $0x28] sm:$0xff]
    %v5502 = vld [vmem:[#allocation7 + $0x30] sm:$0xff]
    %v5503 = vld [vmem:[#allocation7 + $0x38] sm:$0xff]
    %v5504 = vld [vmem:[#allocation7 + $0x40] sm:$0xff]
    %v5505 = vld [vmem:[#allocation7 + $0x48] sm:$0xff]
    %v5506 = vld [vmem:[#allocation7 + $0x50] sm:$0xff]
    %v5507 = vld [vmem:[#allocation7 + $0x58] sm:$0xff]
    %v5508 = vld [vmem:[#allocation7 + $0x60] sm:$0xff]
    %v5509 = vld [vmem:[#allocation7 + $0x68] sm:$0xff]
    %v5510 = vld [vmem:[#allocation7 + $0x70] sm:$0xff]
    %v5511 = vld [vmem:[#allocation7 + $0x78] sm:$0xff]
    %v5512 = vld [vmem:[#allocation7 + $0x80] sm:$0xff]
    %v5513 = vld [vmem:[#allocation7 + $0x88] sm:$0xff]
    %v5514 = vld [vmem:[#allocation7 + $0x90] sm:$0xff]
    %v5515 = vld [vmem:[#allocation7 + $0x98] sm:$0xff]
    %v5516 = vld [vmem:[#allocation7 + $0xa0] sm:$0xff]
    %v5517 = vld [vmem:[#allocation7 + $0xa8] sm:$0xff]
    %v5518 = vld [vmem:[#allocation7 + $0xb0] sm:$0xff]
    %v5519 = vld [vmem:[#allocation7 + $0xb8] sm:$0xff]
    %v5520 = vld [vmem:[#allocation7 + $0xc0] sm:$0xff]
    %v5521 = vld [vmem:[#allocation7 + $0xc8] sm:$0xff]
    %v5522 = vld [vmem:[#allocation7 + $0xd0] sm:$0xff]
    %v5523 = vld [vmem:[#allocation7 + $0xd8] sm:$0xff]
    %v5524 = vld [vmem:[#allocation7 + $0xe0] sm:$0xff]
    %v5525 = vld [vmem:[#allocation7 + $0xe8] sm:$0xff]
    %v5526 = vld [vmem:[#allocation7 + $0xf0] sm:$0xff]
    %v5527 = vld [vmem:[#allocation7 + $0xf8] sm:$0xff]
    %v5528 = vld [vmem:[#allocation7 + $0x100] sm:$0xff]
    %v5529 = vld [vmem:[#allocation7 + $0x108] sm:$0xff]
    %v5530 = vld [vmem:[#allocation7 + $0x110] sm:$0xff]
    %v5531 = vld [vmem:[#allocation7 + $0x118] sm:$0xff]
    %v5532 = vld [vmem:[#allocation7 + $0x120] sm:$0xff]
    %v5533 = vld [vmem:[#allocation7 + $0x128] sm:$0xff]
    %v5534 = vld [vmem:[#allocation7 + $0x130] sm:$0xff]
    %v5535 = vld [vmem:[#allocation7 + $0x138] sm:$0xff]
    %v5536 = vld [vmem:[#allocation7 + $0x140] sm:$0xff]
    %v5537 = vld [vmem:[#allocation7 + $0x148] sm:$0xff]
    %v5538 = vld [vmem:[#allocation7 + $0x150] sm:$0xff]
    %v5539 = vld [vmem:[#allocation7 + $0x158] sm:$0xff]
    %v5540 = vld [vmem:[#allocation7 + $0x160] sm:$0xff]
    %v5541 = vld [vmem:[#allocation7 + $0x168] sm:$0xff]
    %v5542 = vld [vmem:[#allocation7 + $0x170] sm:$0xff]
    %v5543 = vld [vmem:[#allocation7 + $0x178] sm:$0xff]
    %v5544 = vld [vmem:[#allocation7 + $0x180] sm:$0xff]
    %v5545 = vld [vmem:[#allocation7 + $0x188] sm:$0xff]
    %v5546 = vld [vmem:[#allocation7 + $0x190] sm:$0xff]
    %v5547 = vld [vmem:[#allocation7 + $0x198] sm:$0xff]
    %v5548 = vld [vmem:[#allocation7 + $0x1a0] sm:$0xff]
    %v5549 = vld [vmem:[#allocation7 + $0x1a8] sm:$0xff]
    %v5550 = vld [vmem:[#allocation7 + $0x1b0] sm:$0xff]
    %v5551 = vld [vmem:[#allocation7 + $0x1b8] sm:$0xff]
    %v5552 = vld [vmem:[#allocation7 + $0x1c0] sm:$0xff]
    %v5553 = vld [vmem:[#allocation7 + $0x1c8] sm:$0xff]
    %v5554 = vld [vmem:[#allocation7 + $0x1d0] sm:$0xff]
    %v5555 = vld [vmem:[#allocation7 + $0x1d8] sm:$0xff]
    %v5556 = vld [vmem:[#allocation7 + $0x1e0] sm:$0xff]
    %v5557 = vld [vmem:[#allocation7 + $0x1e8] sm:$0xff]
    %v5558 = vld [vmem:[#allocation7 + $0x1f0] sm:$0xff]
    %v5559 = vld [vmem:[#allocation7 + $0x1f8] sm:$0xff]
    %v5560 = vld [vmem:[#allocation7 + $0x200] sm:$0xff]
    %v5561 = vld [vmem:[#allocation7 + $0x208] sm:$0xff]
    %v5562 = vld [vmem:[#allocation7 + $0x210] sm:$0xff]
    %v5563 = vld [vmem:[#allocation7 + $0x218] sm:$0xff]
    %v5564 = vld [vmem:[#allocation7 + $0x220] sm:$0xff]
    %v5565 = vld [vmem:[#allocation7 + $0x228] sm:$0xff]
    %v5566 = vld [vmem:[#allocation7 + $0x230] sm:$0xff]
    %v5567 = vld [vmem:[#allocation7 + $0x238] sm:$0xff]
    %v5568 = vld [vmem:[#allocation7 + $0x240] sm:$0xff]
    %v5569 = vld [vmem:[#allocation7 + $0x248] sm:$0xff]
    %v5570 = vld [vmem:[#allocation7 + $0x250] sm:$0xff]
    %v5571 = vld [vmem:[#allocation7 + $0x258] sm:$0xff]
    %v5572 = vld [vmem:[#allocation7 + $0x260] sm:$0xff]
    %v5573 = vld [vmem:[#allocation7 + $0x268] sm:$0xff]
    %v5574 = vld [vmem:[#allocation7 + $0x270] sm:$0xff]
    %v5575 = vld [vmem:[#allocation7 + $0x278] sm:$0xff]
    %v5576 = vld [vmem:[#allocation7 + $0x280] sm:$0xff]
    %v5577 = vld [vmem:[#allocation7 + $0x288] sm:$0xff]
    %v5578 = vld [vmem:[#allocation7 + $0x290] sm:$0xff]
    %v5579 = vld [vmem:[#allocation7 + $0x298] sm:$0xff]
    %v5580 = vld [vmem:[#allocation7 + $0x2a0] sm:$0xff]
    %v5581 = vld [vmem:[#allocation7 + $0x2a8] sm:$0xff]
    %v5582 = vld [vmem:[#allocation7 + $0x2b0] sm:$0xff]
    %v5583 = vld [vmem:[#allocation7 + $0x2b8] sm:$0xff]
    %v5584 = vld [vmem:[#allocation7 + $0x2c0] sm:$0xff]
    %v5585 = vld [vmem:[#allocation7 + $0x2c8] sm:$0xff]
    %v5586 = vld [vmem:[#allocation7 + $0x2d0] sm:$0xff]
    %v5587 = vld [vmem:[#allocation7 + $0x2d8] sm:$0xff]
    %v5588 = vld [vmem:[#allocation7 + $0x2e0] sm:$0xff]
    %v5589 = vld [vmem:[#allocation7 + $0x2e8] sm:$0xff]
    %v5590 = vld [vmem:[#allocation7 + $0x2f0] sm:$0xff]
    %v5591 = vld [vmem:[#allocation7 + $0x2f8] sm:$0xff]
    %v5592 = vld [vmem:[#allocation7 + $0x300] sm:$0xff]
    %v5593 = vld [vmem:[#allocation7 + $0x308] sm:$0xff]
    %v5594 = vld [vmem:[#allocation7 + $0x310] sm:$0xff]
    %v5595 = vld [vmem:[#allocation7 + $0x318] sm:$0xff]
    %v5596 = vld [vmem:[#allocation7 + $0x320] sm:$0xff]
    %v5597 = vld [vmem:[#allocation7 + $0x328] sm:$0xff]
    %v5598 = vld [vmem:[#allocation7 + $0x330] sm:$0xff]
    %v5599 = vld [vmem:[#allocation7 + $0x338] sm:$0xff]
    %v5600 = vld [vmem:[#allocation7 + $0x340] sm:$0xff]
    %v5601 = vld [vmem:[#allocation7 + $0x348] sm:$0xff]
    %v5602 = vld [vmem:[#allocation7 + $0x350] sm:$0xff]
    %v5603 = vld [vmem:[#allocation7 + $0x358] sm:$0xff]
    %v5604 = vld [vmem:[#allocation7 + $0x360] sm:$0xff]
    %v5605 = vld [vmem:[#allocation7 + $0x368] sm:$0xff]
    %v5606 = vld [vmem:[#allocation7 + $0x370] sm:$0xff]
    %v5607 = vld [vmem:[#allocation7 + $0x378] sm:$0xff]
    %v5608 = vld [vmem:[#allocation7 + $0x380] sm:$0xff]
    %v5609 = vld [vmem:[#allocation7 + $0x388] sm:$0xff]
    %v5610 = vld [vmem:[#allocation7 + $0x390] sm:$0xff]
    %v5611 = vld [vmem:[#allocation7 + $0x398] sm:$0xff]
    %v5612 = vld [vmem:[#allocation7 + $0x3a0] sm:$0xff]
    %v5613 = vld [vmem:[#allocation7 + $0x3a8] sm:$0xff]
    %v5614 = vld [vmem:[#allocation7 + $0x3b0] sm:$0xff]
    %v5615 = vld [vmem:[#allocation7 + $0x3b8] sm:$0xff]
    %v5616 = vld [vmem:[#allocation7 + $0x3c0] sm:$0xff]
    %v5617 = vld [vmem:[#allocation7 + $0x3c8] sm:$0xff]
    %v5618 = vld [vmem:[#allocation7 + $0x3d0] sm:$0xff]
    %v5619 = vld [vmem:[#allocation7 + $0x3d8] sm:$0xff]
    %v5620 = vld [vmem:[#allocation7 + $0x3e0] sm:$0xff]
    %v5621 = vld [vmem:[#allocation7 + $0x3e8] sm:$0xff]
    %v5622 = vld [vmem:[#allocation7 + $0x3f0] sm:$0xff]
    %v5623 = vld [vmem:[#allocation7 + $0x3f8] sm:$0xff]
    %v5624 = vld [vmem:[%s10] sm:$0xf]
    %v5626 = vperm.slane %v5624, 0
    %v5627 = vperm.slane %v5624, 1
    %v5628 = vperm.slane %v5624, 2
    %v5629 = vperm.slane %v5624, 3
    %v5762 = vunpack.c.l.b16 %v5496
    %v5763 = vunpack.c.h.b16 %v5496
    %v5764 = vunpack.c.l.b16 %v5497
    %v5765 = vunpack.c.h.b16 %v5497
    %v5766 = vunpack.c.l.b16 %v5498
    %v5767 = vunpack.c.h.b16 %v5498
    %v5768 = vunpack.c.l.b16 %v5499
    %v5769 = vunpack.c.h.b16 %v5499
    %v5770 = vunpack.c.l.b16 %v5500
    %v5771 = vunpack.c.h.b16 %v5500
    %v5772 = vunpack.c.l.b16 %v5501
    %v5773 = vunpack.c.h.b16 %v5501
    %v5774 = vunpack.c.l.b16 %v5502
    %v5775 = vunpack.c.h.b16 %v5502
    %v5776 = vunpack.c.l.b16 %v5503
    %v5777 = vunpack.c.h.b16 %v5503
    %v5778 = vunpack.c.l.b16 %v5504
    %v5779 = vunpack.c.h.b16 %v5504
    %v5780 = vunpack.c.l.b16 %v5505
    %v5781 = vunpack.c.h.b16 %v5505
    %v5782 = vunpack.c.l.b16 %v5506
    %v5783 = vunpack.c.h.b16 %v5506
    %v5784 = vunpack.c.l.b16 %v5507
    %v5785 = vunpack.c.h.b16 %v5507
    %v5786 = vunpack.c.l.b16 %v5508
    %v5787 = vunpack.c.h.b16 %v5508
    %v5788 = vunpack.c.l.b16 %v5509
    %v5789 = vunpack.c.h.b16 %v5509
    %v5790 = vunpack.c.l.b16 %v5510
    %v5791 = vunpack.c.h.b16 %v5510
    %v5792 = vunpack.c.l.b16 %v5511
    %v5793 = vunpack.c.h.b16 %v5511
    %v5794 = vunpack.c.l.b16 %v5512
    %v5795 = vunpack.c.h.b16 %v5512
    %v5796 = vunpack.c.l.b16 %v5513
    %v5797 = vunpack.c.h.b16 %v5513
    %v5798 = vunpack.c.l.b16 %v5514
    %v5799 = vunpack.c.h.b16 %v5514
    %v5800 = vunpack.c.l.b16 %v5515
    %v5801 = vunpack.c.h.b16 %v5515
    %v5802 = vunpack.c.l.b16 %v5516
    %v5803 = vunpack.c.h.b16 %v5516
    %v5804 = vunpack.c.l.b16 %v5517
    %v5805 = vunpack.c.h.b16 %v5517
    %v5806 = vunpack.c.l.b16 %v5518
    %v5807 = vunpack.c.h.b16 %v5518
    %v5808 = vunpack.c.l.b16 %v5519
    %v5809 = vunpack.c.h.b16 %v5519
    %v5810 = vunpack.c.l.b16 %v5520
    %v5811 = vunpack.c.h.b16 %v5520
    %v5812 = vunpack.c.l.b16 %v5521
    %v5813 = vunpack.c.h.b16 %v5521
    %v5814 = vunpack.c.l.b16 %v5522
    %v5815 = vunpack.c.h.b16 %v5522
    %v5816 = vunpack.c.l.b16 %v5523
    %v5817 = vunpack.c.h.b16 %v5523
    %v5818 = vunpack.c.l.b16 %v5524
    %v5819 = vunpack.c.h.b16 %v5524
    %v5820 = vunpack.c.l.b16 %v5525
    %v5821 = vunpack.c.h.b16 %v5525
    %v5822 = vunpack.c.l.b16 %v5526
    %v5823 = vunpack.c.h.b16 %v5526
    %v5824 = vunpack.c.l.b16 %v5527
    %v5825 = vunpack.c.h.b16 %v5527
    %v5826 = vunpack.c.l.b16 %v5528
    %v5827 = vunpack.c.h.b16 %v5528
    %v5828 = vunpack.c.l.b16 %v5529
    %v5829 = vunpack.c.h.b16 %v5529
    %v5830 = vunpack.c.l.b16 %v5530
    %v5831 = vunpack.c.h.b16 %v5530
    %v5832 = vunpack.c.l.b16 %v5531
    %v5833 = vunpack.c.h.b16 %v5531
    %v5834 = vunpack.c.l.b16 %v5532
    %v5835 = vunpack.c.h.b16 %v5532
    %v5836 = vunpack.c.l.b16 %v5533
    %v5837 = vunpack.c.h.b16 %v5533
    %v5838 = vunpack.c.l.b16 %v5534
    %v5839 = vunpack.c.h.b16 %v5534
    %v5840 = vunpack.c.l.b16 %v5535
    %v5841 = vunpack.c.h.b16 %v5535
    %v5842 = vunpack.c.l.b16 %v5536
    %v5843 = vunpack.c.h.b16 %v5536
    %v5844 = vunpack.c.l.b16 %v5537
    %v5845 = vunpack.c.h.b16 %v5537
    %v5846 = vunpack.c.l.b16 %v5538
    %v5847 = vunpack.c.h.b16 %v5538
    %v5848 = vunpack.c.l.b16 %v5539
    %v5849 = vunpack.c.h.b16 %v5539
    %v5850 = vunpack.c.l.b16 %v5540
    %v5851 = vunpack.c.h.b16 %v5540
    %v5852 = vunpack.c.l.b16 %v5541
    %v5853 = vunpack.c.h.b16 %v5541
    %v5854 = vunpack.c.l.b16 %v5542
    %v5855 = vunpack.c.h.b16 %v5542
    %v5856 = vunpack.c.l.b16 %v5543
    %v5857 = vunpack.c.h.b16 %v5543
    %v5858 = vunpack.c.l.b16 %v5544
    %v5859 = vunpack.c.h.b16 %v5544
    %v5860 = vunpack.c.l.b16 %v5545
    %v5861 = vunpack.c.h.b16 %v5545
    %v5862 = vunpack.c.l.b16 %v5546
    %v5863 = vunpack.c.h.b16 %v5546
    %v5864 = vunpack.c.l.b16 %v5547
    %v5865 = vunpack.c.h.b16 %v5547
    %v5866 = vunpack.c.l.b16 %v5548
    %v5867 = vunpack.c.h.b16 %v5548
    %v5868 = vunpack.c.l.b16 %v5549
    %v5869 = vunpack.c.h.b16 %v5549
    %v5870 = vunpack.c.l.b16 %v5550
    %v5871 = vunpack.c.h.b16 %v5550
    %v5872 = vunpack.c.l.b16 %v5551
    %v5873 = vunpack.c.h.b16 %v5551
    %v5874 = vunpack.c.l.b16 %v5552
    %v5875 = vunpack.c.h.b16 %v5552
    %v5876 = vunpack.c.l.b16 %v5553
    %v5877 = vunpack.c.h.b16 %v5553
    %v5878 = vunpack.c.l.b16 %v5554
    %v5879 = vunpack.c.h.b16 %v5554
    %v5880 = vunpack.c.l.b16 %v5555
    %v5881 = vunpack.c.h.b16 %v5555
    %v5882 = vunpack.c.l.b16 %v5556
    %v5883 = vunpack.c.h.b16 %v5556
    %v5884 = vunpack.c.l.b16 %v5557
    %v5885 = vunpack.c.h.b16 %v5557
    %v5886 = vunpack.c.l.b16 %v5558
    %v5887 = vunpack.c.h.b16 %v5558
    %v5888 = vunpack.c.l.b16 %v5559
    %v5889 = vunpack.c.h.b16 %v5559
    %v5890 = vunpack.c.l.b16 %v5560
    %v5891 = vunpack.c.h.b16 %v5560
    %v5892 = vunpack.c.l.b16 %v5561
    %v5893 = vunpack.c.h.b16 %v5561
    %v5894 = vunpack.c.l.b16 %v5562
    %v5895 = vunpack.c.h.b16 %v5562
    %v5896 = vunpack.c.l.b16 %v5563
    %v5897 = vunpack.c.h.b16 %v5563
    %v5898 = vunpack.c.l.b16 %v5564
    %v5899 = vunpack.c.h.b16 %v5564
    %v5900 = vunpack.c.l.b16 %v5565
    %v5901 = vunpack.c.h.b16 %v5565
    %v5902 = vunpack.c.l.b16 %v5566
    %v5903 = vunpack.c.h.b16 %v5566
    %v5904 = vunpack.c.l.b16 %v5567
    %v5905 = vunpack.c.h.b16 %v5567
    %v5906 = vunpack.c.l.b16 %v5568
    %v5907 = vunpack.c.h.b16 %v5568
    %v5908 = vunpack.c.l.b16 %v5569
    %v5909 = vunpack.c.h.b16 %v5569
    %v5910 = vunpack.c.l.b16 %v5570
    %v5911 = vunpack.c.h.b16 %v5570
    %v5912 = vunpack.c.l.b16 %v5571
    %v5913 = vunpack.c.h.b16 %v5571
    %v5914 = vunpack.c.l.b16 %v5572
    %v5915 = vunpack.c.h.b16 %v5572
    %v5916 = vunpack.c.l.b16 %v5573
    %v5917 = vunpack.c.h.b16 %v5573
    %v5918 = vunpack.c.l.b16 %v5574
    %v5919 = vunpack.c.h.b16 %v5574
    %v5920 = vunpack.c.l.b16 %v5575
    %v5921 = vunpack.c.h.b16 %v5575
    %v5922 = vunpack.c.l.b16 %v5576
    %v5923 = vunpack.c.h.b16 %v5576
    %v5924 = vunpack.c.l.b16 %v5577
    %v5925 = vunpack.c.h.b16 %v5577
    %v5926 = vunpack.c.l.b16 %v5578
    %v5927 = vunpack.c.h.b16 %v5578
    %v5928 = vunpack.c.l.b16 %v5579
    %v5929 = vunpack.c.h.b16 %v5579
    %v5930 = vunpack.c.l.b16 %v5580
    %v5931 = vunpack.c.h.b16 %v5580
    %v5932 = vunpack.c.l.b16 %v5581
    %v5933 = vunpack.c.h.b16 %v5581
    %v5934 = vunpack.c.l.b16 %v5582
    %v5935 = vunpack.c.h.b16 %v5582
    %v5936 = vunpack.c.l.b16 %v5583
    %v5937 = vunpack.c.h.b16 %v5583
    %v5938 = vunpack.c.l.b16 %v5584
    %v5939 = vunpack.c.h.b16 %v5584
    %v5940 = vunpack.c.l.b16 %v5585
    %v5941 = vunpack.c.h.b16 %v5585
    %v5942 = vunpack.c.l.b16 %v5586
    %v5943 = vunpack.c.h.b16 %v5586
    %v5944 = vunpack.c.l.b16 %v5587
    %v5945 = vunpack.c.h.b16 %v5587
    %v5946 = vunpack.c.l.b16 %v5588
    %v5947 = vunpack.c.h.b16 %v5588
    %v5948 = vunpack.c.l.b16 %v5589
    %v5949 = vunpack.c.h.b16 %v5589
    %v5950 = vunpack.c.l.b16 %v5590
    %v5951 = vunpack.c.h.b16 %v5590
    %v5952 = vunpack.c.l.b16 %v5591
    %v5953 = vunpack.c.h.b16 %v5591
    %v5954 = vunpack.c.l.b16 %v5592
    %v5955 = vunpack.c.h.b16 %v5592
    %v5956 = vunpack.c.l.b16 %v5593
    %v5957 = vunpack.c.h.b16 %v5593
    %v5958 = vunpack.c.l.b16 %v5594
    %v5959 = vunpack.c.h.b16 %v5594
    %v5960 = vunpack.c.l.b16 %v5595
    %v5961 = vunpack.c.h.b16 %v5595
    %v5962 = vunpack.c.l.b16 %v5596
    %v5963 = vunpack.c.h.b16 %v5596
    %v5964 = vunpack.c.l.b16 %v5597
    %v5965 = vunpack.c.h.b16 %v5597
    %v5966 = vunpack.c.l.b16 %v5598
    %v5967 = vunpack.c.h.b16 %v5598
    %v5968 = vunpack.c.l.b16 %v5599
    %v5969 = vunpack.c.h.b16 %v5599
    %v5970 = vunpack.c.l.b16 %v5600
    %v5971 = vunpack.c.h.b16 %v5600
    %v5972 = vunpack.c.l.b16 %v5601
    %v5973 = vunpack.c.h.b16 %v5601
    %v5974 = vunpack.c.l.b16 %v5602
    %v5975 = vunpack.c.h.b16 %v5602
    %v5976 = vunpack.c.l.b16 %v5603
    %v5977 = vunpack.c.h.b16 %v5603
    %v5978 = vunpack.c.l.b16 %v5604
    %v5979 = vunpack.c.h.b16 %v5604
    %v5980 = vunpack.c.l.b16 %v5605
    %v5981 = vunpack.c.h.b16 %v5605
    %v5982 = vunpack.c.l.b16 %v5606
    %v5983 = vunpack.c.h.b16 %v5606
    %v5984 = vunpack.c.l.b16 %v5607
    %v5985 = vunpack.c.h.b16 %v5607
    %v5986 = vunpack.c.l.b16 %v5608
    %v5987 = vunpack.c.h.b16 %v5608
    %v5988 = vunpack.c.l.b16 %v5609
    %v5989 = vunpack.c.h.b16 %v5609
    %v5990 = vunpack.c.l.b16 %v5610
    %v5991 = vunpack.c.h.b16 %v5610
    %v5992 = vunpack.c.l.b16 %v5611
    %v5993 = vunpack.c.h.b16 %v5611
    %v5994 = vunpack.c.l.b16 %v5612
    %v5995 = vunpack.c.h.b16 %v5612
    %v5996 = vunpack.c.l.b16 %v5613
    %v5997 = vunpack.c.h.b16 %v5613
    %v5998 = vunpack.c.l.b16 %v5614
    %v5999 = vunpack.c.h.b16 %v5614
    %v6000 = vunpack.c.l.b16 %v5615
    %v6001 = vunpack.c.h.b16 %v5615
    %v6002 = vunpack.c.l.b16 %v5616
    %v6003 = vunpack.c.h.b16 %v5616
    %v6004 = vunpack.c.l.b16 %v5617
    %v6005 = vunpack.c.h.b16 %v5617
    %v6006 = vunpack.c.l.b16 %v5618
    %v6007 = vunpack.c.h.b16 %v5618
    %v6008 = vunpack.c.l.b16 %v5619
    %v6009 = vunpack.c.h.b16 %v5619
    %v6010 = vunpack.c.l.b16 %v5620
    %v6011 = vunpack.c.h.b16 %v5620
    %v6012 = vunpack.c.l.b16 %v5621
    %v6013 = vunpack.c.h.b16 %v5621
    %v6014 = vunpack.c.l.b16 %v5622
    %v6015 = vunpack.c.h.b16 %v5622
    %v6016 = vunpack.c.l.b16 %v5623
    %v6017 = vunpack.c.h.b16 %v5623
    %v6018 = vpack.c.b16 %v5766, %v5762
    %v6019 = vpack.c.b16 %v5767, %v5763
    %v6020 = vpack.c.b16 %v5768, %v5764
    %v6021 = vpack.c.b16 %v5769, %v5765
    %v6022 = vpack.c.b16 %v5774, %v5770
    %v6023 = vpack.c.b16 %v5775, %v5771
    %v6024 = vpack.c.b16 %v5776, %v5772
    %v6025 = vpack.c.b16 %v5777, %v5773
    %v6026 = vpack.c.b16 %v5782, %v5778
    %v6027 = vpack.c.b16 %v5783, %v5779
    %v6028 = vpack.c.b16 %v5784, %v5780
    %v6029 = vpack.c.b16 %v5785, %v5781
    %v6030 = vpack.c.b16 %v5790, %v5786
    %v6031 = vpack.c.b16 %v5791, %v5787
    %v6032 = vpack.c.b16 %v5792, %v5788
    %v6033 = vpack.c.b16 %v5793, %v5789
    %v6034 = vpack.c.b16 %v5798, %v5794
    %v6035 = vpack.c.b16 %v5799, %v5795
    %v6036 = vpack.c.b16 %v5800, %v5796
    %v6037 = vpack.c.b16 %v5801, %v5797
    %v6038 = vpack.c.b16 %v5806, %v5802
    %v6039 = vpack.c.b16 %v5807, %v5803
    %v6040 = vpack.c.b16 %v5808, %v5804
    %v6041 = vpack.c.b16 %v5809, %v5805
    %v6042 = vpack.c.b16 %v5814, %v5810
    %v6043 = vpack.c.b16 %v5815, %v5811
    %v6044 = vpack.c.b16 %v5816, %v5812
    %v6045 = vpack.c.b16 %v5817, %v5813
    %v6046 = vpack.c.b16 %v5822, %v5818
    %v6047 = vpack.c.b16 %v5823, %v5819
    %v6048 = vpack.c.b16 %v5824, %v5820
    %v6049 = vpack.c.b16 %v5825, %v5821
    %v6050 = vpack.c.b16 %v5830, %v5826
    %v6051 = vpack.c.b16 %v5831, %v5827
    %v6052 = vpack.c.b16 %v5832, %v5828
    %v6053 = vpack.c.b16 %v5833, %v5829
    %v6054 = vpack.c.b16 %v5838, %v5834
    %v6055 = vpack.c.b16 %v5839, %v5835
    %v6056 = vpack.c.b16 %v5840, %v5836
    %v6057 = vpack.c.b16 %v5841, %v5837
    %v6058 = vpack.c.b16 %v5846, %v5842
    %v6059 = vpack.c.b16 %v5847, %v5843
    %v6060 = vpack.c.b16 %v5848, %v5844
    %v6061 = vpack.c.b16 %v5849, %v5845
    %v6062 = vpack.c.b16 %v5854, %v5850
    %v6063 = vpack.c.b16 %v5855, %v5851
    %v6064 = vpack.c.b16 %v5856, %v5852
    %v6065 = vpack.c.b16 %v5857, %v5853
    %v6066 = vpack.c.b16 %v5862, %v5858
    %v6067 = vpack.c.b16 %v5863, %v5859
    %v6068 = vpack.c.b16 %v5864, %v5860
    %v6069 = vpack.c.b16 %v5865, %v5861
    %v6070 = vpack.c.b16 %v5870, %v5866
    %v6071 = vpack.c.b16 %v5871, %v5867
    %v6072 = vpack.c.b16 %v5872, %v5868
    %v6073 = vpack.c.b16 %v5873, %v5869
    %v6074 = vpack.c.b16 %v5878, %v5874
    %v6075 = vpack.c.b16 %v5879, %v5875
    %v6076 = vpack.c.b16 %v5880, %v5876
    %v6077 = vpack.c.b16 %v5881, %v5877
    %v6078 = vpack.c.b16 %v5886, %v5882
    %v6079 = vpack.c.b16 %v5887, %v5883
    %v6080 = vpack.c.b16 %v5888, %v5884
    %v6081 = vpack.c.b16 %v5889, %v5885
    %v6082 = vpack.c.b16 %v5894, %v5890
    %v6083 = vpack.c.b16 %v5895, %v5891
    %v6084 = vpack.c.b16 %v5896, %v5892
    %v6085 = vpack.c.b16 %v5897, %v5893
    %v6086 = vpack.c.b16 %v5902, %v5898
    %v6087 = vpack.c.b16 %v5903, %v5899
    %v6088 = vpack.c.b16 %v5904, %v5900
    %v6089 = vpack.c.b16 %v5905, %v5901
    %v6090 = vpack.c.b16 %v5910, %v5906
    %v6091 = vpack.c.b16 %v5911, %v5907
    %v6092 = vpack.c.b16 %v5912, %v5908
    %v6093 = vpack.c.b16 %v5913, %v5909
    %v6094 = vpack.c.b16 %v5918, %v5914
    %v6095 = vpack.c.b16 %v5919, %v5915
    %v6096 = vpack.c.b16 %v5920, %v5916
    %v6097 = vpack.c.b16 %v5921, %v5917
    %v6098 = vpack.c.b16 %v5926, %v5922
    %v6099 = vpack.c.b16 %v5927, %v5923
    %v6100 = vpack.c.b16 %v5928, %v5924
    %v6101 = vpack.c.b16 %v5929, %v5925
    %v6102 = vpack.c.b16 %v5934, %v5930
    %v6103 = vpack.c.b16 %v5935, %v5931
    %v6104 = vpack.c.b16 %v5936, %v5932
    %v6105 = vpack.c.b16 %v5937, %v5933
    %v6106 = vpack.c.b16 %v5942, %v5938
    %v6107 = vpack.c.b16 %v5943, %v5939
    %v6108 = vpack.c.b16 %v5944, %v5940
    %v6109 = vpack.c.b16 %v5945, %v5941
    %v6110 = vpack.c.b16 %v5950, %v5946
    %v6111 = vpack.c.b16 %v5951, %v5947
    %v6112 = vpack.c.b16 %v5952, %v5948
    %v6113 = vpack.c.b16 %v5953, %v5949
    %v6114 = vpack.c.b16 %v5958, %v5954
    %v6115 = vpack.c.b16 %v5959, %v5955
    %v6116 = vpack.c.b16 %v5960, %v5956
    %v6117 = vpack.c.b16 %v5961, %v5957
    %v6118 = vpack.c.b16 %v5966, %v5962
    %v6119 = vpack.c.b16 %v5967, %v5963
    %v6120 = vpack.c.b16 %v5968, %v5964
    %v6121 = vpack.c.b16 %v5969, %v5965
    %v6122 = vpack.c.b16 %v5974, %v5970
    %v6123 = vpack.c.b16 %v5975, %v5971
    %v6124 = vpack.c.b16 %v5976, %v5972
    %v6125 = vpack.c.b16 %v5977, %v5973
    %v6126 = vpack.c.b16 %v5982, %v5978
    %v6127 = vpack.c.b16 %v5983, %v5979
    %v6128 = vpack.c.b16 %v5984, %v5980
    %v6129 = vpack.c.b16 %v5985, %v5981
    %v6130 = vpack.c.b16 %v5990, %v5986
    %v6131 = vpack.c.b16 %v5991, %v5987
    %v6132 = vpack.c.b16 %v5992, %v5988
    %v6133 = vpack.c.b16 %v5993, %v5989
    %v6134 = vpack.c.b16 %v5998, %v5994
    %v6135 = vpack.c.b16 %v5999, %v5995
    %v6136 = vpack.c.b16 %v6000, %v5996
    %v6137 = vpack.c.b16 %v6001, %v5997
    %v6138 = vpack.c.b16 %v6006, %v6002
    %v6139 = vpack.c.b16 %v6007, %v6003
    %v6140 = vpack.c.b16 %v6008, %v6004
    %v6141 = vpack.c.b16 %v6009, %v6005
    %v6142 = vpack.c.b16 %v6014, %v6010
    %v6143 = vpack.c.b16 %v6015, %v6011
    %v6144 = vpack.c.b16 %v6016, %v6012
    %v6145 = vpack.c.b16 %v6017, %v6013
    %6274 = vmatpush.bf16.msra.mxu0 %v6046
    %6275 = vmatpush.bf16.msra.mxu0 %v6042
    %6276 = vmatpush.bf16.msra.mxu0 %v6038
    %6277 = vmatpush.bf16.msra.mxu0 %v6034
    %6278 = vmatpush.bf16.msra.mxu0 %v6030
    %6279 = vmatpush.bf16.msra.mxu0 %v6026
    %6280 = vmatpush.bf16.msra.mxu0 %v6022
    %6281 = vmatpush.bf16.msra.mxu0 %v6018
    %6282 = vmatmul.bf16.gmra.mxu0 %v5464
    %v6283 = vpop.f32.mrf.mxu0
    %v6284 = vadd.f32 %v5626, %v6283
    %v6285 = vpop.f32.mrf.mxu0
    %v6286 = vadd.f32 %v5626, %v6285
    %6287 = vmatmul.bf16.gmra.mxu0 %v5468
    %v6288 = vpop.f32.mrf.mxu0
    %v6289 = vadd.f32 %v5626, %v6288
    %v6290 = vpop.f32.mrf.mxu0
    %v6291 = vadd.f32 %v5626, %v6290
    %6292 = vmatmul.bf16.gmra.mxu0 %v5472
    %v6293 = vpop.f32.mrf.mxu0
    %v6294 = vadd.f32 %v5626, %v6293
    %v6295 = vpop.f32.mrf.mxu0
    %v6296 = vadd.f32 %v5626, %v6295
    %6297 = vmatmul.bf16.gmra.mxu0 %v5476
    %v6298 = vpop.f32.mrf.mxu0
    %v6299 = vadd.f32 %v5626, %v6298
    %v6300 = vpop.f32.mrf.mxu0
    %v6301 = vadd.f32 %v5626, %v6300
    %6302 = vmatmul.bf16.gmra.mxu0 %v5480
    %v6303 = vpop.f32.mrf.mxu0
    %v6304 = vadd.f32 %v5626, %v6303
    %v6305 = vpop.f32.mrf.mxu0
    %v6306 = vadd.f32 %v5626, %v6305
    %6307 = vmatmul.bf16.gmra.mxu0 %v5484
    %v6308 = vpop.f32.mrf.mxu0
    %v6309 = vadd.f32 %v5626, %v6308
    %v6310 = vpop.f32.mrf.mxu0
    %v6311 = vadd.f32 %v5626, %v6310
    %6312 = vmatmul.bf16.gmra.mxu0 %v5488
    %v6313 = vpop.f32.mrf.mxu0
    %v6314 = vadd.f32 %v5626, %v6313
    %v6315 = vpop.f32.mrf.mxu0
    %v6316 = vadd.f32 %v5626, %v6315
    %6317 = vmatmul.bf16.gmra.mxu0 %v5492
    %v6318 = vpop.f32.mrf.mxu0
    %v6319 = vadd.f32 %v5626, %v6318
    %v6320 = vpop.f32.mrf.mxu0
    %v6321 = vadd.f32 %v5626, %v6320
    %6322 = vdwg.mxu0
    %6323 = vmatpush.bf16.msra.mxu0 %v6078
    %6324 = vmatpush.bf16.msra.mxu0 %v6074
    %6325 = vmatpush.bf16.msra.mxu0 %v6070
    %6326 = vmatpush.bf16.msra.mxu0 %v6066
    %6327 = vmatpush.bf16.msra.mxu0 %v6062
    %6328 = vmatpush.bf16.msra.mxu0 %v6058
    %6329 = vmatpush.bf16.msra.mxu0 %v6054
    %6330 = vmatpush.bf16.msra.mxu0 %v6050
    %6331 = vmatmul.bf16.gmra.mxu0 %v5465
    %v6332 = vpop.f32.mrf.mxu0
    %v6333 = vadd.f32 %v6284, %v6332
    %v6334 = vpop.f32.mrf.mxu0
    %v6335 = vadd.f32 %v6286, %v6334
    %6336 = vmatmul.bf16.gmra.mxu0 %v5469
    %v6337 = vpop.f32.mrf.mxu0
    %v6338 = vadd.f32 %v6289, %v6337
    %v6339 = vpop.f32.mrf.mxu0
    %v6340 = vadd.f32 %v6291, %v6339
    %6341 = vmatmul.bf16.gmra.mxu0 %v5473
    %v6342 = vpop.f32.mrf.mxu0
    %v6343 = vadd.f32 %v6294, %v6342
    %v6344 = vpop.f32.mrf.mxu0
    %v6345 = vadd.f32 %v6296, %v6344
    %6346 = vmatmul.bf16.gmra.mxu0 %v5477
    %v6347 = vpop.f32.mrf.mxu0
    %v6348 = vadd.f32 %v6299, %v6347
    %v6349 = vpop.f32.mrf.mxu0
    %v6350 = vadd.f32 %v6301, %v6349
    %6351 = vmatmul.bf16.gmra.mxu0 %v5481
    %v6352 = vpop.f32.mrf.mxu0
    %v6353 = vadd.f32 %v6304, %v6352
    %v6354 = vpop.f32.mrf.mxu0
    %v6355 = vadd.f32 %v6306, %v6354
    %6356 = vmatmul.bf16.gmra.mxu0 %v5485
    %v6357 = vpop.f32.mrf.mxu0
    %v6358 = vadd.f32 %v6309, %v6357
    %v6359 = vpop.f32.mrf.mxu0
    %v6360 = vadd.f32 %v6311, %v6359
    %6361 = vmatmul.bf16.gmra.mxu0 %v5489
    %v6362 = vpop.f32.mrf.mxu0
    %v6363 = vadd.f32 %v6314, %v6362
    %v6364 = vpop.f32.mrf.mxu0
    %v6365 = vadd.f32 %v6316, %v6364
    %6366 = vmatmul.bf16.gmra.mxu0 %v5493
    %v6367 = vpop.f32.mrf.mxu0
    %v6368 = vadd.f32 %v6319, %v6367
    %v6369 = vpop.f32.mrf.mxu0
    %v6370 = vadd.f32 %v6321, %v6369
    %6371 = vdwg.mxu0
    %6372 = vmatpush.bf16.msra.mxu0 %v6110
    %6373 = vmatpush.bf16.msra.mxu0 %v6106
    %6374 = vmatpush.bf16.msra.mxu0 %v6102
    %6375 = vmatpush.bf16.msra.mxu0 %v6098
    %6376 = vmatpush.bf16.msra.mxu0 %v6094
    %6377 = vmatpush.bf16.msra.mxu0 %v6090
    %6378 = vmatpush.bf16.msra.mxu0 %v6086
    %6379 = vmatpush.bf16.msra.mxu0 %v6082
    %6380 = vmatmul.bf16.gmra.mxu0 %v5466
    %v6381 = vpop.f32.mrf.mxu0
    %v6382 = vadd.f32 %v6333, %v6381
    %v6383 = vpop.f32.mrf.mxu0
    %v6384 = vadd.f32 %v6335, %v6383
    %6385 = vmatmul.bf16.gmra.mxu0 %v5470
    %v6386 = vpop.f32.mrf.mxu0
    %v6387 = vadd.f32 %v6338, %v6386
    %v6388 = vpop.f32.mrf.mxu0
    %v6389 = vadd.f32 %v6340, %v6388
    %6390 = vmatmul.bf16.gmra.mxu0 %v5474
    %v6391 = vpop.f32.mrf.mxu0
    %v6392 = vadd.f32 %v6343, %v6391
    %v6393 = vpop.f32.mrf.mxu0
    %v6394 = vadd.f32 %v6345, %v6393
    %6395 = vmatmul.bf16.gmra.mxu0 %v5478
    %v6396 = vpop.f32.mrf.mxu0
    %v6397 = vadd.f32 %v6348, %v6396
    %v6398 = vpop.f32.mrf.mxu0
    %v6399 = vadd.f32 %v6350, %v6398
    %6400 = vmatmul.bf16.gmra.mxu0 %v5482
    %v6401 = vpop.f32.mrf.mxu0
    %v6402 = vadd.f32 %v6353, %v6401
    %v6403 = vpop.f32.mrf.mxu0
    %v6404 = vadd.f32 %v6355, %v6403
    %6405 = vmatmul.bf16.gmra.mxu0 %v5486
    %v6406 = vpop.f32.mrf.mxu0
    %v6407 = vadd.f32 %v6358, %v6406
    %v6408 = vpop.f32.mrf.mxu0
    %v6409 = vadd.f32 %v6360, %v6408
    %6410 = vmatmul.bf16.gmra.mxu0 %v5490
    %v6411 = vpop.f32.mrf.mxu0
    %v6412 = vadd.f32 %v6363, %v6411
    %v6413 = vpop.f32.mrf.mxu0
    %v6414 = vadd.f32 %v6365, %v6413
    %6415 = vmatmul.bf16.gmra.mxu0 %v5494
    %v6416 = vpop.f32.mrf.mxu0
    %v6417 = vadd.f32 %v6368, %v6416
    %v6418 = vpop.f32.mrf.mxu0
    %v6419 = vadd.f32 %v6370, %v6418
    %6420 = vdwg.mxu0
    %6421 = vmatpush.bf16.msra.mxu0 %v6142
    %6422 = vmatpush.bf16.msra.mxu0 %v6138
    %6423 = vmatpush.bf16.msra.mxu0 %v6134
    %6424 = vmatpush.bf16.msra.mxu0 %v6130
    %6425 = vmatpush.bf16.msra.mxu0 %v6126
    %6426 = vmatpush.bf16.msra.mxu0 %v6122
    %6427 = vmatpush.bf16.msra.mxu0 %v6118
    %6428 = vmatpush.bf16.msra.mxu0 %v6114
    %6429 = vmatmul.bf16.gmra.mxu0 %v5467
    %v6430 = vpop.f32.mrf.mxu0
    %v6431 = vadd.f32 %v6382, %v6430
    %v6432 = vpop.f32.mrf.mxu0
    %v6433 = vadd.f32 %v6384, %v6432
    %6434 = vmatmul.bf16.gmra.mxu0 %v5471
    %v6435 = vpop.f32.mrf.mxu0
    %v6436 = vadd.f32 %v6387, %v6435
    %v6437 = vpop.f32.mrf.mxu0
    %v6438 = vadd.f32 %v6389, %v6437
    %6439 = vmatmul.bf16.gmra.mxu0 %v5475
    %v6440 = vpop.f32.mrf.mxu0
    %v6441 = vadd.f32 %v6392, %v6440
    %v6442 = vpop.f32.mrf.mxu0
    %v6443 = vadd.f32 %v6394, %v6442
    %6444 = vmatmul.bf16.gmra.mxu0 %v5479
    %v6445 = vpop.f32.mrf.mxu0
    %v6446 = vadd.f32 %v6397, %v6445
    %v6447 = vpop.f32.mrf.mxu0
    %v6448 = vadd.f32 %v6399, %v6447
    %6449 = vmatmul.bf16.gmra.mxu0 %v5483
    %v6450 = vpop.f32.mrf.mxu0
    %v6451 = vadd.f32 %v6402, %v6450
    %v6452 = vpop.f32.mrf.mxu0
    %v6453 = vadd.f32 %v6404, %v6452
    %6454 = vmatmul.bf16.gmra.mxu0 %v5487
    %v6455 = vpop.f32.mrf.mxu0
    %v6456 = vadd.f32 %v6407, %v6455
    %v6457 = vpop.f32.mrf.mxu0
    %v6458 = vadd.f32 %v6409, %v6457
    %6459 = vmatmul.bf16.gmra.mxu0 %v5491
    %v6460 = vpop.f32.mrf.mxu0
    %v6461 = vadd.f32 %v6412, %v6460
    %v6462 = vpop.f32.mrf.mxu0
    %v6463 = vadd.f32 %v6414, %v6462
    %6464 = vmatmul.bf16.gmra.mxu0 %v5495
    %v6465 = vpop.f32.mrf.mxu0
    %v6466 = vadd.f32 %v6417, %v6465
    %v6467 = vpop.f32.mrf.mxu0
    %v6468 = vadd.f32 %v6419, %v6467
    %6469 = vdwg.mxu0
    %6470 = vmatpush.bf16.msra.mxu0 %v6047
    %6471 = vmatpush.bf16.msra.mxu0 %v6043
    %6472 = vmatpush.bf16.msra.mxu0 %v6039
    %6473 = vmatpush.bf16.msra.mxu0 %v6035
    %6474 = vmatpush.bf16.msra.mxu0 %v6031
    %6475 = vmatpush.bf16.msra.mxu0 %v6027
    %6476 = vmatpush.bf16.msra.mxu0 %v6023
    %6477 = vmatpush.bf16.msra.mxu0 %v6019
    %6478 = vmatmul.bf16.gmra.mxu0 %v5464
    %v6479 = vpop.f32.mrf.mxu0
    %v6480 = vadd.f32 %v5627, %v6479
    %v6481 = vpop.f32.mrf.mxu0
    %v6482 = vadd.f32 %v5627, %v6481
    %6483 = vmatmul.bf16.gmra.mxu0 %v5468
    %v6484 = vpop.f32.mrf.mxu0
    %v6485 = vadd.f32 %v5627, %v6484
    %v6486 = vpop.f32.mrf.mxu0
    %v6487 = vadd.f32 %v5627, %v6486
    %6488 = vmatmul.bf16.gmra.mxu0 %v5472
    %v6489 = vpop.f32.mrf.mxu0
    %v6490 = vadd.f32 %v5627, %v6489
    %v6491 = vpop.f32.mrf.mxu0
    %v6492 = vadd.f32 %v5627, %v6491
    %6493 = vmatmul.bf16.gmra.mxu0 %v5476
    %v6494 = vpop.f32.mrf.mxu0
    %v6495 = vadd.f32 %v5627, %v6494
    %v6496 = vpop.f32.mrf.mxu0
    %v6497 = vadd.f32 %v5627, %v6496
    %6498 = vmatmul.bf16.gmra.mxu0 %v5480
    %v6499 = vpop.f32.mrf.mxu0
    %v6500 = vadd.f32 %v5627, %v6499
    %v6501 = vpop.f32.mrf.mxu0
    %v6502 = vadd.f32 %v5627, %v6501
    %6503 = vmatmul.bf16.gmra.mxu0 %v5484
    %v6504 = vpop.f32.mrf.mxu0
    %v6505 = vadd.f32 %v5627, %v6504
    %v6506 = vpop.f32.mrf.mxu0
    %v6507 = vadd.f32 %v5627, %v6506
    %6508 = vmatmul.bf16.gmra.mxu0 %v5488
    %v6509 = vpop.f32.mrf.mxu0
    %v6510 = vadd.f32 %v5627, %v6509
    %v6511 = vpop.f32.mrf.mxu0
    %v6512 = vadd.f32 %v5627, %v6511
    %6513 = vmatmul.bf16.gmra.mxu0 %v5492
    %v6514 = vpop.f32.mrf.mxu0
    %v6515 = vadd.f32 %v5627, %v6514
    %v6516 = vpop.f32.mrf.mxu0
    %v6517 = vadd.f32 %v5627, %v6516
    %6518 = vdwg.mxu0
    %6519 = vmatpush.bf16.msra.mxu0 %v6079
    %6520 = vmatpush.bf16.msra.mxu0 %v6075
    %6521 = vmatpush.bf16.msra.mxu0 %v6071
    %6522 = vmatpush.bf16.msra.mxu0 %v6067
    %6523 = vmatpush.bf16.msra.mxu0 %v6063
    %6524 = vmatpush.bf16.msra.mxu0 %v6059
    %6525 = vmatpush.bf16.msra.mxu0 %v6055
    %6526 = vmatpush.bf16.msra.mxu0 %v6051
    %6527 = vmatmul.bf16.gmra.mxu0 %v5465
    %v6528 = vpop.f32.mrf.mxu0
    %v6529 = vadd.f32 %v6480, %v6528
    %v6530 = vpop.f32.mrf.mxu0
    %v6531 = vadd.f32 %v6482, %v6530
    %6532 = vmatmul.bf16.gmra.mxu0 %v5469
    %v6533 = vpop.f32.mrf.mxu0
    %v6534 = vadd.f32 %v6485, %v6533
    %v6535 = vpop.f32.mrf.mxu0
    %v6536 = vadd.f32 %v6487, %v6535
    %6537 = vmatmul.bf16.gmra.mxu0 %v5473
    %v6538 = vpop.f32.mrf.mxu0
    %v6539 = vadd.f32 %v6490, %v6538
    %v6540 = vpop.f32.mrf.mxu0
    %v6541 = vadd.f32 %v6492, %v6540
    %6542 = vmatmul.bf16.gmra.mxu0 %v5477
    %v6543 = vpop.f32.mrf.mxu0
    %v6544 = vadd.f32 %v6495, %v6543
    %v6545 = vpop.f32.mrf.mxu0
    %v6546 = vadd.f32 %v6497, %v6545
    %6547 = vmatmul.bf16.gmra.mxu0 %v5481
    %v6548 = vpop.f32.mrf.mxu0
    %v6549 = vadd.f32 %v6500, %v6548
    %v6550 = vpop.f32.mrf.mxu0
    %v6551 = vadd.f32 %v6502, %v6550
    %6552 = vmatmul.bf16.gmra.mxu0 %v5485
    %v6553 = vpop.f32.mrf.mxu0
    %v6554 = vadd.f32 %v6505, %v6553
    %v6555 = vpop.f32.mrf.mxu0
    %v6556 = vadd.f32 %v6507, %v6555
    %6557 = vmatmul.bf16.gmra.mxu0 %v5489
    %v6558 = vpop.f32.mrf.mxu0
    %v6559 = vadd.f32 %v6510, %v6558
    %v6560 = vpop.f32.mrf.mxu0
    %v6561 = vadd.f32 %v6512, %v6560
    %6562 = vmatmul.bf16.gmra.mxu0 %v5493
    %v6563 = vpop.f32.mrf.mxu0
    %v6564 = vadd.f32 %v6515, %v6563
    %v6565 = vpop.f32.mrf.mxu0
    %v6566 = vadd.f32 %v6517, %v6565
    %6567 = vdwg.mxu0
    %6568 = vmatpush.bf16.msra.mxu0 %v6111
    %6569 = vmatpush.bf16.msra.mxu0 %v6107
    %6570 = vmatpush.bf16.msra.mxu0 %v6103
    %6571 = vmatpush.bf16.msra.mxu0 %v6099
    %6572 = vmatpush.bf16.msra.mxu0 %v6095
    %6573 = vmatpush.bf16.msra.mxu0 %v6091
    %6574 = vmatpush.bf16.msra.mxu0 %v6087
    %6575 = vmatpush.bf16.msra.mxu0 %v6083
    %6576 = vmatmul.bf16.gmra.mxu0 %v5466
    %v6577 = vpop.f32.mrf.mxu0
    %v6578 = vadd.f32 %v6529, %v6577
    %v6579 = vpop.f32.mrf.mxu0
    %v6580 = vadd.f32 %v6531, %v6579
    %6581 = vmatmul.bf16.gmra.mxu0 %v5470
    %v6582 = vpop.f32.mrf.mxu0
    %v6583 = vadd.f32 %v6534, %v6582
    %v6584 = vpop.f32.mrf.mxu0
    %v6585 = vadd.f32 %v6536, %v6584
    %6586 = vmatmul.bf16.gmra.mxu0 %v5474
    %v6587 = vpop.f32.mrf.mxu0
    %v6588 = vadd.f32 %v6539, %v6587
    %v6589 = vpop.f32.mrf.mxu0
    %v6590 = vadd.f32 %v6541, %v6589
    %6591 = vmatmul.bf16.gmra.mxu0 %v5478
    %v6592 = vpop.f32.mrf.mxu0
    %v6593 = vadd.f32 %v6544, %v6592
    %v6594 = vpop.f32.mrf.mxu0
    %v6595 = vadd.f32 %v6546, %v6594
    %6596 = vmatmul.bf16.gmra.mxu0 %v5482
    %v6597 = vpop.f32.mrf.mxu0
    %v6598 = vadd.f32 %v6549, %v6597
    %v6599 = vpop.f32.mrf.mxu0
    %v6600 = vadd.f32 %v6551, %v6599
    %6601 = vmatmul.bf16.gmra.mxu0 %v5486
    %v6602 = vpop.f32.mrf.mxu0
    %v6603 = vadd.f32 %v6554, %v6602
    %v6604 = vpop.f32.mrf.mxu0
    %v6605 = vadd.f32 %v6556, %v6604
    %6606 = vmatmul.bf16.gmra.mxu0 %v5490
    %v6607 = vpop.f32.mrf.mxu0
    %v6608 = vadd.f32 %v6559, %v6607
    %v6609 = vpop.f32.mrf.mxu0
    %v6610 = vadd.f32 %v6561, %v6609
    %6611 = vmatmul.bf16.gmra.mxu0 %v5494
    %v6612 = vpop.f32.mrf.mxu0
    %v6613 = vadd.f32 %v6564, %v6612
    %v6614 = vpop.f32.mrf.mxu0
    %v6615 = vadd.f32 %v6566, %v6614
    %6616 = vdwg.mxu0
    %6617 = vmatpush.bf16.msra.mxu0 %v6143
    %6618 = vmatpush.bf16.msra.mxu0 %v6139
    %6619 = vmatpush.bf16.msra.mxu0 %v6135
    %6620 = vmatpush.bf16.msra.mxu0 %v6131
    %6621 = vmatpush.bf16.msra.mxu0 %v6127
    %6622 = vmatpush.bf16.msra.mxu0 %v6123
    %6623 = vmatpush.bf16.msra.mxu0 %v6119
    %6624 = vmatpush.bf16.msra.mxu0 %v6115
    %6625 = vmatmul.bf16.gmra.mxu0 %v5467
    %v6626 = vpop.f32.mrf.mxu0
    %v6627 = vadd.f32 %v6578, %v6626
    %v6628 = vpop.f32.mrf.mxu0
    %v6629 = vadd.f32 %v6580, %v6628
    %6630 = vmatmul.bf16.gmra.mxu0 %v5471
    %v6631 = vpop.f32.mrf.mxu0
    %v6632 = vadd.f32 %v6583, %v6631
    %v6633 = vpop.f32.mrf.mxu0
    %v6634 = vadd.f32 %v6585, %v6633
    %6635 = vmatmul.bf16.gmra.mxu0 %v5475
    %v6636 = vpop.f32.mrf.mxu0
    %v6637 = vadd.f32 %v6588, %v6636
    %v6638 = vpop.f32.mrf.mxu0
    %v6639 = vadd.f32 %v6590, %v6638
    %6640 = vmatmul.bf16.gmra.mxu0 %v5479
    %v6641 = vpop.f32.mrf.mxu0
    %v6642 = vadd.f32 %v6593, %v6641
    %v6643 = vpop.f32.mrf.mxu0
    %v6644 = vadd.f32 %v6595, %v6643
    %6645 = vmatmul.bf16.gmra.mxu0 %v5483
    %v6646 = vpop.f32.mrf.mxu0
    %v6647 = vadd.f32 %v6598, %v6646
    %v6648 = vpop.f32.mrf.mxu0
    %v6649 = vadd.f32 %v6600, %v6648
    %6650 = vmatmul.bf16.gmra.mxu0 %v5487
    %v6651 = vpop.f32.mrf.mxu0
    %v6652 = vadd.f32 %v6603, %v6651
    %v6653 = vpop.f32.mrf.mxu0
    %v6654 = vadd.f32 %v6605, %v6653
    %6655 = vmatmul.bf16.gmra.mxu0 %v5491
    %v6656 = vpop.f32.mrf.mxu0
    %v6657 = vadd.f32 %v6608, %v6656
    %v6658 = vpop.f32.mrf.mxu0
    %v6659 = vadd.f32 %v6610, %v6658
    %6660 = vmatmul.bf16.gmra.mxu0 %v5495
    %v6661 = vpop.f32.mrf.mxu0
    %v6662 = vadd.f32 %v6613, %v6661
    %v6663 = vpop.f32.mrf.mxu0
    %v6664 = vadd.f32 %v6615, %v6663
    %6665 = vdwg.mxu0
    %6666 = vmatpush.bf16.msra.mxu0 %v6048
    %6667 = vmatpush.bf16.msra.mxu0 %v6044
    %6668 = vmatpush.bf16.msra.mxu0 %v6040
    %6669 = vmatpush.bf16.msra.mxu0 %v6036
    %6670 = vmatpush.bf16.msra.mxu0 %v6032
    %6671 = vmatpush.bf16.msra.mxu0 %v6028
    %6672 = vmatpush.bf16.msra.mxu0 %v6024
    %6673 = vmatpush.bf16.msra.mxu0 %v6020
    %6674 = vmatmul.bf16.gmra.mxu0 %v5464
    %v6675 = vpop.f32.mrf.mxu0
    %v6676 = vadd.f32 %v5628, %v6675
    %v6677 = vpop.f32.mrf.mxu0
    %v6678 = vadd.f32 %v5628, %v6677
    %6679 = vmatmul.bf16.gmra.mxu0 %v5468
    %v6680 = vpop.f32.mrf.mxu0
    %v6681 = vadd.f32 %v5628, %v6680
    %v6682 = vpop.f32.mrf.mxu0
    %v6683 = vadd.f32 %v5628, %v6682
    %6684 = vmatmul.bf16.gmra.mxu0 %v5472
    %v6685 = vpop.f32.mrf.mxu0
    %v6686 = vadd.f32 %v5628, %v6685
    %v6687 = vpop.f32.mrf.mxu0
    %v6688 = vadd.f32 %v5628, %v6687
    %6689 = vmatmul.bf16.gmra.mxu0 %v5476
    %v6690 = vpop.f32.mrf.mxu0
    %v6691 = vadd.f32 %v5628, %v6690
    %v6692 = vpop.f32.mrf.mxu0
    %v6693 = vadd.f32 %v5628, %v6692
    %6694 = vmatmul.bf16.gmra.mxu0 %v5480
    %v6695 = vpop.f32.mrf.mxu0
    %v6696 = vadd.f32 %v5628, %v6695
    %v6697 = vpop.f32.mrf.mxu0
    %v6698 = vadd.f32 %v5628, %v6697
    %6699 = vmatmul.bf16.gmra.mxu0 %v5484
    %v6700 = vpop.f32.mrf.mxu0
    %v6701 = vadd.f32 %v5628, %v6700
    %v6702 = vpop.f32.mrf.mxu0
    %v6703 = vadd.f32 %v5628, %v6702
    %6704 = vmatmul.bf16.gmra.mxu0 %v5488
    %v6705 = vpop.f32.mrf.mxu0
    %v6706 = vadd.f32 %v5628, %v6705
    %v6707 = vpop.f32.mrf.mxu0
    %v6708 = vadd.f32 %v5628, %v6707
    %6709 = vmatmul.bf16.gmra.mxu0 %v5492
    %v6710 = vpop.f32.mrf.mxu0
    %v6711 = vadd.f32 %v5628, %v6710
    %v6712 = vpop.f32.mrf.mxu0
    %v6713 = vadd.f32 %v5628, %v6712
    %6714 = vdwg.mxu0
    %6715 = vmatpush.bf16.msra.mxu0 %v6080
    %6716 = vmatpush.bf16.msra.mxu0 %v6076
    %6717 = vmatpush.bf16.msra.mxu0 %v6072
    %6718 = vmatpush.bf16.msra.mxu0 %v6068
    %6719 = vmatpush.bf16.msra.mxu0 %v6064
    %6720 = vmatpush.bf16.msra.mxu0 %v6060
    %6721 = vmatpush.bf16.msra.mxu0 %v6056
    %6722 = vmatpush.bf16.msra.mxu0 %v6052
    %6723 = vmatmul.bf16.gmra.mxu0 %v5465
    %v6724 = vpop.f32.mrf.mxu0
    %v6725 = vadd.f32 %v6676, %v6724
    %v6726 = vpop.f32.mrf.mxu0
    %v6727 = vadd.f32 %v6678, %v6726
    %6728 = vmatmul.bf16.gmra.mxu0 %v5469
    %v6729 = vpop.f32.mrf.mxu0
    %v6730 = vadd.f32 %v6681, %v6729
    %v6731 = vpop.f32.mrf.mxu0
    %v6732 = vadd.f32 %v6683, %v6731
    %6733 = vmatmul.bf16.gmra.mxu0 %v5473
    %v6734 = vpop.f32.mrf.mxu0
    %v6735 = vadd.f32 %v6686, %v6734
    %v6736 = vpop.f32.mrf.mxu0
    %v6737 = vadd.f32 %v6688, %v6736
    %6738 = vmatmul.bf16.gmra.mxu0 %v5477
    %v6739 = vpop.f32.mrf.mxu0
    %v6740 = vadd.f32 %v6691, %v6739
    %v6741 = vpop.f32.mrf.mxu0
    %v6742 = vadd.f32 %v6693, %v6741
    %6743 = vmatmul.bf16.gmra.mxu0 %v5481
    %v6744 = vpop.f32.mrf.mxu0
    %v6745 = vadd.f32 %v6696, %v6744
    %v6746 = vpop.f32.mrf.mxu0
    %v6747 = vadd.f32 %v6698, %v6746
    %6748 = vmatmul.bf16.gmra.mxu0 %v5485
    %v6749 = vpop.f32.mrf.mxu0
    %v6750 = vadd.f32 %v6701, %v6749
    %v6751 = vpop.f32.mrf.mxu0
    %v6752 = vadd.f32 %v6703, %v6751
    %6753 = vmatmul.bf16.gmra.mxu0 %v5489
    %v6754 = vpop.f32.mrf.mxu0
    %v6755 = vadd.f32 %v6706, %v6754
    %v6756 = vpop.f32.mrf.mxu0
    %v6757 = vadd.f32 %v6708, %v6756
    %6758 = vmatmul.bf16.gmra.mxu0 %v5493
    %v6759 = vpop.f32.mrf.mxu0
    %v6760 = vadd.f32 %v6711, %v6759
    %v6761 = vpop.f32.mrf.mxu0
    %v6762 = vadd.f32 %v6713, %v6761
    %6763 = vdwg.mxu0
    %6764 = vmatpush.bf16.msra.mxu0 %v6112
    %6765 = vmatpush.bf16.msra.mxu0 %v6108
    %6766 = vmatpush.bf16.msra.mxu0 %v6104
    %6767 = vmatpush.bf16.msra.mxu0 %v6100
    %6768 = vmatpush.bf16.msra.mxu0 %v6096
    %6769 = vmatpush.bf16.msra.mxu0 %v6092
    %6770 = vmatpush.bf16.msra.mxu0 %v6088
    %6771 = vmatpush.bf16.msra.mxu0 %v6084
    %6772 = vmatmul.bf16.gmra.mxu0 %v5466
    %v6773 = vpop.f32.mrf.mxu0
    %v6774 = vadd.f32 %v6725, %v6773
    %v6775 = vpop.f32.mrf.mxu0
    %v6776 = vadd.f32 %v6727, %v6775
    %6777 = vmatmul.bf16.gmra.mxu0 %v5470
    %v6778 = vpop.f32.mrf.mxu0
    %v6779 = vadd.f32 %v6730, %v6778
    %v6780 = vpop.f32.mrf.mxu0
    %v6781 = vadd.f32 %v6732, %v6780
    %6782 = vmatmul.bf16.gmra.mxu0 %v5474
    %v6783 = vpop.f32.mrf.mxu0
    %v6784 = vadd.f32 %v6735, %v6783
    %v6785 = vpop.f32.mrf.mxu0
    %v6786 = vadd.f32 %v6737, %v6785
    %6787 = vmatmul.bf16.gmra.mxu0 %v5478
    %v6788 = vpop.f32.mrf.mxu0
    %v6789 = vadd.f32 %v6740, %v6788
    %v6790 = vpop.f32.mrf.mxu0
    %v6791 = vadd.f32 %v6742, %v6790
    %6792 = vmatmul.bf16.gmra.mxu0 %v5482
    %v6793 = vpop.f32.mrf.mxu0
    %v6794 = vadd.f32 %v6745, %v6793
    %v6795 = vpop.f32.mrf.mxu0
    %v6796 = vadd.f32 %v6747, %v6795
    %6797 = vmatmul.bf16.gmra.mxu0 %v5486
    %v6798 = vpop.f32.mrf.mxu0
    %v6799 = vadd.f32 %v6750, %v6798
    %v6800 = vpop.f32.mrf.mxu0
    %v6801 = vadd.f32 %v6752, %v6800
    %6802 = vmatmul.bf16.gmra.mxu0 %v5490
    %v6803 = vpop.f32.mrf.mxu0
    %v6804 = vadd.f32 %v6755, %v6803
    %v6805 = vpop.f32.mrf.mxu0
    %v6806 = vadd.f32 %v6757, %v6805
    %6807 = vmatmul.bf16.gmra.mxu0 %v5494
    %v6808 = vpop.f32.mrf.mxu0
    %v6809 = vadd.f32 %v6760, %v6808
    %v6810 = vpop.f32.mrf.mxu0
    %v6811 = vadd.f32 %v6762, %v6810
    %6812 = vdwg.mxu0
    %6813 = vmatpush.bf16.msra.mxu0 %v6144
    %6814 = vmatpush.bf16.msra.mxu0 %v6140
    %6815 = vmatpush.bf16.msra.mxu0 %v6136
    %6816 = vmatpush.bf16.msra.mxu0 %v6132
    %6817 = vmatpush.bf16.msra.mxu0 %v6128
    %6818 = vmatpush.bf16.msra.mxu0 %v6124
    %6819 = vmatpush.bf16.msra.mxu0 %v6120
    %6820 = vmatpush.bf16.msra.mxu0 %v6116
    %6821 = vmatmul.bf16.gmra.mxu0 %v5467
    %v6822 = vpop.f32.mrf.mxu0
    %v6823 = vadd.f32 %v6774, %v6822
    %v6824 = vpop.f32.mrf.mxu0
    %v6825 = vadd.f32 %v6776, %v6824
    %6826 = vmatmul.bf16.gmra.mxu0 %v5471
    %v6827 = vpop.f32.mrf.mxu0
    %v6828 = vadd.f32 %v6779, %v6827
    %v6829 = vpop.f32.mrf.mxu0
    %v6830 = vadd.f32 %v6781, %v6829
    %6831 = vmatmul.bf16.gmra.mxu0 %v5475
    %v6832 = vpop.f32.mrf.mxu0
    %v6833 = vadd.f32 %v6784, %v6832
    %v6834 = vpop.f32.mrf.mxu0
    %v6835 = vadd.f32 %v6786, %v6834
    %6836 = vmatmul.bf16.gmra.mxu0 %v5479
    %v6837 = vpop.f32.mrf.mxu0
    %v6838 = vadd.f32 %v6789, %v6837
    %v6839 = vpop.f32.mrf.mxu0
    %v6840 = vadd.f32 %v6791, %v6839
    %6841 = vmatmul.bf16.gmra.mxu0 %v5483
    %v6842 = vpop.f32.mrf.mxu0
    %v6843 = vadd.f32 %v6794, %v6842
    %v6844 = vpop.f32.mrf.mxu0
    %v6845 = vadd.f32 %v6796, %v6844
    %6846 = vmatmul.bf16.gmra.mxu0 %v5487
    %v6847 = vpop.f32.mrf.mxu0
    %v6848 = vadd.f32 %v6799, %v6847
    %v6849 = vpop.f32.mrf.mxu0
    %v6850 = vadd.f32 %v6801, %v6849
    %6851 = vmatmul.bf16.gmra.mxu0 %v5491
    %v6852 = vpop.f32.mrf.mxu0
    %v6853 = vadd.f32 %v6804, %v6852
    %v6854 = vpop.f32.mrf.mxu0
    %v6855 = vadd.f32 %v6806, %v6854
    %6856 = vmatmul.bf16.gmra.mxu0 %v5495
    %v6857 = vpop.f32.mrf.mxu0
    %v6858 = vadd.f32 %v6809, %v6857
    %v6859 = vpop.f32.mrf.mxu0
    %v6860 = vadd.f32 %v6811, %v6859
    %6861 = vdwg.mxu0
    %6862 = vmatpush.bf16.msra.mxu0 %v6049
    %6863 = vmatpush.bf16.msra.mxu0 %v6045
    %6864 = vmatpush.bf16.msra.mxu0 %v6041
    %6865 = vmatpush.bf16.msra.mxu0 %v6037
    %6866 = vmatpush.bf16.msra.mxu0 %v6033
    %6867 = vmatpush.bf16.msra.mxu0 %v6029
    %6868 = vmatpush.bf16.msra.mxu0 %v6025
    %6869 = vmatpush.bf16.msra.mxu0 %v6021
    %6870 = vmatmul.bf16.gmra.mxu0 %v5464
    %v6871 = vpop.f32.mrf.mxu0
    %v6872 = vadd.f32 %v5629, %v6871
    %v6873 = vpop.f32.mrf.mxu0
    %v6874 = vadd.f32 %v5629, %v6873
    %6875 = vmatmul.bf16.gmra.mxu0 %v5468
    %v6876 = vpop.f32.mrf.mxu0
    %v6877 = vadd.f32 %v5629, %v6876
    %v6878 = vpop.f32.mrf.mxu0
    %v6879 = vadd.f32 %v5629, %v6878
    %6880 = vmatmul.bf16.gmra.mxu0 %v5472
    %v6881 = vpop.f32.mrf.mxu0
    %v6882 = vadd.f32 %v5629, %v6881
    %v6883 = vpop.f32.mrf.mxu0
    %v6884 = vadd.f32 %v5629, %v6883
    %6885 = vmatmul.bf16.gmra.mxu0 %v5476
    %v6886 = vpop.f32.mrf.mxu0
    %v6887 = vadd.f32 %v5629, %v6886
    %v6888 = vpop.f32.mrf.mxu0
    %v6889 = vadd.f32 %v5629, %v6888
    %6890 = vmatmul.bf16.gmra.mxu0 %v5480
    %v6891 = vpop.f32.mrf.mxu0
    %v6892 = vadd.f32 %v5629, %v6891
    %v6893 = vpop.f32.mrf.mxu0
    %v6894 = vadd.f32 %v5629, %v6893
    %6895 = vmatmul.bf16.gmra.mxu0 %v5484
    %v6896 = vpop.f32.mrf.mxu0
    %v6897 = vadd.f32 %v5629, %v6896
    %v6898 = vpop.f32.mrf.mxu0
    %v6899 = vadd.f32 %v5629, %v6898
    %6900 = vmatmul.bf16.gmra.mxu0 %v5488
    %v6901 = vpop.f32.mrf.mxu0
    %v6902 = vadd.f32 %v5629, %v6901
    %v6903 = vpop.f32.mrf.mxu0
    %v6904 = vadd.f32 %v5629, %v6903
    %6905 = vmatmul.bf16.gmra.mxu0 %v5492
    %v6906 = vpop.f32.mrf.mxu0
    %v6907 = vadd.f32 %v5629, %v6906
    %v6908 = vpop.f32.mrf.mxu0
    %v6909 = vadd.f32 %v5629, %v6908
    %6910 = vdwg.mxu0
    %6911 = vmatpush.bf16.msra.mxu0 %v6081
    %6912 = vmatpush.bf16.msra.mxu0 %v6077
    %6913 = vmatpush.bf16.msra.mxu0 %v6073
    %6914 = vmatpush.bf16.msra.mxu0 %v6069
    %6915 = vmatpush.bf16.msra.mxu0 %v6065
    %6916 = vmatpush.bf16.msra.mxu0 %v6061
    %6917 = vmatpush.bf16.msra.mxu0 %v6057
    %6918 = vmatpush.bf16.msra.mxu0 %v6053
    %6919 = vmatmul.bf16.gmra.mxu0 %v5465
    %v6920 = vpop.f32.mrf.mxu0
    %v6921 = vadd.f32 %v6872, %v6920
    %v6922 = vpop.f32.mrf.mxu0
    %v6923 = vadd.f32 %v6874, %v6922
    %6924 = vmatmul.bf16.gmra.mxu0 %v5469
    %v6925 = vpop.f32.mrf.mxu0
    %v6926 = vadd.f32 %v6877, %v6925
    %v6927 = vpop.f32.mrf.mxu0
    %v6928 = vadd.f32 %v6879, %v6927
    %6929 = vmatmul.bf16.gmra.mxu0 %v5473
    %v6930 = vpop.f32.mrf.mxu0
    %v6931 = vadd.f32 %v6882, %v6930
    %v6932 = vpop.f32.mrf.mxu0
    %v6933 = vadd.f32 %v6884, %v6932
    %6934 = vmatmul.bf16.gmra.mxu0 %v5477
    %v6935 = vpop.f32.mrf.mxu0
    %v6936 = vadd.f32 %v6887, %v6935
    %v6937 = vpop.f32.mrf.mxu0
    %v6938 = vadd.f32 %v6889, %v6937
    %6939 = vmatmul.bf16.gmra.mxu0 %v5481
    %v6940 = vpop.f32.mrf.mxu0
    %v6941 = vadd.f32 %v6892, %v6940
    %v6942 = vpop.f32.mrf.mxu0
    %v6943 = vadd.f32 %v6894, %v6942
    %6944 = vmatmul.bf16.gmra.mxu0 %v5485
    %v6945 = vpop.f32.mrf.mxu0
    %v6946 = vadd.f32 %v6897, %v6945
    %v6947 = vpop.f32.mrf.mxu0
    %v6948 = vadd.f32 %v6899, %v6947
    %6949 = vmatmul.bf16.gmra.mxu0 %v5489
    %v6950 = vpop.f32.mrf.mxu0
    %v6951 = vadd.f32 %v6902, %v6950
    %v6952 = vpop.f32.mrf.mxu0
    %v6953 = vadd.f32 %v6904, %v6952
    %6954 = vmatmul.bf16.gmra.mxu0 %v5493
    %v6955 = vpop.f32.mrf.mxu0
    %v6956 = vadd.f32 %v6907, %v6955
    %v6957 = vpop.f32.mrf.mxu0
    %v6958 = vadd.f32 %v6909, %v6957
    %6959 = vdwg.mxu0
    %6960 = vmatpush.bf16.msra.mxu0 %v6113
    %6961 = vmatpush.bf16.msra.mxu0 %v6109
    %6962 = vmatpush.bf16.msra.mxu0 %v6105
    %6963 = vmatpush.bf16.msra.mxu0 %v6101
    %6964 = vmatpush.bf16.msra.mxu0 %v6097
    %6965 = vmatpush.bf16.msra.mxu0 %v6093
    %6966 = vmatpush.bf16.msra.mxu0 %v6089
    %6967 = vmatpush.bf16.msra.mxu0 %v6085
    %6968 = vmatmul.bf16.gmra.mxu0 %v5466
    %v6969 = vpop.f32.mrf.mxu0
    %v6970 = vadd.f32 %v6921, %v6969
    %v6971 = vpop.f32.mrf.mxu0
    %v6972 = vadd.f32 %v6923, %v6971
    %6973 = vmatmul.bf16.gmra.mxu0 %v5470
    %v6974 = vpop.f32.mrf.mxu0
    %v6975 = vadd.f32 %v6926, %v6974
    %v6976 = vpop.f32.mrf.mxu0
    %v6977 = vadd.f32 %v6928, %v6976
    %6978 = vmatmul.bf16.gmra.mxu0 %v5474
    %v6979 = vpop.f32.mrf.mxu0
    %v6980 = vadd.f32 %v6931, %v6979
    %v6981 = vpop.f32.mrf.mxu0
    %v6982 = vadd.f32 %v6933, %v6981
    %6983 = vmatmul.bf16.gmra.mxu0 %v5478
    %v6984 = vpop.f32.mrf.mxu0
    %v6985 = vadd.f32 %v6936, %v6984
    %v6986 = vpop.f32.mrf.mxu0
    %v6987 = vadd.f32 %v6938, %v6986
    %6988 = vmatmul.bf16.gmra.mxu0 %v5482
    %v6989 = vpop.f32.mrf.mxu0
    %v6990 = vadd.f32 %v6941, %v6989
    %v6991 = vpop.f32.mrf.mxu0
    %v6992 = vadd.f32 %v6943, %v6991
    %6993 = vmatmul.bf16.gmra.mxu0 %v5486
    %v6994 = vpop.f32.mrf.mxu0
    %v6995 = vadd.f32 %v6946, %v6994
    %v6996 = vpop.f32.mrf.mxu0
    %v6997 = vadd.f32 %v6948, %v6996
    %6998 = vmatmul.bf16.gmra.mxu0 %v5490
    %v6999 = vpop.f32.mrf.mxu0
    %v7000 = vadd.f32 %v6951, %v6999
    %v7001 = vpop.f32.mrf.mxu0
    %v7002 = vadd.f32 %v6953, %v7001
    %7003 = vmatmul.bf16.gmra.mxu0 %v5494
    %v7004 = vpop.f32.mrf.mxu0
    %v7005 = vadd.f32 %v6956, %v7004
    %v7006 = vpop.f32.mrf.mxu0
    %v7007 = vadd.f32 %v6958, %v7006
    %7008 = vdwg.mxu0
    %7009 = vmatpush.bf16.msra.mxu0 %v6145
    %7010 = vmatpush.bf16.msra.mxu0 %v6141
    %7011 = vmatpush.bf16.msra.mxu0 %v6137
    %7012 = vmatpush.bf16.msra.mxu0 %v6133
    %7013 = vmatpush.bf16.msra.mxu0 %v6129
    %7014 = vmatpush.bf16.msra.mxu0 %v6125
    %7015 = vmatpush.bf16.msra.mxu0 %v6121
    %7016 = vmatpush.bf16.msra.mxu0 %v6117
    %7017 = vmatmul.bf16.gmra.mxu0 %v5467
    %v7018 = vpop.f32.mrf.mxu0
    %v7019 = vadd.f32 %v6970, %v7018
    %v7020 = vpop.f32.mrf.mxu0
    %v7021 = vadd.f32 %v6972, %v7020
    %7022 = vmatmul.bf16.gmra.mxu0 %v5471
    %v7023 = vpop.f32.mrf.mxu0
    %v7024 = vadd.f32 %v6975, %v7023
    %v7025 = vpop.f32.mrf.mxu0
    %v7026 = vadd.f32 %v6977, %v7025
    %7027 = vmatmul.bf16.gmra.mxu0 %v5475
    %v7028 = vpop.f32.mrf.mxu0
    %v7029 = vadd.f32 %v6980, %v7028
    %v7030 = vpop.f32.mrf.mxu0
    %v7031 = vadd.f32 %v6982, %v7030
    %7032 = vmatmul.bf16.gmra.mxu0 %v5479
    %v7033 = vpop.f32.mrf.mxu0
    %v7034 = vadd.f32 %v6985, %v7033
    %v7035 = vpop.f32.mrf.mxu0
    %v7036 = vadd.f32 %v6987, %v7035
    %7037 = vmatmul.bf16.gmra.mxu0 %v5483
    %v7038 = vpop.f32.mrf.mxu0
    %v7039 = vadd.f32 %v6990, %v7038
    %v7040 = vpop.f32.mrf.mxu0
    %v7041 = vadd.f32 %v6992, %v7040
    %7042 = vmatmul.bf16.gmra.mxu0 %v5487
    %v7043 = vpop.f32.mrf.mxu0
    %v7044 = vadd.f32 %v6995, %v7043
    %v7045 = vpop.f32.mrf.mxu0
    %v7046 = vadd.f32 %v6997, %v7045
    %7047 = vmatmul.bf16.gmra.mxu0 %v5491
    %v7048 = vpop.f32.mrf.mxu0
    %v7049 = vadd.f32 %v7000, %v7048
    %v7050 = vpop.f32.mrf.mxu0
    %v7051 = vadd.f32 %v7002, %v7050
    %7052 = vmatmul.bf16.gmra.mxu0 %v5495
    %v7053 = vpop.f32.mrf.mxu0
    %v7054 = vadd.f32 %v7005, %v7053
    %v7055 = vpop.f32.mrf.mxu0
    %v7056 = vadd.f32 %v7007, %v7055
    %7057 = vdwg.mxu0
    %v7058 = vmax.f32 %v6431, 0.0
    %v7059 = vmax.f32 %v6627, 0.0
    %v7060 = vmax.f32 %v6823, 0.0
    %v7061 = vmax.f32 %v7019, 0.0
    %v7062 = vmax.f32 %v6433, 0.0
    %v7063 = vmax.f32 %v6629, 0.0
    %v7064 = vmax.f32 %v6825, 0.0
    %v7065 = vmax.f32 %v7021, 0.0
    %v7066 = vmax.f32 %v6436, 0.0
    %v7067 = vmax.f32 %v6632, 0.0
    %v7068 = vmax.f32 %v6828, 0.0
    %v7069 = vmax.f32 %v7024, 0.0
    %v7070 = vmax.f32 %v6438, 0.0
    %v7071 = vmax.f32 %v6634, 0.0
    %v7072 = vmax.f32 %v6830, 0.0
    %v7073 = vmax.f32 %v7026, 0.0
    %v7074 = vmax.f32 %v6441, 0.0
    %v7075 = vmax.f32 %v6637, 0.0
    %v7076 = vmax.f32 %v6833, 0.0
    %v7077 = vmax.f32 %v7029, 0.0
    %v7078 = vmax.f32 %v6443, 0.0
    %v7079 = vmax.f32 %v6639, 0.0
    %v7080 = vmax.f32 %v6835, 0.0
    %v7081 = vmax.f32 %v7031, 0.0
    %v7082 = vmax.f32 %v6446, 0.0
    %v7083 = vmax.f32 %v6642, 0.0
    %v7084 = vmax.f32 %v6838, 0.0
    %v7085 = vmax.f32 %v7034, 0.0
    %v7086 = vmax.f32 %v6448, 0.0
    %v7087 = vmax.f32 %v6644, 0.0
    %v7088 = vmax.f32 %v6840, 0.0
    %v7089 = vmax.f32 %v7036, 0.0
    %v7090 = vmax.f32 %v6451, 0.0
    %v7091 = vmax.f32 %v6647, 0.0
    %v7092 = vmax.f32 %v6843, 0.0
    %v7093 = vmax.f32 %v7039, 0.0
    %v7094 = vmax.f32 %v6453, 0.0
    %v7095 = vmax.f32 %v6649, 0.0
    %v7096 = vmax.f32 %v6845, 0.0
    %v7097 = vmax.f32 %v7041, 0.0
    %v7098 = vmax.f32 %v6456, 0.0
    %v7099 = vmax.f32 %v6652, 0.0
    %v7100 = vmax.f32 %v6848, 0.0
    %v7101 = vmax.f32 %v7044, 0.0
    %v7102 = vmax.f32 %v6458, 0.0
    %v7103 = vmax.f32 %v6654, 0.0
    %v7104 = vmax.f32 %v6850, 0.0
    %v7105 = vmax.f32 %v7046, 0.0
    %v7106 = vmax.f32 %v6461, 0.0
    %v7107 = vmax.f32 %v6657, 0.0
    %v7108 = vmax.f32 %v6853, 0.0
    %v7109 = vmax.f32 %v7049, 0.0
    %v7110 = vmax.f32 %v6463, 0.0
    %v7111 = vmax.f32 %v6659, 0.0
    %v7112 = vmax.f32 %v6855, 0.0
    %v7113 = vmax.f32 %v7051, 0.0
    %v7114 = vmax.f32 %v6466, 0.0
    %v7115 = vmax.f32 %v6662, 0.0
    %v7116 = vmax.f32 %v6858, 0.0
    %v7117 = vmax.f32 %v7054, 0.0
    %v7118 = vmax.f32 %v6468, 0.0
    %v7119 = vmax.f32 %v6664, 0.0
    %v7120 = vmax.f32 %v6860, 0.0
    %v7121 = vmax.f32 %v7056, 0.0
    %v7122 = vpack.c.bf16 %v7062, %v7058
    %v7123 = vpack.c.bf16 %v7063, %v7059
    %v7124 = vpack.c.bf16 %v7064, %v7060
    %v7125 = vpack.c.bf16 %v7065, %v7061
    %v7126 = vpack.c.bf16 %v7070, %v7066
    %v7127 = vpack.c.bf16 %v7071, %v7067
    %v7128 = vpack.c.bf16 %v7072, %v7068
    %v7129 = vpack.c.bf16 %v7073, %v7069
    %v7130 = vpack.c.bf16 %v7078, %v7074
    %v7131 = vpack.c.bf16 %v7079, %v7075
    %v7132 = vpack.c.bf16 %v7080, %v7076
    %v7133 = vpack.c.bf16 %v7081, %v7077
    %v7134 = vpack.c.bf16 %v7086, %v7082
    %v7135 = vpack.c.bf16 %v7087, %v7083
    %v7136 = vpack.c.bf16 %v7088, %v7084
    %v7137 = vpack.c.bf16 %v7089, %v7085
    %v7138 = vpack.c.bf16 %v7094, %v7090
    %v7139 = vpack.c.bf16 %v7095, %v7091
    %v7140 = vpack.c.bf16 %v7096, %v7092
    %v7141 = vpack.c.bf16 %v7097, %v7093
    %v7142 = vpack.c.bf16 %v7102, %v7098
    %v7143 = vpack.c.bf16 %v7103, %v7099
    %v7144 = vpack.c.bf16 %v7104, %v7100
    %v7145 = vpack.c.bf16 %v7105, %v7101
    %v7146 = vpack.c.bf16 %v7110, %v7106
    %v7147 = vpack.c.bf16 %v7111, %v7107
    %v7148 = vpack.c.bf16 %v7112, %v7108
    %v7149 = vpack.c.bf16 %v7113, %v7109
    %v7150 = vpack.c.bf16 %v7118, %v7114
    %v7151 = vpack.c.bf16 %v7119, %v7115
    %v7152 = vpack.c.bf16 %v7120, %v7116
    %v7153 = vpack.c.bf16 %v7121, %v7117
    %v7154 = vld [vmem:[#allocation9] sm:$0xf]
    %v7155 = vld [vmem:[#allocation9 + $0x4] sm:$0xf]
    %v7156 = vld [vmem:[#allocation9 + $0x8] sm:$0xf]
    %v7157 = vld [vmem:[#allocation9 + $0xc] sm:$0xf]
    %v7158 = vld [vmem:[#allocation9 + $0x10] sm:$0xf]
    %v7159 = vld [vmem:[#allocation9 + $0x14] sm:$0xf]
    %v7160 = vld [vmem:[#allocation9 + $0x18] sm:$0xf]
    %v7161 = vld [vmem:[#allocation9 + $0x1c] sm:$0xf]
    %v7162 = vld [vmem:[#allocation9 + $0x20] sm:$0xf]
    %v7163 = vld [vmem:[#allocation9 + $0x24] sm:$0xf]
    %v7164 = vld [vmem:[#allocation9 + $0x28] sm:$0xf]
    %v7165 = vld [vmem:[#allocation9 + $0x2c] sm:$0xf]
    %v7166 = vld [vmem:[#allocation9 + $0x30] sm:$0xf]
    %v7167 = vld [vmem:[#allocation9 + $0x34] sm:$0xf]
    %v7168 = vld [vmem:[#allocation9 + $0x38] sm:$0xf]
    %v7169 = vld [vmem:[#allocation9 + $0x3c] sm:$0xf]
    %v7170 = vld [vmem:[#allocation9 + $0x40] sm:$0xf]
    %v7171 = vld [vmem:[#allocation9 + $0x44] sm:$0xf]
    %v7172 = vld [vmem:[#allocation9 + $0x48] sm:$0xf]
    %v7173 = vld [vmem:[#allocation9 + $0x4c] sm:$0xf]
    %v7174 = vld [vmem:[#allocation9 + $0x50] sm:$0xf]
    %v7175 = vld [vmem:[#allocation9 + $0x54] sm:$0xf]
    %v7176 = vld [vmem:[#allocation9 + $0x58] sm:$0xf]
    %v7177 = vld [vmem:[#allocation9 + $0x5c] sm:$0xf]
    %v7178 = vld [vmem:[#allocation9 + $0x60] sm:$0xf]
    %v7179 = vld [vmem:[#allocation9 + $0x64] sm:$0xf]
    %v7180 = vld [vmem:[#allocation9 + $0x68] sm:$0xf]
    %v7181 = vld [vmem:[#allocation9 + $0x6c] sm:$0xf]
    %v7182 = vld [vmem:[#allocation9 + $0x70] sm:$0xf]
    %v7183 = vld [vmem:[#allocation9 + $0x74] sm:$0xf]
    %v7184 = vld [vmem:[#allocation9 + $0x78] sm:$0xf]
    %v7185 = vld [vmem:[#allocation9 + $0x7c] sm:$0xf]
    %v7186 = vld [vmem:[#allocation9 + $0x80] sm:$0xf]
    %v7187 = vld [vmem:[#allocation9 + $0x84] sm:$0xf]
    %v7188 = vld [vmem:[#allocation9 + $0x88] sm:$0xf]
    %v7189 = vld [vmem:[#allocation9 + $0x8c] sm:$0xf]
    %v7190 = vld [vmem:[#allocation9 + $0x90] sm:$0xf]
    %v7191 = vld [vmem:[#allocation9 + $0x94] sm:$0xf]
    %v7192 = vld [vmem:[#allocation9 + $0x98] sm:$0xf]
    %v7193 = vld [vmem:[#allocation9 + $0x9c] sm:$0xf]
    %v7194 = vld [vmem:[#allocation9 + $0xa0] sm:$0xf]
    %v7195 = vld [vmem:[#allocation9 + $0xa4] sm:$0xf]
    %v7196 = vld [vmem:[#allocation9 + $0xa8] sm:$0xf]
    %v7197 = vld [vmem:[#allocation9 + $0xac] sm:$0xf]
    %v7198 = vld [vmem:[#allocation9 + $0xb0] sm:$0xf]
    %v7199 = vld [vmem:[#allocation9 + $0xb4] sm:$0xf]
    %v7200 = vld [vmem:[#allocation9 + $0xb8] sm:$0xf]
    %v7201 = vld [vmem:[#allocation9 + $0xbc] sm:$0xf]
    %v7202 = vld [vmem:[#allocation9 + $0xc0] sm:$0xf]
    %v7203 = vld [vmem:[#allocation9 + $0xc4] sm:$0xf]
    %v7204 = vld [vmem:[#allocation9 + $0xc8] sm:$0xf]
    %v7205 = vld [vmem:[#allocation9 + $0xcc] sm:$0xf]
    %v7206 = vld [vmem:[#allocation9 + $0xd0] sm:$0xf]
    %v7207 = vld [vmem:[#allocation9 + $0xd4] sm:$0xf]
    %v7208 = vld [vmem:[#allocation9 + $0xd8] sm:$0xf]
    %v7209 = vld [vmem:[#allocation9 + $0xdc] sm:$0xf]
    %v7210 = vld [vmem:[#allocation9 + $0xe0] sm:$0xf]
    %v7211 = vld [vmem:[#allocation9 + $0xe4] sm:$0xf]
    %v7212 = vld [vmem:[#allocation9 + $0xe8] sm:$0xf]
    %v7213 = vld [vmem:[#allocation9 + $0xec] sm:$0xf]
    %v7214 = vld [vmem:[#allocation9 + $0xf0] sm:$0xf]
    %v7215 = vld [vmem:[#allocation9 + $0xf4] sm:$0xf]
    %v7216 = vld [vmem:[#allocation9 + $0xf8] sm:$0xf]
    %v7217 = vld [vmem:[#allocation9 + $0xfc] sm:$0xf]
    %v7218 = vld [vmem:[%s12] sm:$0x1]
    %v7220 = vperm.slane %v7218, 0
    %v7286 = vunpack.c.l.b16 %v7154
    %v7287 = vunpack.c.l.b16 %v7155
    %v7288 = vunpack.c.l.b16 %v7156
    %v7289 = vunpack.c.l.b16 %v7157
    %v7290 = vunpack.c.l.b16 %v7158
    %v7291 = vunpack.c.l.b16 %v7159
    %v7292 = vunpack.c.l.b16 %v7160
    %v7293 = vunpack.c.l.b16 %v7161
    %v7294 = vunpack.c.l.b16 %v7162
    %v7295 = vunpack.c.l.b16 %v7163
    %v7296 = vunpack.c.l.b16 %v7164
    %v7297 = vunpack.c.l.b16 %v7165
    %v7298 = vunpack.c.l.b16 %v7166
    %v7299 = vunpack.c.l.b16 %v7167
    %v7300 = vunpack.c.l.b16 %v7168
    %v7301 = vunpack.c.l.b16 %v7169
    %v7302 = vunpack.c.l.b16 %v7170
    %v7303 = vunpack.c.l.b16 %v7171
    %v7304 = vunpack.c.l.b16 %v7172
    %v7305 = vunpack.c.l.b16 %v7173
    %v7306 = vunpack.c.l.b16 %v7174
    %v7307 = vunpack.c.l.b16 %v7175
    %v7308 = vunpack.c.l.b16 %v7176
    %v7309 = vunpack.c.l.b16 %v7177
    %v7310 = vunpack.c.l.b16 %v7178
    %v7311 = vunpack.c.l.b16 %v7179
    %v7312 = vunpack.c.l.b16 %v7180
    %v7313 = vunpack.c.l.b16 %v7181
    %v7314 = vunpack.c.l.b16 %v7182
    %v7315 = vunpack.c.l.b16 %v7183
    %v7316 = vunpack.c.l.b16 %v7184
    %v7317 = vunpack.c.l.b16 %v7185
    %v7318 = vunpack.c.l.b16 %v7186
    %v7319 = vunpack.c.l.b16 %v7187
    %v7320 = vunpack.c.l.b16 %v7188
    %v7321 = vunpack.c.l.b16 %v7189
    %v7322 = vunpack.c.l.b16 %v7190
    %v7323 = vunpack.c.l.b16 %v7191
    %v7324 = vunpack.c.l.b16 %v7192
    %v7325 = vunpack.c.l.b16 %v7193
    %v7326 = vunpack.c.l.b16 %v7194
    %v7327 = vunpack.c.l.b16 %v7195
    %v7328 = vunpack.c.l.b16 %v7196
    %v7329 = vunpack.c.l.b16 %v7197
    %v7330 = vunpack.c.l.b16 %v7198
    %v7331 = vunpack.c.l.b16 %v7199
    %v7332 = vunpack.c.l.b16 %v7200
    %v7333 = vunpack.c.l.b16 %v7201
    %v7334 = vunpack.c.l.b16 %v7202
    %v7335 = vunpack.c.l.b16 %v7203
    %v7336 = vunpack.c.l.b16 %v7204
    %v7337 = vunpack.c.l.b16 %v7205
    %v7338 = vunpack.c.l.b16 %v7206
    %v7339 = vunpack.c.l.b16 %v7207
    %v7340 = vunpack.c.l.b16 %v7208
    %v7341 = vunpack.c.l.b16 %v7209
    %v7342 = vunpack.c.l.b16 %v7210
    %v7343 = vunpack.c.l.b16 %v7211
    %v7344 = vunpack.c.l.b16 %v7212
    %v7345 = vunpack.c.l.b16 %v7213
    %v7346 = vunpack.c.l.b16 %v7214
    %v7347 = vunpack.c.l.b16 %v7215
    %v7348 = vunpack.c.l.b16 %v7216
    %v7349 = vunpack.c.l.b16 %v7217
    %v7350 = vpack.c.b16 %v7287, %v7286
    %v7351 = vpack.c.b16 %v7289, %v7288
    %v7352 = vpack.c.b16 %v7291, %v7290
    %v7353 = vpack.c.b16 %v7293, %v7292
    %v7354 = vpack.c.b16 %v7295, %v7294
    %v7355 = vpack.c.b16 %v7297, %v7296
    %v7356 = vpack.c.b16 %v7299, %v7298
    %v7357 = vpack.c.b16 %v7301, %v7300
    %v7358 = vpack.c.b16 %v7303, %v7302
    %v7359 = vpack.c.b16 %v7305, %v7304
    %v7360 = vpack.c.b16 %v7307, %v7306
    %v7361 = vpack.c.b16 %v7309, %v7308
    %v7362 = vpack.c.b16 %v7311, %v7310
    %v7363 = vpack.c.b16 %v7313, %v7312
    %v7364 = vpack.c.b16 %v7315, %v7314
    %v7365 = vpack.c.b16 %v7317, %v7316
    %v7366 = vpack.c.b16 %v7319, %v7318
    %v7367 = vpack.c.b16 %v7321, %v7320
    %v7368 = vpack.c.b16 %v7323, %v7322
    %v7369 = vpack.c.b16 %v7325, %v7324
    %v7370 = vpack.c.b16 %v7327, %v7326
    %v7371 = vpack.c.b16 %v7329, %v7328
    %v7372 = vpack.c.b16 %v7331, %v7330
    %v7373 = vpack.c.b16 %v7333, %v7332
    %v7374 = vpack.c.b16 %v7335, %v7334
    %v7375 = vpack.c.b16 %v7337, %v7336
    %v7376 = vpack.c.b16 %v7339, %v7338
    %v7377 = vpack.c.b16 %v7341, %v7340
    %v7378 = vpack.c.b16 %v7343, %v7342
    %v7379 = vpack.c.b16 %v7345, %v7344
    %v7380 = vpack.c.b16 %v7347, %v7346
    %v7381 = vpack.c.b16 %v7349, %v7348
    %7414 = vmatpush.bf16.msra.mxu0 %v7357
    %7415 = vmatpush.bf16.msra.mxu0 %v7356
    %7416 = vmatpush.bf16.msra.mxu0 %v7355
    %7417 = vmatpush.bf16.msra.mxu0 %v7354
    %7418 = vmatpush.bf16.msra.mxu0 %v7353
    %7419 = vmatpush.bf16.msra.mxu0 %v7352
    %7420 = vmatpush.bf16.msra.mxu0 %v7351
    %7421 = vmatpush.bf16.msra.mxu0 %v7350
    %7422 = vmatmul.bf16.gmra.mxu0 %v7122
    %v7423 = vpop.f32.mrf.mxu0
    %v7424 = vadd.f32 %v7220, %v7423
    %v7425 = vpop.f32.mrf.mxu0
    %v7426 = vadd.f32 %v7220, %v7425
    %7427 = vmatmul.bf16.gmra.mxu0 %v7126
    %v7428 = vpop.f32.mrf.mxu0
    %v7429 = vadd.f32 %v7220, %v7428
    %v7430 = vpop.f32.mrf.mxu0
    %v7431 = vadd.f32 %v7220, %v7430
    %7432 = vmatmul.bf16.gmra.mxu0 %v7130
    %v7433 = vpop.f32.mrf.mxu0
    %v7434 = vadd.f32 %v7220, %v7433
    %v7435 = vpop.f32.mrf.mxu0
    %v7436 = vadd.f32 %v7220, %v7435
    %7437 = vmatmul.bf16.gmra.mxu0 %v7134
    %v7438 = vpop.f32.mrf.mxu0
    %v7439 = vadd.f32 %v7220, %v7438
    %v7440 = vpop.f32.mrf.mxu0
    %v7441 = vadd.f32 %v7220, %v7440
    %7442 = vmatmul.bf16.gmra.mxu0 %v7138
    %v7443 = vpop.f32.mrf.mxu0
    %v7444 = vadd.f32 %v7220, %v7443
    %v7445 = vpop.f32.mrf.mxu0
    %v7446 = vadd.f32 %v7220, %v7445
    %7447 = vmatmul.bf16.gmra.mxu0 %v7142
    %v7448 = vpop.f32.mrf.mxu0
    %v7449 = vadd.f32 %v7220, %v7448
    %v7450 = vpop.f32.mrf.mxu0
    %v7451 = vadd.f32 %v7220, %v7450
    %7452 = vmatmul.bf16.gmra.mxu0 %v7146
    %v7453 = vpop.f32.mrf.mxu0
    %v7454 = vadd.f32 %v7220, %v7453
    %v7455 = vpop.f32.mrf.mxu0
    %v7456 = vadd.f32 %v7220, %v7455
    %7457 = vmatmul.bf16.gmra.mxu0 %v7150
    %v7458 = vpop.f32.mrf.mxu0
    %v7459 = vadd.f32 %v7220, %v7458
    %v7460 = vpop.f32.mrf.mxu0
    %v7461 = vadd.f32 %v7220, %v7460
    %7462 = vdwg.mxu0
    %7463 = vmatpush.bf16.msra.mxu0 %v7365
    %7464 = vmatpush.bf16.msra.mxu0 %v7364
    %7465 = vmatpush.bf16.msra.mxu0 %v7363
    %7466 = vmatpush.bf16.msra.mxu0 %v7362
    %7467 = vmatpush.bf16.msra.mxu0 %v7361
    %7468 = vmatpush.bf16.msra.mxu0 %v7360
    %7469 = vmatpush.bf16.msra.mxu0 %v7359
    %7470 = vmatpush.bf16.msra.mxu0 %v7358
    %7471 = vmatmul.bf16.gmra.mxu0 %v7123
    %v7472 = vpop.f32.mrf.mxu0
    %v7473 = vadd.f32 %v7424, %v7472
    %v7474 = vpop.f32.mrf.mxu0
    %v7475 = vadd.f32 %v7426, %v7474
    %7476 = vmatmul.bf16.gmra.mxu0 %v7127
    %v7477 = vpop.f32.mrf.mxu0
    %v7478 = vadd.f32 %v7429, %v7477
    %v7479 = vpop.f32.mrf.mxu0
    %v7480 = vadd.f32 %v7431, %v7479
    %7481 = vmatmul.bf16.gmra.mxu0 %v7131
    %v7482 = vpop.f32.mrf.mxu0
    %v7483 = vadd.f32 %v7434, %v7482
    %v7484 = vpop.f32.mrf.mxu0
    %v7485 = vadd.f32 %v7436, %v7484
    %7486 = vmatmul.bf16.gmra.mxu0 %v7135
    %v7487 = vpop.f32.mrf.mxu0
    %v7488 = vadd.f32 %v7439, %v7487
    %v7489 = vpop.f32.mrf.mxu0
    %v7490 = vadd.f32 %v7441, %v7489
    %7491 = vmatmul.bf16.gmra.mxu0 %v7139
    %v7492 = vpop.f32.mrf.mxu0
    %v7493 = vadd.f32 %v7444, %v7492
    %v7494 = vpop.f32.mrf.mxu0
    %v7495 = vadd.f32 %v7446, %v7494
    %7496 = vmatmul.bf16.gmra.mxu0 %v7143
    %v7497 = vpop.f32.mrf.mxu0
    %v7498 = vadd.f32 %v7449, %v7497
    %v7499 = vpop.f32.mrf.mxu0
    %v7500 = vadd.f32 %v7451, %v7499
    %7501 = vmatmul.bf16.gmra.mxu0 %v7147
    %v7502 = vpop.f32.mrf.mxu0
    %v7503 = vadd.f32 %v7454, %v7502
    %v7504 = vpop.f32.mrf.mxu0
    %v7505 = vadd.f32 %v7456, %v7504
    %7506 = vmatmul.bf16.gmra.mxu0 %v7151
    %v7507 = vpop.f32.mrf.mxu0
    %v7508 = vadd.f32 %v7459, %v7507
    %v7509 = vpop.f32.mrf.mxu0
    %v7510 = vadd.f32 %v7461, %v7509
    %7511 = vdwg.mxu0
    %7512 = vmatpush.bf16.msra.mxu0 %v7373
    %7513 = vmatpush.bf16.msra.mxu0 %v7372
    %7514 = vmatpush.bf16.msra.mxu0 %v7371
    %7515 = vmatpush.bf16.msra.mxu0 %v7370
    %7516 = vmatpush.bf16.msra.mxu0 %v7369
    %7517 = vmatpush.bf16.msra.mxu0 %v7368
    %7518 = vmatpush.bf16.msra.mxu0 %v7367
    %7519 = vmatpush.bf16.msra.mxu0 %v7366
    %7520 = vmatmul.bf16.gmra.mxu0 %v7124
    %v7521 = vpop.f32.mrf.mxu0
    %v7522 = vadd.f32 %v7473, %v7521
    %v7523 = vpop.f32.mrf.mxu0
    %v7524 = vadd.f32 %v7475, %v7523
    %7525 = vmatmul.bf16.gmra.mxu0 %v7128
    %v7526 = vpop.f32.mrf.mxu0
    %v7527 = vadd.f32 %v7478, %v7526
    %v7528 = vpop.f32.mrf.mxu0
    %v7529 = vadd.f32 %v7480, %v7528
    %7530 = vmatmul.bf16.gmra.mxu0 %v7132
    %v7531 = vpop.f32.mrf.mxu0
    %v7532 = vadd.f32 %v7483, %v7531
    %v7533 = vpop.f32.mrf.mxu0
    %v7534 = vadd.f32 %v7485, %v7533
    %7535 = vmatmul.bf16.gmra.mxu0 %v7136
    %v7536 = vpop.f32.mrf.mxu0
    %v7537 = vadd.f32 %v7488, %v7536
    %v7538 = vpop.f32.mrf.mxu0
    %v7539 = vadd.f32 %v7490, %v7538
    %7540 = vmatmul.bf16.gmra.mxu0 %v7140
    %v7541 = vpop.f32.mrf.mxu0
    %v7542 = vadd.f32 %v7493, %v7541
    %v7543 = vpop.f32.mrf.mxu0
    %v7544 = vadd.f32 %v7495, %v7543
    %7545 = vmatmul.bf16.gmra.mxu0 %v7144
    %v7546 = vpop.f32.mrf.mxu0
    %v7547 = vadd.f32 %v7498, %v7546
    %v7548 = vpop.f32.mrf.mxu0
    %v7549 = vadd.f32 %v7500, %v7548
    %7550 = vmatmul.bf16.gmra.mxu0 %v7148
    %v7551 = vpop.f32.mrf.mxu0
    %v7552 = vadd.f32 %v7503, %v7551
    %v7553 = vpop.f32.mrf.mxu0
    %v7554 = vadd.f32 %v7505, %v7553
    %7555 = vmatmul.bf16.gmra.mxu0 %v7152
    %v7556 = vpop.f32.mrf.mxu0
    %v7557 = vadd.f32 %v7508, %v7556
    %v7558 = vpop.f32.mrf.mxu0
    %v7559 = vadd.f32 %v7510, %v7558
    %7560 = vdwg.mxu0
    %7561 = vmatpush.bf16.msra.mxu0 %v7381
    %7562 = vmatpush.bf16.msra.mxu0 %v7380
    %7563 = vmatpush.bf16.msra.mxu0 %v7379
    %7564 = vmatpush.bf16.msra.mxu0 %v7378
    %7565 = vmatpush.bf16.msra.mxu0 %v7377
    %7566 = vmatpush.bf16.msra.mxu0 %v7376
    %7567 = vmatpush.bf16.msra.mxu0 %v7375
    %7568 = vmatpush.bf16.msra.mxu0 %v7374
    %7569 = vmatmul.bf16.gmra.mxu0 %v7125
    %v7570 = vpop.f32.mrf.mxu0
    %v7571 = vadd.f32 %v7522, %v7570
    %v7572 = vpop.f32.mrf.mxu0
    %v7573 = vadd.f32 %v7524, %v7572
    %7574 = vmatmul.bf16.gmra.mxu0 %v7129
    %v7575 = vpop.f32.mrf.mxu0
    %v7576 = vadd.f32 %v7527, %v7575
    %v7577 = vpop.f32.mrf.mxu0
    %v7578 = vadd.f32 %v7529, %v7577
    %7579 = vmatmul.bf16.gmra.mxu0 %v7133
    %v7580 = vpop.f32.mrf.mxu0
    %v7581 = vadd.f32 %v7532, %v7580
    %v7582 = vpop.f32.mrf.mxu0
    %v7583 = vadd.f32 %v7534, %v7582
    %7584 = vmatmul.bf16.gmra.mxu0 %v7137
    %v7585 = vpop.f32.mrf.mxu0
    %v7586 = vadd.f32 %v7537, %v7585
    %v7587 = vpop.f32.mrf.mxu0
    %v7588 = vadd.f32 %v7539, %v7587
    %7589 = vmatmul.bf16.gmra.mxu0 %v7141
    %v7590 = vpop.f32.mrf.mxu0
    %v7591 = vadd.f32 %v7542, %v7590
    %v7592 = vpop.f32.mrf.mxu0
    %v7593 = vadd.f32 %v7544, %v7592
    %7594 = vmatmul.bf16.gmra.mxu0 %v7145
    %v7595 = vpop.f32.mrf.mxu0
    %v7596 = vadd.f32 %v7547, %v7595
    %v7597 = vpop.f32.mrf.mxu0
    %v7598 = vadd.f32 %v7549, %v7597
    %7599 = vmatmul.bf16.gmra.mxu0 %v7149
    %v7600 = vpop.f32.mrf.mxu0
    %v7601 = vadd.f32 %v7552, %v7600
    %v7602 = vpop.f32.mrf.mxu0
    %v7603 = vadd.f32 %v7554, %v7602
    %7604 = vmatmul.bf16.gmra.mxu0 %v7153
    %v7605 = vpop.f32.mrf.mxu0
    %v7606 = vadd.f32 %v7557, %v7605
    %v7607 = vpop.f32.mrf.mxu0
    %v7608 = vadd.f32 %v7559, %v7607
    %7609 = vdwg.mxu0
    %v7610 = vsub.f32 0.0, %v7571
    %v7611 = vsub.f32 0.0, %v7573
    %v7612 = vsub.f32 0.0, %v7576
    %v7613 = vsub.f32 0.0, %v7578
    %v7614 = vsub.f32 0.0, %v7581
    %v7615 = vsub.f32 0.0, %v7583
    %v7616 = vsub.f32 0.0, %v7586
    %v7617 = vsub.f32 0.0, %v7588
    %v7618 = vsub.f32 0.0, %v7591
    %v7619 = vsub.f32 0.0, %v7593
    %v7620 = vsub.f32 0.0, %v7596
    %v7621 = vsub.f32 0.0, %v7598
    %v7622 = vsub.f32 0.0, %v7601
    %v7623 = vsub.f32 0.0, %v7603
    %v7624 = vsub.f32 0.0, %v7606
    %v7625 = vsub.f32 0.0, %v7608
    %v7626 = vmul.f32 %v7610, 1.442695
    %v7627 = vpow.pop %v7626
    %v7628 = vmul.f32 %v7611, 1.442695
    %v7629 = vpow.pop %v7628
    %v7630 = vmul.f32 %v7612, 1.442695
    %v7631 = vpow.pop %v7630
    %v7632 = vmul.f32 %v7613, 1.442695
    %v7633 = vpow.pop %v7632
    %v7634 = vmul.f32 %v7614, 1.442695
    %v7635 = vpow.pop %v7634
    %v7636 = vmul.f32 %v7615, 1.442695
    %v7637 = vpow.pop %v7636
    %v7638 = vmul.f32 %v7616, 1.442695
    %v7639 = vpow.pop %v7638
    %v7640 = vmul.f32 %v7617, 1.442695
    %v7641 = vpow.pop %v7640
    %v7642 = vmul.f32 %v7618, 1.442695
    %v7643 = vpow.pop %v7642
    %v7644 = vmul.f32 %v7619, 1.442695
    %v7645 = vpow.pop %v7644
    %v7646 = vmul.f32 %v7620, 1.442695
    %v7647 = vpow.pop %v7646
    %v7648 = vmul.f32 %v7621, 1.442695
    %v7649 = vpow.pop %v7648
    %v7650 = vmul.f32 %v7622, 1.442695
    %v7651 = vpow.pop %v7650
    %v7652 = vmul.f32 %v7623, 1.442695
    %v7653 = vpow.pop %v7652
    %v7654 = vmul.f32 %v7624, 1.442695
    %v7655 = vpow.pop %v7654
    %v7656 = vmul.f32 %v7625, 1.442695
    %v7657 = vpow.pop %v7656
    %v7658 = vadd.f32 %v7627, 1.0
    %v7659 = vadd.f32 %v7629, 1.0
    %v7660 = vadd.f32 %v7631, 1.0
    %v7661 = vadd.f32 %v7633, 1.0
    %v7662 = vadd.f32 %v7635, 1.0
    %v7663 = vadd.f32 %v7637, 1.0
    %v7664 = vadd.f32 %v7639, 1.0
    %v7665 = vadd.f32 %v7641, 1.0
    %v7666 = vadd.f32 %v7643, 1.0
    %v7667 = vadd.f32 %v7645, 1.0
    %v7668 = vadd.f32 %v7647, 1.0
    %v7669 = vadd.f32 %v7649, 1.0
    %v7670 = vadd.f32 %v7651, 1.0
    %v7671 = vadd.f32 %v7653, 1.0
    %v7672 = vadd.f32 %v7655, 1.0
    %v7673 = vadd.f32 %v7657, 1.0
    %v7674 = vrcp.pop %v7658
    %v7675 = vrcp.pop %v7659
    %v7676 = vrcp.pop %v7660
    %v7677 = vrcp.pop %v7661
    %v7678 = vrcp.pop %v7662
    %v7679 = vrcp.pop %v7663
    %v7680 = vrcp.pop %v7664
    %v7681 = vrcp.pop %v7665
    %v7682 = vrcp.pop %v7666
    %v7683 = vrcp.pop %v7667
    %v7684 = vrcp.pop %v7668
    %v7685 = vrcp.pop %v7669
    %v7686 = vrcp.pop %v7670
    %v7687 = vrcp.pop %v7671
    %v7688 = vrcp.pop %v7672
    %v7689 = vrcp.pop %v7673
    %7690 = vst [vmem:[%s13] sm:$0xff] %v7674
    %7691 = vst [vmem:[%s13 + $0x8] sm:$0xff] %v7675
    %7692 = vst [vmem:[%s13 + $0x10] sm:$0xff] %v7676
    %7693 = vst [vmem:[%s13 + $0x18] sm:$0xff] %v7677
    %7694 = vst [vmem:[%s13 + $0x20] sm:$0xff] %v7678
    %7695 = vst [vmem:[%s13 + $0x28] sm:$0xff] %v7679
    %7696 = vst [vmem:[%s13 + $0x30] sm:$0xff] %v7680
    %7697 = vst [vmem:[%s13 + $0x38] sm:$0xff] %v7681
    %7698 = vst [vmem:[%s13 + $0x40] sm:$0xff] %v7682
    %7699 = vst [vmem:[%s13 + $0x48] sm:$0xff] %v7683
    %7700 = vst [vmem:[%s13 + $0x50] sm:$0xff] %v7684
    %7701 = vst [vmem:[%s13 + $0x58] sm:$0xff] %v7685
    %7702 = vst [vmem:[%s13 + $0x60] sm:$0xff] %v7686
    %7703 = vst [vmem:[%s13 + $0x68] sm:$0xff] %v7687
    %7704 = vst [vmem:[%s13 + $0x70] sm:$0xff] %v7688
    %7705 = vst [vmem:[%s13 + $0x78] sm:$0xff] %v7689
    // Predicated region
    $region74: #{discriminator_forward.1} parent=1 // pred_check
      _
    $region75: #{discriminator_forward.1} parent=1 // pred_check_branch
      %7707 = sbr.rel (0) target = $region77
    $region76: #{discriminator_forward.1} parent=1 // pred_region
      _
    $region77: #{discriminator_forward.1} parent=1 // pred_fallthru
      _
    // Predicated region
    $region78: #{discriminator_forward.1} parent=1 // pred_check
      _
    $region79: #{discriminator_forward.1} parent=1 // pred_check_branch
      %7709 = sbr.rel (0) target = $region81
    $region80: #{discriminator_forward.1} parent=1 // pred_region
      _
    $region81: #{discriminator_forward.1} parent=1 // pred_fallthru
      _
    %7710 = vsyncpa [#allocation3], 1
    %7711 = vsyncpa [#allocation5], 1
    %7712 = vsyncpa [#allocation8], 1

</llo_original>
